<compile_context>
chip_gen: v6e
topology: v6e:2x2x1
jax: 0.10.0
libtpu: 0.0.40
codegen_flags: <defaults>
</compile_context>

<pallas_src>
import math

import jax
import jax.numpy as jnp
from jax.experimental import pallas as pl
from jax.experimental.pallas import tpu as pltpu


def _stage_im2col(col_ref, act_hwc, kw_size, pad):
    """Stage one layer input into its im2col slab.

    col_ref : VMEM ref of shape (H + 2*pad, W, kw_size * C), bf16.
    act_hwc : (H, W, C) f32 value.

    After this call, col_ref[hp, w, kw*C + c] == padded_act[hp, w + kw, c]
    where padded_act is act zero-padded by `pad` on both spatial axes, so the
    kh-th tap row of a (kh_size x kw_size) conv is the contiguous slab
    col_ref[kh : kh + H] (one MXU dot of depth kw_size * C per kh).
    """
    H, W, C = act_hwc.shape
    dt = col_ref.dtype
    k_lanes = col_ref.shape[-1]

    # H-direction halo rows.  Re-zeroed every grid step (cheap strip writes,
    # not a full-buffer memset) so correctness holds when the batch axis is
    # split across TensorCores.
    zrow = jnp.zeros((pad, W, k_lanes), dt)
    col_ref[pl.ds(0, pad), :, :] = zrow
    col_ref[pl.ds(pad + H, pad), :, :] = zrow

    # W-direction zero padding is materialized once in registers (f32 concat,
    # the most robust relayout path); every ref store below then has offset 0
    # and full extent on the sublane-tiled W axis and only a lane-masked
    # offset (kw * C) on the minor axis.
    zcol = jnp.zeros((H, pad, C), jnp.float32)
    actp = jnp.concatenate([zcol, act_hwc.astype(jnp.float32), zcol], axis=1)
    for kw in range(kw_size):
        col_ref[pl.ds(pad, H), :, pl.ds(kw * C, C)] = (
            actp[:, kw:kw + W, :].astype(dt))


def _conv_from_col(col_ref, w_ref, kh_size, H, W):
    """sum_kh  col[kh:kh+H].reshape(H*W, KW*C) @ w[kh]  ->  (H*W, Cout) f32."""
    k = col_ref.shape[-1]
    acc = None
    # kh fully unrolled (<= 11 full-depth dots); partial sums stay in vregs /
    # the MXU result buffer -- no accumulator VMEM read-modify-write.
    # TODO(synk): chunk the H*W rows per dot at production H/W to bound vreg
    # pressure (the f32 accumulator is H*W x Cout).
    for kh in range(kh_size):
        lhs = col_ref[pl.ds(kh, H), :, :].reshape(H * W, k)
        part = jnp.dot(lhs, w_ref[kh], preferred_element_type=jnp.float32)
        acc = part if acc is None else acc + part
    return acc


def _fused_kernel(x_ref, w1_ref, s1_ref, b1_ref, w2_ref, s2_ref, b2_ref,
                  w3_ref, s3_ref, b3_ref, w4_ref, o_ref, col1_ref, col23_ref):
    H, W, _ = x_ref.shape
    Cmid = s1_ref.shape[-1]

    # Layer 1: 11x11 conv (pad 5) + folded BN + ReLU.
    _stage_im2col(col1_ref, x_ref[...], kw_size=11, pad=5)
    y1 = _conv_from_col(col1_ref, w1_ref, kh_size=11, H=H, W=W)
    y1 = jnp.maximum(y1 * s1_ref[...] + b1_ref[...], 0.0)

    # Layer 2: 3x3 conv (pad 1) + folded BN + ReLU.
    _stage_im2col(col23_ref, y1.reshape(H, W, Cmid), kw_size=3, pad=1)
    y2 = _conv_from_col(col23_ref, w2_ref, kh_size=3, H=H, W=W)
    y2 = jnp.maximum(y2 * s2_ref[...] + b2_ref[...], 0.0)

    # Layer 3: 3x3 conv (pad 1) + folded BN + ReLU.  Reuses the layer-2
    # im2col scratch (its contents are dead once y2 is materialized).
    _stage_im2col(col23_ref, y2.reshape(H, W, Cmid), kw_size=3, pad=1)
    y3 = _conv_from_col(col23_ref, w3_ref, kh_size=3, H=H, W=W)
    y3 = jnp.maximum(y3 * s3_ref[...] + b3_ref[...], 0.0)

    # Layer 4: 1x1 conv == plain matmul (no BN / ReLU).
    y4 = jnp.dot(y3.astype(jnp.bfloat16), w4_ref[...],
                 preferred_element_type=jnp.float32)
    o_ref[...] = y4.astype(o_ref.dtype)


def _prep_w(w):
    """(KH, KW, Cin, Cout) f32 -> (KH, KW*Cin, Cout) bf16 im2col weight slabs."""
    KH, KW, Cin, Cout = w.shape
    return w.reshape(KH, KW * Cin, Cout).astype(jnp.bfloat16)


def _full_spec(shape):
    return pl.BlockSpec(shape, lambda n: (0,) * len(shape))


def multiframe_net_large_forward(params, x_nchw):
    """MultiFrameNetLarge.forward: x (N, in_channels, H, W) -> (N, num_classes, H, W)."""
    x = jnp.transpose(x_nchw, (0, 2, 3, 1))          # NCHW -> NHWC
    N, H, W, Cin = x.shape
    Cmid = params["w1"].shape[-1]
    Cout = params["w4"].shape[-1]

    w1, w2, w3 = (_prep_w(params[k]) for k in ("w1", "w2", "w3"))
    w4 = params["w4"].reshape(Cmid, Cout).astype(jnp.bfloat16)
    s1, b1 = [v.reshape(1, Cmid).astype(jnp.float32) for v in params["bn1"]]
    s2, b2 = [v.reshape(1, Cmid).astype(jnp.float32) for v in params["bn2"]]
    s3, b3 = [v.reshape(1, Cmid).astype(jnp.float32) for v in params["bn3"]]

    col1_shape = (H + 10, W, 11 * Cin)     # layer-1 (11x11, pad 5) im2col slab
    col23_shape = (H + 2, W, 3 * Cmid)     # shared layer-2/3 (3x3, pad 1) slab

    # VMEM budget: bf16 scratch slabs + double-buffered I/O blocks + resident
    # weights, with 2x headroom; keep the request well under v7x's 64 MiB.
    scratch_bytes = 2 * (math.prod(col1_shape) + math.prod(col23_shape))
    io_bytes = 2 * 4 * (H * W * Cin + H * W * Cout)
    param_bytes = 2 * sum(int(a.size) for a in (w1, w2, w3, w4)) + 4 * 6 * Cmid
    vmem_limit = int(min(max(2 * (scratch_bytes + io_bytes + param_bytes),
                             32 * 1024 * 1024), 56 * 1024 * 1024))

    out_flat = pl.pallas_call(
        _fused_kernel,
        out_shape=jax.ShapeDtypeStruct((N, H * W, Cout), jnp.float32),
        grid=(N,),
        in_specs=[
            pl.BlockSpec((None, H, W, Cin), lambda n: (n, 0, 0, 0)),
            _full_spec(w1.shape), _full_spec(s1.shape), _full_spec(b1.shape),
            _full_spec(w2.shape), _full_spec(s2.shape), _full_spec(b2.shape),
            _full_spec(w3.shape), _full_spec(s3.shape), _full_spec(b3.shape),
            _full_spec(w4.shape),
        ],
        out_specs=pl.BlockSpec((None, H * W, Cout), lambda n: (n, 0, 0)),
        scratch_shapes=[
            pltpu.VMEM(col1_shape, jnp.bfloat16),
            pltpu.VMEM(col23_shape, jnp.bfloat16),
        ],
        compiler_params=pltpu.CompilerParams(
            dimension_semantics=("parallel",),
            vmem_limit_bytes=vmem_limit),
    )(x, w1, s1, b1, w2, s2, b2, w3, s3, b3, w4)

    # (N, H*W, Cout) is bit-identical to the NHWC HBM layout: reshape is free.
    return jnp.transpose(out_flat.reshape(N, H, W, Cout), (0, 3, 1, 2))


def fold_bn(gamma, beta, mean, var, eps=1e-5):
    scale = gamma / jnp.sqrt(var + eps)
    bias = beta - mean * scale
    return scale, bias


def init_params(key, num_classes, num_frames,
                has_base_perframe_model_trained=False,
                with_optflow=False, with_depth=False):
    C = num_classes
    mf_c = num_frames * num_classes
    in_c = mf_c if has_base_perframe_model_trained else 1 * num_frames * num_classes
    if with_optflow:
        in_c += 2 * (num_frames - 1)
    if with_depth:
        in_c += num_frames
    keys = jax.random.split(key, 7)

    def conv_w(k, kh, kw, cin, cout):
        fan = kh * kw * cin
        return jax.random.normal(k, (kh, kw, cin, cout), jnp.float32) / jnp.sqrt(fan)

    def bn(k, c):
        k1, k2, k3 = jax.random.split(k, 3)
        gamma = 1.0 + 0.1 * jax.random.normal(k1, (c,), jnp.float32)
        beta = 0.1 * jax.random.normal(k2, (c,), jnp.float32)
        mean = 0.1 * jax.random.normal(k3, (c,), jnp.float32)
        var = jnp.ones((c,), jnp.float32)
        return fold_bn(gamma, beta, mean, var)

    return {
        "w1": conv_w(keys[0], 11, 11, in_c, mf_c), "bn1": bn(keys[1], mf_c),
        "w2": conv_w(keys[2], 3, 3, mf_c, mf_c),   "bn2": bn(keys[3], mf_c),
        "w3": conv_w(keys[4], 3, 3, mf_c, mf_c),   "bn3": bn(keys[5], mf_c),
        "w4": conv_w(keys[6], 1, 1, mf_c, C),
    }


def _reference_forward(params, x_nchw):
    """Pure-XLA f32 reference of the same forward pass (for verification)."""
    x = jnp.transpose(x_nchw, (0, 2, 3, 1))

    def conv(y, w, pad):
        return jax.lax.conv_general_dilated(
            y, w, window_strides=(1, 1), padding=((pad, pad), (pad, pad)),
            dimension_numbers=("NHWC", "HWIO", "NHWC"),
            precision=jax.lax.Precision.HIGHEST)

    s1, b1 = params["bn1"]
    s2, b2 = params["bn2"]
    s3, b3 = params["bn3"]
    y = jnp.maximum(conv(x, params["w1"], 5) * s1 + b1, 0.0)
    y = jnp.maximum(conv(y, params["w2"], 1) * s2 + b2, 0.0)
    y = jnp.maximum(conv(y, params["w3"], 1) * s3 + b3, 0.0)
    y = conv(y, params["w4"], 0)
    return jnp.transpose(y, (0, 3, 1, 2))


if __name__ == "__main__":
    key = jax.random.PRNGKey(0)
    kp, kx = jax.random.split(key)

    num_classes, num_frames = 2, 2
    N, H, W = 2, 16, 16
    in_c = num_frames * num_classes  # has_base_perframe_model_trained=False, no optflow/depth

    params = init_params(kp, num_classes, num_frames)
    x = jax.random.normal(kx, (N, in_c, H, W), jnp.float32)

    fwd = jax.jit(multiframe_net_large_forward)
    out = jax.block_until_ready(fwd(params, x))
    assert out.shape == (N, num_classes, H, W), out.shape
    assert out.dtype == jnp.float32

    ref = jax.block_until_ready(_reference_forward(params, x))
    max_err = float(jnp.max(jnp.abs(out - ref)))
    assert max_err < 5e-2, f"max |err| vs XLA reference = {max_err}"
    print("KERNEL_OK")
</pallas_src>

<mosaic_0001>
module attributes {stable_mosaic.version = 11 : i64} {
  func.func @_fused_kernel(%arg0: i32, %arg1: memref<1x16x16x4xf32, #tpu.memory_space<vmem>>, %arg2: memref<11x44x4xbf16, #tpu.memory_space<vmem>>, %arg3: memref<1x4xf32, #tpu.memory_space<vmem>>, %arg4: memref<1x4xf32, #tpu.memory_space<vmem>>, %arg5: memref<3x12x4xbf16, #tpu.memory_space<vmem>>, %arg6: memref<1x4xf32, #tpu.memory_space<vmem>>, %arg7: memref<1x4xf32, #tpu.memory_space<vmem>>, %arg8: memref<3x12x4xbf16, #tpu.memory_space<vmem>>, %arg9: memref<1x4xf32, #tpu.memory_space<vmem>>, %arg10: memref<1x4xf32, #tpu.memory_space<vmem>>, %arg11: memref<4x2xbf16, #tpu.memory_space<vmem>>, %arg12: memref<1x256x2xf32, #tpu.memory_space<vmem>>, %arg13: memref<26x16x44xbf16, #tpu.memory_space<vmem>>, %arg14: memref<18x16x12xbf16, #tpu.memory_space<vmem>>) attributes {dimension_semantics = [#tpu.dimension_semantics<parallel>], iteration_bounds = array<i64: 2>, scalar_prefetch = 0 : i64, scratch_operands = 2 : i64, tpu.core_type = #tpu.core_type<tc>, window_params = [{transform_indices = @transform_0, window_bounds = array<i64: 1, 16, 16, 4>}, {pipeline_mode = #tpu.pipeline_mode<synchronous>, transform_indices = @transform_1, window_bounds = array<i64: 11, 44, 4>}, {pipeline_mode = #tpu.pipeline_mode<synchronous>, transform_indices = @transform_2, window_bounds = array<i64: 1, 4>}, {pipeline_mode = #tpu.pipeline_mode<synchronous>, transform_indices = @transform_3, window_bounds = array<i64: 1, 4>}, {pipeline_mode = #tpu.pipeline_mode<synchronous>, transform_indices = @transform_4, window_bounds = array<i64: 3, 12, 4>}, {pipeline_mode = #tpu.pipeline_mode<synchronous>, transform_indices = @transform_5, window_bounds = array<i64: 1, 4>}, {pipeline_mode = #tpu.pipeline_mode<synchronous>, transform_indices = @transform_6, window_bounds = array<i64: 1, 4>}, {pipeline_mode = #tpu.pipeline_mode<synchronous>, transform_indices = @transform_7, window_bounds = array<i64: 3, 12, 4>}, {pipeline_mode = #tpu.pipeline_mode<synchronous>, transform_indices = @transform_8, window_bounds = array<i64: 1, 4>}, {pipeline_mode = #tpu.pipeline_mode<synchronous>, transform_indices = @transform_9, window_bounds = array<i64: 1, 4>}, {pipeline_mode = #tpu.pipeline_mode<synchronous>, transform_indices = @transform_10, window_bounds = array<i64: 4, 2>}, {transform_indices = @transform_11, window_bounds = array<i64: 1, 256, 2>}]} {
    %c0 = arith.constant 0 : index
    %c0_0 = arith.constant 0 : index
    %c0_1 = arith.constant 0 : index
    %c0_2 = arith.constant 0 : index
    %0 = vector.load %arg1[%c0, %c0_0, %c0_1, %c0_2] : memref<1x16x16x4xf32, #tpu.memory_space<vmem>>, vector<1x16x16x4xf32>
    %1 = vector.shape_cast %0 : vector<1x16x16x4xf32> to vector<16x16x4xf32>
    %cst = arith.constant 0.000000e+00 : bf16
    %2 = vector.broadcast %cst : bf16 to vector<5x16x44xbf16>
    %c0_3 = arith.constant 0 : index
    %c0_4 = arith.constant 0 : index
    %c0_5 = arith.constant 0 : index
    %3 = vector.load %arg13[%c0_3, %c0_4, %c0_5] : memref<26x16x44xbf16, #tpu.memory_space<vmem>>, vector<5x16x44xbf16>
    tpu.vector_store %arg13[%c0_3, %c0_4, %c0_5], %2 {strides = array<i32>} : memref<26x16x44xbf16, #tpu.memory_space<vmem>>, vector<5x16x44xbf16>,
    %c21 = arith.constant 21 : index
    %c0_6 = arith.constant 0 : index
    %c0_7 = arith.constant 0 : index
    %4 = vector.load %arg13[%c21, %c0_6, %c0_7] : memref<26x16x44xbf16, #tpu.memory_space<vmem>>, vector<5x16x44xbf16>
    tpu.vector_store %arg13[%c21, %c0_6, %c0_7], %2 {strides = array<i32>} : memref<26x16x44xbf16, #tpu.memory_space<vmem>>, vector<5x16x44xbf16>,
    %cst_8 = arith.constant 0.000000e+00 : f32
    %5 = vector.broadcast %cst_8 : f32 to vector<16x5x4xf32>
    %6 = tpu.concatenate %5, %1, %5 in 1 : vector<16x5x4xf32>, vector<16x16x4xf32>, vector<16x5x4xf32> -> vector<16x26x4xf32>
    %7 = vector.extract_strided_slice %6 {offsets = [0, 0, 0], sizes = [16, 16, 4], strides = [1, 1, 1]} : vector<16x26x4xf32> to vector<16x16x4xf32>
    %8 = arith.truncf %7 : vector<16x16x4xf32> to vector<16x16x4xbf16>
    %c5 = arith.constant 5 : index
    %c0_9 = arith.constant 0 : index
    %c0_10 = arith.constant 0 : index
    %9 = vector.load %arg13[%c5, %c0_9, %c0_10] : memref<26x16x44xbf16, #tpu.memory_space<vmem>>, vector<16x16x4xbf16>
    tpu.vector_store %arg13[%c5, %c0_9, %c0_10], %8 {strides = array<i32>} : memref<26x16x44xbf16, #tpu.memory_space<vmem>>, vector<16x16x4xbf16>,
    %10 = vector.extract_strided_slice %6 {offsets = [0, 1, 0], sizes = [16, 16, 4], strides = [1, 1, 1]} : vector<16x26x4xf32> to vector<16x16x4xf32>
    %11 = arith.truncf %10 : vector<16x16x4xf32> to vector<16x16x4xbf16>
    %c5_11 = arith.constant 5 : index
    %c0_12 = arith.constant 0 : index
    %c4 = arith.constant 4 : index
    %12 = vector.load %arg13[%c5_11, %c0_12, %c4] : memref<26x16x44xbf16, #tpu.memory_space<vmem>>, vector<16x16x4xbf16>
    tpu.vector_store %arg13[%c5_11, %c0_12, %c4], %11 {strides = array<i32>} : memref<26x16x44xbf16, #tpu.memory_space<vmem>>, vector<16x16x4xbf16>,
    %13 = vector.extract_strided_slice %6 {offsets = [0, 2, 0], sizes = [16, 16, 4], strides = [1, 1, 1]} : vector<16x26x4xf32> to vector<16x16x4xf32>
    %14 = arith.truncf %13 : vector<16x16x4xf32> to vector<16x16x4xbf16>
    %c5_13 = arith.constant 5 : index
    %c0_14 = arith.constant 0 : index
    %c8 = arith.constant 8 : index
    %15 = vector.load %arg13[%c5_13, %c0_14, %c8] : memref<26x16x44xbf16, #tpu.memory_space<vmem>>, vector<16x16x4xbf16>
    tpu.vector_store %arg13[%c5_13, %c0_14, %c8], %14 {strides = array<i32>} : memref<26x16x44xbf16, #tpu.memory_space<vmem>>, vector<16x16x4xbf16>,
    %16 = vector.extract_strided_slice %6 {offsets = [0, 3, 0], sizes = [16, 16, 4], strides = [1, 1, 1]} : vector<16x26x4xf32> to vector<16x16x4xf32>
    %17 = arith.truncf %16 : vector<16x16x4xf32> to vector<16x16x4xbf16>
    %c5_15 = arith.constant 5 : index
    %c0_16 = arith.constant 0 : index
    %c12 = arith.constant 12 : index
    %18 = vector.load %arg13[%c5_15, %c0_16, %c12] : memref<26x16x44xbf16, #tpu.memory_space<vmem>>, vector<16x16x4xbf16>
    tpu.vector_store %arg13[%c5_15, %c0_16, %c12], %17 {strides = array<i32>} : memref<26x16x44xbf16, #tpu.memory_space<vmem>>, vector<16x16x4xbf16>,
    %19 = vector.extract_strided_slice %6 {offsets = [0, 4, 0], sizes = [16, 16, 4], strides = [1, 1, 1]} : vector<16x26x4xf32> to vector<16x16x4xf32>
    %20 = arith.truncf %19 : vector<16x16x4xf32> to vector<16x16x4xbf16>
    %c5_17 = arith.constant 5 : index
    %c0_18 = arith.constant 0 : index
    %c16 = arith.constant 16 : index
    %21 = vector.load %arg13[%c5_17, %c0_18, %c16] : memref<26x16x44xbf16, #tpu.memory_space<vmem>>, vector<16x16x4xbf16>
    tpu.vector_store %arg13[%c5_17, %c0_18, %c16], %20 {strides = array<i32>} : memref<26x16x44xbf16, #tpu.memory_space<vmem>>, vector<16x16x4xbf16>,
    %22 = vector.extract_strided_slice %6 {offsets = [0, 5, 0], sizes = [16, 16, 4], strides = [1, 1, 1]} : vector<16x26x4xf32> to vector<16x16x4xf32>
    %23 = arith.truncf %22 : vector<16x16x4xf32> to vector<16x16x4xbf16>
    %c5_19 = arith.constant 5 : index
    %c0_20 = arith.constant 0 : index
    %c20 = arith.constant 20 : index
    %24 = vector.load %arg13[%c5_19, %c0_20, %c20] : memref<26x16x44xbf16, #tpu.memory_space<vmem>>, vector<16x16x4xbf16>
    tpu.vector_store %arg13[%c5_19, %c0_20, %c20], %23 {strides = array<i32>} : memref<26x16x44xbf16, #tpu.memory_space<vmem>>, vector<16x16x4xbf16>,
    %25 = vector.extract_strided_slice %6 {offsets = [0, 6, 0], sizes = [16, 16, 4], strides = [1, 1, 1]} : vector<16x26x4xf32> to vector<16x16x4xf32>
    %26 = arith.truncf %25 : vector<16x16x4xf32> to vector<16x16x4xbf16>
    %c5_21 = arith.constant 5 : index
    %c0_22 = arith.constant 0 : index
    %c24 = arith.constant 24 : index
    %27 = vector.load %arg13[%c5_21, %c0_22, %c24] : memref<26x16x44xbf16, #tpu.memory_space<vmem>>, vector<16x16x4xbf16>
    tpu.vector_store %arg13[%c5_21, %c0_22, %c24], %26 {strides = array<i32>} : memref<26x16x44xbf16, #tpu.memory_space<vmem>>, vector<16x16x4xbf16>,
    %28 = vector.extract_strided_slice %6 {offsets = [0, 7, 0], sizes = [16, 16, 4], strides = [1, 1, 1]} : vector<16x26x4xf32> to vector<16x16x4xf32>
    %29 = arith.truncf %28 : vector<16x16x4xf32> to vector<16x16x4xbf16>
    %c5_23 = arith.constant 5 : index
    %c0_24 = arith.constant 0 : index
    %c28 = arith.constant 28 : index
    %30 = vector.load %arg13[%c5_23, %c0_24, %c28] : memref<26x16x44xbf16, #tpu.memory_space<vmem>>, vector<16x16x4xbf16>
    tpu.vector_store %arg13[%c5_23, %c0_24, %c28], %29 {strides = array<i32>} : memref<26x16x44xbf16, #tpu.memory_space<vmem>>, vector<16x16x4xbf16>,
    %31 = vector.extract_strided_slice %6 {offsets = [0, 8, 0], sizes = [16, 16, 4], strides = [1, 1, 1]} : vector<16x26x4xf32> to vector<16x16x4xf32>
    %32 = arith.truncf %31 : vector<16x16x4xf32> to vector<16x16x4xbf16>
    %c5_25 = arith.constant 5 : index
    %c0_26 = arith.constant 0 : index
    %c32 = arith.constant 32 : index
    %33 = vector.load %arg13[%c5_25, %c0_26, %c32] : memref<26x16x44xbf16, #tpu.memory_space<vmem>>, vector<16x16x4xbf16>
    tpu.vector_store %arg13[%c5_25, %c0_26, %c32], %32 {strides = array<i32>} : memref<26x16x44xbf16, #tpu.memory_space<vmem>>, vector<16x16x4xbf16>,
    %34 = vector.extract_strided_slice %6 {offsets = [0, 9, 0], sizes = [16, 16, 4], strides = [1, 1, 1]} : vector<16x26x4xf32> to vector<16x16x4xf32>
    %35 = arith.truncf %34 : vector<16x16x4xf32> to vector<16x16x4xbf16>
    %c5_27 = arith.constant 5 : index
    %c0_28 = arith.constant 0 : index
    %c36 = arith.constant 36 : index
    %36 = vector.load %arg13[%c5_27, %c0_28, %c36] : memref<26x16x44xbf16, #tpu.memory_space<vmem>>, vector<16x16x4xbf16>
    tpu.vector_store %arg13[%c5_27, %c0_28, %c36], %35 {strides = array<i32>} : memref<26x16x44xbf16, #tpu.memory_space<vmem>>, vector<16x16x4xbf16>,
    %37 = vector.extract_strided_slice %6 {offsets = [0, 10, 0], sizes = [16, 16, 4], strides = [1, 1, 1]} : vector<16x26x4xf32> to vector<16x16x4xf32>
    %38 = arith.truncf %37 : vector<16x16x4xf32> to vector<16x16x4xbf16>
    %c5_29 = arith.constant 5 : index
    %c0_30 = arith.constant 0 : index
    %c40 = arith.constant 40 : index
    %39 = vector.load %arg13[%c5_29, %c0_30, %c40] : memref<26x16x44xbf16, #tpu.memory_space<vmem>>, vector<16x16x4xbf16>
    tpu.vector_store %arg13[%c5_29, %c0_30, %c40], %38 {strides = array<i32>} : memref<26x16x44xbf16, #tpu.memory_space<vmem>>, vector<16x16x4xbf16>,
    %c0_31 = arith.constant 0 : index
    %c0_32 = arith.constant 0 : index
    %c0_33 = arith.constant 0 : index
    %40 = vector.load %arg13[%c0_31, %c0_32, %c0_33] : memref<26x16x44xbf16, #tpu.memory_space<vmem>>, vector<16x16x44xbf16>
    %41 = vector.shape_cast %40 : vector<16x16x44xbf16> to vector<256x44xbf16>
    %c0_34 = arith.constant 0 : index
    %c0_35 = arith.constant 0 : index
    %c0_36 = arith.constant 0 : index
    %42 = vector.load %arg2[%c0_34, %c0_35, %c0_36] : memref<11x44x4xbf16, #tpu.memory_space<vmem>>, vector<1x44x4xbf16>
    %43 = vector.shape_cast %42 : vector<1x44x4xbf16> to vector<44x4xbf16>
    %cst_37 = arith.constant dense<0.000000e+00> : vector<256x4xf32>
    %44 = tpu.matmul %41, %43, %cst_37 {dimension_numbers = #tpu.dot_dimension_numbers<[1], [0], [0], [1], [0, 0, 1, 1], [], []>} : vector<256x44xbf16>, vector<44x4xbf16>, vector<256x4xf32> -> vector<256x4xf32>
    %c1 = arith.constant 1 : index
    %c0_38 = arith.constant 0 : index
    %c0_39 = arith.constant 0 : index
    %45 = vector.load %arg13[%c1, %c0_38, %c0_39] : memref<26x16x44xbf16, #tpu.memory_space<vmem>>, vector<16x16x44xbf16>
    %46 = vector.shape_cast %45 : vector<16x16x44xbf16> to vector<256x44xbf16>
    %c1_40 = arith.constant 1 : index
    %c0_41 = arith.constant 0 : index
    %c0_42 = arith.constant 0 : index
    %47 = vector.load %arg2[%c1_40, %c0_41, %c0_42] : memref<11x44x4xbf16, #tpu.memory_space<vmem>>, vector<1x44x4xbf16>
    %48 = vector.shape_cast %47 : vector<1x44x4xbf16> to vector<44x4xbf16>
    %cst_43 = arith.constant dense<0.000000e+00> : vector<256x4xf32>
    %49 = tpu.matmul %46, %48, %cst_43 {dimension_numbers = #tpu.dot_dimension_numbers<[1], [0], [0], [1], [0, 0, 1, 1], [], []>} : vector<256x44xbf16>, vector<44x4xbf16>, vector<256x4xf32> -> vector<256x4xf32>
    %50 = arith.addf %44, %49 : vector<256x4xf32>
    %c2 = arith.constant 2 : index
    %c0_44 = arith.constant 0 : index
    %c0_45 = arith.constant 0 : index
    %51 = vector.load %arg13[%c2, %c0_44, %c0_45] : memref<26x16x44xbf16, #tpu.memory_space<vmem>>, vector<16x16x44xbf16>
    %52 = vector.shape_cast %51 : vector<16x16x44xbf16> to vector<256x44xbf16>
    %c2_46 = arith.constant 2 : index
    %c0_47 = arith.constant 0 : index
    %c0_48 = arith.constant 0 : index
    %53 = vector.load %arg2[%c2_46, %c0_47, %c0_48] : memref<11x44x4xbf16, #tpu.memory_space<vmem>>, vector<1x44x4xbf16>
    %54 = vector.shape_cast %53 : vector<1x44x4xbf16> to vector<44x4xbf16>
    %cst_49 = arith.constant dense<0.000000e+00> : vector<256x4xf32>
    %55 = tpu.matmul %52, %54, %cst_49 {dimension_numbers = #tpu.dot_dimension_numbers<[1], [0], [0], [1], [0, 0, 1, 1], [], []>} : vector<256x44xbf16>, vector<44x4xbf16>, vector<256x4xf32> -> vector<256x4xf32>
    %56 = arith.addf %50, %55 : vector<256x4xf32>
    %c3 = arith.constant 3 : index
    %c0_50 = arith.constant 0 : index
    %c0_51 = arith.constant 0 : index
    %57 = vector.load %arg13[%c3, %c0_50, %c0_51] : memref<26x16x44xbf16, #tpu.memory_space<vmem>>, vector<16x16x44xbf16>
    %58 = vector.shape_cast %57 : vector<16x16x44xbf16> to vector<256x44xbf16>
    %c3_52 = arith.constant 3 : index
    %c0_53 = arith.constant 0 : index
    %c0_54 = arith.constant 0 : index
    %59 = vector.load %arg2[%c3_52, %c0_53, %c0_54] : memref<11x44x4xbf16, #tpu.memory_space<vmem>>, vector<1x44x4xbf16>
    %60 = vector.shape_cast %59 : vector<1x44x4xbf16> to vector<44x4xbf16>
    %cst_55 = arith.constant dense<0.000000e+00> : vector<256x4xf32>
    %61 = tpu.matmul %58, %60, %cst_55 {dimension_numbers = #tpu.dot_dimension_numbers<[1], [0], [0], [1], [0, 0, 1, 1], [], []>} : vector<256x44xbf16>, vector<44x4xbf16>, vector<256x4xf32> -> vector<256x4xf32>
    %62 = arith.addf %56, %61 : vector<256x4xf32>
    %c4_56 = arith.constant 4 : index
    %c0_57 = arith.constant 0 : index
    %c0_58 = arith.constant 0 : index
    %63 = vector.load %arg13[%c4_56, %c0_57, %c0_58] : memref<26x16x44xbf16, #tpu.memory_space<vmem>>, vector<16x16x44xbf16>
    %64 = vector.shape_cast %63 : vector<16x16x44xbf16> to vector<256x44xbf16>
    %c4_59 = arith.constant 4 : index
    %c0_60 = arith.constant 0 : index
    %c0_61 = arith.constant 0 : index
    %65 = vector.load %arg2[%c4_59, %c0_60, %c0_61] : memref<11x44x4xbf16, #tpu.memory_space<vmem>>, vector<1x44x4xbf16>
    %66 = vector.shape_cast %65 : vector<1x44x4xbf16> to vector<44x4xbf16>
    %cst_62 = arith.constant dense<0.000000e+00> : vector<256x4xf32>
    %67 = tpu.matmul %64, %66, %cst_62 {dimension_numbers = #tpu.dot_dimension_numbers<[1], [0], [0], [1], [0, 0, 1, 1], [], []>} : vector<256x44xbf16>, vector<44x4xbf16>, vector<256x4xf32> -> vector<256x4xf32>
    %68 = arith.addf %62, %67 : vector<256x4xf32>
    %c5_63 = arith.constant 5 : index
    %c0_64 = arith.constant 0 : index
    %c0_65 = arith.constant 0 : index
    %69 = vector.load %arg13[%c5_63, %c0_64, %c0_65] : memref<26x16x44xbf16, #tpu.memory_space<vmem>>, vector<16x16x44xbf16>
    %70 = vector.shape_cast %69 : vector<16x16x44xbf16> to vector<256x44xbf16>
    %c5_66 = arith.constant 5 : index
    %c0_67 = arith.constant 0 : index
    %c0_68 = arith.constant 0 : index
    %71 = vector.load %arg2[%c5_66, %c0_67, %c0_68] : memref<11x44x4xbf16, #tpu.memory_space<vmem>>, vector<1x44x4xbf16>
    %72 = vector.shape_cast %71 : vector<1x44x4xbf16> to vector<44x4xbf16>
    %cst_69 = arith.constant dense<0.000000e+00> : vector<256x4xf32>
    %73 = tpu.matmul %70, %72, %cst_69 {dimension_numbers = #tpu.dot_dimension_numbers<[1], [0], [0], [1], [0, 0, 1, 1], [], []>} : vector<256x44xbf16>, vector<44x4xbf16>, vector<256x4xf32> -> vector<256x4xf32>
    %74 = arith.addf %68, %73 : vector<256x4xf32>
    %c6 = arith.constant 6 : index
    %c0_70 = arith.constant 0 : index
    %c0_71 = arith.constant 0 : index
    %75 = vector.load %arg13[%c6, %c0_70, %c0_71] : memref<26x16x44xbf16, #tpu.memory_space<vmem>>, vector<16x16x44xbf16>
    %76 = vector.shape_cast %75 : vector<16x16x44xbf16> to vector<256x44xbf16>
    %c6_72 = arith.constant 6 : index
    %c0_73 = arith.constant 0 : index
    %c0_74 = arith.constant 0 : index
    %77 = vector.load %arg2[%c6_72, %c0_73, %c0_74] : memref<11x44x4xbf16, #tpu.memory_space<vmem>>, vector<1x44x4xbf16>
    %78 = vector.shape_cast %77 : vector<1x44x4xbf16> to vector<44x4xbf16>
    %cst_75 = arith.constant dense<0.000000e+00> : vector<256x4xf32>
    %79 = tpu.matmul %76, %78, %cst_75 {dimension_numbers = #tpu.dot_dimension_numbers<[1], [0], [0], [1], [0, 0, 1, 1], [], []>} : vector<256x44xbf16>, vector<44x4xbf16>, vector<256x4xf32> -> vector<256x4xf32>
    %80 = arith.addf %74, %79 : vector<256x4xf32>
    %c7 = arith.constant 7 : index
    %c0_76 = arith.constant 0 : index
    %c0_77 = arith.constant 0 : index
    %81 = vector.load %arg13[%c7, %c0_76, %c0_77] : memref<26x16x44xbf16, #tpu.memory_space<vmem>>, vector<16x16x44xbf16>
    %82 = vector.shape_cast %81 : vector<16x16x44xbf16> to vector<256x44xbf16>
    %c7_78 = arith.constant 7 : index
    %c0_79 = arith.constant 0 : index
    %c0_80 = arith.constant 0 : index
    %83 = vector.load %arg2[%c7_78, %c0_79, %c0_80] : memref<11x44x4xbf16, #tpu.memory_space<vmem>>, vector<1x44x4xbf16>
    %84 = vector.shape_cast %83 : vector<1x44x4xbf16> to vector<44x4xbf16>
    %cst_81 = arith.constant dense<0.000000e+00> : vector<256x4xf32>
    %85 = tpu.matmul %82, %84, %cst_81 {dimension_numbers = #tpu.dot_dimension_numbers<[1], [0], [0], [1], [0, 0, 1, 1], [], []>} : vector<256x44xbf16>, vector<44x4xbf16>, vector<256x4xf32> -> vector<256x4xf32>
    %86 = arith.addf %80, %85 : vector<256x4xf32>
    %c8_82 = arith.constant 8 : index
    %c0_83 = arith.constant 0 : index
    %c0_84 = arith.constant 0 : index
    %87 = vector.load %arg13[%c8_82, %c0_83, %c0_84] : memref<26x16x44xbf16, #tpu.memory_space<vmem>>, vector<16x16x44xbf16>
    %88 = vector.shape_cast %87 : vector<16x16x44xbf16> to vector<256x44xbf16>
    %c8_85 = arith.constant 8 : index
    %c0_86 = arith.constant 0 : index
    %c0_87 = arith.constant 0 : index
    %89 = vector.load %arg2[%c8_85, %c0_86, %c0_87] : memref<11x44x4xbf16, #tpu.memory_space<vmem>>, vector<1x44x4xbf16>
    %90 = vector.shape_cast %89 : vector<1x44x4xbf16> to vector<44x4xbf16>
    %cst_88 = arith.constant dense<0.000000e+00> : vector<256x4xf32>
    %91 = tpu.matmul %88, %90, %cst_88 {dimension_numbers = #tpu.dot_dimension_numbers<[1], [0], [0], [1], [0, 0, 1, 1], [], []>} : vector<256x44xbf16>, vector<44x4xbf16>, vector<256x4xf32> -> vector<256x4xf32>
    %92 = arith.addf %86, %91 : vector<256x4xf32>
    %c9 = arith.constant 9 : index
    %c0_89 = arith.constant 0 : index
    %c0_90 = arith.constant 0 : index
    %93 = vector.load %arg13[%c9, %c0_89, %c0_90] : memref<26x16x44xbf16, #tpu.memory_space<vmem>>, vector<16x16x44xbf16>
    %94 = vector.shape_cast %93 : vector<16x16x44xbf16> to vector<256x44xbf16>
    %c9_91 = arith.constant 9 : index
    %c0_92 = arith.constant 0 : index
    %c0_93 = arith.constant 0 : index
    %95 = vector.load %arg2[%c9_91, %c0_92, %c0_93] : memref<11x44x4xbf16, #tpu.memory_space<vmem>>, vector<1x44x4xbf16>
    %96 = vector.shape_cast %95 : vector<1x44x4xbf16> to vector<44x4xbf16>
    %cst_94 = arith.constant dense<0.000000e+00> : vector<256x4xf32>
    %97 = tpu.matmul %94, %96, %cst_94 {dimension_numbers = #tpu.dot_dimension_numbers<[1], [0], [0], [1], [0, 0, 1, 1], [], []>} : vector<256x44xbf16>, vector<44x4xbf16>, vector<256x4xf32> -> vector<256x4xf32>
    %98 = arith.addf %92, %97 : vector<256x4xf32>
    %c10 = arith.constant 10 : index
    %c0_95 = arith.constant 0 : index
    %c0_96 = arith.constant 0 : index
    %99 = vector.load %arg13[%c10, %c0_95, %c0_96] : memref<26x16x44xbf16, #tpu.memory_space<vmem>>, vector<16x16x44xbf16>
    %100 = vector.shape_cast %99 : vector<16x16x44xbf16> to vector<256x44xbf16>
    %c10_97 = arith.constant 10 : index
    %c0_98 = arith.constant 0 : index
    %c0_99 = arith.constant 0 : index
    %101 = vector.load %arg2[%c10_97, %c0_98, %c0_99] : memref<11x44x4xbf16, #tpu.memory_space<vmem>>, vector<1x44x4xbf16>
    %102 = vector.shape_cast %101 : vector<1x44x4xbf16> to vector<44x4xbf16>
    %cst_100 = arith.constant dense<0.000000e+00> : vector<256x4xf32>
    %103 = tpu.matmul %100, %102, %cst_100 {dimension_numbers = #tpu.dot_dimension_numbers<[1], [0], [0], [1], [0, 0, 1, 1], [], []>} : vector<256x44xbf16>, vector<44x4xbf16>, vector<256x4xf32> -> vector<256x4xf32>
    %104 = arith.addf %98, %103 : vector<256x4xf32>
    %c0_101 = arith.constant 0 : index
    %c0_102 = arith.constant 0 : index
    %105 = vector.load %arg3[%c0_101, %c0_102] : memref<1x4xf32, #tpu.memory_space<vmem>>, vector<1x4xf32>
    %106 = vector.broadcast %105 : vector<1x4xf32> to vector<256x4xf32>
    %107 = arith.mulf %104, %106 : vector<256x4xf32>
    %c0_103 = arith.constant 0 : index
    %c0_104 = arith.constant 0 : index
    %108 = vector.load %arg4[%c0_103, %c0_104] : memref<1x4xf32, #tpu.memory_space<vmem>>, vector<1x4xf32>
    %109 = vector.broadcast %108 : vector<1x4xf32> to vector<256x4xf32>
    %110 = arith.addf %107, %109 : vector<256x4xf32>
    %cst_105 = arith.constant 0.000000e+00 : f32
    %111 = vector.broadcast %cst_105 : f32 to vector<256x4xf32>
    %112 = arith.maximumf %110, %111 : vector<256x4xf32>
    %113 = vector.shape_cast %112 : vector<256x4xf32> to vector<16x16x4xf32>
    %cst_106 = arith.constant 0.000000e+00 : bf16
    %114 = vector.broadcast %cst_106 : bf16 to vector<1x16x12xbf16>
    %c0_107 = arith.constant 0 : index
    %c0_108 = arith.constant 0 : index
    %c0_109 = arith.constant 0 : index
    %115 = vector.load %arg14[%c0_107, %c0_108, %c0_109] : memref<18x16x12xbf16, #tpu.memory_space<vmem>>, vector<1x16x12xbf16>
    tpu.vector_store %arg14[%c0_107, %c0_108, %c0_109], %114 {strides = array<i32>} : memref<18x16x12xbf16, #tpu.memory_space<vmem>>, vector<1x16x12xbf16>,
    %c17 = arith.constant 17 : index
    %c0_110 = arith.constant 0 : index
    %c0_111 = arith.constant 0 : index
    %116 = vector.load %arg14[%c17, %c0_110, %c0_111] : memref<18x16x12xbf16, #tpu.memory_space<vmem>>, vector<1x16x12xbf16>
    tpu.vector_store %arg14[%c17, %c0_110, %c0_111], %114 {strides = array<i32>} : memref<18x16x12xbf16, #tpu.memory_space<vmem>>, vector<1x16x12xbf16>,
    %cst_112 = arith.constant 0.000000e+00 : f32
    %117 = vector.broadcast %cst_112 : f32 to vector<16x1x4xf32>
    %118 = tpu.concatenate %117, %113, %117 in 1 : vector<16x1x4xf32>, vector<16x16x4xf32>, vector<16x1x4xf32> -> vector<16x18x4xf32>
    %119 = vector.extract_strided_slice %118 {offsets = [0, 0, 0], sizes = [16, 16, 4], strides = [1, 1, 1]} : vector<16x18x4xf32> to vector<16x16x4xf32>
    %120 = arith.truncf %119 : vector<16x16x4xf32> to vector<16x16x4xbf16>
    %c1_113 = arith.constant 1 : index
    %c0_114 = arith.constant 0 : index
    %c0_115 = arith.constant 0 : index
    %121 = vector.load %arg14[%c1_113, %c0_114, %c0_115] : memref<18x16x12xbf16, #tpu.memory_space<vmem>>, vector<16x16x4xbf16>
    tpu.vector_store %arg14[%c1_113, %c0_114, %c0_115], %120 {strides = array<i32>} : memref<18x16x12xbf16, #tpu.memory_space<vmem>>, vector<16x16x4xbf16>,
    %122 = vector.extract_strided_slice %118 {offsets = [0, 1, 0], sizes = [16, 16, 4], strides = [1, 1, 1]} : vector<16x18x4xf32> to vector<16x16x4xf32>
    %123 = arith.truncf %122 : vector<16x16x4xf32> to vector<16x16x4xbf16>
    %c1_116 = arith.constant 1 : index
    %c0_117 = arith.constant 0 : index
    %c4_118 = arith.constant 4 : index
    %124 = vector.load %arg14[%c1_116, %c0_117, %c4_118] : memref<18x16x12xbf16, #tpu.memory_space<vmem>>, vector<16x16x4xbf16>
    tpu.vector_store %arg14[%c1_116, %c0_117, %c4_118], %123 {strides = array<i32>} : memref<18x16x12xbf16, #tpu.memory_space<vmem>>, vector<16x16x4xbf16>,
    %125 = vector.extract_strided_slice %118 {offsets = [0, 2, 0], sizes = [16, 16, 4], strides = [1, 1, 1]} : vector<16x18x4xf32> to vector<16x16x4xf32>
    %126 = arith.truncf %125 : vector<16x16x4xf32> to vector<16x16x4xbf16>
    %c1_119 = arith.constant 1 : index
    %c0_120 = arith.constant 0 : index
    %c8_121 = arith.constant 8 : index
    %127 = vector.load %arg14[%c1_119, %c0_120, %c8_121] : memref<18x16x12xbf16, #tpu.memory_space<vmem>>, vector<16x16x4xbf16>
    tpu.vector_store %arg14[%c1_119, %c0_120, %c8_121], %126 {strides = array<i32>} : memref<18x16x12xbf16, #tpu.memory_space<vmem>>, vector<16x16x4xbf16>,
    %c0_122 = arith.constant 0 : index
    %c0_123 = arith.constant 0 : index
    %c0_124 = arith.constant 0 : index
    %128 = vector.load %arg14[%c0_122, %c0_123, %c0_124] : memref<18x16x12xbf16, #tpu.memory_space<vmem>>, vector<16x16x12xbf16>
    %129 = vector.shape_cast %128 : vector<16x16x12xbf16> to vector<256x12xbf16>
    %c0_125 = arith.constant 0 : index
    %c0_126 = arith.constant 0 : index
    %c0_127 = arith.constant 0 : index
    %130 = vector.load %arg5[%c0_125, %c0_126, %c0_127] : memref<3x12x4xbf16, #tpu.memory_space<vmem>>, vector<1x12x4xbf16>
    %131 = vector.shape_cast %130 : vector<1x12x4xbf16> to vector<12x4xbf16>
    %cst_128 = arith.constant dense<0.000000e+00> : vector<256x4xf32>
    %132 = tpu.matmul %129, %131, %cst_128 {dimension_numbers = #tpu.dot_dimension_numbers<[1], [0], [0], [1], [0, 0, 1, 1], [], []>} : vector<256x12xbf16>, vector<12x4xbf16>, vector<256x4xf32> -> vector<256x4xf32>
    %c1_129 = arith.constant 1 : index
    %c0_130 = arith.constant 0 : index
    %c0_131 = arith.constant 0 : index
    %133 = vector.load %arg14[%c1_129, %c0_130, %c0_131] : memref<18x16x12xbf16, #tpu.memory_space<vmem>>, vector<16x16x12xbf16>
    %134 = vector.shape_cast %133 : vector<16x16x12xbf16> to vector<256x12xbf16>
    %c1_132 = arith.constant 1 : index
    %c0_133 = arith.constant 0 : index
    %c0_134 = arith.constant 0 : index
    %135 = vector.load %arg5[%c1_132, %c0_133, %c0_134] : memref<3x12x4xbf16, #tpu.memory_space<vmem>>, vector<1x12x4xbf16>
    %136 = vector.shape_cast %135 : vector<1x12x4xbf16> to vector<12x4xbf16>
    %cst_135 = arith.constant dense<0.000000e+00> : vector<256x4xf32>
    %137 = tpu.matmul %134, %136, %cst_135 {dimension_numbers = #tpu.dot_dimension_numbers<[1], [0], [0], [1], [0, 0, 1, 1], [], []>} : vector<256x12xbf16>, vector<12x4xbf16>, vector<256x4xf32> -> vector<256x4xf32>
    %138 = arith.addf %132, %137 : vector<256x4xf32>
    %c2_136 = arith.constant 2 : index
    %c0_137 = arith.constant 0 : index
    %c0_138 = arith.constant 0 : index
    %139 = vector.load %arg14[%c2_136, %c0_137, %c0_138] : memref<18x16x12xbf16, #tpu.memory_space<vmem>>, vector<16x16x12xbf16>
    %140 = vector.shape_cast %139 : vector<16x16x12xbf16> to vector<256x12xbf16>
    %c2_139 = arith.constant 2 : index
    %c0_140 = arith.constant 0 : index
    %c0_141 = arith.constant 0 : index
    %141 = vector.load %arg5[%c2_139, %c0_140, %c0_141] : memref<3x12x4xbf16, #tpu.memory_space<vmem>>, vector<1x12x4xbf16>
    %142 = vector.shape_cast %141 : vector<1x12x4xbf16> to vector<12x4xbf16>
    %cst_142 = arith.constant dense<0.000000e+00> : vector<256x4xf32>
    %143 = tpu.matmul %140, %142, %cst_142 {dimension_numbers = #tpu.dot_dimension_numbers<[1], [0], [0], [1], [0, 0, 1, 1], [], []>} : vector<256x12xbf16>, vector<12x4xbf16>, vector<256x4xf32> -> vector<256x4xf32>
    %144 = arith.addf %138, %143 : vector<256x4xf32>
    %c0_143 = arith.constant 0 : index
    %c0_144 = arith.constant 0 : index
    %145 = vector.load %arg6[%c0_143, %c0_144] : memref<1x4xf32, #tpu.memory_space<vmem>>, vector<1x4xf32>
    %146 = vector.broadcast %145 : vector<1x4xf32> to vector<256x4xf32>
    %147 = arith.mulf %144, %146 : vector<256x4xf32>
    %c0_145 = arith.constant 0 : index
    %c0_146 = arith.constant 0 : index
    %148 = vector.load %arg7[%c0_145, %c0_146] : memref<1x4xf32, #tpu.memory_space<vmem>>, vector<1x4xf32>
    %149 = vector.broadcast %148 : vector<1x4xf32> to vector<256x4xf32>
    %150 = arith.addf %147, %149 : vector<256x4xf32>
    %cst_147 = arith.constant 0.000000e+00 : f32
    %151 = vector.broadcast %cst_147 : f32 to vector<256x4xf32>
    %152 = arith.maximumf %150, %151 : vector<256x4xf32>
    %153 = vector.shape_cast %152 : vector<256x4xf32> to vector<16x16x4xf32>
    %cst_148 = arith.constant 0.000000e+00 : bf16
    %154 = vector.broadcast %cst_148 : bf16 to vector<1x16x12xbf16>
    %c0_149 = arith.constant 0 : index
    %c0_150 = arith.constant 0 : index
    %c0_151 = arith.constant 0 : index
    %155 = vector.load %arg14[%c0_149, %c0_150, %c0_151] : memref<18x16x12xbf16, #tpu.memory_space<vmem>>, vector<1x16x12xbf16>
    tpu.vector_store %arg14[%c0_149, %c0_150, %c0_151], %154 {strides = array<i32>} : memref<18x16x12xbf16, #tpu.memory_space<vmem>>, vector<1x16x12xbf16>,
    %c17_152 = arith.constant 17 : index
    %c0_153 = arith.constant 0 : index
    %c0_154 = arith.constant 0 : index
    %156 = vector.load %arg14[%c17_152, %c0_153, %c0_154] : memref<18x16x12xbf16, #tpu.memory_space<vmem>>, vector<1x16x12xbf16>
    tpu.vector_store %arg14[%c17_152, %c0_153, %c0_154], %154 {strides = array<i32>} : memref<18x16x12xbf16, #tpu.memory_space<vmem>>, vector<1x16x12xbf16>,
    %cst_155 = arith.constant 0.000000e+00 : f32
    %157 = vector.broadcast %cst_155 : f32 to vector<16x1x4xf32>
    %158 = tpu.concatenate %157, %153, %157 in 1 : vector<16x1x4xf32>, vector<16x16x4xf32>, vector<16x1x4xf32> -> vector<16x18x4xf32>
    %159 = vector.extract_strided_slice %158 {offsets = [0, 0, 0], sizes = [16, 16, 4], strides = [1, 1, 1]} : vector<16x18x4xf32> to vector<16x16x4xf32>
    %160 = arith.truncf %159 : vector<16x16x4xf32> to vector<16x16x4xbf16>
    %c1_156 = arith.constant 1 : index
    %c0_157 = arith.constant 0 : index
    %c0_158 = arith.constant 0 : index
    %161 = vector.load %arg14[%c1_156, %c0_157, %c0_158] : memref<18x16x12xbf16, #tpu.memory_space<vmem>>, vector<16x16x4xbf16>
    tpu.vector_store %arg14[%c1_156, %c0_157, %c0_158], %160 {strides = array<i32>} : memref<18x16x12xbf16, #tpu.memory_space<vmem>>, vector<16x16x4xbf16>,
    %162 = vector.extract_strided_slice %158 {offsets = [0, 1, 0], sizes = [16, 16, 4], strides = [1, 1, 1]} : vector<16x18x4xf32> to vector<16x16x4xf32>
    %163 = arith.truncf %162 : vector<16x16x4xf32> to vector<16x16x4xbf16>
    %c1_159 = arith.constant 1 : index
    %c0_160 = arith.constant 0 : index
    %c4_161 = arith.constant 4 : index
    %164 = vector.load %arg14[%c1_159, %c0_160, %c4_161] : memref<18x16x12xbf16, #tpu.memory_space<vmem>>, vector<16x16x4xbf16>
    tpu.vector_store %arg14[%c1_159, %c0_160, %c4_161], %163 {strides = array<i32>} : memref<18x16x12xbf16, #tpu.memory_space<vmem>>, vector<16x16x4xbf16>,
    %165 = vector.extract_strided_slice %158 {offsets = [0, 2, 0], sizes = [16, 16, 4], strides = [1, 1, 1]} : vector<16x18x4xf32> to vector<16x16x4xf32>
    %166 = arith.truncf %165 : vector<16x16x4xf32> to vector<16x16x4xbf16>
    %c1_162 = arith.constant 1 : index
    %c0_163 = arith.constant 0 : index
    %c8_164 = arith.constant 8 : index
    %167 = vector.load %arg14[%c1_162, %c0_163, %c8_164] : memref<18x16x12xbf16, #tpu.memory_space<vmem>>, vector<16x16x4xbf16>
    tpu.vector_store %arg14[%c1_162, %c0_163, %c8_164], %166 {strides = array<i32>} : memref<18x16x12xbf16, #tpu.memory_space<vmem>>, vector<16x16x4xbf16>,
    %c0_165 = arith.constant 0 : index
    %c0_166 = arith.constant 0 : index
    %c0_167 = arith.constant 0 : index
    %168 = vector.load %arg14[%c0_165, %c0_166, %c0_167] : memref<18x16x12xbf16, #tpu.memory_space<vmem>>, vector<16x16x12xbf16>
    %169 = vector.shape_cast %168 : vector<16x16x12xbf16> to vector<256x12xbf16>
    %c0_168 = arith.constant 0 : index
    %c0_169 = arith.constant 0 : index
    %c0_170 = arith.constant 0 : index
    %170 = vector.load %arg8[%c0_168, %c0_169, %c0_170] : memref<3x12x4xbf16, #tpu.memory_space<vmem>>, vector<1x12x4xbf16>
    %171 = vector.shape_cast %170 : vector<1x12x4xbf16> to vector<12x4xbf16>
    %cst_171 = arith.constant dense<0.000000e+00> : vector<256x4xf32>
    %172 = tpu.matmul %169, %171, %cst_171 {dimension_numbers = #tpu.dot_dimension_numbers<[1], [0], [0], [1], [0, 0, 1, 1], [], []>} : vector<256x12xbf16>, vector<12x4xbf16>, vector<256x4xf32> -> vector<256x4xf32>
    %c1_172 = arith.constant 1 : index
    %c0_173 = arith.constant 0 : index
    %c0_174 = arith.constant 0 : index
    %173 = vector.load %arg14[%c1_172, %c0_173, %c0_174] : memref<18x16x12xbf16, #tpu.memory_space<vmem>>, vector<16x16x12xbf16>
    %174 = vector.shape_cast %173 : vector<16x16x12xbf16> to vector<256x12xbf16>
    %c1_175 = arith.constant 1 : index
    %c0_176 = arith.constant 0 : index
    %c0_177 = arith.constant 0 : index
    %175 = vector.load %arg8[%c1_175, %c0_176, %c0_177] : memref<3x12x4xbf16, #tpu.memory_space<vmem>>, vector<1x12x4xbf16>
    %176 = vector.shape_cast %175 : vector<1x12x4xbf16> to vector<12x4xbf16>
    %cst_178 = arith.constant dense<0.000000e+00> : vector<256x4xf32>
    %177 = tpu.matmul %174, %176, %cst_178 {dimension_numbers = #tpu.dot_dimension_numbers<[1], [0], [0], [1], [0, 0, 1, 1], [], []>} : vector<256x12xbf16>, vector<12x4xbf16>, vector<256x4xf32> -> vector<256x4xf32>
    %178 = arith.addf %172, %177 : vector<256x4xf32>
    %c2_179 = arith.constant 2 : index
    %c0_180 = arith.constant 0 : index
    %c0_181 = arith.constant 0 : index
    %179 = vector.load %arg14[%c2_179, %c0_180, %c0_181] : memref<18x16x12xbf16, #tpu.memory_space<vmem>>, vector<16x16x12xbf16>
    %180 = vector.shape_cast %179 : vector<16x16x12xbf16> to vector<256x12xbf16>
    %c2_182 = arith.constant 2 : index
    %c0_183 = arith.constant 0 : index
    %c0_184 = arith.constant 0 : index
    %181 = vector.load %arg8[%c2_182, %c0_183, %c0_184] : memref<3x12x4xbf16, #tpu.memory_space<vmem>>, vector<1x12x4xbf16>
    %182 = vector.shape_cast %181 : vector<1x12x4xbf16> to vector<12x4xbf16>
    %cst_185 = arith.constant dense<0.000000e+00> : vector<256x4xf32>
    %183 = tpu.matmul %180, %182, %cst_185 {dimension_numbers = #tpu.dot_dimension_numbers<[1], [0], [0], [1], [0, 0, 1, 1], [], []>} : vector<256x12xbf16>, vector<12x4xbf16>, vector<256x4xf32> -> vector<256x4xf32>
    %184 = arith.addf %178, %183 : vector<256x4xf32>
    %c0_186 = arith.constant 0 : index
    %c0_187 = arith.constant 0 : index
    %185 = vector.load %arg9[%c0_186, %c0_187] : memref<1x4xf32, #tpu.memory_space<vmem>>, vector<1x4xf32>
    %186 = vector.broadcast %185 : vector<1x4xf32> to vector<256x4xf32>
    %187 = arith.mulf %184, %186 : vector<256x4xf32>
    %c0_188 = arith.constant 0 : index
    %c0_189 = arith.constant 0 : index
    %188 = vector.load %arg10[%c0_188, %c0_189] : memref<1x4xf32, #tpu.memory_space<vmem>>, vector<1x4xf32>
    %189 = vector.broadcast %188 : vector<1x4xf32> to vector<256x4xf32>
    %190 = arith.addf %187, %189 : vector<256x4xf32>
    %cst_190 = arith.constant 0.000000e+00 : f32
    %191 = vector.broadcast %cst_190 : f32 to vector<256x4xf32>
    %192 = arith.maximumf %190, %191 : vector<256x4xf32>
    %193 = arith.truncf %192 : vector<256x4xf32> to vector<256x4xbf16>
    %c0_191 = arith.constant 0 : index
    %c0_192 = arith.constant 0 : index
    %194 = vector.load %arg11[%c0_191, %c0_192] : memref<4x2xbf16, #tpu.memory_space<vmem>>, vector<4x2xbf16>
    %cst_193 = arith.constant dense<0.000000e+00> : vector<256x2xf32>
    %195 = tpu.matmul %193, %194, %cst_193 {dimension_numbers = #tpu.dot_dimension_numbers<[1], [0], [0], [1], [0, 0, 1, 1], [], []>} : vector<256x4xbf16>, vector<4x2xbf16>, vector<256x2xf32> -> vector<256x2xf32>
    %c0_194 = arith.constant 0 : index
    %c0_195 = arith.constant 0 : index
    %c0_196 = arith.constant 0 : index
    %196 = vector.load %arg12[%c0_194, %c0_195, %c0_196] : memref<1x256x2xf32, #tpu.memory_space<vmem>>, vector<1x256x2xf32>
    %197 = vector.shape_cast %196 : vector<1x256x2xf32> to vector<256x2xf32>
    %198 = vector.shape_cast %195 : vector<256x2xf32> to vector<1x256x2xf32>
    tpu.vector_store %arg12[%c0_194, %c0_195, %c0_196], %198 {strides = array<i32>} : memref<1x256x2xf32, #tpu.memory_space<vmem>>, vector<1x256x2xf32>,
    return
  }
  func.func @transform_0(%arg0: i32) -> (i32, i32, i32, i32) {
    %c0_i32 = arith.constant 0 : i32
    %c0_i32_0 = arith.constant 0 : i32
    %c0_i32_1 = arith.constant 0 : i32
    %c0_i32_2 = arith.constant 0 : i32
    return %arg0, %c0_i32, %c0_i32_0, %c0_i32_1 : i32, i32, i32, i32
  }
  func.func @transform_1(%arg0: i32) -> (i32, i32, i32) {
    %c0_i32 = arith.constant 0 : i32
    %c0_i32_0 = arith.constant 0 : i32
    %c0_i32_1 = arith.constant 0 : i32
    %c0_i32_2 = arith.constant 0 : i32
    return %c0_i32, %c0_i32_0, %c0_i32_1 : i32, i32, i32
  }
  func.func @transform_2(%arg0: i32) -> (i32, i32) {
    %c0_i32 = arith.constant 0 : i32
    %c0_i32_0 = arith.constant 0 : i32
    %c0_i32_1 = arith.constant 0 : i32
    return %c0_i32, %c0_i32_0 : i32, i32
  }
  func.func @transform_3(%arg0: i32) -> (i32, i32) {
    %c0_i32 = arith.constant 0 : i32
    %c0_i32_0 = arith.constant 0 : i32
    %c0_i32_1 = arith.constant 0 : i32
    return %c0_i32, %c0_i32_0 : i32, i32
  }
  func.func @transform_4(%arg0: i32) -> (i32, i32, i32) {
    %c0_i32 = arith.constant 0 : i32
    %c0_i32_0 = arith.constant 0 : i32
    %c0_i32_1 = arith.constant 0 : i32
    %c0_i32_2 = arith.constant 0 : i32
    return %c0_i32, %c0_i32_0, %c0_i32_1 : i32, i32, i32
  }
  func.func @transform_5(%arg0: i32) -> (i32, i32) {
    %c0_i32 = arith.constant 0 : i32
    %c0_i32_0 = arith.constant 0 : i32
    %c0_i32_1 = arith.constant 0 : i32
    return %c0_i32, %c0_i32_0 : i32, i32
  }
  func.func @transform_6(%arg0: i32) -> (i32, i32) {
    %c0_i32 = arith.constant 0 : i32
    %c0_i32_0 = arith.constant 0 : i32
    %c0_i32_1 = arith.constant 0 : i32
    return %c0_i32, %c0_i32_0 : i32, i32
  }
  func.func @transform_7(%arg0: i32) -> (i32, i32, i32) {
    %c0_i32 = arith.constant 0 : i32
    %c0_i32_0 = arith.constant 0 : i32
    %c0_i32_1 = arith.constant 0 : i32
    %c0_i32_2 = arith.constant 0 : i32
    return %c0_i32, %c0_i32_0, %c0_i32_1 : i32, i32, i32
  }
  func.func @transform_8(%arg0: i32) -> (i32, i32) {
    %c0_i32 = arith.constant 0 : i32
    %c0_i32_0 = arith.constant 0 : i32
    %c0_i32_1 = arith.constant 0 : i32
    return %c0_i32, %c0_i32_0 : i32, i32
  }
  func.func @transform_9(%arg0: i32) -> (i32, i32) {
    %c0_i32 = arith.constant 0 : i32
    %c0_i32_0 = arith.constant 0 : i32
    %c0_i32_1 = arith.constant 0 : i32
    return %c0_i32, %c0_i32_0 : i32, i32
  }
  func.func @transform_10(%arg0: i32) -> (i32, i32) {
    %c0_i32 = arith.constant 0 : i32
    %c0_i32_0 = arith.constant 0 : i32
    %c0_i32_1 = arith.constant 0 : i32
    return %c0_i32, %c0_i32_0 : i32, i32
  }
  func.func @transform_11(%arg0: i32) -> (i32, i32, i32) {
    %c0_i32 = arith.constant 0 : i32
    %c0_i32_0 = arith.constant 0 : i32
    %c0_i32_1 = arith.constant 0 : i32
    return %arg0, %c0_i32, %c0_i32_0 : i32, i32, i32
  }
}

</mosaic_0001>

<llo_original>
// kernel: multiframe_net_large_forward.1
$region0: #{multiframe_net_large_forward.1}
  #allocation0 [shape = 'u32[]', space=smem, size = 0x4, offset = 0x4, fixed_abs, tag = 'smem constant byte address 0x4 - core index']
  #allocation1 [shape = 'u32[144,128]{1,0:T(1,128)}', space=vmem, size = 0x12000, scoped, tag = 'internal scratch']
  #allocation2 [shape = 'bf16[26,16,44]{2,1,0:T(8,128)(2,1)}', space=vmem, size = 0x1a000, scoped, tag = 'scratch operand']
  #allocation3 [shape = 'bf16[18,16,12]{2,1,0:T(8,128)(2,1)}', space=vmem, size = 0x12000, scoped, tag = 'scratch operand']
  %s0 = inlined_call_operand.vmem [shape: f32[2,16,16,4], index: 0, kind: input, shape index: {}]
  %s1 = inlined_call_operand.vmem [shape: bf16[11,44,4], index: 1, kind: input, shape index: {}]
  %s2 = inlined_call_operand.vmem [shape: f32[1,4], index: 2, kind: input, shape index: {}]
  %s3 = inlined_call_operand.vmem [shape: f32[1,4], index: 3, kind: input, shape index: {}]
  %s4 = inlined_call_operand.vmem [shape: bf16[3,12,4], index: 4, kind: input, shape index: {}]
  %s5 = inlined_call_operand.vmem [shape: f32[1,4], index: 5, kind: input, shape index: {}]
  %s6 = inlined_call_operand.vmem [shape: f32[1,4], index: 6, kind: input, shape index: {}]
  %s7 = inlined_call_operand.vmem [shape: bf16[3,12,4], index: 7, kind: input, shape index: {}]
  %s8 = inlined_call_operand.vmem [shape: f32[1,4], index: 8, kind: input, shape index: {}]
  %s9 = inlined_call_operand.vmem [shape: f32[1,4], index: 9, kind: input, shape index: {}]
  %s10 = inlined_call_operand.vmem [shape: bf16[4,2], index: 10, kind: input, shape index: {}]
  %s11 = inlined_call_operand.vmem [shape: f32[2,256,2], index: 11, kind: output, shape index: {}]
  %s12 = sld [smem:[#allocation0]]
  $region77: #{multiframe_net_large_forward.1} parent=0
    _
  %s14 = ssub.s32 1, %s12
  %s15 = scalar_select 0, %s14, %s12
  loop: start=0, step=1, limit=4
  $region2: #{multiframe_net_large_forward.1} parent=0 // loop_pre_header
    _
  $region3: #{multiframe_net_large_forward.1} parent=0 // loop_header
    %s17 = sphi 0, %s21
    %p18 = scmp.ge.s32.totalorder %s17, 4
    %s27 = sphi 0, %s29
    %s30 = sphi 0, %s27
    %s31 = sphi 0, %s30
    %s47 = sphi 0, %s31
    %s51 = sphi 0, %s51
    %s53 = sphi 0, %s51
    %s54 = sphi 0, %s53
    %s68 = sphi 0, %s54
    %s72 = sphi 0, %s72
    %s74 = sphi 0, %s72
    %s75 = sphi 0, %s74
    %s89 = sphi 0, %s75
    %s93 = sphi 0, %s93
    %s95 = sphi 0, %s93
    %s96 = sphi 0, %s95
    %s110 = sphi 0, %s96
    %s114 = sphi 0, %s114
    %s116 = sphi 0, %s114
    %s117 = sphi 0, %s116
    %s131 = sphi 0, %s117
    %s135 = sphi 0, %s135
    %s137 = sphi 0, %s135
    %s138 = sphi 0, %s137
    %s152 = sphi 0, %s138
    %s156 = sphi 0, %s156
    %s158 = sphi 0, %s156
    %s159 = sphi 0, %s158
    %s173 = sphi 0, %s159
    %s177 = sphi 0, %s177
    %s179 = sphi 0, %s177
    %s180 = sphi 0, %s179
    %s194 = sphi 0, %s180
    %s198 = sphi 0, %s198
    %s200 = sphi 0, %s198
    %s201 = sphi 0, %s200
    %s215 = sphi 0, %s201
    %s219 = sphi 0, %s219
    %s221 = sphi 0, %s219
    %s222 = sphi 0, %s221
    %s236 = sphi 0, %s222
    %s240 = sphi 0, %s240
    %s242 = sphi 0, %s240
    %s243 = sphi 0, %s242
    %s257 = sphi 0, %s243
    %s263 = sphi 0, %s265
    %s266 = sphi 0, %s263
    %s267 = sphi 0, %s266
    %s283 = sphi 0, %s267
  $region4: #{multiframe_net_large_forward.1} parent=0 // loop_header_branch
    %20 = sbr.rel (%p18) target = $region8
  $region5: #{multiframe_net_large_forward.1} parent=0 // loop_body
    %s22 = ssub.s32 %s17, 1
    %s23 = ssub.s32 %s17, 2
    %s24 = sadd.s32 %s17, 1
    %s25 = ssub.s32 %s17, %s24
    %p26 = scmp.eq.s32.totalorder %s25, 0
    %s28 = sadd.s32 %s27, 1
    %s29 = scalar_select %p26, %s27, %s28
    %p32 = pneg %p26
    %p33 = scmp.eq.s32.totalorder %s17, 1
    %p34 = por %p32, %p33
    %p35 = scmp.ne.s32.totalorder %s27, %s30
    %p36 = scmp.eq.s32.totalorder %s17, 0
    %p37 = por %p35, %p36
    %p38 = scmp.ne.s32.totalorder %s27, %s30
    %p39 = scmp.eq.s32.totalorder %s22, 1
    %p40 = por %p38, %p39
    %p41 = scmp.ne.s32.totalorder %s30, %s31
    %p42 = scmp.eq.s32.totalorder %s22, 0
    %p43 = por %p41, %p42
    %p44 = scmp.ne.s32.totalorder %s30, %s31
    %p45 = scmp.eq.s32.totalorder %s23, 1
    %p46 = por %p44, %p45
    %p48 = scmp.ne.s32.totalorder %s31, %s47
    %p49 = scmp.eq.s32.totalorder %s23, 0
    %p50 = por %p48, %p49
    %s52 = sadd.s32 %s51, 1
    %p55 = scmp.eq.s32.totalorder %s17, 1
    %p56 = scmp.ne.s32.totalorder %s51, %s53
    %p57 = scmp.eq.s32.totalorder %s17, 0
    %p58 = por %p56, %p57
    %p59 = scmp.ne.s32.totalorder %s51, %s53
    %p60 = scmp.eq.s32.totalorder %s22, 1
    %p61 = por %p59, %p60
    %p62 = scmp.ne.s32.totalorder %s53, %s54
    %p63 = scmp.eq.s32.totalorder %s22, 0
    %p64 = por %p62, %p63
    %p65 = scmp.ne.s32.totalorder %s53, %s54
    %p66 = scmp.eq.s32.totalorder %s23, 1
    %p67 = por %p65, %p66
    %p69 = scmp.ne.s32.totalorder %s54, %s68
    %p70 = scmp.eq.s32.totalorder %s23, 0
    %p71 = por %p69, %p70
    %s73 = sadd.s32 %s72, 1
    %p76 = scmp.eq.s32.totalorder %s17, 1
    %p77 = scmp.ne.s32.totalorder %s72, %s74
    %p78 = scmp.eq.s32.totalorder %s17, 0
    %p79 = por %p77, %p78
    %p80 = scmp.ne.s32.totalorder %s72, %s74
    %p81 = scmp.eq.s32.totalorder %s22, 1
    %p82 = por %p80, %p81
    %p83 = scmp.ne.s32.totalorder %s74, %s75
    %p84 = scmp.eq.s32.totalorder %s22, 0
    %p85 = por %p83, %p84
    %p86 = scmp.ne.s32.totalorder %s74, %s75
    %p87 = scmp.eq.s32.totalorder %s23, 1
    %p88 = por %p86, %p87
    %p90 = scmp.ne.s32.totalorder %s75, %s89
    %p91 = scmp.eq.s32.totalorder %s23, 0
    %p92 = por %p90, %p91
    %s94 = sadd.s32 %s93, 1
    %p97 = scmp.eq.s32.totalorder %s17, 1
    %p98 = scmp.ne.s32.totalorder %s93, %s95
    %p99 = scmp.eq.s32.totalorder %s17, 0
    %p100 = por %p98, %p99
    %p101 = scmp.ne.s32.totalorder %s93, %s95
    %p102 = scmp.eq.s32.totalorder %s22, 1
    %p103 = por %p101, %p102
    %p104 = scmp.ne.s32.totalorder %s95, %s96
    %p105 = scmp.eq.s32.totalorder %s22, 0
    %p106 = por %p104, %p105
    %p107 = scmp.ne.s32.totalorder %s95, %s96
    %p108 = scmp.eq.s32.totalorder %s23, 1
    %p109 = por %p107, %p108
    %p111 = scmp.ne.s32.totalorder %s96, %s110
    %p112 = scmp.eq.s32.totalorder %s23, 0
    %p113 = por %p111, %p112
    %s115 = sadd.s32 %s114, 1
    %p118 = scmp.eq.s32.totalorder %s17, 1
    %p119 = scmp.ne.s32.totalorder %s114, %s116
    %p120 = scmp.eq.s32.totalorder %s17, 0
    %p121 = por %p119, %p120
    %p122 = scmp.ne.s32.totalorder %s114, %s116
    %p123 = scmp.eq.s32.totalorder %s22, 1
    %p124 = por %p122, %p123
    %p125 = scmp.ne.s32.totalorder %s116, %s117
    %p126 = scmp.eq.s32.totalorder %s22, 0
    %p127 = por %p125, %p126
    %p128 = scmp.ne.s32.totalorder %s116, %s117
    %p129 = scmp.eq.s32.totalorder %s23, 1
    %p130 = por %p128, %p129
    %p132 = scmp.ne.s32.totalorder %s117, %s131
    %p133 = scmp.eq.s32.totalorder %s23, 0
    %p134 = por %p132, %p133
    %s136 = sadd.s32 %s135, 1
    %p139 = scmp.eq.s32.totalorder %s17, 1
    %p140 = scmp.ne.s32.totalorder %s135, %s137
    %p141 = scmp.eq.s32.totalorder %s17, 0
    %p142 = por %p140, %p141
    %p143 = scmp.ne.s32.totalorder %s135, %s137
    %p144 = scmp.eq.s32.totalorder %s22, 1
    %p145 = por %p143, %p144
    %p146 = scmp.ne.s32.totalorder %s137, %s138
    %p147 = scmp.eq.s32.totalorder %s22, 0
    %p148 = por %p146, %p147
    %p149 = scmp.ne.s32.totalorder %s137, %s138
    %p150 = scmp.eq.s32.totalorder %s23, 1
    %p151 = por %p149, %p150
    %p153 = scmp.ne.s32.totalorder %s138, %s152
    %p154 = scmp.eq.s32.totalorder %s23, 0
    %p155 = por %p153, %p154
    %s157 = sadd.s32 %s156, 1
    %p160 = scmp.eq.s32.totalorder %s17, 1
    %p161 = scmp.ne.s32.totalorder %s156, %s158
    %p162 = scmp.eq.s32.totalorder %s17, 0
    %p163 = por %p161, %p162
    %p164 = scmp.ne.s32.totalorder %s156, %s158
    %p165 = scmp.eq.s32.totalorder %s22, 1
    %p166 = por %p164, %p165
    %p167 = scmp.ne.s32.totalorder %s158, %s159
    %p168 = scmp.eq.s32.totalorder %s22, 0
    %p169 = por %p167, %p168
    %p170 = scmp.ne.s32.totalorder %s158, %s159
    %p171 = scmp.eq.s32.totalorder %s23, 1
    %p172 = por %p170, %p171
    %p174 = scmp.ne.s32.totalorder %s159, %s173
    %p175 = scmp.eq.s32.totalorder %s23, 0
    %p176 = por %p174, %p175
    %s178 = sadd.s32 %s177, 1
    %p181 = scmp.eq.s32.totalorder %s17, 1
    %p182 = scmp.ne.s32.totalorder %s177, %s179
    %p183 = scmp.eq.s32.totalorder %s17, 0
    %p184 = por %p182, %p183
    %p185 = scmp.ne.s32.totalorder %s177, %s179
    %p186 = scmp.eq.s32.totalorder %s22, 1
    %p187 = por %p185, %p186
    %p188 = scmp.ne.s32.totalorder %s179, %s180
    %p189 = scmp.eq.s32.totalorder %s22, 0
    %p190 = por %p188, %p189
    %p191 = scmp.ne.s32.totalorder %s179, %s180
    %p192 = scmp.eq.s32.totalorder %s23, 1
    %p193 = por %p191, %p192
    %p195 = scmp.ne.s32.totalorder %s180, %s194
    %p196 = scmp.eq.s32.totalorder %s23, 0
    %p197 = por %p195, %p196
    %s199 = sadd.s32 %s198, 1
    %p202 = scmp.eq.s32.totalorder %s17, 1
    %p203 = scmp.ne.s32.totalorder %s198, %s200
    %p204 = scmp.eq.s32.totalorder %s17, 0
    %p205 = por %p203, %p204
    %p206 = scmp.ne.s32.totalorder %s198, %s200
    %p207 = scmp.eq.s32.totalorder %s22, 1
    %p208 = por %p206, %p207
    %p209 = scmp.ne.s32.totalorder %s200, %s201
    %p210 = scmp.eq.s32.totalorder %s22, 0
    %p211 = por %p209, %p210
    %p212 = scmp.ne.s32.totalorder %s200, %s201
    %p213 = scmp.eq.s32.totalorder %s23, 1
    %p214 = por %p212, %p213
    %p216 = scmp.ne.s32.totalorder %s201, %s215
    %p217 = scmp.eq.s32.totalorder %s23, 0
    %p218 = por %p216, %p217
    %s220 = sadd.s32 %s219, 1
    %p223 = scmp.eq.s32.totalorder %s17, 1
    %p224 = scmp.ne.s32.totalorder %s219, %s221
    %p225 = scmp.eq.s32.totalorder %s17, 0
    %p226 = por %p224, %p225
    %p227 = scmp.ne.s32.totalorder %s219, %s221
    %p228 = scmp.eq.s32.totalorder %s22, 1
    %p229 = por %p227, %p228
    %p230 = scmp.ne.s32.totalorder %s221, %s222
    %p231 = scmp.eq.s32.totalorder %s22, 0
    %p232 = por %p230, %p231
    %p233 = scmp.ne.s32.totalorder %s221, %s222
    %p234 = scmp.eq.s32.totalorder %s23, 1
    %p235 = por %p233, %p234
    %p237 = scmp.ne.s32.totalorder %s222, %s236
    %p238 = scmp.eq.s32.totalorder %s23, 0
    %p239 = por %p237, %p238
    %s241 = sadd.s32 %s240, 1
    %p244 = scmp.eq.s32.totalorder %s17, 1
    %p245 = scmp.ne.s32.totalorder %s240, %s242
    %p246 = scmp.eq.s32.totalorder %s17, 0
    %p247 = por %p245, %p246
    %p248 = scmp.ne.s32.totalorder %s240, %s242
    %p249 = scmp.eq.s32.totalorder %s22, 1
    %p250 = por %p248, %p249
    %p251 = scmp.ne.s32.totalorder %s242, %s243
    %p252 = scmp.eq.s32.totalorder %s22, 0
    %p253 = por %p251, %p252
    %p254 = scmp.ne.s32.totalorder %s242, %s243
    %p255 = scmp.eq.s32.totalorder %s23, 1
    %p256 = por %p254, %p255
    %p258 = scmp.ne.s32.totalorder %s243, %s257
    %p259 = scmp.eq.s32.totalorder %s23, 0
    %p260 = por %p258, %p259
    %s261 = ssub.s32 %s17, %s24
    %p262 = scmp.eq.s32.totalorder %s261, 0
    %s264 = sadd.s32 %s263, 1
    %s265 = scalar_select %p262, %s263, %s264
    %p268 = pneg %p262
    %p269 = scmp.eq.s32.totalorder %s17, 1
    %p270 = por %p268, %p269
    %p271 = scmp.ne.s32.totalorder %s263, %s266
    %p272 = scmp.eq.s32.totalorder %s17, 0
    %p273 = por %p271, %p272
    %p274 = scmp.ne.s32.totalorder %s263, %s266
    %p275 = scmp.eq.s32.totalorder %s22, 1
    %p276 = por %p274, %p275
    %p277 = scmp.ne.s32.totalorder %s266, %s267
    %p278 = scmp.eq.s32.totalorder %s22, 0
    %p279 = por %p277, %p278
    %p280 = scmp.ne.s32.totalorder %s266, %s267
    %p281 = scmp.eq.s32.totalorder %s23, 1
    %p282 = por %p280, %p281
    %p284 = scmp.ne.s32.totalorder %s267, %s283
    %p285 = scmp.eq.s32.totalorder %s23, 0
    %p286 = por %p284, %p285
    %p287 = scmp.le.s32.totalorder 1, %s17
    %p288 = scmp.lt.s32.totalorder %s17, 3
    %p289 = pnand %p287, %p288
    %p290 = pneg %p289
    // Predicated region
    $region9: #{multiframe_net_large_forward.1} parent=5 // pred_check
      _
    $region10: #{multiframe_net_large_forward.1} parent=5 // pred_check_branch
      %292 = sbr.rel (%p289) target = $region12
    $region11: #{multiframe_net_large_forward.1} parent=5 // pred_region
      %s293 = ssub.s32 %s17, 1
      // Predicated region
      $region13: #{multiframe_net_large_forward.1} parent=11 // pred_check
        %p294 = pneg %p64
      $region14: #{multiframe_net_large_forward.1} parent=11 // pred_check_branch
        %296 = sbr.rel (%p294) target = $region16
      $region15: #{multiframe_net_large_forward.1} parent=11 // pred_region
        _
      $region16: #{multiframe_net_large_forward.1} parent=11 // pred_fallthru
        _
      // Predicated region
      $region17: #{multiframe_net_large_forward.1} parent=11 // pred_check
        %p297 = pneg %p85
      $region18: #{multiframe_net_large_forward.1} parent=11 // pred_check_branch
        %299 = sbr.rel (%p297) target = $region20
      $region19: #{multiframe_net_large_forward.1} parent=11 // pred_region
        _
      $region20: #{multiframe_net_large_forward.1} parent=11 // pred_fallthru
        _
      // Predicated region
      $region21: #{multiframe_net_large_forward.1} parent=11 // pred_check
        %p300 = pneg %p106
      $region22: #{multiframe_net_large_forward.1} parent=11 // pred_check_branch
        %302 = sbr.rel (%p300) target = $region24
      $region23: #{multiframe_net_large_forward.1} parent=11 // pred_region
        _
      $region24: #{multiframe_net_large_forward.1} parent=11 // pred_fallthru
        _
      // Predicated region
      $region25: #{multiframe_net_large_forward.1} parent=11 // pred_check
        %p303 = pneg %p127
      $region26: #{multiframe_net_large_forward.1} parent=11 // pred_check_branch
        %305 = sbr.rel (%p303) target = $region28
      $region27: #{multiframe_net_large_forward.1} parent=11 // pred_region
        _
      $region28: #{multiframe_net_large_forward.1} parent=11 // pred_fallthru
        _
      // Predicated region
      $region29: #{multiframe_net_large_forward.1} parent=11 // pred_check
        %p306 = pneg %p148
      $region30: #{multiframe_net_large_forward.1} parent=11 // pred_check_branch
        %308 = sbr.rel (%p306) target = $region32
      $region31: #{multiframe_net_large_forward.1} parent=11 // pred_region
        _
      $region32: #{multiframe_net_large_forward.1} parent=11 // pred_fallthru
        _
      // Predicated region
      $region33: #{multiframe_net_large_forward.1} parent=11 // pred_check
        %p309 = pneg %p169
      $region34: #{multiframe_net_large_forward.1} parent=11 // pred_check_branch
        %311 = sbr.rel (%p309) target = $region36
      $region35: #{multiframe_net_large_forward.1} parent=11 // pred_region
        _
      $region36: #{multiframe_net_large_forward.1} parent=11 // pred_fallthru
        _
      // Predicated region
      $region37: #{multiframe_net_large_forward.1} parent=11 // pred_check
        %p312 = pneg %p190
      $region38: #{multiframe_net_large_forward.1} parent=11 // pred_check_branch
        %314 = sbr.rel (%p312) target = $region40
      $region39: #{multiframe_net_large_forward.1} parent=11 // pred_region
        _
      $region40: #{multiframe_net_large_forward.1} parent=11 // pred_fallthru
        _
      // Predicated region
      $region41: #{multiframe_net_large_forward.1} parent=11 // pred_check
        %p315 = pneg %p211
      $region42: #{multiframe_net_large_forward.1} parent=11 // pred_check_branch
        %317 = sbr.rel (%p315) target = $region44
      $region43: #{multiframe_net_large_forward.1} parent=11 // pred_region
        _
      $region44: #{multiframe_net_large_forward.1} parent=11 // pred_fallthru
        _
      // Predicated region
      $region45: #{multiframe_net_large_forward.1} parent=11 // pred_check
        %p318 = pneg %p232
      $region46: #{multiframe_net_large_forward.1} parent=11 // pred_check_branch
        %320 = sbr.rel (%p318) target = $region48
      $region47: #{multiframe_net_large_forward.1} parent=11 // pred_region
        _
      $region48: #{multiframe_net_large_forward.1} parent=11 // pred_fallthru
        _
      // Predicated region
      $region49: #{multiframe_net_large_forward.1} parent=11 // pred_check
        %p321 = pneg %p253
      $region50: #{multiframe_net_large_forward.1} parent=11 // pred_check_branch
        %323 = sbr.rel (%p321) target = $region52
      $region51: #{multiframe_net_large_forward.1} parent=11 // pred_region
        _
      $region52: #{multiframe_net_large_forward.1} parent=11 // pred_fallthru
        _
    $region12: #{multiframe_net_large_forward.1} parent=5 // pred_fallthru
      _
    %p324 = scmp.lt.s32.totalorder %s17, 2
    // Predicated region
    $region53: #{multiframe_net_large_forward.1} parent=5 // pred_check
      %p325 = pneg %p324
    $region54: #{multiframe_net_large_forward.1} parent=5 // pred_check_branch
      %327 = sbr.rel (%p325) target = $region56
    $region55: #{multiframe_net_large_forward.1} parent=5 // pred_region
      // Predicated region
      $region57: #{multiframe_net_large_forward.1} parent=55 // pred_check
        %p328 = pneg %p37
      $region58: #{multiframe_net_large_forward.1} parent=55 // pred_check_branch
        %330 = sbr.rel (%p328) target = $region60
      $region59: #{multiframe_net_large_forward.1} parent=55 // pred_region
        %p331 = scmp.lt.s32.totalorder %s17, 1
        %s332 = scalar_select %p331, %s17, 1
        %s333 = smul.addr %s332, 32
        %s334 = smul.addr %s333, 8
        %s335 = scalar_lea.vmem %s0, %s334
      $region60: #{multiframe_net_large_forward.1} parent=55 // pred_fallthru
        _
    $region56: #{multiframe_net_large_forward.1} parent=5 // pred_fallthru
      _
    %p336 = scmp.le.s32.totalorder 1, %s17
    %p337 = scmp.lt.s32.totalorder %s17, 3
    %p338 = pnand %p336, %p337
    %p339 = pneg %p338
    // Predicated region
    $region61: #{multiframe_net_large_forward.1} parent=5 // pred_check
      _
    $region62: #{multiframe_net_large_forward.1} parent=5 // pred_check_branch
      %341 = sbr.rel (%p338) target = $region64
    $region63: #{multiframe_net_large_forward.1} parent=5 // pred_region
      %s342 = ssub.s32 %s17, 1
      %p343 = scmp.lt.s32.totalorder %s22, 1
      %s344 = scalar_select %p343, %s22, 1
      %s345 = smul.addr %s344, 32
      %s346 = smul.addr %s345, 8
      %s347 = scalar_lea.vmem %s0, %s346
      %p348 = pneg %p43
      %p349 = pneg %p40
      %p350 = pneg %p64
      %p351 = pneg %p61
      %p352 = pneg %p85
      %p353 = pneg %p82
      %p354 = pneg %p106
      %p355 = pneg %p103
      %p356 = pneg %p127
      %p357 = pneg %p124
      %p358 = pneg %p148
      %p359 = pneg %p145
      %p360 = pneg %p169
      %p361 = pneg %p166
      %p362 = pneg %p190
      %p363 = pneg %p187
      %p364 = pneg %p211
      %p365 = pneg %p208
      %p366 = pneg %p232
      %p367 = pneg %p229
      %p368 = pneg %p253
      %p369 = pneg %p250
      %p370 = pneg %p279
      %p371 = pneg %p276
      %p372 = scmp.lt.s32.totalorder %s22, 1
      %s373 = scalar_select %p372, %s22, 1
      %s374 = smul.addr %s373, 32
      %s375 = smul.addr %s374, 8
      %s376 = scalar_lea.vmem %s11, %s375
      %p377 = scmp.lt.s32.totalorder %s22, 1
      %s378 = scalar_select %p377, %s22, 1
      %s379 = smul.addr %s378, 32
      %s380 = smul.addr %s379, 8
      %s381 = scalar_lea.vmem %s0, %s380
      %p382 = scmp.lt.s32.totalorder %s22, 1
      %s383 = scalar_select %p382, %s22, 1
      %s384 = smul.addr %s383, 32
      %s385 = smul.addr %s384, 8
      %s386 = scalar_lea.vmem %s11, %s385
      %v388 = vld [vmem:[%s381] sm:$0xff]
      %v389 = vld [vmem:[%s381 + $0x8] sm:$0xff]
      %v390 = vld [vmem:[%s381 + $0x10] sm:$0xff]
      %v391 = vld [vmem:[%s381 + $0x18] sm:$0xff]
      %v392 = vld [vmem:[%s381 + $0x20] sm:$0xff]
      %v393 = vld [vmem:[%s381 + $0x28] sm:$0xff]
      %v394 = vld [vmem:[%s381 + $0x30] sm:$0xff]
      %v395 = vld [vmem:[%s381 + $0x38] sm:$0xff]
      %v396 = vld [vmem:[%s381 + $0x40] sm:$0xff]
      %v397 = vld [vmem:[%s381 + $0x48] sm:$0xff]
      %v398 = vld [vmem:[%s381 + $0x50] sm:$0xff]
      %v399 = vld [vmem:[%s381 + $0x58] sm:$0xff]
      %v400 = vld [vmem:[%s381 + $0x60] sm:$0xff]
      %v401 = vld [vmem:[%s381 + $0x68] sm:$0xff]
      %v402 = vld [vmem:[%s381 + $0x70] sm:$0xff]
      %v403 = vld [vmem:[%s381 + $0x78] sm:$0xff]
      %v404 = vld [vmem:[%s381 + $0x80] sm:$0xff]
      %v405 = vld [vmem:[%s381 + $0x88] sm:$0xff]
      %v406 = vld [vmem:[%s381 + $0x90] sm:$0xff]
      %v407 = vld [vmem:[%s381 + $0x98] sm:$0xff]
      %v408 = vld [vmem:[%s381 + $0xa0] sm:$0xff]
      %v409 = vld [vmem:[%s381 + $0xa8] sm:$0xff]
      %v410 = vld [vmem:[%s381 + $0xb0] sm:$0xff]
      %v411 = vld [vmem:[%s381 + $0xb8] sm:$0xff]
      %v412 = vld [vmem:[%s381 + $0xc0] sm:$0xff]
      %v413 = vld [vmem:[%s381 + $0xc8] sm:$0xff]
      %v414 = vld [vmem:[%s381 + $0xd0] sm:$0xff]
      %v415 = vld [vmem:[%s381 + $0xd8] sm:$0xff]
      %v416 = vld [vmem:[%s381 + $0xe0] sm:$0xff]
      %v417 = vld [vmem:[%s381 + $0xe8] sm:$0xff]
      %v418 = vld [vmem:[%s381 + $0xf0] sm:$0xff]
      %v419 = vld [vmem:[%s381 + $0xf8] sm:$0xff]
      %vm420 = vcmask 355328
      %421 = vst.msk [vmem:[#allocation2] sm:$0xf] %vm420, 0
      %422 = vst.msk [vmem:[#allocation2 + $0x4] sm:$0xf] %vm420, 0
      %423 = vst.msk [vmem:[#allocation2 + $0x8] sm:$0xf] %vm420, 0
      %424 = vst.msk [vmem:[#allocation2 + $0xc] sm:$0xf] %vm420, 0
      %425 = vst.msk [vmem:[#allocation2 + $0x10] sm:$0xf] %vm420, 0
      %426 = vst.msk [vmem:[#allocation2 + $0x14] sm:$0xf] %vm420, 0
      %427 = vst.msk [vmem:[#allocation2 + $0x18] sm:$0xf] %vm420, 0
      %428 = vst.msk [vmem:[#allocation2 + $0x1c] sm:$0xf] %vm420, 0
      %429 = vst.msk [vmem:[#allocation2 + $0x20] sm:$0xf] %vm420, 0
      %430 = vst.msk [vmem:[#allocation2 + $0x24] sm:$0xf] %vm420, 0
      %s431 = scalar_lea.vmem [#allocation2], 168
      %432 = vst.msk [vmem:[%s431] sm:$0xf] %vm420, 0
      %433 = vst.msk [vmem:[%s431 + $0x4] sm:$0xf] %vm420, 0
      %434 = vst.msk [vmem:[%s431 + $0x8] sm:$0xf] %vm420, 0
      %435 = vst.msk [vmem:[%s431 + $0xc] sm:$0xf] %vm420, 0
      %436 = vst.msk [vmem:[%s431 + $0x10] sm:$0xf] %vm420, 0
      %437 = vst.msk [vmem:[%s431 + $0x14] sm:$0xf] %vm420, 0
      %438 = vst.msk [vmem:[%s431 + $0x18] sm:$0xf] %vm420, 0
      %439 = vst.msk [vmem:[%s431 + $0x1c] sm:$0xf] %vm420, 0
      %440 = vst.msk [vmem:[%s431 + $0x20] sm:$0xf] %vm420, 0
      %441 = vst.msk [vmem:[%s431 + $0x24] sm:$0xf] %vm420, 0
      %vm474 = vcmask 1044480
      %v475 = vrot.slane %v388, 3
      %v476 = vrot.slane %v389, 3
      %v477 = vsel %vm474, %v475, %v476
      %v478 = vrot.slane %v390, 3
      %v479 = vrot.slane %v391, 3
      %v480 = vsel %vm474, %v478, %v479
      %v481 = vrot.slane %v392, 3
      %v482 = vrot.slane %v393, 3
      %v483 = vsel %vm474, %v481, %v482
      %v484 = vrot.slane %v394, 3
      %v485 = vrot.slane %v395, 3
      %v486 = vsel %vm474, %v484, %v485
      %v487 = vrot.slane %v396, 3
      %v488 = vrot.slane %v397, 3
      %v489 = vsel %vm474, %v487, %v488
      %v490 = vrot.slane %v398, 3
      %v491 = vrot.slane %v399, 3
      %v492 = vsel %vm474, %v490, %v491
      %v493 = vrot.slane %v400, 3
      %v494 = vrot.slane %v401, 3
      %v495 = vsel %vm474, %v493, %v494
      %v496 = vrot.slane %v402, 3
      %v497 = vrot.slane %v403, 3
      %v498 = vsel %vm474, %v496, %v497
      %v499 = vrot.slane %v404, 3
      %v500 = vrot.slane %v405, 3
      %v501 = vsel %vm474, %v499, %v500
      %v502 = vrot.slane %v406, 3
      %v503 = vrot.slane %v407, 3
      %v504 = vsel %vm474, %v502, %v503
      %v505 = vrot.slane %v408, 3
      %v506 = vrot.slane %v409, 3
      %v507 = vsel %vm474, %v505, %v506
      %v508 = vrot.slane %v410, 3
      %v509 = vrot.slane %v411, 3
      %v510 = vsel %vm474, %v508, %v509
      %v511 = vrot.slane %v412, 3
      %v512 = vrot.slane %v413, 3
      %v513 = vsel %vm474, %v511, %v512
      %v514 = vrot.slane %v414, 3
      %v515 = vrot.slane %v415, 3
      %v516 = vsel %vm474, %v514, %v515
      %v517 = vrot.slane %v416, 3
      %v518 = vrot.slane %v417, 3
      %v519 = vsel %vm474, %v517, %v518
      %v520 = vrot.slane %v418, 3
      %v521 = vrot.slane %v419, 3
      %v522 = vsel %vm474, %v520, %v521
      %v571 = vsel %vm474, 0.0, %v475
      %v572 = vsel %vm474, 0.0, %v478
      %v573 = vsel %vm474, 0.0, %v481
      %v574 = vsel %vm474, 0.0, %v484
      %v575 = vsel %vm474, 0.0, %v487
      %v576 = vsel %vm474, 0.0, %v490
      %v577 = vsel %vm474, 0.0, %v493
      %v578 = vsel %vm474, 0.0, %v496
      %v579 = vsel %vm474, 0.0, %v499
      %v580 = vsel %vm474, 0.0, %v502
      %v581 = vsel %vm474, 0.0, %v505
      %v582 = vsel %vm474, 0.0, %v508
      %v583 = vsel %vm474, 0.0, %v511
      %v584 = vsel %vm474, 0.0, %v514
      %v585 = vsel %vm474, 0.0, %v517
      %v586 = vsel %vm474, 0.0, %v520
      %v587 = vsel %vm474, %v476, 0.0
      %v588 = vsel %vm474, %v479, 0.0
      %v589 = vsel %vm474, %v482, 0.0
      %v590 = vsel %vm474, %v485, 0.0
      %v591 = vsel %vm474, %v488, 0.0
      %v592 = vsel %vm474, %v491, 0.0
      %v593 = vsel %vm474, %v494, 0.0
      %v594 = vsel %vm474, %v497, 0.0
      %v595 = vsel %vm474, %v500, 0.0
      %v596 = vsel %vm474, %v503, 0.0
      %v597 = vsel %vm474, %v506, 0.0
      %v598 = vsel %vm474, %v509, 0.0
      %v599 = vsel %vm474, %v512, 0.0
      %v600 = vsel %vm474, %v515, 0.0
      %v601 = vsel %vm474, %v518, 0.0
      %v602 = vsel %vm474, %v521, 0.0
      %v603 = vpack.c.bf16 %v477, %v571
      %v604 = vpack.c.bf16 %v480, %v572
      %v605 = vpack.c.bf16 %v483, %v573
      %v606 = vpack.c.bf16 %v486, %v574
      %v607 = vpack.c.bf16 %v489, %v575
      %v608 = vpack.c.bf16 %v492, %v576
      %v609 = vpack.c.bf16 %v495, %v577
      %v610 = vpack.c.bf16 %v498, %v578
      %v611 = vpack.c.bf16 %v501, %v579
      %v612 = vpack.c.bf16 %v504, %v580
      %v613 = vpack.c.bf16 %v507, %v581
      %v614 = vpack.c.bf16 %v510, %v582
      %v615 = vpack.c.bf16 %v513, %v583
      %v616 = vpack.c.bf16 %v516, %v584
      %v617 = vpack.c.bf16 %v519, %v585
      %v618 = vpack.c.bf16 %v522, %v586
      %v635 = vunpack.c.l.b16 %v603
      %v636 = vunpack.c.h.b16 %v603
      %v637 = vunpack.c.l.b16 %v604
      %v638 = vunpack.c.h.b16 %v604
      %v639 = vunpack.c.l.b16 %v605
      %v640 = vunpack.c.h.b16 %v605
      %v641 = vunpack.c.l.b16 %v606
      %v642 = vunpack.c.h.b16 %v606
      %v643 = vunpack.c.l.b16 %v607
      %v644 = vunpack.c.h.b16 %v607
      %v645 = vunpack.c.l.b16 %v608
      %v646 = vunpack.c.h.b16 %v608
      %v647 = vunpack.c.l.b16 %v609
      %v648 = vunpack.c.h.b16 %v609
      %v649 = vunpack.c.l.b16 %v610
      %v650 = vunpack.c.h.b16 %v610
      %v651 = vunpack.c.l.b16 %v611
      %v652 = vunpack.c.h.b16 %v611
      %v653 = vunpack.c.l.b16 %v612
      %v654 = vunpack.c.h.b16 %v612
      %v655 = vunpack.c.l.b16 %v613
      %v656 = vunpack.c.h.b16 %v613
      %v657 = vunpack.c.l.b16 %v614
      %v658 = vunpack.c.h.b16 %v614
      %v659 = vunpack.c.l.b16 %v615
      %v660 = vunpack.c.h.b16 %v615
      %v661 = vunpack.c.l.b16 %v616
      %v662 = vunpack.c.h.b16 %v616
      %v663 = vunpack.c.l.b16 %v617
      %v664 = vunpack.c.h.b16 %v617
      %v665 = vunpack.c.l.b16 %v618
      %v666 = vunpack.c.h.b16 %v618
      %v667 = vpack.c.b16 %v635, %v635
      %v668 = vpack.c.b16 %v636, %v636
      %v669 = vpack.c.b16 %v637, %v637
      %v670 = vpack.c.b16 %v638, %v638
      %v671 = vpack.c.b16 %v639, %v639
      %v672 = vpack.c.b16 %v640, %v640
      %v673 = vpack.c.b16 %v641, %v641
      %v674 = vpack.c.b16 %v642, %v642
      %v675 = vpack.c.b16 %v643, %v643
      %v676 = vpack.c.b16 %v644, %v644
      %v677 = vpack.c.b16 %v645, %v645
      %v678 = vpack.c.b16 %v646, %v646
      %v679 = vpack.c.b16 %v647, %v647
      %v680 = vpack.c.b16 %v648, %v648
      %v681 = vpack.c.b16 %v649, %v649
      %v682 = vpack.c.b16 %v650, %v650
      %v683 = vpack.c.b16 %v651, %v651
      %v684 = vpack.c.b16 %v652, %v652
      %v685 = vpack.c.b16 %v653, %v653
      %v686 = vpack.c.b16 %v654, %v654
      %v687 = vpack.c.b16 %v655, %v655
      %v688 = vpack.c.b16 %v656, %v656
      %v689 = vpack.c.b16 %v657, %v657
      %v690 = vpack.c.b16 %v658, %v658
      %v691 = vpack.c.b16 %v659, %v659
      %v692 = vpack.c.b16 %v660, %v660
      %v693 = vpack.c.b16 %v661, %v661
      %v694 = vpack.c.b16 %v662, %v662
      %v695 = vpack.c.b16 %v663, %v663
      %v696 = vpack.c.b16 %v664, %v664
      %v697 = vpack.c.b16 %v665, %v665
      %v698 = vpack.c.b16 %v666, %v666
      %s731 = scalar_lea.vmem [#allocation2], 40
      %vm732 = vcmask 27648
      %733 = vst.msk [vmem:[%s731] sm:$0xf] %vm732, %v667
      %734 = vst.msk [vmem:[%s731 + $0x4] sm:$0xf] %vm732, %v668
      %735 = vst.msk [vmem:[%s731 + $0x8] sm:$0xf] %vm732, %v669
      %736 = vst.msk [vmem:[%s731 + $0xc] sm:$0xf] %vm732, %v670
      %737 = vst.msk [vmem:[%s731 + $0x10] sm:$0xf] %vm732, %v671
      %738 = vst.msk [vmem:[%s731 + $0x14] sm:$0xf] %vm732, %v672
      %739 = vst.msk [vmem:[%s731 + $0x18] sm:$0xf] %vm732, %v673
      %740 = vst.msk [vmem:[%s731 + $0x1c] sm:$0xf] %vm732, %v674
      %741 = vst.msk [vmem:[%s731 + $0x20] sm:$0xf] %vm732, %v675
      %742 = vst.msk [vmem:[%s731 + $0x24] sm:$0xf] %vm732, %v676
      %743 = vst.msk [vmem:[%s731 + $0x28] sm:$0xf] %vm732, %v677
      %744 = vst.msk [vmem:[%s731 + $0x2c] sm:$0xf] %vm732, %v678
      %745 = vst.msk [vmem:[%s731 + $0x30] sm:$0xf] %vm732, %v679
      %746 = vst.msk [vmem:[%s731 + $0x34] sm:$0xf] %vm732, %v680
      %747 = vst.msk [vmem:[%s731 + $0x38] sm:$0xf] %vm732, %v681
      %748 = vst.msk [vmem:[%s731 + $0x3c] sm:$0xf] %vm732, %v682
      %749 = vst.msk [vmem:[%s731 + $0x40] sm:$0xf] %vm732, %v683
      %750 = vst.msk [vmem:[%s731 + $0x44] sm:$0xf] %vm732, %v684
      %751 = vst.msk [vmem:[%s731 + $0x48] sm:$0xf] %vm732, %v685
      %752 = vst.msk [vmem:[%s731 + $0x4c] sm:$0xf] %vm732, %v686
      %753 = vst.msk [vmem:[%s731 + $0x50] sm:$0xf] %vm732, %v687
      %754 = vst.msk [vmem:[%s731 + $0x54] sm:$0xf] %vm732, %v688
      %755 = vst.msk [vmem:[%s731 + $0x58] sm:$0xf] %vm732, %v689
      %756 = vst.msk [vmem:[%s731 + $0x5c] sm:$0xf] %vm732, %v690
      %757 = vst.msk [vmem:[%s731 + $0x60] sm:$0xf] %vm732, %v691
      %758 = vst.msk [vmem:[%s731 + $0x64] sm:$0xf] %vm732, %v692
      %759 = vst.msk [vmem:[%s731 + $0x68] sm:$0xf] %vm732, %v693
      %760 = vst.msk [vmem:[%s731 + $0x6c] sm:$0xf] %vm732, %v694
      %761 = vst.msk [vmem:[%s731 + $0x70] sm:$0xf] %vm732, %v695
      %762 = vst.msk [vmem:[%s731 + $0x74] sm:$0xf] %vm732, %v696
      %763 = vst.msk [vmem:[%s731 + $0x78] sm:$0xf] %vm732, %v697
      %764 = vst.msk [vmem:[%s731 + $0x7c] sm:$0xf] %vm732, %v698
      %v765 = vpack.c.bf16 %v587, %v587
      %v766 = vpack.c.bf16 %v588, %v588
      %v767 = vpack.c.bf16 %v589, %v589
      %v768 = vpack.c.bf16 %v590, %v590
      %v769 = vpack.c.bf16 %v591, %v591
      %v770 = vpack.c.bf16 %v592, %v592
      %v771 = vpack.c.bf16 %v593, %v593
      %v772 = vpack.c.bf16 %v594, %v594
      %v773 = vpack.c.bf16 %v595, %v595
      %v774 = vpack.c.bf16 %v596, %v596
      %v775 = vpack.c.bf16 %v597, %v597
      %v776 = vpack.c.bf16 %v598, %v598
      %v777 = vpack.c.bf16 %v599, %v599
      %v778 = vpack.c.bf16 %v600, %v600
      %v779 = vpack.c.bf16 %v601, %v601
      %v780 = vpack.c.bf16 %v602, %v602
      %v797 = vunpack.c.l.b16 %v765
      %v798 = vunpack.c.l.b16 %v766
      %v799 = vunpack.c.l.b16 %v767
      %v800 = vunpack.c.l.b16 %v768
      %v801 = vunpack.c.l.b16 %v769
      %v802 = vunpack.c.l.b16 %v770
      %v803 = vunpack.c.l.b16 %v771
      %v804 = vunpack.c.l.b16 %v772
      %v805 = vunpack.c.l.b16 %v773
      %v806 = vunpack.c.l.b16 %v774
      %v807 = vunpack.c.l.b16 %v775
      %v808 = vunpack.c.l.b16 %v776
      %v809 = vunpack.c.l.b16 %v777
      %v810 = vunpack.c.l.b16 %v778
      %v811 = vunpack.c.l.b16 %v779
      %v812 = vunpack.c.l.b16 %v780
      %v813 = vpack.c.b16 %v797, %v797
      %v814 = vpack.c.b16 %v798, %v798
      %v815 = vpack.c.b16 %v799, %v799
      %v816 = vpack.c.b16 %v800, %v800
      %v817 = vpack.c.b16 %v801, %v801
      %v818 = vpack.c.b16 %v802, %v802
      %v819 = vpack.c.b16 %v803, %v803
      %v820 = vpack.c.b16 %v804, %v804
      %v821 = vpack.c.b16 %v805, %v805
      %v822 = vpack.c.b16 %v806, %v806
      %v823 = vpack.c.b16 %v807, %v807
      %v824 = vpack.c.b16 %v808, %v808
      %v825 = vpack.c.b16 %v809, %v809
      %v826 = vpack.c.b16 %v810, %v810
      %v827 = vpack.c.b16 %v811, %v811
      %v828 = vpack.c.b16 %v812, %v812
      %vm829 = vsmask.f32 3328
      %vm830 = vsmask.f32 7440
      %vm831 = vmor %vm829, %vm830
      %v833 = vshrl.u32 %v667, 16
      %v835 = vrot.slane %v833, 4
      %v836 = vshll.u32 %v667, 16
      %v838 = vrot.slane %v836, 5
      %v839 = vor.u32 %v835, %v838
      %v840 = vrot.slane %v839, 4
      %v842 = vshll.u32 %v668, 16
      %v844 = vrot.slane %v842, 5
      %v845 = vsel %vm831, %v840, %v844
      %v846 = vshrl.u32 %v668, 16
      %v848 = vrot.slane %v846, 4
      %v849 = vor.u32 %v848, %v844
      %v850 = vrot.slane %v849, 4
      %v852 = vshll.u32 %v813, 16
      %v854 = vrot.slane %v852, 5
      %v855 = vsel %vm831, %v850, %v854
      %v857 = vshrl.u32 %v669, 16
      %v859 = vrot.slane %v857, 4
      %v860 = vshll.u32 %v669, 16
      %v862 = vrot.slane %v860, 5
      %v863 = vor.u32 %v859, %v862
      %v864 = vrot.slane %v863, 4
      %v866 = vshll.u32 %v670, 16
      %v868 = vrot.slane %v866, 5
      %v869 = vsel %vm831, %v864, %v868
      %v870 = vshrl.u32 %v670, 16
      %v872 = vrot.slane %v870, 4
      %v873 = vor.u32 %v872, %v868
      %v874 = vrot.slane %v873, 4
      %v876 = vshll.u32 %v814, 16
      %v878 = vrot.slane %v876, 5
      %v879 = vsel %vm831, %v874, %v878
      %v881 = vshrl.u32 %v671, 16
      %v883 = vrot.slane %v881, 4
      %v884 = vshll.u32 %v671, 16
      %v886 = vrot.slane %v884, 5
      %v887 = vor.u32 %v883, %v886
      %v888 = vrot.slane %v887, 4
      %v890 = vshll.u32 %v672, 16
      %v892 = vrot.slane %v890, 5
      %v893 = vsel %vm831, %v888, %v892
      %v894 = vshrl.u32 %v672, 16
      %v896 = vrot.slane %v894, 4
      %v897 = vor.u32 %v896, %v892
      %v898 = vrot.slane %v897, 4
      %v900 = vshll.u32 %v815, 16
      %v902 = vrot.slane %v900, 5
      %v903 = vsel %vm831, %v898, %v902
      %v905 = vshrl.u32 %v673, 16
      %v907 = vrot.slane %v905, 4
      %v908 = vshll.u32 %v673, 16
      %v910 = vrot.slane %v908, 5
      %v911 = vor.u32 %v907, %v910
      %v912 = vrot.slane %v911, 4
      %v914 = vshll.u32 %v674, 16
      %v916 = vrot.slane %v914, 5
      %v917 = vsel %vm831, %v912, %v916
      %v918 = vshrl.u32 %v674, 16
      %v920 = vrot.slane %v918, 4
      %v921 = vor.u32 %v920, %v916
      %v922 = vrot.slane %v921, 4
      %v924 = vshll.u32 %v816, 16
      %v926 = vrot.slane %v924, 5
      %v927 = vsel %vm831, %v922, %v926
      %v929 = vshrl.u32 %v675, 16
      %v931 = vrot.slane %v929, 4
      %v932 = vshll.u32 %v675, 16
      %v934 = vrot.slane %v932, 5
      %v935 = vor.u32 %v931, %v934
      %v936 = vrot.slane %v935, 4
      %v938 = vshll.u32 %v676, 16
      %v940 = vrot.slane %v938, 5
      %v941 = vsel %vm831, %v936, %v940
      %v942 = vshrl.u32 %v676, 16
      %v944 = vrot.slane %v942, 4
      %v945 = vor.u32 %v944, %v940
      %v946 = vrot.slane %v945, 4
      %v948 = vshll.u32 %v817, 16
      %v950 = vrot.slane %v948, 5
      %v951 = vsel %vm831, %v946, %v950
      %v953 = vshrl.u32 %v677, 16
      %v955 = vrot.slane %v953, 4
      %v956 = vshll.u32 %v677, 16
      %v958 = vrot.slane %v956, 5
      %v959 = vor.u32 %v955, %v958
      %v960 = vrot.slane %v959, 4
      %v962 = vshll.u32 %v678, 16
      %v964 = vrot.slane %v962, 5
      %v965 = vsel %vm831, %v960, %v964
      %v966 = vshrl.u32 %v678, 16
      %v968 = vrot.slane %v966, 4
      %v969 = vor.u32 %v968, %v964
      %v970 = vrot.slane %v969, 4
      %v972 = vshll.u32 %v818, 16
      %v974 = vrot.slane %v972, 5
      %v975 = vsel %vm831, %v970, %v974
      %v977 = vshrl.u32 %v679, 16
      %v979 = vrot.slane %v977, 4
      %v980 = vshll.u32 %v679, 16
      %v982 = vrot.slane %v980, 5
      %v983 = vor.u32 %v979, %v982
      %v984 = vrot.slane %v983, 4
      %v986 = vshll.u32 %v680, 16
      %v988 = vrot.slane %v986, 5
      %v989 = vsel %vm831, %v984, %v988
      %v990 = vshrl.u32 %v680, 16
      %v992 = vrot.slane %v990, 4
      %v993 = vor.u32 %v992, %v988
      %v994 = vrot.slane %v993, 4
      %v996 = vshll.u32 %v819, 16
      %v998 = vrot.slane %v996, 5
      %v999 = vsel %vm831, %v994, %v998
      %v1001 = vshrl.u32 %v681, 16
      %v1003 = vrot.slane %v1001, 4
      %v1004 = vshll.u32 %v681, 16
      %v1006 = vrot.slane %v1004, 5
      %v1007 = vor.u32 %v1003, %v1006
      %v1008 = vrot.slane %v1007, 4
      %v1010 = vshll.u32 %v682, 16
      %v1012 = vrot.slane %v1010, 5
      %v1013 = vsel %vm831, %v1008, %v1012
      %v1014 = vshrl.u32 %v682, 16
      %v1016 = vrot.slane %v1014, 4
      %v1017 = vor.u32 %v1016, %v1012
      %v1018 = vrot.slane %v1017, 4
      %v1020 = vshll.u32 %v820, 16
      %v1022 = vrot.slane %v1020, 5
      %v1023 = vsel %vm831, %v1018, %v1022
      %v1025 = vshrl.u32 %v683, 16
      %v1027 = vrot.slane %v1025, 4
      %v1028 = vshll.u32 %v683, 16
      %v1030 = vrot.slane %v1028, 5
      %v1031 = vor.u32 %v1027, %v1030
      %v1032 = vrot.slane %v1031, 4
      %v1034 = vshll.u32 %v684, 16
      %v1036 = vrot.slane %v1034, 5
      %v1037 = vsel %vm831, %v1032, %v1036
      %v1038 = vshrl.u32 %v684, 16
      %v1040 = vrot.slane %v1038, 4
      %v1041 = vor.u32 %v1040, %v1036
      %v1042 = vrot.slane %v1041, 4
      %v1044 = vshll.u32 %v821, 16
      %v1046 = vrot.slane %v1044, 5
      %v1047 = vsel %vm831, %v1042, %v1046
      %v1049 = vshrl.u32 %v685, 16
      %v1051 = vrot.slane %v1049, 4
      %v1052 = vshll.u32 %v685, 16
      %v1054 = vrot.slane %v1052, 5
      %v1055 = vor.u32 %v1051, %v1054
      %v1056 = vrot.slane %v1055, 4
      %v1058 = vshll.u32 %v686, 16
      %v1060 = vrot.slane %v1058, 5
      %v1061 = vsel %vm831, %v1056, %v1060
      %v1062 = vshrl.u32 %v686, 16
      %v1064 = vrot.slane %v1062, 4
      %v1065 = vor.u32 %v1064, %v1060
      %v1066 = vrot.slane %v1065, 4
      %v1068 = vshll.u32 %v822, 16
      %v1070 = vrot.slane %v1068, 5
      %v1071 = vsel %vm831, %v1066, %v1070
      %v1073 = vshrl.u32 %v687, 16
      %v1075 = vrot.slane %v1073, 4
      %v1076 = vshll.u32 %v687, 16
      %v1078 = vrot.slane %v1076, 5
      %v1079 = vor.u32 %v1075, %v1078
      %v1080 = vrot.slane %v1079, 4
      %v1082 = vshll.u32 %v688, 16
      %v1084 = vrot.slane %v1082, 5
      %v1085 = vsel %vm831, %v1080, %v1084
      %v1086 = vshrl.u32 %v688, 16
      %v1088 = vrot.slane %v1086, 4
      %v1089 = vor.u32 %v1088, %v1084
      %v1090 = vrot.slane %v1089, 4
      %v1092 = vshll.u32 %v823, 16
      %v1094 = vrot.slane %v1092, 5
      %v1095 = vsel %vm831, %v1090, %v1094
      %v1097 = vshrl.u32 %v689, 16
      %v1099 = vrot.slane %v1097, 4
      %v1100 = vshll.u32 %v689, 16
      %v1102 = vrot.slane %v1100, 5
      %v1103 = vor.u32 %v1099, %v1102
      %v1104 = vrot.slane %v1103, 4
      %v1106 = vshll.u32 %v690, 16
      %v1108 = vrot.slane %v1106, 5
      %v1109 = vsel %vm831, %v1104, %v1108
      %v1110 = vshrl.u32 %v690, 16
      %v1112 = vrot.slane %v1110, 4
      %v1113 = vor.u32 %v1112, %v1108
      %v1114 = vrot.slane %v1113, 4
      %v1116 = vshll.u32 %v824, 16
      %v1118 = vrot.slane %v1116, 5
      %v1119 = vsel %vm831, %v1114, %v1118
      %v1121 = vshrl.u32 %v691, 16
      %v1123 = vrot.slane %v1121, 4
      %v1124 = vshll.u32 %v691, 16
      %v1126 = vrot.slane %v1124, 5
      %v1127 = vor.u32 %v1123, %v1126
      %v1128 = vrot.slane %v1127, 4
      %v1130 = vshll.u32 %v692, 16
      %v1132 = vrot.slane %v1130, 5
      %v1133 = vsel %vm831, %v1128, %v1132
      %v1134 = vshrl.u32 %v692, 16
      %v1136 = vrot.slane %v1134, 4
      %v1137 = vor.u32 %v1136, %v1132
      %v1138 = vrot.slane %v1137, 4
      %v1140 = vshll.u32 %v825, 16
      %v1142 = vrot.slane %v1140, 5
      %v1143 = vsel %vm831, %v1138, %v1142
      %v1145 = vshrl.u32 %v693, 16
      %v1147 = vrot.slane %v1145, 4
      %v1148 = vshll.u32 %v693, 16
      %v1150 = vrot.slane %v1148, 5
      %v1151 = vor.u32 %v1147, %v1150
      %v1152 = vrot.slane %v1151, 4
      %v1154 = vshll.u32 %v694, 16
      %v1156 = vrot.slane %v1154, 5
      %v1157 = vsel %vm831, %v1152, %v1156
      %v1158 = vshrl.u32 %v694, 16
      %v1160 = vrot.slane %v1158, 4
      %v1161 = vor.u32 %v1160, %v1156
      %v1162 = vrot.slane %v1161, 4
      %v1164 = vshll.u32 %v826, 16
      %v1166 = vrot.slane %v1164, 5
      %v1167 = vsel %vm831, %v1162, %v1166
      %v1169 = vshrl.u32 %v695, 16
      %v1171 = vrot.slane %v1169, 4
      %v1172 = vshll.u32 %v695, 16
      %v1174 = vrot.slane %v1172, 5
      %v1175 = vor.u32 %v1171, %v1174
      %v1176 = vrot.slane %v1175, 4
      %v1178 = vshll.u32 %v696, 16
      %v1180 = vrot.slane %v1178, 5
      %v1181 = vsel %vm831, %v1176, %v1180
      %v1182 = vshrl.u32 %v696, 16
      %v1184 = vrot.slane %v1182, 4
      %v1185 = vor.u32 %v1184, %v1180
      %v1186 = vrot.slane %v1185, 4
      %v1188 = vshll.u32 %v827, 16
      %v1190 = vrot.slane %v1188, 5
      %v1191 = vsel %vm831, %v1186, %v1190
      %v1193 = vshrl.u32 %v697, 16
      %v1195 = vrot.slane %v1193, 4
      %v1196 = vshll.u32 %v697, 16
      %v1198 = vrot.slane %v1196, 5
      %v1199 = vor.u32 %v1195, %v1198
      %v1200 = vrot.slane %v1199, 4
      %v1202 = vshll.u32 %v698, 16
      %v1204 = vrot.slane %v1202, 5
      %v1205 = vsel %vm831, %v1200, %v1204
      %v1206 = vshrl.u32 %v698, 16
      %v1208 = vrot.slane %v1206, 4
      %v1209 = vor.u32 %v1208, %v1204
      %v1210 = vrot.slane %v1209, 4
      %v1212 = vshll.u32 %v828, 16
      %v1214 = vrot.slane %v1212, 5
      %v1215 = vsel %vm831, %v1210, %v1214
      %1216 = vrot.lane.b32.xlu0 %v845, 4
      %v1217 = vpop.permute.xlu0 %1216
      %1218 = vrot.lane.b32.xlu0 %v855, 4
      %v1219 = vpop.permute.xlu0 %1218
      %1220 = vrot.lane.b32.xlu0 %v869, 4
      %v1221 = vpop.permute.xlu0 %1220
      %1222 = vrot.lane.b32.xlu0 %v879, 4
      %v1223 = vpop.permute.xlu0 %1222
      %1224 = vrot.lane.b32.xlu0 %v893, 4
      %v1225 = vpop.permute.xlu0 %1224
      %1226 = vrot.lane.b32.xlu0 %v903, 4
      %v1227 = vpop.permute.xlu0 %1226
      %1228 = vrot.lane.b32.xlu0 %v917, 4
      %v1229 = vpop.permute.xlu0 %1228
      %1230 = vrot.lane.b32.xlu0 %v927, 4
      %v1231 = vpop.permute.xlu0 %1230
      %1232 = vrot.lane.b32.xlu0 %v941, 4
      %v1233 = vpop.permute.xlu0 %1232
      %1234 = vrot.lane.b32.xlu0 %v951, 4
      %v1235 = vpop.permute.xlu0 %1234
      %1236 = vrot.lane.b32.xlu0 %v965, 4
      %v1237 = vpop.permute.xlu0 %1236
      %1238 = vrot.lane.b32.xlu0 %v975, 4
      %v1239 = vpop.permute.xlu0 %1238
      %1240 = vrot.lane.b32.xlu0 %v989, 4
      %v1241 = vpop.permute.xlu0 %1240
      %1242 = vrot.lane.b32.xlu0 %v999, 4
      %v1243 = vpop.permute.xlu0 %1242
      %1244 = vrot.lane.b32.xlu0 %v1013, 4
      %v1245 = vpop.permute.xlu0 %1244
      %1246 = vrot.lane.b32.xlu0 %v1023, 4
      %v1247 = vpop.permute.xlu0 %1246
      %1248 = vrot.lane.b32.xlu0 %v1037, 4
      %v1249 = vpop.permute.xlu0 %1248
      %1250 = vrot.lane.b32.xlu0 %v1047, 4
      %v1251 = vpop.permute.xlu0 %1250
      %1252 = vrot.lane.b32.xlu0 %v1061, 4
      %v1253 = vpop.permute.xlu0 %1252
      %1254 = vrot.lane.b32.xlu0 %v1071, 4
      %v1255 = vpop.permute.xlu0 %1254
      %1256 = vrot.lane.b32.xlu0 %v1085, 4
      %v1257 = vpop.permute.xlu0 %1256
      %1258 = vrot.lane.b32.xlu0 %v1095, 4
      %v1259 = vpop.permute.xlu0 %1258
      %1260 = vrot.lane.b32.xlu0 %v1109, 4
      %v1261 = vpop.permute.xlu0 %1260
      %1262 = vrot.lane.b32.xlu0 %v1119, 4
      %v1263 = vpop.permute.xlu0 %1262
      %1264 = vrot.lane.b32.xlu0 %v1133, 4
      %v1265 = vpop.permute.xlu0 %1264
      %1266 = vrot.lane.b32.xlu0 %v1143, 4
      %v1267 = vpop.permute.xlu0 %1266
      %1268 = vrot.lane.b32.xlu0 %v1157, 4
      %v1269 = vpop.permute.xlu0 %1268
      %1270 = vrot.lane.b32.xlu0 %v1167, 4
      %v1271 = vpop.permute.xlu0 %1270
      %1272 = vrot.lane.b32.xlu0 %v1181, 4
      %v1273 = vpop.permute.xlu0 %1272
      %1274 = vrot.lane.b32.xlu0 %v1191, 4
      %v1275 = vpop.permute.xlu0 %1274
      %1276 = vrot.lane.b32.xlu0 %v1205, 4
      %v1277 = vpop.permute.xlu0 %1276
      %1278 = vrot.lane.b32.xlu0 %v1215, 4
      %v1279 = vpop.permute.xlu0 %1278
      %vm1312 = vcmask 60448
      %1313 = vst.msk [vmem:[%s731] sm:$0xf] %vm1312, %v1217
      %1314 = vst.msk [vmem:[%s731 + $0x4] sm:$0xf] %vm1312, %v1219
      %1315 = vst.msk [vmem:[%s731 + $0x8] sm:$0xf] %vm1312, %v1221
      %1316 = vst.msk [vmem:[%s731 + $0xc] sm:$0xf] %vm1312, %v1223
      %1317 = vst.msk [vmem:[%s731 + $0x10] sm:$0xf] %vm1312, %v1225
      %1318 = vst.msk [vmem:[%s731 + $0x14] sm:$0xf] %vm1312, %v1227
      %1319 = vst.msk [vmem:[%s731 + $0x18] sm:$0xf] %vm1312, %v1229
      %1320 = vst.msk [vmem:[%s731 + $0x1c] sm:$0xf] %vm1312, %v1231
      %1321 = vst.msk [vmem:[%s731 + $0x20] sm:$0xf] %vm1312, %v1233
      %1322 = vst.msk [vmem:[%s731 + $0x24] sm:$0xf] %vm1312, %v1235
      %1323 = vst.msk [vmem:[%s731 + $0x28] sm:$0xf] %vm1312, %v1237
      %1324 = vst.msk [vmem:[%s731 + $0x2c] sm:$0xf] %vm1312, %v1239
      %1325 = vst.msk [vmem:[%s731 + $0x30] sm:$0xf] %vm1312, %v1241
      %1326 = vst.msk [vmem:[%s731 + $0x34] sm:$0xf] %vm1312, %v1243
      %1327 = vst.msk [vmem:[%s731 + $0x38] sm:$0xf] %vm1312, %v1245
      %1328 = vst.msk [vmem:[%s731 + $0x3c] sm:$0xf] %vm1312, %v1247
      %1329 = vst.msk [vmem:[%s731 + $0x40] sm:$0xf] %vm1312, %v1249
      %1330 = vst.msk [vmem:[%s731 + $0x44] sm:$0xf] %vm1312, %v1251
      %1331 = vst.msk [vmem:[%s731 + $0x48] sm:$0xf] %vm1312, %v1253
      %1332 = vst.msk [vmem:[%s731 + $0x4c] sm:$0xf] %vm1312, %v1255
      %1333 = vst.msk [vmem:[%s731 + $0x50] sm:$0xf] %vm1312, %v1257
      %1334 = vst.msk [vmem:[%s731 + $0x54] sm:$0xf] %vm1312, %v1259
      %1335 = vst.msk [vmem:[%s731 + $0x58] sm:$0xf] %vm1312, %v1261
      %1336 = vst.msk [vmem:[%s731 + $0x5c] sm:$0xf] %vm1312, %v1263
      %1337 = vst.msk [vmem:[%s731 + $0x60] sm:$0xf] %vm1312, %v1265
      %1338 = vst.msk [vmem:[%s731 + $0x64] sm:$0xf] %vm1312, %v1267
      %1339 = vst.msk [vmem:[%s731 + $0x68] sm:$0xf] %vm1312, %v1269
      %1340 = vst.msk [vmem:[%s731 + $0x6c] sm:$0xf] %vm1312, %v1271
      %1341 = vst.msk [vmem:[%s731 + $0x70] sm:$0xf] %vm1312, %v1273
      %1342 = vst.msk [vmem:[%s731 + $0x74] sm:$0xf] %vm1312, %v1275
      %1343 = vst.msk [vmem:[%s731 + $0x78] sm:$0xf] %vm1312, %v1277
      %1344 = vst.msk [vmem:[%s731 + $0x7c] sm:$0xf] %vm1312, %v1279
      %vm1345 = vcmask 1042432
      %vm1346 = vcmask 1046532
      %vm1347 = vmor %vm1345, %vm1346
      %v1348 = vrot.slane %v667, 5
      %v1349 = vrot.slane %v1348, 4
      %v1350 = vrot.slane %v668, 5
      %v1351 = vsel %vm1347, %v1349, %v1350
      %v1352 = vrot.slane %v1350, 4
      %v1353 = vrot.slane %v813, 5
      %v1354 = vsel %vm1347, %v1352, %v1353
      %v1355 = vrot.slane %v669, 5
      %v1356 = vrot.slane %v1355, 4
      %v1357 = vrot.slane %v670, 5
      %v1358 = vsel %vm1347, %v1356, %v1357
      %v1359 = vrot.slane %v1357, 4
      %v1360 = vrot.slane %v814, 5
      %v1361 = vsel %vm1347, %v1359, %v1360
      %v1362 = vrot.slane %v671, 5
      %v1363 = vrot.slane %v1362, 4
      %v1364 = vrot.slane %v672, 5
      %v1365 = vsel %vm1347, %v1363, %v1364
      %v1366 = vrot.slane %v1364, 4
      %v1367 = vrot.slane %v815, 5
      %v1368 = vsel %vm1347, %v1366, %v1367
      %v1369 = vrot.slane %v673, 5
      %v1370 = vrot.slane %v1369, 4
      %v1371 = vrot.slane %v674, 5
      %v1372 = vsel %vm1347, %v1370, %v1371
      %v1373 = vrot.slane %v1371, 4
      %v1374 = vrot.slane %v816, 5
      %v1375 = vsel %vm1347, %v1373, %v1374
      %v1376 = vrot.slane %v675, 5
      %v1377 = vrot.slane %v1376, 4
      %v1378 = vrot.slane %v676, 5
      %v1379 = vsel %vm1347, %v1377, %v1378
      %v1380 = vrot.slane %v1378, 4
      %v1381 = vrot.slane %v817, 5
      %v1382 = vsel %vm1347, %v1380, %v1381
      %v1383 = vrot.slane %v677, 5
      %v1384 = vrot.slane %v1383, 4
      %v1385 = vrot.slane %v678, 5
      %v1386 = vsel %vm1347, %v1384, %v1385
      %v1387 = vrot.slane %v1385, 4
      %v1388 = vrot.slane %v818, 5
      %v1389 = vsel %vm1347, %v1387, %v1388
      %v1390 = vrot.slane %v679, 5
      %v1391 = vrot.slane %v1390, 4
      %v1392 = vrot.slane %v680, 5
      %v1393 = vsel %vm1347, %v1391, %v1392
      %v1394 = vrot.slane %v1392, 4
      %v1395 = vrot.slane %v819, 5
      %v1396 = vsel %vm1347, %v1394, %v1395
      %v1397 = vrot.slane %v681, 5
      %v1398 = vrot.slane %v1397, 4
      %v1399 = vrot.slane %v682, 5
      %v1400 = vsel %vm1347, %v1398, %v1399
      %v1401 = vrot.slane %v1399, 4
      %v1402 = vrot.slane %v820, 5
      %v1403 = vsel %vm1347, %v1401, %v1402
      %v1404 = vrot.slane %v683, 5
      %v1405 = vrot.slane %v1404, 4
      %v1406 = vrot.slane %v684, 5
      %v1407 = vsel %vm1347, %v1405, %v1406
      %v1408 = vrot.slane %v1406, 4
      %v1409 = vrot.slane %v821, 5
      %v1410 = vsel %vm1347, %v1408, %v1409
      %v1411 = vrot.slane %v685, 5
      %v1412 = vrot.slane %v1411, 4
      %v1413 = vrot.slane %v686, 5
      %v1414 = vsel %vm1347, %v1412, %v1413
      %v1415 = vrot.slane %v1413, 4
      %v1416 = vrot.slane %v822, 5
      %v1417 = vsel %vm1347, %v1415, %v1416
      %v1418 = vrot.slane %v687, 5
      %v1419 = vrot.slane %v1418, 4
      %v1420 = vrot.slane %v688, 5
      %v1421 = vsel %vm1347, %v1419, %v1420
      %v1422 = vrot.slane %v1420, 4
      %v1423 = vrot.slane %v823, 5
      %v1424 = vsel %vm1347, %v1422, %v1423
      %v1425 = vrot.slane %v689, 5
      %v1426 = vrot.slane %v1425, 4
      %v1427 = vrot.slane %v690, 5
      %v1428 = vsel %vm1347, %v1426, %v1427
      %v1429 = vrot.slane %v1427, 4
      %v1430 = vrot.slane %v824, 5
      %v1431 = vsel %vm1347, %v1429, %v1430
      %v1432 = vrot.slane %v691, 5
      %v1433 = vrot.slane %v1432, 4
      %v1434 = vrot.slane %v692, 5
      %v1435 = vsel %vm1347, %v1433, %v1434
      %v1436 = vrot.slane %v1434, 4
      %v1437 = vrot.slane %v825, 5
      %v1438 = vsel %vm1347, %v1436, %v1437
      %v1439 = vrot.slane %v693, 5
      %v1440 = vrot.slane %v1439, 4
      %v1441 = vrot.slane %v694, 5
      %v1442 = vsel %vm1347, %v1440, %v1441
      %v1443 = vrot.slane %v1441, 4
      %v1444 = vrot.slane %v826, 5
      %v1445 = vsel %vm1347, %v1443, %v1444
      %v1446 = vrot.slane %v695, 5
      %v1447 = vrot.slane %v1446, 4
      %v1448 = vrot.slane %v696, 5
      %v1449 = vsel %vm1347, %v1447, %v1448
      %v1450 = vrot.slane %v1448, 4
      %v1451 = vrot.slane %v827, 5
      %v1452 = vsel %vm1347, %v1450, %v1451
      %v1453 = vrot.slane %v697, 5
      %v1454 = vrot.slane %v1453, 4
      %v1455 = vrot.slane %v698, 5
      %v1456 = vsel %vm1347, %v1454, %v1455
      %v1457 = vrot.slane %v1455, 4
      %v1458 = vrot.slane %v828, 5
      %v1459 = vsel %vm1347, %v1457, %v1458
      %1460 = vrot.lane.b32.xlu0 %v1351, 8
      %v1461 = vpop.permute.xlu0 %1460
      %1462 = vrot.lane.b32.xlu0 %v1354, 8
      %v1463 = vpop.permute.xlu0 %1462
      %1464 = vrot.lane.b32.xlu0 %v1358, 8
      %v1465 = vpop.permute.xlu0 %1464
      %1466 = vrot.lane.b32.xlu0 %v1361, 8
      %v1467 = vpop.permute.xlu0 %1466
      %1468 = vrot.lane.b32.xlu0 %v1365, 8
      %v1469 = vpop.permute.xlu0 %1468
      %1470 = vrot.lane.b32.xlu0 %v1368, 8
      %v1471 = vpop.permute.xlu0 %1470
      %1472 = vrot.lane.b32.xlu0 %v1372, 8
      %v1473 = vpop.permute.xlu0 %1472
      %1474 = vrot.lane.b32.xlu0 %v1375, 8
      %v1475 = vpop.permute.xlu0 %1474
      %1476 = vrot.lane.b32.xlu0 %v1379, 8
      %v1477 = vpop.permute.xlu0 %1476
      %1478 = vrot.lane.b32.xlu0 %v1382, 8
      %v1479 = vpop.permute.xlu0 %1478
      %1480 = vrot.lane.b32.xlu0 %v1386, 8
      %v1481 = vpop.permute.xlu0 %1480
      %1482 = vrot.lane.b32.xlu0 %v1389, 8
      %v1483 = vpop.permute.xlu0 %1482
      %1484 = vrot.lane.b32.xlu0 %v1393, 8
      %v1485 = vpop.permute.xlu0 %1484
      %1486 = vrot.lane.b32.xlu0 %v1396, 8
      %v1487 = vpop.permute.xlu0 %1486
      %1488 = vrot.lane.b32.xlu0 %v1400, 8
      %v1489 = vpop.permute.xlu0 %1488
      %1490 = vrot.lane.b32.xlu0 %v1403, 8
      %v1491 = vpop.permute.xlu0 %1490
      %1492 = vrot.lane.b32.xlu0 %v1407, 8
      %v1493 = vpop.permute.xlu0 %1492
      %1494 = vrot.lane.b32.xlu0 %v1410, 8
      %v1495 = vpop.permute.xlu0 %1494
      %1496 = vrot.lane.b32.xlu0 %v1414, 8
      %v1497 = vpop.permute.xlu0 %1496
      %1498 = vrot.lane.b32.xlu0 %v1417, 8
      %v1499 = vpop.permute.xlu0 %1498
      %1500 = vrot.lane.b32.xlu0 %v1421, 8
      %v1501 = vpop.permute.xlu0 %1500
      %1502 = vrot.lane.b32.xlu0 %v1424, 8
      %v1503 = vpop.permute.xlu0 %1502
      %1504 = vrot.lane.b32.xlu0 %v1428, 8
      %v1505 = vpop.permute.xlu0 %1504
      %1506 = vrot.lane.b32.xlu0 %v1431, 8
      %v1507 = vpop.permute.xlu0 %1506
      %1508 = vrot.lane.b32.xlu0 %v1435, 8
      %v1509 = vpop.permute.xlu0 %1508
      %1510 = vrot.lane.b32.xlu0 %v1438, 8
      %v1511 = vpop.permute.xlu0 %1510
      %1512 = vrot.lane.b32.xlu0 %v1442, 8
      %v1513 = vpop.permute.xlu0 %1512
      %1514 = vrot.lane.b32.xlu0 %v1445, 8
      %v1515 = vpop.permute.xlu0 %1514
      %1516 = vrot.lane.b32.xlu0 %v1449, 8
      %v1517 = vpop.permute.xlu0 %1516
      %1518 = vrot.lane.b32.xlu0 %v1452, 8
      %v1519 = vpop.permute.xlu0 %1518
      %1520 = vrot.lane.b32.xlu0 %v1456, 8
      %v1521 = vpop.permute.xlu0 %1520
      %1522 = vrot.lane.b32.xlu0 %v1459, 8
      %v1523 = vpop.permute.xlu0 %1522
      %vm1556 = vcmask 93248
      %1557 = vst.msk [vmem:[%s731] sm:$0xf] %vm1556, %v1461
      %1558 = vst.msk [vmem:[%s731 + $0x4] sm:$0xf] %vm1556, %v1463
      %1559 = vst.msk [vmem:[%s731 + $0x8] sm:$0xf] %vm1556, %v1465
      %1560 = vst.msk [vmem:[%s731 + $0xc] sm:$0xf] %vm1556, %v1467
      %1561 = vst.msk [vmem:[%s731 + $0x10] sm:$0xf] %vm1556, %v1469
      %1562 = vst.msk [vmem:[%s731 + $0x14] sm:$0xf] %vm1556, %v1471
      %1563 = vst.msk [vmem:[%s731 + $0x18] sm:$0xf] %vm1556, %v1473
      %1564 = vst.msk [vmem:[%s731 + $0x1c] sm:$0xf] %vm1556, %v1475
      %1565 = vst.msk [vmem:[%s731 + $0x20] sm:$0xf] %vm1556, %v1477
      %1566 = vst.msk [vmem:[%s731 + $0x24] sm:$0xf] %vm1556, %v1479
      %1567 = vst.msk [vmem:[%s731 + $0x28] sm:$0xf] %vm1556, %v1481
      %1568 = vst.msk [vmem:[%s731 + $0x2c] sm:$0xf] %vm1556, %v1483
      %1569 = vst.msk [vmem:[%s731 + $0x30] sm:$0xf] %vm1556, %v1485
      %1570 = vst.msk [vmem:[%s731 + $0x34] sm:$0xf] %vm1556, %v1487
      %1571 = vst.msk [vmem:[%s731 + $0x38] sm:$0xf] %vm1556, %v1489
      %1572 = vst.msk [vmem:[%s731 + $0x3c] sm:$0xf] %vm1556, %v1491
      %1573 = vst.msk [vmem:[%s731 + $0x40] sm:$0xf] %vm1556, %v1493
      %1574 = vst.msk [vmem:[%s731 + $0x44] sm:$0xf] %vm1556, %v1495
      %1575 = vst.msk [vmem:[%s731 + $0x48] sm:$0xf] %vm1556, %v1497
      %1576 = vst.msk [vmem:[%s731 + $0x4c] sm:$0xf] %vm1556, %v1499
      %1577 = vst.msk [vmem:[%s731 + $0x50] sm:$0xf] %vm1556, %v1501
      %1578 = vst.msk [vmem:[%s731 + $0x54] sm:$0xf] %vm1556, %v1503
      %1579 = vst.msk [vmem:[%s731 + $0x58] sm:$0xf] %vm1556, %v1505
      %1580 = vst.msk [vmem:[%s731 + $0x5c] sm:$0xf] %vm1556, %v1507
      %1581 = vst.msk [vmem:[%s731 + $0x60] sm:$0xf] %vm1556, %v1509
      %1582 = vst.msk [vmem:[%s731 + $0x64] sm:$0xf] %vm1556, %v1511
      %1583 = vst.msk [vmem:[%s731 + $0x68] sm:$0xf] %vm1556, %v1513
      %1584 = vst.msk [vmem:[%s731 + $0x6c] sm:$0xf] %vm1556, %v1515
      %1585 = vst.msk [vmem:[%s731 + $0x70] sm:$0xf] %vm1556, %v1517
      %1586 = vst.msk [vmem:[%s731 + $0x74] sm:$0xf] %vm1556, %v1519
      %1587 = vst.msk [vmem:[%s731 + $0x78] sm:$0xf] %vm1556, %v1521
      %1588 = vst.msk [vmem:[%s731 + $0x7c] sm:$0xf] %vm1556, %v1523
      %vm1589 = vsmask.f32 2304
      %vm1590 = vsmask.f32 6416
      %vm1591 = vmor %vm1589, %vm1590
      %v1592 = vrot.slane %v833, 5
      %v1593 = vrot.slane %v836, 6
      %v1594 = vor.u32 %v1592, %v1593
      %v1595 = vrot.slane %v1594, 4
      %v1596 = vrot.slane %v846, 5
      %v1597 = vrot.slane %v842, 6
      %v1598 = vor.u32 %v1596, %v1597
      %v1599 = vsel %vm1591, %v1595, %v1598
      %v1600 = vrot.slane %v1598, 4
      %v1601 = vshrl.u32 %v813, 16
      %v1603 = vrot.slane %v1601, 5
      %v1604 = vrot.slane %v852, 6
      %v1605 = vor.u32 %v1603, %v1604
      %v1606 = vsel %vm1591, %v1600, %v1605
      %v1607 = vrot.slane %v857, 5
      %v1608 = vrot.slane %v860, 6
      %v1609 = vor.u32 %v1607, %v1608
      %v1610 = vrot.slane %v1609, 4
      %v1611 = vrot.slane %v870, 5
      %v1612 = vrot.slane %v866, 6
      %v1613 = vor.u32 %v1611, %v1612
      %v1614 = vsel %vm1591, %v1610, %v1613
      %v1615 = vrot.slane %v1613, 4
      %v1616 = vshrl.u32 %v814, 16
      %v1618 = vrot.slane %v1616, 5
      %v1619 = vrot.slane %v876, 6
      %v1620 = vor.u32 %v1618, %v1619
      %v1621 = vsel %vm1591, %v1615, %v1620
      %v1622 = vrot.slane %v881, 5
      %v1623 = vrot.slane %v884, 6
      %v1624 = vor.u32 %v1622, %v1623
      %v1625 = vrot.slane %v1624, 4
      %v1626 = vrot.slane %v894, 5
      %v1627 = vrot.slane %v890, 6
      %v1628 = vor.u32 %v1626, %v1627
      %v1629 = vsel %vm1591, %v1625, %v1628
      %v1630 = vrot.slane %v1628, 4
      %v1631 = vshrl.u32 %v815, 16
      %v1633 = vrot.slane %v1631, 5
      %v1634 = vrot.slane %v900, 6
      %v1635 = vor.u32 %v1633, %v1634
      %v1636 = vsel %vm1591, %v1630, %v1635
      %v1637 = vrot.slane %v905, 5
      %v1638 = vrot.slane %v908, 6
      %v1639 = vor.u32 %v1637, %v1638
      %v1640 = vrot.slane %v1639, 4
      %v1641 = vrot.slane %v918, 5
      %v1642 = vrot.slane %v914, 6
      %v1643 = vor.u32 %v1641, %v1642
      %v1644 = vsel %vm1591, %v1640, %v1643
      %v1645 = vrot.slane %v1643, 4
      %v1646 = vshrl.u32 %v816, 16
      %v1648 = vrot.slane %v1646, 5
      %v1649 = vrot.slane %v924, 6
      %v1650 = vor.u32 %v1648, %v1649
      %v1651 = vsel %vm1591, %v1645, %v1650
      %v1652 = vrot.slane %v929, 5
      %v1653 = vrot.slane %v932, 6
      %v1654 = vor.u32 %v1652, %v1653
      %v1655 = vrot.slane %v1654, 4
      %v1656 = vrot.slane %v942, 5
      %v1657 = vrot.slane %v938, 6
      %v1658 = vor.u32 %v1656, %v1657
      %v1659 = vsel %vm1591, %v1655, %v1658
      %v1660 = vrot.slane %v1658, 4
      %v1661 = vshrl.u32 %v817, 16
      %v1663 = vrot.slane %v1661, 5
      %v1664 = vrot.slane %v948, 6
      %v1665 = vor.u32 %v1663, %v1664
      %v1666 = vsel %vm1591, %v1660, %v1665
      %v1667 = vrot.slane %v953, 5
      %v1668 = vrot.slane %v956, 6
      %v1669 = vor.u32 %v1667, %v1668
      %v1670 = vrot.slane %v1669, 4
      %v1671 = vrot.slane %v966, 5
      %v1672 = vrot.slane %v962, 6
      %v1673 = vor.u32 %v1671, %v1672
      %v1674 = vsel %vm1591, %v1670, %v1673
      %v1675 = vrot.slane %v1673, 4
      %v1676 = vshrl.u32 %v818, 16
      %v1678 = vrot.slane %v1676, 5
      %v1679 = vrot.slane %v972, 6
      %v1680 = vor.u32 %v1678, %v1679
      %v1681 = vsel %vm1591, %v1675, %v1680
      %v1682 = vrot.slane %v977, 5
      %v1683 = vrot.slane %v980, 6
      %v1684 = vor.u32 %v1682, %v1683
      %v1685 = vrot.slane %v1684, 4
      %v1686 = vrot.slane %v990, 5
      %v1687 = vrot.slane %v986, 6
      %v1688 = vor.u32 %v1686, %v1687
      %v1689 = vsel %vm1591, %v1685, %v1688
      %v1690 = vrot.slane %v1688, 4
      %v1691 = vshrl.u32 %v819, 16
      %v1693 = vrot.slane %v1691, 5
      %v1694 = vrot.slane %v996, 6
      %v1695 = vor.u32 %v1693, %v1694
      %v1696 = vsel %vm1591, %v1690, %v1695
      %v1697 = vrot.slane %v1001, 5
      %v1698 = vrot.slane %v1004, 6
      %v1699 = vor.u32 %v1697, %v1698
      %v1700 = vrot.slane %v1699, 4
      %v1701 = vrot.slane %v1014, 5
      %v1702 = vrot.slane %v1010, 6
      %v1703 = vor.u32 %v1701, %v1702
      %v1704 = vsel %vm1591, %v1700, %v1703
      %v1705 = vrot.slane %v1703, 4
      %v1706 = vshrl.u32 %v820, 16
      %v1708 = vrot.slane %v1706, 5
      %v1709 = vrot.slane %v1020, 6
      %v1710 = vor.u32 %v1708, %v1709
      %v1711 = vsel %vm1591, %v1705, %v1710
      %v1712 = vrot.slane %v1025, 5
      %v1713 = vrot.slane %v1028, 6
      %v1714 = vor.u32 %v1712, %v1713
      %v1715 = vrot.slane %v1714, 4
      %v1716 = vrot.slane %v1038, 5
      %v1717 = vrot.slane %v1034, 6
      %v1718 = vor.u32 %v1716, %v1717
      %v1719 = vsel %vm1591, %v1715, %v1718
      %v1720 = vrot.slane %v1718, 4
      %v1721 = vshrl.u32 %v821, 16
      %v1723 = vrot.slane %v1721, 5
      %v1724 = vrot.slane %v1044, 6
      %v1725 = vor.u32 %v1723, %v1724
      %v1726 = vsel %vm1591, %v1720, %v1725
      %v1727 = vrot.slane %v1049, 5
      %v1728 = vrot.slane %v1052, 6
      %v1729 = vor.u32 %v1727, %v1728
      %v1730 = vrot.slane %v1729, 4
      %v1731 = vrot.slane %v1062, 5
      %v1732 = vrot.slane %v1058, 6
      %v1733 = vor.u32 %v1731, %v1732
      %v1734 = vsel %vm1591, %v1730, %v1733
      %v1735 = vrot.slane %v1733, 4
      %v1736 = vshrl.u32 %v822, 16
      %v1738 = vrot.slane %v1736, 5
      %v1739 = vrot.slane %v1068, 6
      %v1740 = vor.u32 %v1738, %v1739
      %v1741 = vsel %vm1591, %v1735, %v1740
      %v1742 = vrot.slane %v1073, 5
      %v1743 = vrot.slane %v1076, 6
      %v1744 = vor.u32 %v1742, %v1743
      %v1745 = vrot.slane %v1744, 4
      %v1746 = vrot.slane %v1086, 5
      %v1747 = vrot.slane %v1082, 6
      %v1748 = vor.u32 %v1746, %v1747
      %v1749 = vsel %vm1591, %v1745, %v1748
      %v1750 = vrot.slane %v1748, 4
      %v1751 = vshrl.u32 %v823, 16
      %v1753 = vrot.slane %v1751, 5
      %v1754 = vrot.slane %v1092, 6
      %v1755 = vor.u32 %v1753, %v1754
      %v1756 = vsel %vm1591, %v1750, %v1755
      %v1757 = vrot.slane %v1097, 5
      %v1758 = vrot.slane %v1100, 6
      %v1759 = vor.u32 %v1757, %v1758
      %v1760 = vrot.slane %v1759, 4
      %v1761 = vrot.slane %v1110, 5
      %v1762 = vrot.slane %v1106, 6
      %v1763 = vor.u32 %v1761, %v1762
      %v1764 = vsel %vm1591, %v1760, %v1763
      %v1765 = vrot.slane %v1763, 4
      %v1766 = vshrl.u32 %v824, 16
      %v1768 = vrot.slane %v1766, 5
      %v1769 = vrot.slane %v1116, 6
      %v1770 = vor.u32 %v1768, %v1769
      %v1771 = vsel %vm1591, %v1765, %v1770
      %v1772 = vrot.slane %v1121, 5
      %v1773 = vrot.slane %v1124, 6
      %v1774 = vor.u32 %v1772, %v1773
      %v1775 = vrot.slane %v1774, 4
      %v1776 = vrot.slane %v1134, 5
      %v1777 = vrot.slane %v1130, 6
      %v1778 = vor.u32 %v1776, %v1777
      %v1779 = vsel %vm1591, %v1775, %v1778
      %v1780 = vrot.slane %v1778, 4
      %v1781 = vshrl.u32 %v825, 16
      %v1783 = vrot.slane %v1781, 5
      %v1784 = vrot.slane %v1140, 6
      %v1785 = vor.u32 %v1783, %v1784
      %v1786 = vsel %vm1591, %v1780, %v1785
      %v1787 = vrot.slane %v1145, 5
      %v1788 = vrot.slane %v1148, 6
      %v1789 = vor.u32 %v1787, %v1788
      %v1790 = vrot.slane %v1789, 4
      %v1791 = vrot.slane %v1158, 5
      %v1792 = vrot.slane %v1154, 6
      %v1793 = vor.u32 %v1791, %v1792
      %v1794 = vsel %vm1591, %v1790, %v1793
      %v1795 = vrot.slane %v1793, 4
      %v1796 = vshrl.u32 %v826, 16
      %v1798 = vrot.slane %v1796, 5
      %v1799 = vrot.slane %v1164, 6
      %v1800 = vor.u32 %v1798, %v1799
      %v1801 = vsel %vm1591, %v1795, %v1800
      %v1802 = vrot.slane %v1169, 5
      %v1803 = vrot.slane %v1172, 6
      %v1804 = vor.u32 %v1802, %v1803
      %v1805 = vrot.slane %v1804, 4
      %v1806 = vrot.slane %v1182, 5
      %v1807 = vrot.slane %v1178, 6
      %v1808 = vor.u32 %v1806, %v1807
      %v1809 = vsel %vm1591, %v1805, %v1808
      %v1810 = vrot.slane %v1808, 4
      %v1811 = vshrl.u32 %v827, 16
      %v1813 = vrot.slane %v1811, 5
      %v1814 = vrot.slane %v1188, 6
      %v1815 = vor.u32 %v1813, %v1814
      %v1816 = vsel %vm1591, %v1810, %v1815
      %v1817 = vrot.slane %v1193, 5
      %v1818 = vrot.slane %v1196, 6
      %v1819 = vor.u32 %v1817, %v1818
      %v1820 = vrot.slane %v1819, 4
      %v1821 = vrot.slane %v1206, 5
      %v1822 = vrot.slane %v1202, 6
      %v1823 = vor.u32 %v1821, %v1822
      %v1824 = vsel %vm1591, %v1820, %v1823
      %v1825 = vrot.slane %v1823, 4
      %v1826 = vshrl.u32 %v828, 16
      %v1828 = vrot.slane %v1826, 5
      %v1829 = vrot.slane %v1212, 6
      %v1830 = vor.u32 %v1828, %v1829
      %v1831 = vsel %vm1591, %v1825, %v1830
      %1832 = vrot.lane.b32.xlu0 %v1599, 12
      %v1833 = vpop.permute.xlu0 %1832
      %1834 = vrot.lane.b32.xlu0 %v1606, 12
      %v1835 = vpop.permute.xlu0 %1834
      %1836 = vrot.lane.b32.xlu0 %v1614, 12
      %v1837 = vpop.permute.xlu0 %1836
      %1838 = vrot.lane.b32.xlu0 %v1621, 12
      %v1839 = vpop.permute.xlu0 %1838
      %1840 = vrot.lane.b32.xlu0 %v1629, 12
      %v1841 = vpop.permute.xlu0 %1840
      %1842 = vrot.lane.b32.xlu0 %v1636, 12
      %v1843 = vpop.permute.xlu0 %1842
      %1844 = vrot.lane.b32.xlu0 %v1644, 12
      %v1845 = vpop.permute.xlu0 %1844
      %1846 = vrot.lane.b32.xlu0 %v1651, 12
      %v1847 = vpop.permute.xlu0 %1846
      %1848 = vrot.lane.b32.xlu0 %v1659, 12
      %v1849 = vpop.permute.xlu0 %1848
      %1850 = vrot.lane.b32.xlu0 %v1666, 12
      %v1851 = vpop.permute.xlu0 %1850
      %1852 = vrot.lane.b32.xlu0 %v1674, 12
      %v1853 = vpop.permute.xlu0 %1852
      %1854 = vrot.lane.b32.xlu0 %v1681, 12
      %v1855 = vpop.permute.xlu0 %1854
      %1856 = vrot.lane.b32.xlu0 %v1689, 12
      %v1857 = vpop.permute.xlu0 %1856
      %1858 = vrot.lane.b32.xlu0 %v1696, 12
      %v1859 = vpop.permute.xlu0 %1858
      %1860 = vrot.lane.b32.xlu0 %v1704, 12
      %v1861 = vpop.permute.xlu0 %1860
      %1862 = vrot.lane.b32.xlu0 %v1711, 12
      %v1863 = vpop.permute.xlu0 %1862
      %1864 = vrot.lane.b32.xlu0 %v1719, 12
      %v1865 = vpop.permute.xlu0 %1864
      %1866 = vrot.lane.b32.xlu0 %v1726, 12
      %v1867 = vpop.permute.xlu0 %1866
      %1868 = vrot.lane.b32.xlu0 %v1734, 12
      %v1869 = vpop.permute.xlu0 %1868
      %1870 = vrot.lane.b32.xlu0 %v1741, 12
      %v1871 = vpop.permute.xlu0 %1870
      %1872 = vrot.lane.b32.xlu0 %v1749, 12
      %v1873 = vpop.permute.xlu0 %1872
      %1874 = vrot.lane.b32.xlu0 %v1756, 12
      %v1875 = vpop.permute.xlu0 %1874
      %1876 = vrot.lane.b32.xlu0 %v1764, 12
      %v1877 = vpop.permute.xlu0 %1876
      %1878 = vrot.lane.b32.xlu0 %v1771, 12
      %v1879 = vpop.permute.xlu0 %1878
      %1880 = vrot.lane.b32.xlu0 %v1779, 12
      %v1881 = vpop.permute.xlu0 %1880
      %1882 = vrot.lane.b32.xlu0 %v1786, 12
      %v1883 = vpop.permute.xlu0 %1882
      %1884 = vrot.lane.b32.xlu0 %v1794, 12
      %v1885 = vpop.permute.xlu0 %1884
      %1886 = vrot.lane.b32.xlu0 %v1801, 12
      %v1887 = vpop.permute.xlu0 %1886
      %1888 = vrot.lane.b32.xlu0 %v1809, 12
      %v1889 = vpop.permute.xlu0 %1888
      %1890 = vrot.lane.b32.xlu0 %v1816, 12
      %v1891 = vpop.permute.xlu0 %1890
      %1892 = vrot.lane.b32.xlu0 %v1824, 12
      %v1893 = vpop.permute.xlu0 %1892
      %1894 = vrot.lane.b32.xlu0 %v1831, 12
      %v1895 = vpop.permute.xlu0 %1894
      %vm1928 = vcmask 126048
      %1929 = vst.msk [vmem:[%s731] sm:$0xf] %vm1928, %v1833
      %1930 = vst.msk [vmem:[%s731 + $0x4] sm:$0xf] %vm1928, %v1835
      %1931 = vst.msk [vmem:[%s731 + $0x8] sm:$0xf] %vm1928, %v1837
      %1932 = vst.msk [vmem:[%s731 + $0xc] sm:$0xf] %vm1928, %v1839
      %1933 = vst.msk [vmem:[%s731 + $0x10] sm:$0xf] %vm1928, %v1841
      %1934 = vst.msk [vmem:[%s731 + $0x14] sm:$0xf] %vm1928, %v1843
      %1935 = vst.msk [vmem:[%s731 + $0x18] sm:$0xf] %vm1928, %v1845
      %1936 = vst.msk [vmem:[%s731 + $0x1c] sm:$0xf] %vm1928, %v1847
      %1937 = vst.msk [vmem:[%s731 + $0x20] sm:$0xf] %vm1928, %v1849
      %1938 = vst.msk [vmem:[%s731 + $0x24] sm:$0xf] %vm1928, %v1851
      %1939 = vst.msk [vmem:[%s731 + $0x28] sm:$0xf] %vm1928, %v1853
      %1940 = vst.msk [vmem:[%s731 + $0x2c] sm:$0xf] %vm1928, %v1855
      %1941 = vst.msk [vmem:[%s731 + $0x30] sm:$0xf] %vm1928, %v1857
      %1942 = vst.msk [vmem:[%s731 + $0x34] sm:$0xf] %vm1928, %v1859
      %1943 = vst.msk [vmem:[%s731 + $0x38] sm:$0xf] %vm1928, %v1861
      %1944 = vst.msk [vmem:[%s731 + $0x3c] sm:$0xf] %vm1928, %v1863
      %1945 = vst.msk [vmem:[%s731 + $0x40] sm:$0xf] %vm1928, %v1865
      %1946 = vst.msk [vmem:[%s731 + $0x44] sm:$0xf] %vm1928, %v1867
      %1947 = vst.msk [vmem:[%s731 + $0x48] sm:$0xf] %vm1928, %v1869
      %1948 = vst.msk [vmem:[%s731 + $0x4c] sm:$0xf] %vm1928, %v1871
      %1949 = vst.msk [vmem:[%s731 + $0x50] sm:$0xf] %vm1928, %v1873
      %1950 = vst.msk [vmem:[%s731 + $0x54] sm:$0xf] %vm1928, %v1875
      %1951 = vst.msk [vmem:[%s731 + $0x58] sm:$0xf] %vm1928, %v1877
      %1952 = vst.msk [vmem:[%s731 + $0x5c] sm:$0xf] %vm1928, %v1879
      %1953 = vst.msk [vmem:[%s731 + $0x60] sm:$0xf] %vm1928, %v1881
      %1954 = vst.msk [vmem:[%s731 + $0x64] sm:$0xf] %vm1928, %v1883
      %1955 = vst.msk [vmem:[%s731 + $0x68] sm:$0xf] %vm1928, %v1885
      %1956 = vst.msk [vmem:[%s731 + $0x6c] sm:$0xf] %vm1928, %v1887
      %1957 = vst.msk [vmem:[%s731 + $0x70] sm:$0xf] %vm1928, %v1889
      %1958 = vst.msk [vmem:[%s731 + $0x74] sm:$0xf] %vm1928, %v1891
      %1959 = vst.msk [vmem:[%s731 + $0x78] sm:$0xf] %vm1928, %v1893
      %1960 = vst.msk [vmem:[%s731 + $0x7c] sm:$0xf] %vm1928, %v1895
      %vm1961 = vcmask 1041408
      %vm1962 = vcmask 1045508
      %vm1963 = vmor %vm1961, %vm1962
      %v1964 = vrot.slane %v667, 6
      %v1965 = vrot.slane %v1964, 4
      %v1966 = vrot.slane %v668, 6
      %v1967 = vsel %vm1963, %v1965, %v1966
      %v1968 = vrot.slane %v1966, 4
      %v1969 = vrot.slane %v813, 6
      %v1970 = vsel %vm1963, %v1968, %v1969
      %v1971 = vrot.slane %v669, 6
      %v1972 = vrot.slane %v1971, 4
      %v1973 = vrot.slane %v670, 6
      %v1974 = vsel %vm1963, %v1972, %v1973
      %v1975 = vrot.slane %v1973, 4
      %v1976 = vrot.slane %v814, 6
      %v1977 = vsel %vm1963, %v1975, %v1976
      %v1978 = vrot.slane %v671, 6
      %v1979 = vrot.slane %v1978, 4
      %v1980 = vrot.slane %v672, 6
      %v1981 = vsel %vm1963, %v1979, %v1980
      %v1982 = vrot.slane %v1980, 4
      %v1983 = vrot.slane %v815, 6
      %v1984 = vsel %vm1963, %v1982, %v1983
      %v1985 = vrot.slane %v673, 6
      %v1986 = vrot.slane %v1985, 4
      %v1987 = vrot.slane %v674, 6
      %v1988 = vsel %vm1963, %v1986, %v1987
      %v1989 = vrot.slane %v1987, 4
      %v1990 = vrot.slane %v816, 6
      %v1991 = vsel %vm1963, %v1989, %v1990
      %v1992 = vrot.slane %v675, 6
      %v1993 = vrot.slane %v1992, 4
      %v1994 = vrot.slane %v676, 6
      %v1995 = vsel %vm1963, %v1993, %v1994
      %v1996 = vrot.slane %v1994, 4
      %v1997 = vrot.slane %v817, 6
      %v1998 = vsel %vm1963, %v1996, %v1997
      %v1999 = vrot.slane %v677, 6
      %v2000 = vrot.slane %v1999, 4
      %v2001 = vrot.slane %v678, 6
      %v2002 = vsel %vm1963, %v2000, %v2001
      %v2003 = vrot.slane %v2001, 4
      %v2004 = vrot.slane %v818, 6
      %v2005 = vsel %vm1963, %v2003, %v2004
      %v2006 = vrot.slane %v679, 6
      %v2007 = vrot.slane %v2006, 4
      %v2008 = vrot.slane %v680, 6
      %v2009 = vsel %vm1963, %v2007, %v2008
      %v2010 = vrot.slane %v2008, 4
      %v2011 = vrot.slane %v819, 6
      %v2012 = vsel %vm1963, %v2010, %v2011
      %v2013 = vrot.slane %v681, 6
      %v2014 = vrot.slane %v2013, 4
      %v2015 = vrot.slane %v682, 6
      %v2016 = vsel %vm1963, %v2014, %v2015
      %v2017 = vrot.slane %v2015, 4
      %v2018 = vrot.slane %v820, 6
      %v2019 = vsel %vm1963, %v2017, %v2018
      %v2020 = vrot.slane %v683, 6
      %v2021 = vrot.slane %v2020, 4
      %v2022 = vrot.slane %v684, 6
      %v2023 = vsel %vm1963, %v2021, %v2022
      %v2024 = vrot.slane %v2022, 4
      %v2025 = vrot.slane %v821, 6
      %v2026 = vsel %vm1963, %v2024, %v2025
      %v2027 = vrot.slane %v685, 6
      %v2028 = vrot.slane %v2027, 4
      %v2029 = vrot.slane %v686, 6
      %v2030 = vsel %vm1963, %v2028, %v2029
      %v2031 = vrot.slane %v2029, 4
      %v2032 = vrot.slane %v822, 6
      %v2033 = vsel %vm1963, %v2031, %v2032
      %v2034 = vrot.slane %v687, 6
      %v2035 = vrot.slane %v2034, 4
      %v2036 = vrot.slane %v688, 6
      %v2037 = vsel %vm1963, %v2035, %v2036
      %v2038 = vrot.slane %v2036, 4
      %v2039 = vrot.slane %v823, 6
      %v2040 = vsel %vm1963, %v2038, %v2039
      %v2041 = vrot.slane %v689, 6
      %v2042 = vrot.slane %v2041, 4
      %v2043 = vrot.slane %v690, 6
      %v2044 = vsel %vm1963, %v2042, %v2043
      %v2045 = vrot.slane %v2043, 4
      %v2046 = vrot.slane %v824, 6
      %v2047 = vsel %vm1963, %v2045, %v2046
      %v2048 = vrot.slane %v691, 6
      %v2049 = vrot.slane %v2048, 4
      %v2050 = vrot.slane %v692, 6
      %v2051 = vsel %vm1963, %v2049, %v2050
      %v2052 = vrot.slane %v2050, 4
      %v2053 = vrot.slane %v825, 6
      %v2054 = vsel %vm1963, %v2052, %v2053
      %v2055 = vrot.slane %v693, 6
      %v2056 = vrot.slane %v2055, 4
      %v2057 = vrot.slane %v694, 6
      %v2058 = vsel %vm1963, %v2056, %v2057
      %v2059 = vrot.slane %v2057, 4
      %v2060 = vrot.slane %v826, 6
      %v2061 = vsel %vm1963, %v2059, %v2060
      %v2062 = vrot.slane %v695, 6
      %v2063 = vrot.slane %v2062, 4
      %v2064 = vrot.slane %v696, 6
      %v2065 = vsel %vm1963, %v2063, %v2064
      %v2066 = vrot.slane %v2064, 4
      %v2067 = vrot.slane %v827, 6
      %v2068 = vsel %vm1963, %v2066, %v2067
      %v2069 = vrot.slane %v697, 6
      %v2070 = vrot.slane %v2069, 4
      %v2071 = vrot.slane %v698, 6
      %v2072 = vsel %vm1963, %v2070, %v2071
      %v2073 = vrot.slane %v2071, 4
      %v2074 = vrot.slane %v828, 6
      %v2075 = vsel %vm1963, %v2073, %v2074
      %2076 = vrot.lane.b32.xlu0 %v1967, 16
      %v2077 = vpop.permute.xlu0 %2076
      %2078 = vrot.lane.b32.xlu0 %v1970, 16
      %v2079 = vpop.permute.xlu0 %2078
      %2080 = vrot.lane.b32.xlu0 %v1974, 16
      %v2081 = vpop.permute.xlu0 %2080
      %2082 = vrot.lane.b32.xlu0 %v1977, 16
      %v2083 = vpop.permute.xlu0 %2082
      %2084 = vrot.lane.b32.xlu0 %v1981, 16
      %v2085 = vpop.permute.xlu0 %2084
      %2086 = vrot.lane.b32.xlu0 %v1984, 16
      %v2087 = vpop.permute.xlu0 %2086
      %2088 = vrot.lane.b32.xlu0 %v1988, 16
      %v2089 = vpop.permute.xlu0 %2088
      %2090 = vrot.lane.b32.xlu0 %v1991, 16
      %v2091 = vpop.permute.xlu0 %2090
      %2092 = vrot.lane.b32.xlu0 %v1995, 16
      %v2093 = vpop.permute.xlu0 %2092
      %2094 = vrot.lane.b32.xlu0 %v1998, 16
      %v2095 = vpop.permute.xlu0 %2094
      %2096 = vrot.lane.b32.xlu0 %v2002, 16
      %v2097 = vpop.permute.xlu0 %2096
      %2098 = vrot.lane.b32.xlu0 %v2005, 16
      %v2099 = vpop.permute.xlu0 %2098
      %2100 = vrot.lane.b32.xlu0 %v2009, 16
      %v2101 = vpop.permute.xlu0 %2100
      %2102 = vrot.lane.b32.xlu0 %v2012, 16
      %v2103 = vpop.permute.xlu0 %2102
      %2104 = vrot.lane.b32.xlu0 %v2016, 16
      %v2105 = vpop.permute.xlu0 %2104
      %2106 = vrot.lane.b32.xlu0 %v2019, 16
      %v2107 = vpop.permute.xlu0 %2106
      %2108 = vrot.lane.b32.xlu0 %v2023, 16
      %v2109 = vpop.permute.xlu0 %2108
      %2110 = vrot.lane.b32.xlu0 %v2026, 16
      %v2111 = vpop.permute.xlu0 %2110
      %2112 = vrot.lane.b32.xlu0 %v2030, 16
      %v2113 = vpop.permute.xlu0 %2112
      %2114 = vrot.lane.b32.xlu0 %v2033, 16
      %v2115 = vpop.permute.xlu0 %2114
      %2116 = vrot.lane.b32.xlu0 %v2037, 16
      %v2117 = vpop.permute.xlu0 %2116
      %2118 = vrot.lane.b32.xlu0 %v2040, 16
      %v2119 = vpop.permute.xlu0 %2118
      %2120 = vrot.lane.b32.xlu0 %v2044, 16
      %v2121 = vpop.permute.xlu0 %2120
      %2122 = vrot.lane.b32.xlu0 %v2047, 16
      %v2123 = vpop.permute.xlu0 %2122
      %2124 = vrot.lane.b32.xlu0 %v2051, 16
      %v2125 = vpop.permute.xlu0 %2124
      %2126 = vrot.lane.b32.xlu0 %v2054, 16
      %v2127 = vpop.permute.xlu0 %2126
      %2128 = vrot.lane.b32.xlu0 %v2058, 16
      %v2129 = vpop.permute.xlu0 %2128
      %2130 = vrot.lane.b32.xlu0 %v2061, 16
      %v2131 = vpop.permute.xlu0 %2130
      %2132 = vrot.lane.b32.xlu0 %v2065, 16
      %v2133 = vpop.permute.xlu0 %2132
      %2134 = vrot.lane.b32.xlu0 %v2068, 16
      %v2135 = vpop.permute.xlu0 %2134
      %2136 = vrot.lane.b32.xlu0 %v2072, 16
      %v2137 = vpop.permute.xlu0 %2136
      %2138 = vrot.lane.b32.xlu0 %v2075, 16
      %v2139 = vpop.permute.xlu0 %2138
      %vm2172 = vcmask 158848
      %2173 = vst.msk [vmem:[%s731] sm:$0xf] %vm2172, %v2077
      %2174 = vst.msk [vmem:[%s731 + $0x4] sm:$0xf] %vm2172, %v2079
      %2175 = vst.msk [vmem:[%s731 + $0x8] sm:$0xf] %vm2172, %v2081
      %2176 = vst.msk [vmem:[%s731 + $0xc] sm:$0xf] %vm2172, %v2083
      %2177 = vst.msk [vmem:[%s731 + $0x10] sm:$0xf] %vm2172, %v2085
      %2178 = vst.msk [vmem:[%s731 + $0x14] sm:$0xf] %vm2172, %v2087
      %2179 = vst.msk [vmem:[%s731 + $0x18] sm:$0xf] %vm2172, %v2089
      %2180 = vst.msk [vmem:[%s731 + $0x1c] sm:$0xf] %vm2172, %v2091
      %2181 = vst.msk [vmem:[%s731 + $0x20] sm:$0xf] %vm2172, %v2093
      %2182 = vst.msk [vmem:[%s731 + $0x24] sm:$0xf] %vm2172, %v2095
      %2183 = vst.msk [vmem:[%s731 + $0x28] sm:$0xf] %vm2172, %v2097
      %2184 = vst.msk [vmem:[%s731 + $0x2c] sm:$0xf] %vm2172, %v2099
      %2185 = vst.msk [vmem:[%s731 + $0x30] sm:$0xf] %vm2172, %v2101
      %2186 = vst.msk [vmem:[%s731 + $0x34] sm:$0xf] %vm2172, %v2103
      %2187 = vst.msk [vmem:[%s731 + $0x38] sm:$0xf] %vm2172, %v2105
      %2188 = vst.msk [vmem:[%s731 + $0x3c] sm:$0xf] %vm2172, %v2107
      %2189 = vst.msk [vmem:[%s731 + $0x40] sm:$0xf] %vm2172, %v2109
      %2190 = vst.msk [vmem:[%s731 + $0x44] sm:$0xf] %vm2172, %v2111
      %2191 = vst.msk [vmem:[%s731 + $0x48] sm:$0xf] %vm2172, %v2113
      %2192 = vst.msk [vmem:[%s731 + $0x4c] sm:$0xf] %vm2172, %v2115
      %2193 = vst.msk [vmem:[%s731 + $0x50] sm:$0xf] %vm2172, %v2117
      %2194 = vst.msk [vmem:[%s731 + $0x54] sm:$0xf] %vm2172, %v2119
      %2195 = vst.msk [vmem:[%s731 + $0x58] sm:$0xf] %vm2172, %v2121
      %2196 = vst.msk [vmem:[%s731 + $0x5c] sm:$0xf] %vm2172, %v2123
      %2197 = vst.msk [vmem:[%s731 + $0x60] sm:$0xf] %vm2172, %v2125
      %2198 = vst.msk [vmem:[%s731 + $0x64] sm:$0xf] %vm2172, %v2127
      %2199 = vst.msk [vmem:[%s731 + $0x68] sm:$0xf] %vm2172, %v2129
      %2200 = vst.msk [vmem:[%s731 + $0x6c] sm:$0xf] %vm2172, %v2131
      %2201 = vst.msk [vmem:[%s731 + $0x70] sm:$0xf] %vm2172, %v2133
      %2202 = vst.msk [vmem:[%s731 + $0x74] sm:$0xf] %vm2172, %v2135
      %2203 = vst.msk [vmem:[%s731 + $0x78] sm:$0xf] %vm2172, %v2137
      %2204 = vst.msk [vmem:[%s731 + $0x7c] sm:$0xf] %vm2172, %v2139
      %vm2205 = vsmask.f32 1280
      %vm2206 = vsmask.f32 5392
      %vm2207 = vmor %vm2205, %vm2206
      %v2208 = vrot.slane %v833, 6
      %v2209 = vrot.slane %v836, 7
      %v2210 = vor.u32 %v2208, %v2209
      %v2211 = vrot.slane %v2210, 4
      %v2212 = vrot.slane %v846, 6
      %v2213 = vrot.slane %v842, 7
      %v2214 = vor.u32 %v2212, %v2213
      %v2215 = vsel %vm2207, %v2211, %v2214
      %v2216 = vrot.slane %v2214, 4
      %v2217 = vrot.slane %v1601, 6
      %v2218 = vrot.slane %v852, 7
      %v2219 = vor.u32 %v2217, %v2218
      %v2220 = vsel %vm2207, %v2216, %v2219
      %v2221 = vrot.slane %v857, 6
      %v2222 = vrot.slane %v860, 7
      %v2223 = vor.u32 %v2221, %v2222
      %v2224 = vrot.slane %v2223, 4
      %v2225 = vrot.slane %v870, 6
      %v2226 = vrot.slane %v866, 7
      %v2227 = vor.u32 %v2225, %v2226
      %v2228 = vsel %vm2207, %v2224, %v2227
      %v2229 = vrot.slane %v2227, 4
      %v2230 = vrot.slane %v1616, 6
      %v2231 = vrot.slane %v876, 7
      %v2232 = vor.u32 %v2230, %v2231
      %v2233 = vsel %vm2207, %v2229, %v2232
      %v2234 = vrot.slane %v881, 6
      %v2235 = vrot.slane %v884, 7
      %v2236 = vor.u32 %v2234, %v2235
      %v2237 = vrot.slane %v2236, 4
      %v2238 = vrot.slane %v894, 6
      %v2239 = vrot.slane %v890, 7
      %v2240 = vor.u32 %v2238, %v2239
      %v2241 = vsel %vm2207, %v2237, %v2240
      %v2242 = vrot.slane %v2240, 4
      %v2243 = vrot.slane %v1631, 6
      %v2244 = vrot.slane %v900, 7
      %v2245 = vor.u32 %v2243, %v2244
      %v2246 = vsel %vm2207, %v2242, %v2245
      %v2247 = vrot.slane %v905, 6
      %v2248 = vrot.slane %v908, 7
      %v2249 = vor.u32 %v2247, %v2248
      %v2250 = vrot.slane %v2249, 4
      %v2251 = vrot.slane %v918, 6
      %v2252 = vrot.slane %v914, 7
      %v2253 = vor.u32 %v2251, %v2252
      %v2254 = vsel %vm2207, %v2250, %v2253
      %v2255 = vrot.slane %v2253, 4
      %v2256 = vrot.slane %v1646, 6
      %v2257 = vrot.slane %v924, 7
      %v2258 = vor.u32 %v2256, %v2257
      %v2259 = vsel %vm2207, %v2255, %v2258
      %v2260 = vrot.slane %v929, 6
      %v2261 = vrot.slane %v932, 7
      %v2262 = vor.u32 %v2260, %v2261
      %v2263 = vrot.slane %v2262, 4
      %v2264 = vrot.slane %v942, 6
      %v2265 = vrot.slane %v938, 7
      %v2266 = vor.u32 %v2264, %v2265
      %v2267 = vsel %vm2207, %v2263, %v2266
      %v2268 = vrot.slane %v2266, 4
      %v2269 = vrot.slane %v1661, 6
      %v2270 = vrot.slane %v948, 7
      %v2271 = vor.u32 %v2269, %v2270
      %v2272 = vsel %vm2207, %v2268, %v2271
      %v2273 = vrot.slane %v953, 6
      %v2274 = vrot.slane %v956, 7
      %v2275 = vor.u32 %v2273, %v2274
      %v2276 = vrot.slane %v2275, 4
      %v2277 = vrot.slane %v966, 6
      %v2278 = vrot.slane %v962, 7
      %v2279 = vor.u32 %v2277, %v2278
      %v2280 = vsel %vm2207, %v2276, %v2279
      %v2281 = vrot.slane %v2279, 4
      %v2282 = vrot.slane %v1676, 6
      %v2283 = vrot.slane %v972, 7
      %v2284 = vor.u32 %v2282, %v2283
      %v2285 = vsel %vm2207, %v2281, %v2284
      %v2286 = vrot.slane %v977, 6
      %v2287 = vrot.slane %v980, 7
      %v2288 = vor.u32 %v2286, %v2287
      %v2289 = vrot.slane %v2288, 4
      %v2290 = vrot.slane %v990, 6
      %v2291 = vrot.slane %v986, 7
      %v2292 = vor.u32 %v2290, %v2291
      %v2293 = vsel %vm2207, %v2289, %v2292
      %v2294 = vrot.slane %v2292, 4
      %v2295 = vrot.slane %v1691, 6
      %v2296 = vrot.slane %v996, 7
      %v2297 = vor.u32 %v2295, %v2296
      %v2298 = vsel %vm2207, %v2294, %v2297
      %v2299 = vrot.slane %v1001, 6
      %v2300 = vrot.slane %v1004, 7
      %v2301 = vor.u32 %v2299, %v2300
      %v2302 = vrot.slane %v2301, 4
      %v2303 = vrot.slane %v1014, 6
      %v2304 = vrot.slane %v1010, 7
      %v2305 = vor.u32 %v2303, %v2304
      %v2306 = vsel %vm2207, %v2302, %v2305
      %v2307 = vrot.slane %v2305, 4
      %v2308 = vrot.slane %v1706, 6
      %v2309 = vrot.slane %v1020, 7
      %v2310 = vor.u32 %v2308, %v2309
      %v2311 = vsel %vm2207, %v2307, %v2310
      %v2312 = vrot.slane %v1025, 6
      %v2313 = vrot.slane %v1028, 7
      %v2314 = vor.u32 %v2312, %v2313
      %v2315 = vrot.slane %v2314, 4
      %v2316 = vrot.slane %v1038, 6
      %v2317 = vrot.slane %v1034, 7
      %v2318 = vor.u32 %v2316, %v2317
      %v2319 = vsel %vm2207, %v2315, %v2318
      %v2320 = vrot.slane %v2318, 4
      %v2321 = vrot.slane %v1721, 6
      %v2322 = vrot.slane %v1044, 7
      %v2323 = vor.u32 %v2321, %v2322
      %v2324 = vsel %vm2207, %v2320, %v2323
      %v2325 = vrot.slane %v1049, 6
      %v2326 = vrot.slane %v1052, 7
      %v2327 = vor.u32 %v2325, %v2326
      %v2328 = vrot.slane %v2327, 4
      %v2329 = vrot.slane %v1062, 6
      %v2330 = vrot.slane %v1058, 7
      %v2331 = vor.u32 %v2329, %v2330
      %v2332 = vsel %vm2207, %v2328, %v2331
      %v2333 = vrot.slane %v2331, 4
      %v2334 = vrot.slane %v1736, 6
      %v2335 = vrot.slane %v1068, 7
      %v2336 = vor.u32 %v2334, %v2335
      %v2337 = vsel %vm2207, %v2333, %v2336
      %v2338 = vrot.slane %v1073, 6
      %v2339 = vrot.slane %v1076, 7
      %v2340 = vor.u32 %v2338, %v2339
      %v2341 = vrot.slane %v2340, 4
      %v2342 = vrot.slane %v1086, 6
      %v2343 = vrot.slane %v1082, 7
      %v2344 = vor.u32 %v2342, %v2343
      %v2345 = vsel %vm2207, %v2341, %v2344
      %v2346 = vrot.slane %v2344, 4
      %v2347 = vrot.slane %v1751, 6
      %v2348 = vrot.slane %v1092, 7
      %v2349 = vor.u32 %v2347, %v2348
      %v2350 = vsel %vm2207, %v2346, %v2349
      %v2351 = vrot.slane %v1097, 6
      %v2352 = vrot.slane %v1100, 7
      %v2353 = vor.u32 %v2351, %v2352
      %v2354 = vrot.slane %v2353, 4
      %v2355 = vrot.slane %v1110, 6
      %v2356 = vrot.slane %v1106, 7
      %v2357 = vor.u32 %v2355, %v2356
      %v2358 = vsel %vm2207, %v2354, %v2357
      %v2359 = vrot.slane %v2357, 4
      %v2360 = vrot.slane %v1766, 6
      %v2361 = vrot.slane %v1116, 7
      %v2362 = vor.u32 %v2360, %v2361
      %v2363 = vsel %vm2207, %v2359, %v2362
      %v2364 = vrot.slane %v1121, 6
      %v2365 = vrot.slane %v1124, 7
      %v2366 = vor.u32 %v2364, %v2365
      %v2367 = vrot.slane %v2366, 4
      %v2368 = vrot.slane %v1134, 6
      %v2369 = vrot.slane %v1130, 7
      %v2370 = vor.u32 %v2368, %v2369
      %v2371 = vsel %vm2207, %v2367, %v2370
      %v2372 = vrot.slane %v2370, 4
      %v2373 = vrot.slane %v1781, 6
      %v2374 = vrot.slane %v1140, 7
      %v2375 = vor.u32 %v2373, %v2374
      %v2376 = vsel %vm2207, %v2372, %v2375
      %v2377 = vrot.slane %v1145, 6
      %v2378 = vrot.slane %v1148, 7
      %v2379 = vor.u32 %v2377, %v2378
      %v2380 = vrot.slane %v2379, 4
      %v2381 = vrot.slane %v1158, 6
      %v2382 = vrot.slane %v1154, 7
      %v2383 = vor.u32 %v2381, %v2382
      %v2384 = vsel %vm2207, %v2380, %v2383
      %v2385 = vrot.slane %v2383, 4
      %v2386 = vrot.slane %v1796, 6
      %v2387 = vrot.slane %v1164, 7
      %v2388 = vor.u32 %v2386, %v2387
      %v2389 = vsel %vm2207, %v2385, %v2388
      %v2390 = vrot.slane %v1169, 6
      %v2391 = vrot.slane %v1172, 7
      %v2392 = vor.u32 %v2390, %v2391
      %v2393 = vrot.slane %v2392, 4
      %v2394 = vrot.slane %v1182, 6
      %v2395 = vrot.slane %v1178, 7
      %v2396 = vor.u32 %v2394, %v2395
      %v2397 = vsel %vm2207, %v2393, %v2396
      %v2398 = vrot.slane %v2396, 4
      %v2399 = vrot.slane %v1811, 6
      %v2400 = vrot.slane %v1188, 7
      %v2401 = vor.u32 %v2399, %v2400
      %v2402 = vsel %vm2207, %v2398, %v2401
      %v2403 = vrot.slane %v1193, 6
      %v2404 = vrot.slane %v1196, 7
      %v2405 = vor.u32 %v2403, %v2404
      %v2406 = vrot.slane %v2405, 4
      %v2407 = vrot.slane %v1206, 6
      %v2408 = vrot.slane %v1202, 7
      %v2409 = vor.u32 %v2407, %v2408
      %v2410 = vsel %vm2207, %v2406, %v2409
      %v2411 = vrot.slane %v2409, 4
      %v2412 = vrot.slane %v1826, 6
      %v2413 = vrot.slane %v1212, 7
      %v2414 = vor.u32 %v2412, %v2413
      %v2415 = vsel %vm2207, %v2411, %v2414
      %2416 = vrot.lane.b32.xlu0 %v2215, 20
      %v2417 = vpop.permute.xlu0 %2416
      %2418 = vrot.lane.b32.xlu0 %v2220, 20
      %v2419 = vpop.permute.xlu0 %2418
      %2420 = vrot.lane.b32.xlu0 %v2228, 20
      %v2421 = vpop.permute.xlu0 %2420
      %2422 = vrot.lane.b32.xlu0 %v2233, 20
      %v2423 = vpop.permute.xlu0 %2422
      %2424 = vrot.lane.b32.xlu0 %v2241, 20
      %v2425 = vpop.permute.xlu0 %2424
      %2426 = vrot.lane.b32.xlu0 %v2246, 20
      %v2427 = vpop.permute.xlu0 %2426
      %2428 = vrot.lane.b32.xlu0 %v2254, 20
      %v2429 = vpop.permute.xlu0 %2428
      %2430 = vrot.lane.b32.xlu0 %v2259, 20
      %v2431 = vpop.permute.xlu0 %2430
      %2432 = vrot.lane.b32.xlu0 %v2267, 20
      %v2433 = vpop.permute.xlu0 %2432
      %2434 = vrot.lane.b32.xlu0 %v2272, 20
      %v2435 = vpop.permute.xlu0 %2434
      %2436 = vrot.lane.b32.xlu0 %v2280, 20
      %v2437 = vpop.permute.xlu0 %2436
      %2438 = vrot.lane.b32.xlu0 %v2285, 20
      %v2439 = vpop.permute.xlu0 %2438
      %2440 = vrot.lane.b32.xlu0 %v2293, 20
      %v2441 = vpop.permute.xlu0 %2440
      %2442 = vrot.lane.b32.xlu0 %v2298, 20
      %v2443 = vpop.permute.xlu0 %2442
      %2444 = vrot.lane.b32.xlu0 %v2306, 20
      %v2445 = vpop.permute.xlu0 %2444
      %2446 = vrot.lane.b32.xlu0 %v2311, 20
      %v2447 = vpop.permute.xlu0 %2446
      %2448 = vrot.lane.b32.xlu0 %v2319, 20
      %v2449 = vpop.permute.xlu0 %2448
      %2450 = vrot.lane.b32.xlu0 %v2324, 20
      %v2451 = vpop.permute.xlu0 %2450
      %2452 = vrot.lane.b32.xlu0 %v2332, 20
      %v2453 = vpop.permute.xlu0 %2452
      %2454 = vrot.lane.b32.xlu0 %v2337, 20
      %v2455 = vpop.permute.xlu0 %2454
      %2456 = vrot.lane.b32.xlu0 %v2345, 20
      %v2457 = vpop.permute.xlu0 %2456
      %2458 = vrot.lane.b32.xlu0 %v2350, 20
      %v2459 = vpop.permute.xlu0 %2458
      %2460 = vrot.lane.b32.xlu0 %v2358, 20
      %v2461 = vpop.permute.xlu0 %2460
      %2462 = vrot.lane.b32.xlu0 %v2363, 20
      %v2463 = vpop.permute.xlu0 %2462
      %2464 = vrot.lane.b32.xlu0 %v2371, 20
      %v2465 = vpop.permute.xlu0 %2464
      %2466 = vrot.lane.b32.xlu0 %v2376, 20
      %v2467 = vpop.permute.xlu0 %2466
      %2468 = vrot.lane.b32.xlu0 %v2384, 20
      %v2469 = vpop.permute.xlu0 %2468
      %2470 = vrot.lane.b32.xlu0 %v2389, 20
      %v2471 = vpop.permute.xlu0 %2470
      %2472 = vrot.lane.b32.xlu0 %v2397, 20
      %v2473 = vpop.permute.xlu0 %2472
      %2474 = vrot.lane.b32.xlu0 %v2402, 20
      %v2475 = vpop.permute.xlu0 %2474
      %2476 = vrot.lane.b32.xlu0 %v2410, 20
      %v2477 = vpop.permute.xlu0 %2476
      %2478 = vrot.lane.b32.xlu0 %v2415, 20
      %v2479 = vpop.permute.xlu0 %2478
      %vm2512 = vcmask 191648
      %2513 = vst.msk [vmem:[%s731] sm:$0xf] %vm2512, %v2417
      %2514 = vst.msk [vmem:[%s731 + $0x4] sm:$0xf] %vm2512, %v2419
      %2515 = vst.msk [vmem:[%s731 + $0x8] sm:$0xf] %vm2512, %v2421
      %2516 = vst.msk [vmem:[%s731 + $0xc] sm:$0xf] %vm2512, %v2423
      %2517 = vst.msk [vmem:[%s731 + $0x10] sm:$0xf] %vm2512, %v2425
      %2518 = vst.msk [vmem:[%s731 + $0x14] sm:$0xf] %vm2512, %v2427
      %2519 = vst.msk [vmem:[%s731 + $0x18] sm:$0xf] %vm2512, %v2429
      %2520 = vst.msk [vmem:[%s731 + $0x1c] sm:$0xf] %vm2512, %v2431
      %2521 = vst.msk [vmem:[%s731 + $0x20] sm:$0xf] %vm2512, %v2433
      %2522 = vst.msk [vmem:[%s731 + $0x24] sm:$0xf] %vm2512, %v2435
      %2523 = vst.msk [vmem:[%s731 + $0x28] sm:$0xf] %vm2512, %v2437
      %2524 = vst.msk [vmem:[%s731 + $0x2c] sm:$0xf] %vm2512, %v2439
      %2525 = vst.msk [vmem:[%s731 + $0x30] sm:$0xf] %vm2512, %v2441
      %2526 = vst.msk [vmem:[%s731 + $0x34] sm:$0xf] %vm2512, %v2443
      %2527 = vst.msk [vmem:[%s731 + $0x38] sm:$0xf] %vm2512, %v2445
      %2528 = vst.msk [vmem:[%s731 + $0x3c] sm:$0xf] %vm2512, %v2447
      %2529 = vst.msk [vmem:[%s731 + $0x40] sm:$0xf] %vm2512, %v2449
      %2530 = vst.msk [vmem:[%s731 + $0x44] sm:$0xf] %vm2512, %v2451
      %2531 = vst.msk [vmem:[%s731 + $0x48] sm:$0xf] %vm2512, %v2453
      %2532 = vst.msk [vmem:[%s731 + $0x4c] sm:$0xf] %vm2512, %v2455
      %2533 = vst.msk [vmem:[%s731 + $0x50] sm:$0xf] %vm2512, %v2457
      %2534 = vst.msk [vmem:[%s731 + $0x54] sm:$0xf] %vm2512, %v2459
      %2535 = vst.msk [vmem:[%s731 + $0x58] sm:$0xf] %vm2512, %v2461
      %2536 = vst.msk [vmem:[%s731 + $0x5c] sm:$0xf] %vm2512, %v2463
      %2537 = vst.msk [vmem:[%s731 + $0x60] sm:$0xf] %vm2512, %v2465
      %2538 = vst.msk [vmem:[%s731 + $0x64] sm:$0xf] %vm2512, %v2467
      %2539 = vst.msk [vmem:[%s731 + $0x68] sm:$0xf] %vm2512, %v2469
      %2540 = vst.msk [vmem:[%s731 + $0x6c] sm:$0xf] %vm2512, %v2471
      %2541 = vst.msk [vmem:[%s731 + $0x70] sm:$0xf] %vm2512, %v2473
      %2542 = vst.msk [vmem:[%s731 + $0x74] sm:$0xf] %vm2512, %v2475
      %2543 = vst.msk [vmem:[%s731 + $0x78] sm:$0xf] %vm2512, %v2477
      %2544 = vst.msk [vmem:[%s731 + $0x7c] sm:$0xf] %vm2512, %v2479
      %vm2545 = vcmask 1040384
      %vm2546 = vcmask 1044484
      %vm2547 = vmor %vm2545, %vm2546
      %v2548 = vrot.slane %v667, 7
      %v2549 = vrot.slane %v2548, 4
      %v2550 = vrot.slane %v668, 7
      %v2551 = vsel %vm2547, %v2549, %v2550
      %v2552 = vrot.slane %v2550, 4
      %v2553 = vrot.slane %v813, 7
      %v2554 = vsel %vm2547, %v2552, %v2553
      %v2555 = vrot.slane %v669, 7
      %v2556 = vrot.slane %v2555, 4
      %v2557 = vrot.slane %v670, 7
      %v2558 = vsel %vm2547, %v2556, %v2557
      %v2559 = vrot.slane %v2557, 4
      %v2560 = vrot.slane %v814, 7
      %v2561 = vsel %vm2547, %v2559, %v2560
      %v2562 = vrot.slane %v671, 7
      %v2563 = vrot.slane %v2562, 4
      %v2564 = vrot.slane %v672, 7
      %v2565 = vsel %vm2547, %v2563, %v2564
      %v2566 = vrot.slane %v2564, 4
      %v2567 = vrot.slane %v815, 7
      %v2568 = vsel %vm2547, %v2566, %v2567
      %v2569 = vrot.slane %v673, 7
      %v2570 = vrot.slane %v2569, 4
      %v2571 = vrot.slane %v674, 7
      %v2572 = vsel %vm2547, %v2570, %v2571
      %v2573 = vrot.slane %v2571, 4
      %v2574 = vrot.slane %v816, 7
      %v2575 = vsel %vm2547, %v2573, %v2574
      %v2576 = vrot.slane %v675, 7
      %v2577 = vrot.slane %v2576, 4
      %v2578 = vrot.slane %v676, 7
      %v2579 = vsel %vm2547, %v2577, %v2578
      %v2580 = vrot.slane %v2578, 4
      %v2581 = vrot.slane %v817, 7
      %v2582 = vsel %vm2547, %v2580, %v2581
      %v2583 = vrot.slane %v677, 7
      %v2584 = vrot.slane %v2583, 4
      %v2585 = vrot.slane %v678, 7
      %v2586 = vsel %vm2547, %v2584, %v2585
      %v2587 = vrot.slane %v2585, 4
      %v2588 = vrot.slane %v818, 7
      %v2589 = vsel %vm2547, %v2587, %v2588
      %v2590 = vrot.slane %v679, 7
      %v2591 = vrot.slane %v2590, 4
      %v2592 = vrot.slane %v680, 7
      %v2593 = vsel %vm2547, %v2591, %v2592
      %v2594 = vrot.slane %v2592, 4
      %v2595 = vrot.slane %v819, 7
      %v2596 = vsel %vm2547, %v2594, %v2595
      %v2597 = vrot.slane %v681, 7
      %v2598 = vrot.slane %v2597, 4
      %v2599 = vrot.slane %v682, 7
      %v2600 = vsel %vm2547, %v2598, %v2599
      %v2601 = vrot.slane %v2599, 4
      %v2602 = vrot.slane %v820, 7
      %v2603 = vsel %vm2547, %v2601, %v2602
      %v2604 = vrot.slane %v683, 7
      %v2605 = vrot.slane %v2604, 4
      %v2606 = vrot.slane %v684, 7
      %v2607 = vsel %vm2547, %v2605, %v2606
      %v2608 = vrot.slane %v2606, 4
      %v2609 = vrot.slane %v821, 7
      %v2610 = vsel %vm2547, %v2608, %v2609
      %v2611 = vrot.slane %v685, 7
      %v2612 = vrot.slane %v2611, 4
      %v2613 = vrot.slane %v686, 7
      %v2614 = vsel %vm2547, %v2612, %v2613
      %v2615 = vrot.slane %v2613, 4
      %v2616 = vrot.slane %v822, 7
      %v2617 = vsel %vm2547, %v2615, %v2616
      %v2618 = vrot.slane %v687, 7
      %v2619 = vrot.slane %v2618, 4
      %v2620 = vrot.slane %v688, 7
      %v2621 = vsel %vm2547, %v2619, %v2620
      %v2622 = vrot.slane %v2620, 4
      %v2623 = vrot.slane %v823, 7
      %v2624 = vsel %vm2547, %v2622, %v2623
      %v2625 = vrot.slane %v689, 7
      %v2626 = vrot.slane %v2625, 4
      %v2627 = vrot.slane %v690, 7
      %v2628 = vsel %vm2547, %v2626, %v2627
      %v2629 = vrot.slane %v2627, 4
      %v2630 = vrot.slane %v824, 7
      %v2631 = vsel %vm2547, %v2629, %v2630
      %v2632 = vrot.slane %v691, 7
      %v2633 = vrot.slane %v2632, 4
      %v2634 = vrot.slane %v692, 7
      %v2635 = vsel %vm2547, %v2633, %v2634
      %v2636 = vrot.slane %v2634, 4
      %v2637 = vrot.slane %v825, 7
      %v2638 = vsel %vm2547, %v2636, %v2637
      %v2639 = vrot.slane %v693, 7
      %v2640 = vrot.slane %v2639, 4
      %v2641 = vrot.slane %v694, 7
      %v2642 = vsel %vm2547, %v2640, %v2641
      %v2643 = vrot.slane %v2641, 4
      %v2644 = vrot.slane %v826, 7
      %v2645 = vsel %vm2547, %v2643, %v2644
      %v2646 = vrot.slane %v695, 7
      %v2647 = vrot.slane %v2646, 4
      %v2648 = vrot.slane %v696, 7
      %v2649 = vsel %vm2547, %v2647, %v2648
      %v2650 = vrot.slane %v2648, 4
      %v2651 = vrot.slane %v827, 7
      %v2652 = vsel %vm2547, %v2650, %v2651
      %v2653 = vrot.slane %v697, 7
      %v2654 = vrot.slane %v2653, 4
      %v2655 = vrot.slane %v698, 7
      %v2656 = vsel %vm2547, %v2654, %v2655
      %v2657 = vrot.slane %v2655, 4
      %v2658 = vrot.slane %v828, 7
      %v2659 = vsel %vm2547, %v2657, %v2658
      %2660 = vrot.lane.b32.xlu0 %v2551, 24
      %v2661 = vpop.permute.xlu0 %2660
      %2662 = vrot.lane.b32.xlu0 %v2554, 24
      %v2663 = vpop.permute.xlu0 %2662
      %2664 = vrot.lane.b32.xlu0 %v2558, 24
      %v2665 = vpop.permute.xlu0 %2664
      %2666 = vrot.lane.b32.xlu0 %v2561, 24
      %v2667 = vpop.permute.xlu0 %2666
      %2668 = vrot.lane.b32.xlu0 %v2565, 24
      %v2669 = vpop.permute.xlu0 %2668
      %2670 = vrot.lane.b32.xlu0 %v2568, 24
      %v2671 = vpop.permute.xlu0 %2670
      %2672 = vrot.lane.b32.xlu0 %v2572, 24
      %v2673 = vpop.permute.xlu0 %2672
      %2674 = vrot.lane.b32.xlu0 %v2575, 24
      %v2675 = vpop.permute.xlu0 %2674
      %2676 = vrot.lane.b32.xlu0 %v2579, 24
      %v2677 = vpop.permute.xlu0 %2676
      %2678 = vrot.lane.b32.xlu0 %v2582, 24
      %v2679 = vpop.permute.xlu0 %2678
      %2680 = vrot.lane.b32.xlu0 %v2586, 24
      %v2681 = vpop.permute.xlu0 %2680
      %2682 = vrot.lane.b32.xlu0 %v2589, 24
      %v2683 = vpop.permute.xlu0 %2682
      %2684 = vrot.lane.b32.xlu0 %v2593, 24
      %v2685 = vpop.permute.xlu0 %2684
      %2686 = vrot.lane.b32.xlu0 %v2596, 24
      %v2687 = vpop.permute.xlu0 %2686
      %2688 = vrot.lane.b32.xlu0 %v2600, 24
      %v2689 = vpop.permute.xlu0 %2688
      %2690 = vrot.lane.b32.xlu0 %v2603, 24
      %v2691 = vpop.permute.xlu0 %2690
      %2692 = vrot.lane.b32.xlu0 %v2607, 24
      %v2693 = vpop.permute.xlu0 %2692
      %2694 = vrot.lane.b32.xlu0 %v2610, 24
      %v2695 = vpop.permute.xlu0 %2694
      %2696 = vrot.lane.b32.xlu0 %v2614, 24
      %v2697 = vpop.permute.xlu0 %2696
      %2698 = vrot.lane.b32.xlu0 %v2617, 24
      %v2699 = vpop.permute.xlu0 %2698
      %2700 = vrot.lane.b32.xlu0 %v2621, 24
      %v2701 = vpop.permute.xlu0 %2700
      %2702 = vrot.lane.b32.xlu0 %v2624, 24
      %v2703 = vpop.permute.xlu0 %2702
      %2704 = vrot.lane.b32.xlu0 %v2628, 24
      %v2705 = vpop.permute.xlu0 %2704
      %2706 = vrot.lane.b32.xlu0 %v2631, 24
      %v2707 = vpop.permute.xlu0 %2706
      %2708 = vrot.lane.b32.xlu0 %v2635, 24
      %v2709 = vpop.permute.xlu0 %2708
      %2710 = vrot.lane.b32.xlu0 %v2638, 24
      %v2711 = vpop.permute.xlu0 %2710
      %2712 = vrot.lane.b32.xlu0 %v2642, 24
      %v2713 = vpop.permute.xlu0 %2712
      %2714 = vrot.lane.b32.xlu0 %v2645, 24
      %v2715 = vpop.permute.xlu0 %2714
      %2716 = vrot.lane.b32.xlu0 %v2649, 24
      %v2717 = vpop.permute.xlu0 %2716
      %2718 = vrot.lane.b32.xlu0 %v2652, 24
      %v2719 = vpop.permute.xlu0 %2718
      %2720 = vrot.lane.b32.xlu0 %v2656, 24
      %v2721 = vpop.permute.xlu0 %2720
      %2722 = vrot.lane.b32.xlu0 %v2659, 24
      %v2723 = vpop.permute.xlu0 %2722
      %vm2756 = vcmask 224448
      %2757 = vst.msk [vmem:[%s731] sm:$0xf] %vm2756, %v2661
      %2758 = vst.msk [vmem:[%s731 + $0x4] sm:$0xf] %vm2756, %v2663
      %2759 = vst.msk [vmem:[%s731 + $0x8] sm:$0xf] %vm2756, %v2665
      %2760 = vst.msk [vmem:[%s731 + $0xc] sm:$0xf] %vm2756, %v2667
      %2761 = vst.msk [vmem:[%s731 + $0x10] sm:$0xf] %vm2756, %v2669
      %2762 = vst.msk [vmem:[%s731 + $0x14] sm:$0xf] %vm2756, %v2671
      %2763 = vst.msk [vmem:[%s731 + $0x18] sm:$0xf] %vm2756, %v2673
      %2764 = vst.msk [vmem:[%s731 + $0x1c] sm:$0xf] %vm2756, %v2675
      %2765 = vst.msk [vmem:[%s731 + $0x20] sm:$0xf] %vm2756, %v2677
      %2766 = vst.msk [vmem:[%s731 + $0x24] sm:$0xf] %vm2756, %v2679
      %2767 = vst.msk [vmem:[%s731 + $0x28] sm:$0xf] %vm2756, %v2681
      %2768 = vst.msk [vmem:[%s731 + $0x2c] sm:$0xf] %vm2756, %v2683
      %2769 = vst.msk [vmem:[%s731 + $0x30] sm:$0xf] %vm2756, %v2685
      %2770 = vst.msk [vmem:[%s731 + $0x34] sm:$0xf] %vm2756, %v2687
      %2771 = vst.msk [vmem:[%s731 + $0x38] sm:$0xf] %vm2756, %v2689
      %2772 = vst.msk [vmem:[%s731 + $0x3c] sm:$0xf] %vm2756, %v2691
      %2773 = vst.msk [vmem:[%s731 + $0x40] sm:$0xf] %vm2756, %v2693
      %2774 = vst.msk [vmem:[%s731 + $0x44] sm:$0xf] %vm2756, %v2695
      %2775 = vst.msk [vmem:[%s731 + $0x48] sm:$0xf] %vm2756, %v2697
      %2776 = vst.msk [vmem:[%s731 + $0x4c] sm:$0xf] %vm2756, %v2699
      %2777 = vst.msk [vmem:[%s731 + $0x50] sm:$0xf] %vm2756, %v2701
      %2778 = vst.msk [vmem:[%s731 + $0x54] sm:$0xf] %vm2756, %v2703
      %2779 = vst.msk [vmem:[%s731 + $0x58] sm:$0xf] %vm2756, %v2705
      %2780 = vst.msk [vmem:[%s731 + $0x5c] sm:$0xf] %vm2756, %v2707
      %2781 = vst.msk [vmem:[%s731 + $0x60] sm:$0xf] %vm2756, %v2709
      %2782 = vst.msk [vmem:[%s731 + $0x64] sm:$0xf] %vm2756, %v2711
      %2783 = vst.msk [vmem:[%s731 + $0x68] sm:$0xf] %vm2756, %v2713
      %2784 = vst.msk [vmem:[%s731 + $0x6c] sm:$0xf] %vm2756, %v2715
      %2785 = vst.msk [vmem:[%s731 + $0x70] sm:$0xf] %vm2756, %v2717
      %2786 = vst.msk [vmem:[%s731 + $0x74] sm:$0xf] %vm2756, %v2719
      %2787 = vst.msk [vmem:[%s731 + $0x78] sm:$0xf] %vm2756, %v2721
      %2788 = vst.msk [vmem:[%s731 + $0x7c] sm:$0xf] %vm2756, %v2723
      %vm2789 = vsmask.f32 256
      %vm2790 = vsmask.f32 4368
      %vm2791 = vmor %vm2789, %vm2790
      %v2792 = vrot.slane %v833, 7
      %v2793 = vrot.slane %v2792, 4
      %v2794 = vrot.slane %v846, 7
      %v2795 = vor.u32 %v2794, %v842
      %v2796 = vsel %vm2791, %v2793, %v2795
      %v2797 = vrot.slane %v2794, 4
      %v2798 = vrot.slane %v1601, 7
      %v2799 = vor.u32 %v2798, %v852
      %v2800 = vsel %vm2791, %v2797, %v2799
      %v2801 = vrot.slane %v857, 7
      %v2802 = vrot.slane %v2801, 4
      %v2803 = vrot.slane %v870, 7
      %v2804 = vor.u32 %v2803, %v866
      %v2805 = vsel %vm2791, %v2802, %v2804
      %v2806 = vrot.slane %v2803, 4
      %v2807 = vrot.slane %v1616, 7
      %v2808 = vor.u32 %v2807, %v876
      %v2809 = vsel %vm2791, %v2806, %v2808
      %v2810 = vrot.slane %v881, 7
      %v2811 = vrot.slane %v2810, 4
      %v2812 = vrot.slane %v894, 7
      %v2813 = vor.u32 %v2812, %v890
      %v2814 = vsel %vm2791, %v2811, %v2813
      %v2815 = vrot.slane %v2812, 4
      %v2816 = vrot.slane %v1631, 7
      %v2817 = vor.u32 %v2816, %v900
      %v2818 = vsel %vm2791, %v2815, %v2817
      %v2819 = vrot.slane %v905, 7
      %v2820 = vrot.slane %v2819, 4
      %v2821 = vrot.slane %v918, 7
      %v2822 = vor.u32 %v2821, %v914
      %v2823 = vsel %vm2791, %v2820, %v2822
      %v2824 = vrot.slane %v2821, 4
      %v2825 = vrot.slane %v1646, 7
      %v2826 = vor.u32 %v2825, %v924
      %v2827 = vsel %vm2791, %v2824, %v2826
      %v2828 = vrot.slane %v929, 7
      %v2829 = vrot.slane %v2828, 4
      %v2830 = vrot.slane %v942, 7
      %v2831 = vor.u32 %v2830, %v938
      %v2832 = vsel %vm2791, %v2829, %v2831
      %v2833 = vrot.slane %v2830, 4
      %v2834 = vrot.slane %v1661, 7
      %v2835 = vor.u32 %v2834, %v948
      %v2836 = vsel %vm2791, %v2833, %v2835
      %v2837 = vrot.slane %v953, 7
      %v2838 = vrot.slane %v2837, 4
      %v2839 = vrot.slane %v966, 7
      %v2840 = vor.u32 %v2839, %v962
      %v2841 = vsel %vm2791, %v2838, %v2840
      %v2842 = vrot.slane %v2839, 4
      %v2843 = vrot.slane %v1676, 7
      %v2844 = vor.u32 %v2843, %v972
      %v2845 = vsel %vm2791, %v2842, %v2844
      %v2846 = vrot.slane %v977, 7
      %v2847 = vrot.slane %v2846, 4
      %v2848 = vrot.slane %v990, 7
      %v2849 = vor.u32 %v2848, %v986
      %v2850 = vsel %vm2791, %v2847, %v2849
      %v2851 = vrot.slane %v2848, 4
      %v2852 = vrot.slane %v1691, 7
      %v2853 = vor.u32 %v2852, %v996
      %v2854 = vsel %vm2791, %v2851, %v2853
      %v2855 = vrot.slane %v1001, 7
      %v2856 = vrot.slane %v2855, 4
      %v2857 = vrot.slane %v1014, 7
      %v2858 = vor.u32 %v2857, %v1010
      %v2859 = vsel %vm2791, %v2856, %v2858
      %v2860 = vrot.slane %v2857, 4
      %v2861 = vrot.slane %v1706, 7
      %v2862 = vor.u32 %v2861, %v1020
      %v2863 = vsel %vm2791, %v2860, %v2862
      %v2864 = vrot.slane %v1025, 7
      %v2865 = vrot.slane %v2864, 4
      %v2866 = vrot.slane %v1038, 7
      %v2867 = vor.u32 %v2866, %v1034
      %v2868 = vsel %vm2791, %v2865, %v2867
      %v2869 = vrot.slane %v2866, 4
      %v2870 = vrot.slane %v1721, 7
      %v2871 = vor.u32 %v2870, %v1044
      %v2872 = vsel %vm2791, %v2869, %v2871
      %v2873 = vrot.slane %v1049, 7
      %v2874 = vrot.slane %v2873, 4
      %v2875 = vrot.slane %v1062, 7
      %v2876 = vor.u32 %v2875, %v1058
      %v2877 = vsel %vm2791, %v2874, %v2876
      %v2878 = vrot.slane %v2875, 4
      %v2879 = vrot.slane %v1736, 7
      %v2880 = vor.u32 %v2879, %v1068
      %v2881 = vsel %vm2791, %v2878, %v2880
      %v2882 = vrot.slane %v1073, 7
      %v2883 = vrot.slane %v2882, 4
      %v2884 = vrot.slane %v1086, 7
      %v2885 = vor.u32 %v2884, %v1082
      %v2886 = vsel %vm2791, %v2883, %v2885
      %v2887 = vrot.slane %v2884, 4
      %v2888 = vrot.slane %v1751, 7
      %v2889 = vor.u32 %v2888, %v1092
      %v2890 = vsel %vm2791, %v2887, %v2889
      %v2891 = vrot.slane %v1097, 7
      %v2892 = vrot.slane %v2891, 4
      %v2893 = vrot.slane %v1110, 7
      %v2894 = vor.u32 %v2893, %v1106
      %v2895 = vsel %vm2791, %v2892, %v2894
      %v2896 = vrot.slane %v2893, 4
      %v2897 = vrot.slane %v1766, 7
      %v2898 = vor.u32 %v2897, %v1116
      %v2899 = vsel %vm2791, %v2896, %v2898
      %v2900 = vrot.slane %v1121, 7
      %v2901 = vrot.slane %v2900, 4
      %v2902 = vrot.slane %v1134, 7
      %v2903 = vor.u32 %v2902, %v1130
      %v2904 = vsel %vm2791, %v2901, %v2903
      %v2905 = vrot.slane %v2902, 4
      %v2906 = vrot.slane %v1781, 7
      %v2907 = vor.u32 %v2906, %v1140
      %v2908 = vsel %vm2791, %v2905, %v2907
      %v2909 = vrot.slane %v1145, 7
      %v2910 = vrot.slane %v2909, 4
      %v2911 = vrot.slane %v1158, 7
      %v2912 = vor.u32 %v2911, %v1154
      %v2913 = vsel %vm2791, %v2910, %v2912
      %v2914 = vrot.slane %v2911, 4
      %v2915 = vrot.slane %v1796, 7
      %v2916 = vor.u32 %v2915, %v1164
      %v2917 = vsel %vm2791, %v2914, %v2916
      %v2918 = vrot.slane %v1169, 7
      %v2919 = vrot.slane %v2918, 4
      %v2920 = vrot.slane %v1182, 7
      %v2921 = vor.u32 %v2920, %v1178
      %v2922 = vsel %vm2791, %v2919, %v2921
      %v2923 = vrot.slane %v2920, 4
      %v2924 = vrot.slane %v1811, 7
      %v2925 = vor.u32 %v2924, %v1188
      %v2926 = vsel %vm2791, %v2923, %v2925
      %v2927 = vrot.slane %v1193, 7
      %v2928 = vrot.slane %v2927, 4
      %v2929 = vrot.slane %v1206, 7
      %v2930 = vor.u32 %v2929, %v1202
      %v2931 = vsel %vm2791, %v2928, %v2930
      %v2932 = vrot.slane %v2929, 4
      %v2933 = vrot.slane %v1826, 7
      %v2934 = vor.u32 %v2933, %v1212
      %v2935 = vsel %vm2791, %v2932, %v2934
      %2936 = vrot.lane.b32.xlu0 %v2796, 28
      %v2937 = vpop.permute.xlu0 %2936
      %2938 = vrot.lane.b32.xlu0 %v2800, 28
      %v2939 = vpop.permute.xlu0 %2938
      %2940 = vrot.lane.b32.xlu0 %v2805, 28
      %v2941 = vpop.permute.xlu0 %2940
      %2942 = vrot.lane.b32.xlu0 %v2809, 28
      %v2943 = vpop.permute.xlu0 %2942
      %2944 = vrot.lane.b32.xlu0 %v2814, 28
      %v2945 = vpop.permute.xlu0 %2944
      %2946 = vrot.lane.b32.xlu0 %v2818, 28
      %v2947 = vpop.permute.xlu0 %2946
      %2948 = vrot.lane.b32.xlu0 %v2823, 28
      %v2949 = vpop.permute.xlu0 %2948
      %2950 = vrot.lane.b32.xlu0 %v2827, 28
      %v2951 = vpop.permute.xlu0 %2950
      %2952 = vrot.lane.b32.xlu0 %v2832, 28
      %v2953 = vpop.permute.xlu0 %2952
      %2954 = vrot.lane.b32.xlu0 %v2836, 28
      %v2955 = vpop.permute.xlu0 %2954
      %2956 = vrot.lane.b32.xlu0 %v2841, 28
      %v2957 = vpop.permute.xlu0 %2956
      %2958 = vrot.lane.b32.xlu0 %v2845, 28
      %v2959 = vpop.permute.xlu0 %2958
      %2960 = vrot.lane.b32.xlu0 %v2850, 28
      %v2961 = vpop.permute.xlu0 %2960
      %2962 = vrot.lane.b32.xlu0 %v2854, 28
      %v2963 = vpop.permute.xlu0 %2962
      %2964 = vrot.lane.b32.xlu0 %v2859, 28
      %v2965 = vpop.permute.xlu0 %2964
      %2966 = vrot.lane.b32.xlu0 %v2863, 28
      %v2967 = vpop.permute.xlu0 %2966
      %2968 = vrot.lane.b32.xlu0 %v2868, 28
      %v2969 = vpop.permute.xlu0 %2968
      %2970 = vrot.lane.b32.xlu0 %v2872, 28
      %v2971 = vpop.permute.xlu0 %2970
      %2972 = vrot.lane.b32.xlu0 %v2877, 28
      %v2973 = vpop.permute.xlu0 %2972
      %2974 = vrot.lane.b32.xlu0 %v2881, 28
      %v2975 = vpop.permute.xlu0 %2974
      %2976 = vrot.lane.b32.xlu0 %v2886, 28
      %v2977 = vpop.permute.xlu0 %2976
      %2978 = vrot.lane.b32.xlu0 %v2890, 28
      %v2979 = vpop.permute.xlu0 %2978
      %2980 = vrot.lane.b32.xlu0 %v2895, 28
      %v2981 = vpop.permute.xlu0 %2980
      %2982 = vrot.lane.b32.xlu0 %v2899, 28
      %v2983 = vpop.permute.xlu0 %2982
      %2984 = vrot.lane.b32.xlu0 %v2904, 28
      %v2985 = vpop.permute.xlu0 %2984
      %2986 = vrot.lane.b32.xlu0 %v2908, 28
      %v2987 = vpop.permute.xlu0 %2986
      %2988 = vrot.lane.b32.xlu0 %v2913, 28
      %v2989 = vpop.permute.xlu0 %2988
      %2990 = vrot.lane.b32.xlu0 %v2917, 28
      %v2991 = vpop.permute.xlu0 %2990
      %2992 = vrot.lane.b32.xlu0 %v2922, 28
      %v2993 = vpop.permute.xlu0 %2992
      %2994 = vrot.lane.b32.xlu0 %v2926, 28
      %v2995 = vpop.permute.xlu0 %2994
      %2996 = vrot.lane.b32.xlu0 %v2931, 28
      %v2997 = vpop.permute.xlu0 %2996
      %2998 = vrot.lane.b32.xlu0 %v2935, 28
      %v2999 = vpop.permute.xlu0 %2998
      %vm3032 = vcmask 257248
      %3033 = vst.msk [vmem:[%s731] sm:$0xf] %vm3032, %v2937
      %3034 = vst.msk [vmem:[%s731 + $0x4] sm:$0xf] %vm3032, %v2939
      %3035 = vst.msk [vmem:[%s731 + $0x8] sm:$0xf] %vm3032, %v2941
      %3036 = vst.msk [vmem:[%s731 + $0xc] sm:$0xf] %vm3032, %v2943
      %3037 = vst.msk [vmem:[%s731 + $0x10] sm:$0xf] %vm3032, %v2945
      %3038 = vst.msk [vmem:[%s731 + $0x14] sm:$0xf] %vm3032, %v2947
      %3039 = vst.msk [vmem:[%s731 + $0x18] sm:$0xf] %vm3032, %v2949
      %3040 = vst.msk [vmem:[%s731 + $0x1c] sm:$0xf] %vm3032, %v2951
      %3041 = vst.msk [vmem:[%s731 + $0x20] sm:$0xf] %vm3032, %v2953
      %3042 = vst.msk [vmem:[%s731 + $0x24] sm:$0xf] %vm3032, %v2955
      %3043 = vst.msk [vmem:[%s731 + $0x28] sm:$0xf] %vm3032, %v2957
      %3044 = vst.msk [vmem:[%s731 + $0x2c] sm:$0xf] %vm3032, %v2959
      %3045 = vst.msk [vmem:[%s731 + $0x30] sm:$0xf] %vm3032, %v2961
      %3046 = vst.msk [vmem:[%s731 + $0x34] sm:$0xf] %vm3032, %v2963
      %3047 = vst.msk [vmem:[%s731 + $0x38] sm:$0xf] %vm3032, %v2965
      %3048 = vst.msk [vmem:[%s731 + $0x3c] sm:$0xf] %vm3032, %v2967
      %3049 = vst.msk [vmem:[%s731 + $0x40] sm:$0xf] %vm3032, %v2969
      %3050 = vst.msk [vmem:[%s731 + $0x44] sm:$0xf] %vm3032, %v2971
      %3051 = vst.msk [vmem:[%s731 + $0x48] sm:$0xf] %vm3032, %v2973
      %3052 = vst.msk [vmem:[%s731 + $0x4c] sm:$0xf] %vm3032, %v2975
      %3053 = vst.msk [vmem:[%s731 + $0x50] sm:$0xf] %vm3032, %v2977
      %3054 = vst.msk [vmem:[%s731 + $0x54] sm:$0xf] %vm3032, %v2979
      %3055 = vst.msk [vmem:[%s731 + $0x58] sm:$0xf] %vm3032, %v2981
      %3056 = vst.msk [vmem:[%s731 + $0x5c] sm:$0xf] %vm3032, %v2983
      %3057 = vst.msk [vmem:[%s731 + $0x60] sm:$0xf] %vm3032, %v2985
      %3058 = vst.msk [vmem:[%s731 + $0x64] sm:$0xf] %vm3032, %v2987
      %3059 = vst.msk [vmem:[%s731 + $0x68] sm:$0xf] %vm3032, %v2989
      %3060 = vst.msk [vmem:[%s731 + $0x6c] sm:$0xf] %vm3032, %v2991
      %3061 = vst.msk [vmem:[%s731 + $0x70] sm:$0xf] %vm3032, %v2993
      %3062 = vst.msk [vmem:[%s731 + $0x74] sm:$0xf] %vm3032, %v2995
      %3063 = vst.msk [vmem:[%s731 + $0x78] sm:$0xf] %vm3032, %v2997
      %3064 = vst.msk [vmem:[%s731 + $0x7c] sm:$0xf] %vm3032, %v2999
      %v3065 = vpack.c.bf16 %v587, %v477
      %v3066 = vpack.c.bf16 %v588, %v480
      %v3067 = vpack.c.bf16 %v589, %v483
      %v3068 = vpack.c.bf16 %v590, %v486
      %v3069 = vpack.c.bf16 %v591, %v489
      %v3070 = vpack.c.bf16 %v592, %v492
      %v3071 = vpack.c.bf16 %v593, %v495
      %v3072 = vpack.c.bf16 %v594, %v498
      %v3073 = vpack.c.bf16 %v595, %v501
      %v3074 = vpack.c.bf16 %v596, %v504
      %v3075 = vpack.c.bf16 %v597, %v507
      %v3076 = vpack.c.bf16 %v598, %v510
      %v3077 = vpack.c.bf16 %v599, %v513
      %v3078 = vpack.c.bf16 %v600, %v516
      %v3079 = vpack.c.bf16 %v601, %v519
      %v3080 = vpack.c.bf16 %v602, %v522
      %v3097 = vunpack.c.l.b16 %v3065
      %v3098 = vunpack.c.h.b16 %v3065
      %v3099 = vunpack.c.l.b16 %v3066
      %v3100 = vunpack.c.h.b16 %v3066
      %v3101 = vunpack.c.l.b16 %v3067
      %v3102 = vunpack.c.h.b16 %v3067
      %v3103 = vunpack.c.l.b16 %v3068
      %v3104 = vunpack.c.h.b16 %v3068
      %v3105 = vunpack.c.l.b16 %v3069
      %v3106 = vunpack.c.h.b16 %v3069
      %v3107 = vunpack.c.l.b16 %v3070
      %v3108 = vunpack.c.h.b16 %v3070
      %v3109 = vunpack.c.l.b16 %v3071
      %v3110 = vunpack.c.h.b16 %v3071
      %v3111 = vunpack.c.l.b16 %v3072
      %v3112 = vunpack.c.h.b16 %v3072
      %v3113 = vunpack.c.l.b16 %v3073
      %v3114 = vunpack.c.h.b16 %v3073
      %v3115 = vunpack.c.l.b16 %v3074
      %v3116 = vunpack.c.h.b16 %v3074
      %v3117 = vunpack.c.l.b16 %v3075
      %v3118 = vunpack.c.h.b16 %v3075
      %v3119 = vunpack.c.l.b16 %v3076
      %v3120 = vunpack.c.h.b16 %v3076
      %v3121 = vunpack.c.l.b16 %v3077
      %v3122 = vunpack.c.h.b16 %v3077
      %v3123 = vunpack.c.l.b16 %v3078
      %v3124 = vunpack.c.h.b16 %v3078
      %v3125 = vunpack.c.l.b16 %v3079
      %v3126 = vunpack.c.h.b16 %v3079
      %v3127 = vunpack.c.l.b16 %v3080
      %v3128 = vunpack.c.h.b16 %v3080
      %v3129 = vpack.c.b16 %v3097, %v3097
      %v3130 = vpack.c.b16 %v3098, %v3098
      %v3131 = vpack.c.b16 %v3099, %v3099
      %v3132 = vpack.c.b16 %v3100, %v3100
      %v3133 = vpack.c.b16 %v3101, %v3101
      %v3134 = vpack.c.b16 %v3102, %v3102
      %v3135 = vpack.c.b16 %v3103, %v3103
      %v3136 = vpack.c.b16 %v3104, %v3104
      %v3137 = vpack.c.b16 %v3105, %v3105
      %v3138 = vpack.c.b16 %v3106, %v3106
      %v3139 = vpack.c.b16 %v3107, %v3107
      %v3140 = vpack.c.b16 %v3108, %v3108
      %v3141 = vpack.c.b16 %v3109, %v3109
      %v3142 = vpack.c.b16 %v3110, %v3110
      %v3143 = vpack.c.b16 %v3111, %v3111
      %v3144 = vpack.c.b16 %v3112, %v3112
      %v3145 = vpack.c.b16 %v3113, %v3113
      %v3146 = vpack.c.b16 %v3114, %v3114
      %v3147 = vpack.c.b16 %v3115, %v3115
      %v3148 = vpack.c.b16 %v3116, %v3116
      %v3149 = vpack.c.b16 %v3117, %v3117
      %v3150 = vpack.c.b16 %v3118, %v3118
      %v3151 = vpack.c.b16 %v3119, %v3119
      %v3152 = vpack.c.b16 %v3120, %v3120
      %v3153 = vpack.c.b16 %v3121, %v3121
      %v3154 = vpack.c.b16 %v3122, %v3122
      %v3155 = vpack.c.b16 %v3123, %v3123
      %v3156 = vpack.c.b16 %v3124, %v3124
      %v3157 = vpack.c.b16 %v3125, %v3125
      %v3158 = vpack.c.b16 %v3126, %v3126
      %v3159 = vpack.c.b16 %v3127, %v3127
      %v3160 = vpack.c.b16 %v3128, %v3128
      %3161 = vrot.lane.b32.xlu0 %v3129, 32
      %v3162 = vpop.permute.xlu0 %3161
      %3163 = vrot.lane.b32.xlu0 %v3130, 32
      %v3164 = vpop.permute.xlu0 %3163
      %3165 = vrot.lane.b32.xlu0 %v3131, 32
      %v3166 = vpop.permute.xlu0 %3165
      %3167 = vrot.lane.b32.xlu0 %v3132, 32
      %v3168 = vpop.permute.xlu0 %3167
      %3169 = vrot.lane.b32.xlu0 %v3133, 32
      %v3170 = vpop.permute.xlu0 %3169
      %3171 = vrot.lane.b32.xlu0 %v3134, 32
      %v3172 = vpop.permute.xlu0 %3171
      %3173 = vrot.lane.b32.xlu0 %v3135, 32
      %v3174 = vpop.permute.xlu0 %3173
      %3175 = vrot.lane.b32.xlu0 %v3136, 32
      %v3176 = vpop.permute.xlu0 %3175
      %3177 = vrot.lane.b32.xlu0 %v3137, 32
      %v3178 = vpop.permute.xlu0 %3177
      %3179 = vrot.lane.b32.xlu0 %v3138, 32
      %v3180 = vpop.permute.xlu0 %3179
      %3181 = vrot.lane.b32.xlu0 %v3139, 32
      %v3182 = vpop.permute.xlu0 %3181
      %3183 = vrot.lane.b32.xlu0 %v3140, 32
      %v3184 = vpop.permute.xlu0 %3183
      %3185 = vrot.lane.b32.xlu0 %v3141, 32
      %v3186 = vpop.permute.xlu0 %3185
      %3187 = vrot.lane.b32.xlu0 %v3142, 32
      %v3188 = vpop.permute.xlu0 %3187
      %3189 = vrot.lane.b32.xlu0 %v3143, 32
      %v3190 = vpop.permute.xlu0 %3189
      %3191 = vrot.lane.b32.xlu0 %v3144, 32
      %v3192 = vpop.permute.xlu0 %3191
      %3193 = vrot.lane.b32.xlu0 %v3145, 32
      %v3194 = vpop.permute.xlu0 %3193
      %3195 = vrot.lane.b32.xlu0 %v3146, 32
      %v3196 = vpop.permute.xlu0 %3195
      %3197 = vrot.lane.b32.xlu0 %v3147, 32
      %v3198 = vpop.permute.xlu0 %3197
      %3199 = vrot.lane.b32.xlu0 %v3148, 32
      %v3200 = vpop.permute.xlu0 %3199
      %3201 = vrot.lane.b32.xlu0 %v3149, 32
      %v3202 = vpop.permute.xlu0 %3201
      %3203 = vrot.lane.b32.xlu0 %v3150, 32
      %v3204 = vpop.permute.xlu0 %3203
      %3205 = vrot.lane.b32.xlu0 %v3151, 32
      %v3206 = vpop.permute.xlu0 %3205
      %3207 = vrot.lane.b32.xlu0 %v3152, 32
      %v3208 = vpop.permute.xlu0 %3207
      %3209 = vrot.lane.b32.xlu0 %v3153, 32
      %v3210 = vpop.permute.xlu0 %3209
      %3211 = vrot.lane.b32.xlu0 %v3154, 32
      %v3212 = vpop.permute.xlu0 %3211
      %3213 = vrot.lane.b32.xlu0 %v3155, 32
      %v3214 = vpop.permute.xlu0 %3213
      %3215 = vrot.lane.b32.xlu0 %v3156, 32
      %v3216 = vpop.permute.xlu0 %3215
      %3217 = vrot.lane.b32.xlu0 %v3157, 32
      %v3218 = vpop.permute.xlu0 %3217
      %3219 = vrot.lane.b32.xlu0 %v3158, 32
      %v3220 = vpop.permute.xlu0 %3219
      %3221 = vrot.lane.b32.xlu0 %v3159, 32
      %v3222 = vpop.permute.xlu0 %3221
      %3223 = vrot.lane.b32.xlu0 %v3160, 32
      %v3224 = vpop.permute.xlu0 %3223
      %vm3257 = vcmask 290048
      %3258 = vst.msk [vmem:[%s731] sm:$0xf] %vm3257, %v3162
      %3259 = vst.msk [vmem:[%s731 + $0x4] sm:$0xf] %vm3257, %v3164
      %3260 = vst.msk [vmem:[%s731 + $0x8] sm:$0xf] %vm3257, %v3166
      %3261 = vst.msk [vmem:[%s731 + $0xc] sm:$0xf] %vm3257, %v3168
      %3262 = vst.msk [vmem:[%s731 + $0x10] sm:$0xf] %vm3257, %v3170
      %3263 = vst.msk [vmem:[%s731 + $0x14] sm:$0xf] %vm3257, %v3172
      %3264 = vst.msk [vmem:[%s731 + $0x18] sm:$0xf] %vm3257, %v3174
      %3265 = vst.msk [vmem:[%s731 + $0x1c] sm:$0xf] %vm3257, %v3176
      %3266 = vst.msk [vmem:[%s731 + $0x20] sm:$0xf] %vm3257, %v3178
      %3267 = vst.msk [vmem:[%s731 + $0x24] sm:$0xf] %vm3257, %v3180
      %3268 = vst.msk [vmem:[%s731 + $0x28] sm:$0xf] %vm3257, %v3182
      %3269 = vst.msk [vmem:[%s731 + $0x2c] sm:$0xf] %vm3257, %v3184
      %3270 = vst.msk [vmem:[%s731 + $0x30] sm:$0xf] %vm3257, %v3186
      %3271 = vst.msk [vmem:[%s731 + $0x34] sm:$0xf] %vm3257, %v3188
      %3272 = vst.msk [vmem:[%s731 + $0x38] sm:$0xf] %vm3257, %v3190
      %3273 = vst.msk [vmem:[%s731 + $0x3c] sm:$0xf] %vm3257, %v3192
      %3274 = vst.msk [vmem:[%s731 + $0x40] sm:$0xf] %vm3257, %v3194
      %3275 = vst.msk [vmem:[%s731 + $0x44] sm:$0xf] %vm3257, %v3196
      %3276 = vst.msk [vmem:[%s731 + $0x48] sm:$0xf] %vm3257, %v3198
      %3277 = vst.msk [vmem:[%s731 + $0x4c] sm:$0xf] %vm3257, %v3200
      %3278 = vst.msk [vmem:[%s731 + $0x50] sm:$0xf] %vm3257, %v3202
      %3279 = vst.msk [vmem:[%s731 + $0x54] sm:$0xf] %vm3257, %v3204
      %3280 = vst.msk [vmem:[%s731 + $0x58] sm:$0xf] %vm3257, %v3206
      %3281 = vst.msk [vmem:[%s731 + $0x5c] sm:$0xf] %vm3257, %v3208
      %3282 = vst.msk [vmem:[%s731 + $0x60] sm:$0xf] %vm3257, %v3210
      %3283 = vst.msk [vmem:[%s731 + $0x64] sm:$0xf] %vm3257, %v3212
      %3284 = vst.msk [vmem:[%s731 + $0x68] sm:$0xf] %vm3257, %v3214
      %3285 = vst.msk [vmem:[%s731 + $0x6c] sm:$0xf] %vm3257, %v3216
      %3286 = vst.msk [vmem:[%s731 + $0x70] sm:$0xf] %vm3257, %v3218
      %3287 = vst.msk [vmem:[%s731 + $0x74] sm:$0xf] %vm3257, %v3220
      %3288 = vst.msk [vmem:[%s731 + $0x78] sm:$0xf] %vm3257, %v3222
      %3289 = vst.msk [vmem:[%s731 + $0x7c] sm:$0xf] %vm3257, %v3224
      %v3290 = vpack.c.bf16 0.0, 0.0
      %v3292 = vunpack.c.l.b16 %v3290
      %v3293 = vpack.c.b16 %v3292, %v3292
      %v3295 = vshrl.u32 %v3129, 16
      %v3297 = vrot.slane %v3295, 4
      %v3298 = vshll.u32 %v3129, 16
      %v3300 = vrot.slane %v3298, 5
      %v3301 = vor.u32 %v3297, %v3300
      %v3302 = vrot.slane %v3301, 4
      %v3304 = vshll.u32 %v3130, 16
      %v3306 = vrot.slane %v3304, 5
      %v3307 = vsel %vm831, %v3302, %v3306
      %v3308 = vshrl.u32 %v3130, 16
      %v3310 = vrot.slane %v3308, 4
      %v3311 = vor.u32 %v3310, %v3306
      %v3312 = vrot.slane %v3311, 4
      %v3314 = vshll.u32 %v3293, 16
      %v3316 = vrot.slane %v3314, 5
      %v3317 = vsel %vm831, %v3312, %v3316
      %v3319 = vshrl.u32 %v3131, 16
      %v3321 = vrot.slane %v3319, 4
      %v3322 = vshll.u32 %v3131, 16
      %v3324 = vrot.slane %v3322, 5
      %v3325 = vor.u32 %v3321, %v3324
      %v3326 = vrot.slane %v3325, 4
      %v3328 = vshll.u32 %v3132, 16
      %v3330 = vrot.slane %v3328, 5
      %v3331 = vsel %vm831, %v3326, %v3330
      %v3332 = vshrl.u32 %v3132, 16
      %v3334 = vrot.slane %v3332, 4
      %v3335 = vor.u32 %v3334, %v3330
      %v3336 = vrot.slane %v3335, 4
      %v3337 = vsel %vm831, %v3336, %v3316
      %v3339 = vshrl.u32 %v3133, 16
      %v3341 = vrot.slane %v3339, 4
      %v3342 = vshll.u32 %v3133, 16
      %v3344 = vrot.slane %v3342, 5
      %v3345 = vor.u32 %v3341, %v3344
      %v3346 = vrot.slane %v3345, 4
      %v3348 = vshll.u32 %v3134, 16
      %v3350 = vrot.slane %v3348, 5
      %v3351 = vsel %vm831, %v3346, %v3350
      %v3352 = vshrl.u32 %v3134, 16
      %v3354 = vrot.slane %v3352, 4
      %v3355 = vor.u32 %v3354, %v3350
      %v3356 = vrot.slane %v3355, 4
      %v3357 = vsel %vm831, %v3356, %v3316
      %v3359 = vshrl.u32 %v3135, 16
      %v3361 = vrot.slane %v3359, 4
      %v3362 = vshll.u32 %v3135, 16
      %v3364 = vrot.slane %v3362, 5
      %v3365 = vor.u32 %v3361, %v3364
      %v3366 = vrot.slane %v3365, 4
      %v3368 = vshll.u32 %v3136, 16
      %v3370 = vrot.slane %v3368, 5
      %v3371 = vsel %vm831, %v3366, %v3370
      %v3372 = vshrl.u32 %v3136, 16
      %v3374 = vrot.slane %v3372, 4
      %v3375 = vor.u32 %v3374, %v3370
      %v3376 = vrot.slane %v3375, 4
      %v3377 = vsel %vm831, %v3376, %v3316
      %v3379 = vshrl.u32 %v3137, 16
      %v3381 = vrot.slane %v3379, 4
      %v3382 = vshll.u32 %v3137, 16
      %v3384 = vrot.slane %v3382, 5
      %v3385 = vor.u32 %v3381, %v3384
      %v3386 = vrot.slane %v3385, 4
      %v3388 = vshll.u32 %v3138, 16
      %v3390 = vrot.slane %v3388, 5
      %v3391 = vsel %vm831, %v3386, %v3390
      %v3392 = vshrl.u32 %v3138, 16
      %v3394 = vrot.slane %v3392, 4
      %v3395 = vor.u32 %v3394, %v3390
      %v3396 = vrot.slane %v3395, 4
      %v3397 = vsel %vm831, %v3396, %v3316
      %v3399 = vshrl.u32 %v3139, 16
      %v3401 = vrot.slane %v3399, 4
      %v3402 = vshll.u32 %v3139, 16
      %v3404 = vrot.slane %v3402, 5
      %v3405 = vor.u32 %v3401, %v3404
      %v3406 = vrot.slane %v3405, 4
      %v3408 = vshll.u32 %v3140, 16
      %v3410 = vrot.slane %v3408, 5
      %v3411 = vsel %vm831, %v3406, %v3410
      %v3412 = vshrl.u32 %v3140, 16
      %v3414 = vrot.slane %v3412, 4
      %v3415 = vor.u32 %v3414, %v3410
      %v3416 = vrot.slane %v3415, 4
      %v3417 = vsel %vm831, %v3416, %v3316
      %v3419 = vshrl.u32 %v3141, 16
      %v3421 = vrot.slane %v3419, 4
      %v3422 = vshll.u32 %v3141, 16
      %v3424 = vrot.slane %v3422, 5
      %v3425 = vor.u32 %v3421, %v3424
      %v3426 = vrot.slane %v3425, 4
      %v3428 = vshll.u32 %v3142, 16
      %v3430 = vrot.slane %v3428, 5
      %v3431 = vsel %vm831, %v3426, %v3430
      %v3432 = vshrl.u32 %v3142, 16
      %v3434 = vrot.slane %v3432, 4
      %v3435 = vor.u32 %v3434, %v3430
      %v3436 = vrot.slane %v3435, 4
      %v3437 = vsel %vm831, %v3436, %v3316
      %v3439 = vshrl.u32 %v3143, 16
      %v3441 = vrot.slane %v3439, 4
      %v3442 = vshll.u32 %v3143, 16
      %v3444 = vrot.slane %v3442, 5
      %v3445 = vor.u32 %v3441, %v3444
      %v3446 = vrot.slane %v3445, 4
      %v3448 = vshll.u32 %v3144, 16
      %v3450 = vrot.slane %v3448, 5
      %v3451 = vsel %vm831, %v3446, %v3450
      %v3452 = vshrl.u32 %v3144, 16
      %v3454 = vrot.slane %v3452, 4
      %v3455 = vor.u32 %v3454, %v3450
      %v3456 = vrot.slane %v3455, 4
      %v3457 = vsel %vm831, %v3456, %v3316
      %v3459 = vshrl.u32 %v3145, 16
      %v3461 = vrot.slane %v3459, 4
      %v3462 = vshll.u32 %v3145, 16
      %v3464 = vrot.slane %v3462, 5
      %v3465 = vor.u32 %v3461, %v3464
      %v3466 = vrot.slane %v3465, 4
      %v3468 = vshll.u32 %v3146, 16
      %v3470 = vrot.slane %v3468, 5
      %v3471 = vsel %vm831, %v3466, %v3470
      %v3472 = vshrl.u32 %v3146, 16
      %v3474 = vrot.slane %v3472, 4
      %v3475 = vor.u32 %v3474, %v3470
      %v3476 = vrot.slane %v3475, 4
      %v3477 = vsel %vm831, %v3476, %v3316
      %v3479 = vshrl.u32 %v3147, 16
      %v3481 = vrot.slane %v3479, 4
      %v3482 = vshll.u32 %v3147, 16
      %v3484 = vrot.slane %v3482, 5
      %v3485 = vor.u32 %v3481, %v3484
      %v3486 = vrot.slane %v3485, 4
      %v3488 = vshll.u32 %v3148, 16
      %v3490 = vrot.slane %v3488, 5
      %v3491 = vsel %vm831, %v3486, %v3490
      %v3492 = vshrl.u32 %v3148, 16
      %v3494 = vrot.slane %v3492, 4
      %v3495 = vor.u32 %v3494, %v3490
      %v3496 = vrot.slane %v3495, 4
      %v3497 = vsel %vm831, %v3496, %v3316
      %v3499 = vshrl.u32 %v3149, 16
      %v3501 = vrot.slane %v3499, 4
      %v3502 = vshll.u32 %v3149, 16
      %v3504 = vrot.slane %v3502, 5
      %v3505 = vor.u32 %v3501, %v3504
      %v3506 = vrot.slane %v3505, 4
      %v3508 = vshll.u32 %v3150, 16
      %v3510 = vrot.slane %v3508, 5
      %v3511 = vsel %vm831, %v3506, %v3510
      %v3512 = vshrl.u32 %v3150, 16
      %v3514 = vrot.slane %v3512, 4
      %v3515 = vor.u32 %v3514, %v3510
      %v3516 = vrot.slane %v3515, 4
      %v3517 = vsel %vm831, %v3516, %v3316
      %v3519 = vshrl.u32 %v3151, 16
      %v3521 = vrot.slane %v3519, 4
      %v3522 = vshll.u32 %v3151, 16
      %v3524 = vrot.slane %v3522, 5
      %v3525 = vor.u32 %v3521, %v3524
      %v3526 = vrot.slane %v3525, 4
      %v3528 = vshll.u32 %v3152, 16
      %v3530 = vrot.slane %v3528, 5
      %v3531 = vsel %vm831, %v3526, %v3530
      %v3532 = vshrl.u32 %v3152, 16
      %v3534 = vrot.slane %v3532, 4
      %v3535 = vor.u32 %v3534, %v3530
      %v3536 = vrot.slane %v3535, 4
      %v3537 = vsel %vm831, %v3536, %v3316
      %v3539 = vshrl.u32 %v3153, 16
      %v3541 = vrot.slane %v3539, 4
      %v3542 = vshll.u32 %v3153, 16
      %v3544 = vrot.slane %v3542, 5
      %v3545 = vor.u32 %v3541, %v3544
      %v3546 = vrot.slane %v3545, 4
      %v3548 = vshll.u32 %v3154, 16
      %v3550 = vrot.slane %v3548, 5
      %v3551 = vsel %vm831, %v3546, %v3550
      %v3552 = vshrl.u32 %v3154, 16
      %v3554 = vrot.slane %v3552, 4
      %v3555 = vor.u32 %v3554, %v3550
      %v3556 = vrot.slane %v3555, 4
      %v3557 = vsel %vm831, %v3556, %v3316
      %v3559 = vshrl.u32 %v3155, 16
      %v3561 = vrot.slane %v3559, 4
      %v3562 = vshll.u32 %v3155, 16
      %v3564 = vrot.slane %v3562, 5
      %v3565 = vor.u32 %v3561, %v3564
      %v3566 = vrot.slane %v3565, 4
      %v3568 = vshll.u32 %v3156, 16
      %v3570 = vrot.slane %v3568, 5
      %v3571 = vsel %vm831, %v3566, %v3570
      %v3572 = vshrl.u32 %v3156, 16
      %v3574 = vrot.slane %v3572, 4
      %v3575 = vor.u32 %v3574, %v3570
      %v3576 = vrot.slane %v3575, 4
      %v3577 = vsel %vm831, %v3576, %v3316
      %v3579 = vshrl.u32 %v3157, 16
      %v3581 = vrot.slane %v3579, 4
      %v3582 = vshll.u32 %v3157, 16
      %v3584 = vrot.slane %v3582, 5
      %v3585 = vor.u32 %v3581, %v3584
      %v3586 = vrot.slane %v3585, 4
      %v3588 = vshll.u32 %v3158, 16
      %v3590 = vrot.slane %v3588, 5
      %v3591 = vsel %vm831, %v3586, %v3590
      %v3592 = vshrl.u32 %v3158, 16
      %v3594 = vrot.slane %v3592, 4
      %v3595 = vor.u32 %v3594, %v3590
      %v3596 = vrot.slane %v3595, 4
      %v3597 = vsel %vm831, %v3596, %v3316
      %v3599 = vshrl.u32 %v3159, 16
      %v3601 = vrot.slane %v3599, 4
      %v3602 = vshll.u32 %v3159, 16
      %v3604 = vrot.slane %v3602, 5
      %v3605 = vor.u32 %v3601, %v3604
      %v3606 = vrot.slane %v3605, 4
      %v3608 = vshll.u32 %v3160, 16
      %v3610 = vrot.slane %v3608, 5
      %v3611 = vsel %vm831, %v3606, %v3610
      %v3612 = vshrl.u32 %v3160, 16
      %v3614 = vrot.slane %v3612, 4
      %v3615 = vor.u32 %v3614, %v3610
      %v3616 = vrot.slane %v3615, 4
      %v3617 = vsel %vm831, %v3616, %v3316
      %3618 = vrot.lane.b32.xlu0 %v3307, 36
      %v3619 = vpop.permute.xlu0 %3618
      %3620 = vrot.lane.b32.xlu0 %v3317, 36
      %v3621 = vpop.permute.xlu0 %3620
      %3622 = vrot.lane.b32.xlu0 %v3331, 36
      %v3623 = vpop.permute.xlu0 %3622
      %3624 = vrot.lane.b32.xlu0 %v3337, 36
      %v3625 = vpop.permute.xlu0 %3624
      %3626 = vrot.lane.b32.xlu0 %v3351, 36
      %v3627 = vpop.permute.xlu0 %3626
      %3628 = vrot.lane.b32.xlu0 %v3357, 36
      %v3629 = vpop.permute.xlu0 %3628
      %3630 = vrot.lane.b32.xlu0 %v3371, 36
      %v3631 = vpop.permute.xlu0 %3630
      %3632 = vrot.lane.b32.xlu0 %v3377, 36
      %v3633 = vpop.permute.xlu0 %3632
      %3634 = vrot.lane.b32.xlu0 %v3391, 36
      %v3635 = vpop.permute.xlu0 %3634
      %3636 = vrot.lane.b32.xlu0 %v3397, 36
      %v3637 = vpop.permute.xlu0 %3636
      %3638 = vrot.lane.b32.xlu0 %v3411, 36
      %v3639 = vpop.permute.xlu0 %3638
      %3640 = vrot.lane.b32.xlu0 %v3417, 36
      %v3641 = vpop.permute.xlu0 %3640
      %3642 = vrot.lane.b32.xlu0 %v3431, 36
      %v3643 = vpop.permute.xlu0 %3642
      %3644 = vrot.lane.b32.xlu0 %v3437, 36
      %v3645 = vpop.permute.xlu0 %3644
      %3646 = vrot.lane.b32.xlu0 %v3451, 36
      %v3647 = vpop.permute.xlu0 %3646
      %3648 = vrot.lane.b32.xlu0 %v3457, 36
      %v3649 = vpop.permute.xlu0 %3648
      %3650 = vrot.lane.b32.xlu0 %v3471, 36
      %v3651 = vpop.permute.xlu0 %3650
      %3652 = vrot.lane.b32.xlu0 %v3477, 36
      %v3653 = vpop.permute.xlu0 %3652
      %3654 = vrot.lane.b32.xlu0 %v3491, 36
      %v3655 = vpop.permute.xlu0 %3654
      %3656 = vrot.lane.b32.xlu0 %v3497, 36
      %v3657 = vpop.permute.xlu0 %3656
      %3658 = vrot.lane.b32.xlu0 %v3511, 36
      %v3659 = vpop.permute.xlu0 %3658
      %3660 = vrot.lane.b32.xlu0 %v3517, 36
      %v3661 = vpop.permute.xlu0 %3660
      %3662 = vrot.lane.b32.xlu0 %v3531, 36
      %v3663 = vpop.permute.xlu0 %3662
      %3664 = vrot.lane.b32.xlu0 %v3537, 36
      %v3665 = vpop.permute.xlu0 %3664
      %3666 = vrot.lane.b32.xlu0 %v3551, 36
      %v3667 = vpop.permute.xlu0 %3666
      %3668 = vrot.lane.b32.xlu0 %v3557, 36
      %v3669 = vpop.permute.xlu0 %3668
      %3670 = vrot.lane.b32.xlu0 %v3571, 36
      %v3671 = vpop.permute.xlu0 %3670
      %3672 = vrot.lane.b32.xlu0 %v3577, 36
      %v3673 = vpop.permute.xlu0 %3672
      %3674 = vrot.lane.b32.xlu0 %v3591, 36
      %v3675 = vpop.permute.xlu0 %3674
      %3676 = vrot.lane.b32.xlu0 %v3597, 36
      %v3677 = vpop.permute.xlu0 %3676
      %3678 = vrot.lane.b32.xlu0 %v3611, 36
      %v3679 = vpop.permute.xlu0 %3678
      %3680 = vrot.lane.b32.xlu0 %v3617, 36
      %v3681 = vpop.permute.xlu0 %3680
      %vm3714 = vcmask 322848
      %3715 = vst.msk [vmem:[%s731] sm:$0xf] %vm3714, %v3619
      %3716 = vst.msk [vmem:[%s731 + $0x4] sm:$0xf] %vm3714, %v3621
      %3717 = vst.msk [vmem:[%s731 + $0x8] sm:$0xf] %vm3714, %v3623
      %3718 = vst.msk [vmem:[%s731 + $0xc] sm:$0xf] %vm3714, %v3625
      %3719 = vst.msk [vmem:[%s731 + $0x10] sm:$0xf] %vm3714, %v3627
      %3720 = vst.msk [vmem:[%s731 + $0x14] sm:$0xf] %vm3714, %v3629
      %3721 = vst.msk [vmem:[%s731 + $0x18] sm:$0xf] %vm3714, %v3631
      %3722 = vst.msk [vmem:[%s731 + $0x1c] sm:$0xf] %vm3714, %v3633
      %3723 = vst.msk [vmem:[%s731 + $0x20] sm:$0xf] %vm3714, %v3635
      %3724 = vst.msk [vmem:[%s731 + $0x24] sm:$0xf] %vm3714, %v3637
      %3725 = vst.msk [vmem:[%s731 + $0x28] sm:$0xf] %vm3714, %v3639
      %3726 = vst.msk [vmem:[%s731 + $0x2c] sm:$0xf] %vm3714, %v3641
      %3727 = vst.msk [vmem:[%s731 + $0x30] sm:$0xf] %vm3714, %v3643
      %3728 = vst.msk [vmem:[%s731 + $0x34] sm:$0xf] %vm3714, %v3645
      %3729 = vst.msk [vmem:[%s731 + $0x38] sm:$0xf] %vm3714, %v3647
      %3730 = vst.msk [vmem:[%s731 + $0x3c] sm:$0xf] %vm3714, %v3649
      %3731 = vst.msk [vmem:[%s731 + $0x40] sm:$0xf] %vm3714, %v3651
      %3732 = vst.msk [vmem:[%s731 + $0x44] sm:$0xf] %vm3714, %v3653
      %3733 = vst.msk [vmem:[%s731 + $0x48] sm:$0xf] %vm3714, %v3655
      %3734 = vst.msk [vmem:[%s731 + $0x4c] sm:$0xf] %vm3714, %v3657
      %3735 = vst.msk [vmem:[%s731 + $0x50] sm:$0xf] %vm3714, %v3659
      %3736 = vst.msk [vmem:[%s731 + $0x54] sm:$0xf] %vm3714, %v3661
      %3737 = vst.msk [vmem:[%s731 + $0x58] sm:$0xf] %vm3714, %v3663
      %3738 = vst.msk [vmem:[%s731 + $0x5c] sm:$0xf] %vm3714, %v3665
      %3739 = vst.msk [vmem:[%s731 + $0x60] sm:$0xf] %vm3714, %v3667
      %3740 = vst.msk [vmem:[%s731 + $0x64] sm:$0xf] %vm3714, %v3669
      %3741 = vst.msk [vmem:[%s731 + $0x68] sm:$0xf] %vm3714, %v3671
      %3742 = vst.msk [vmem:[%s731 + $0x6c] sm:$0xf] %vm3714, %v3673
      %3743 = vst.msk [vmem:[%s731 + $0x70] sm:$0xf] %vm3714, %v3675
      %3744 = vst.msk [vmem:[%s731 + $0x74] sm:$0xf] %vm3714, %v3677
      %3745 = vst.msk [vmem:[%s731 + $0x78] sm:$0xf] %vm3714, %v3679
      %3746 = vst.msk [vmem:[%s731 + $0x7c] sm:$0xf] %vm3714, %v3681
      %v3747 = vrot.slane %v3129, 5
      %v3748 = vrot.slane %v3747, 4
      %v3749 = vrot.slane %v3130, 5
      %v3750 = vsel %vm1347, %v3748, %v3749
      %v3751 = vrot.slane %v3749, 4
      %v3752 = vrot.slane %v3293, 5
      %v3753 = vsel %vm1347, %v3751, %v3752
      %v3754 = vrot.slane %v3131, 5
      %v3755 = vrot.slane %v3754, 4
      %v3756 = vrot.slane %v3132, 5
      %v3757 = vsel %vm1347, %v3755, %v3756
      %v3758 = vrot.slane %v3756, 4
      %v3759 = vsel %vm1347, %v3758, %v3752
      %v3760 = vrot.slane %v3133, 5
      %v3761 = vrot.slane %v3760, 4
      %v3762 = vrot.slane %v3134, 5
      %v3763 = vsel %vm1347, %v3761, %v3762
      %v3764 = vrot.slane %v3762, 4
      %v3765 = vsel %vm1347, %v3764, %v3752
      %v3766 = vrot.slane %v3135, 5
      %v3767 = vrot.slane %v3766, 4
      %v3768 = vrot.slane %v3136, 5
      %v3769 = vsel %vm1347, %v3767, %v3768
      %v3770 = vrot.slane %v3768, 4
      %v3771 = vsel %vm1347, %v3770, %v3752
      %v3772 = vrot.slane %v3137, 5
      %v3773 = vrot.slane %v3772, 4
      %v3774 = vrot.slane %v3138, 5
      %v3775 = vsel %vm1347, %v3773, %v3774
      %v3776 = vrot.slane %v3774, 4
      %v3777 = vsel %vm1347, %v3776, %v3752
      %v3778 = vrot.slane %v3139, 5
      %v3779 = vrot.slane %v3778, 4
      %v3780 = vrot.slane %v3140, 5
      %v3781 = vsel %vm1347, %v3779, %v3780
      %v3782 = vrot.slane %v3780, 4
      %v3783 = vsel %vm1347, %v3782, %v3752
      %v3784 = vrot.slane %v3141, 5
      %v3785 = vrot.slane %v3784, 4
      %v3786 = vrot.slane %v3142, 5
      %v3787 = vsel %vm1347, %v3785, %v3786
      %v3788 = vrot.slane %v3786, 4
      %v3789 = vsel %vm1347, %v3788, %v3752
      %v3790 = vrot.slane %v3143, 5
      %v3791 = vrot.slane %v3790, 4
      %v3792 = vrot.slane %v3144, 5
      %v3793 = vsel %vm1347, %v3791, %v3792
      %v3794 = vrot.slane %v3792, 4
      %v3795 = vsel %vm1347, %v3794, %v3752
      %v3796 = vrot.slane %v3145, 5
      %v3797 = vrot.slane %v3796, 4
      %v3798 = vrot.slane %v3146, 5
      %v3799 = vsel %vm1347, %v3797, %v3798
      %v3800 = vrot.slane %v3798, 4
      %v3801 = vsel %vm1347, %v3800, %v3752
      %v3802 = vrot.slane %v3147, 5
      %v3803 = vrot.slane %v3802, 4
      %v3804 = vrot.slane %v3148, 5
      %v3805 = vsel %vm1347, %v3803, %v3804
      %v3806 = vrot.slane %v3804, 4
      %v3807 = vsel %vm1347, %v3806, %v3752
      %v3808 = vrot.slane %v3149, 5
      %v3809 = vrot.slane %v3808, 4
      %v3810 = vrot.slane %v3150, 5
      %v3811 = vsel %vm1347, %v3809, %v3810
      %v3812 = vrot.slane %v3810, 4
      %v3813 = vsel %vm1347, %v3812, %v3752
      %v3814 = vrot.slane %v3151, 5
      %v3815 = vrot.slane %v3814, 4
      %v3816 = vrot.slane %v3152, 5
      %v3817 = vsel %vm1347, %v3815, %v3816
      %v3818 = vrot.slane %v3816, 4
      %v3819 = vsel %vm1347, %v3818, %v3752
      %v3820 = vrot.slane %v3153, 5
      %v3821 = vrot.slane %v3820, 4
      %v3822 = vrot.slane %v3154, 5
      %v3823 = vsel %vm1347, %v3821, %v3822
      %v3824 = vrot.slane %v3822, 4
      %v3825 = vsel %vm1347, %v3824, %v3752
      %v3826 = vrot.slane %v3155, 5
      %v3827 = vrot.slane %v3826, 4
      %v3828 = vrot.slane %v3156, 5
      %v3829 = vsel %vm1347, %v3827, %v3828
      %v3830 = vrot.slane %v3828, 4
      %v3831 = vsel %vm1347, %v3830, %v3752
      %v3832 = vrot.slane %v3157, 5
      %v3833 = vrot.slane %v3832, 4
      %v3834 = vrot.slane %v3158, 5
      %v3835 = vsel %vm1347, %v3833, %v3834
      %v3836 = vrot.slane %v3834, 4
      %v3837 = vsel %vm1347, %v3836, %v3752
      %v3838 = vrot.slane %v3159, 5
      %v3839 = vrot.slane %v3838, 4
      %v3840 = vrot.slane %v3160, 5
      %v3841 = vsel %vm1347, %v3839, %v3840
      %v3842 = vrot.slane %v3840, 4
      %v3843 = vsel %vm1347, %v3842, %v3752
      %3844 = vrot.lane.b32.xlu0 %v3750, 40
      %v3845 = vpop.permute.xlu0 %3844
      %3846 = vrot.lane.b32.xlu0 %v3753, 40
      %v3847 = vpop.permute.xlu0 %3846
      %3848 = vrot.lane.b32.xlu0 %v3757, 40
      %v3849 = vpop.permute.xlu0 %3848
      %3850 = vrot.lane.b32.xlu0 %v3759, 40
      %v3851 = vpop.permute.xlu0 %3850
      %3852 = vrot.lane.b32.xlu0 %v3763, 40
      %v3853 = vpop.permute.xlu0 %3852
      %3854 = vrot.lane.b32.xlu0 %v3765, 40
      %v3855 = vpop.permute.xlu0 %3854
      %3856 = vrot.lane.b32.xlu0 %v3769, 40
      %v3857 = vpop.permute.xlu0 %3856
      %3858 = vrot.lane.b32.xlu0 %v3771, 40
      %v3859 = vpop.permute.xlu0 %3858
      %3860 = vrot.lane.b32.xlu0 %v3775, 40
      %v3861 = vpop.permute.xlu0 %3860
      %3862 = vrot.lane.b32.xlu0 %v3777, 40
      %v3863 = vpop.permute.xlu0 %3862
      %3864 = vrot.lane.b32.xlu0 %v3781, 40
      %v3865 = vpop.permute.xlu0 %3864
      %3866 = vrot.lane.b32.xlu0 %v3783, 40
      %v3867 = vpop.permute.xlu0 %3866
      %3868 = vrot.lane.b32.xlu0 %v3787, 40
      %v3869 = vpop.permute.xlu0 %3868
      %3870 = vrot.lane.b32.xlu0 %v3789, 40
      %v3871 = vpop.permute.xlu0 %3870
      %3872 = vrot.lane.b32.xlu0 %v3793, 40
      %v3873 = vpop.permute.xlu0 %3872
      %3874 = vrot.lane.b32.xlu0 %v3795, 40
      %v3875 = vpop.permute.xlu0 %3874
      %3876 = vrot.lane.b32.xlu0 %v3799, 40
      %v3877 = vpop.permute.xlu0 %3876
      %3878 = vrot.lane.b32.xlu0 %v3801, 40
      %v3879 = vpop.permute.xlu0 %3878
      %3880 = vrot.lane.b32.xlu0 %v3805, 40
      %v3881 = vpop.permute.xlu0 %3880
      %3882 = vrot.lane.b32.xlu0 %v3807, 40
      %v3883 = vpop.permute.xlu0 %3882
      %3884 = vrot.lane.b32.xlu0 %v3811, 40
      %v3885 = vpop.permute.xlu0 %3884
      %3886 = vrot.lane.b32.xlu0 %v3813, 40
      %v3887 = vpop.permute.xlu0 %3886
      %3888 = vrot.lane.b32.xlu0 %v3817, 40
      %v3889 = vpop.permute.xlu0 %3888
      %3890 = vrot.lane.b32.xlu0 %v3819, 40
      %v3891 = vpop.permute.xlu0 %3890
      %3892 = vrot.lane.b32.xlu0 %v3823, 40
      %v3893 = vpop.permute.xlu0 %3892
      %3894 = vrot.lane.b32.xlu0 %v3825, 40
      %v3895 = vpop.permute.xlu0 %3894
      %3896 = vrot.lane.b32.xlu0 %v3829, 40
      %v3897 = vpop.permute.xlu0 %3896
      %3898 = vrot.lane.b32.xlu0 %v3831, 40
      %v3899 = vpop.permute.xlu0 %3898
      %3900 = vrot.lane.b32.xlu0 %v3835, 40
      %v3901 = vpop.permute.xlu0 %3900
      %3902 = vrot.lane.b32.xlu0 %v3837, 40
      %v3903 = vpop.permute.xlu0 %3902
      %3904 = vrot.lane.b32.xlu0 %v3841, 40
      %v3905 = vpop.permute.xlu0 %3904
      %3906 = vrot.lane.b32.xlu0 %v3843, 40
      %v3907 = vpop.permute.xlu0 %3906
      %vm3940 = vcmask 355648
      %3941 = vst.msk [vmem:[%s731] sm:$0xf] %vm3940, %v3845
      %3942 = vst.msk [vmem:[%s731 + $0x4] sm:$0xf] %vm3940, %v3847
      %3943 = vst.msk [vmem:[%s731 + $0x8] sm:$0xf] %vm3940, %v3849
      %3944 = vst.msk [vmem:[%s731 + $0xc] sm:$0xf] %vm3940, %v3851
      %3945 = vst.msk [vmem:[%s731 + $0x10] sm:$0xf] %vm3940, %v3853
      %3946 = vst.msk [vmem:[%s731 + $0x14] sm:$0xf] %vm3940, %v3855
      %3947 = vst.msk [vmem:[%s731 + $0x18] sm:$0xf] %vm3940, %v3857
      %3948 = vst.msk [vmem:[%s731 + $0x1c] sm:$0xf] %vm3940, %v3859
      %3949 = vst.msk [vmem:[%s731 + $0x20] sm:$0xf] %vm3940, %v3861
      %3950 = vst.msk [vmem:[%s731 + $0x24] sm:$0xf] %vm3940, %v3863
      %3951 = vst.msk [vmem:[%s731 + $0x28] sm:$0xf] %vm3940, %v3865
      %3952 = vst.msk [vmem:[%s731 + $0x2c] sm:$0xf] %vm3940, %v3867
      %3953 = vst.msk [vmem:[%s731 + $0x30] sm:$0xf] %vm3940, %v3869
      %3954 = vst.msk [vmem:[%s731 + $0x34] sm:$0xf] %vm3940, %v3871
      %3955 = vst.msk [vmem:[%s731 + $0x38] sm:$0xf] %vm3940, %v3873
      %3956 = vst.msk [vmem:[%s731 + $0x3c] sm:$0xf] %vm3940, %v3875
      %3957 = vst.msk [vmem:[%s731 + $0x40] sm:$0xf] %vm3940, %v3877
      %3958 = vst.msk [vmem:[%s731 + $0x44] sm:$0xf] %vm3940, %v3879
      %3959 = vst.msk [vmem:[%s731 + $0x48] sm:$0xf] %vm3940, %v3881
      %3960 = vst.msk [vmem:[%s731 + $0x4c] sm:$0xf] %vm3940, %v3883
      %3961 = vst.msk [vmem:[%s731 + $0x50] sm:$0xf] %vm3940, %v3885
      %3962 = vst.msk [vmem:[%s731 + $0x54] sm:$0xf] %vm3940, %v3887
      %3963 = vst.msk [vmem:[%s731 + $0x58] sm:$0xf] %vm3940, %v3889
      %3964 = vst.msk [vmem:[%s731 + $0x5c] sm:$0xf] %vm3940, %v3891
      %3965 = vst.msk [vmem:[%s731 + $0x60] sm:$0xf] %vm3940, %v3893
      %3966 = vst.msk [vmem:[%s731 + $0x64] sm:$0xf] %vm3940, %v3895
      %3967 = vst.msk [vmem:[%s731 + $0x68] sm:$0xf] %vm3940, %v3897
      %3968 = vst.msk [vmem:[%s731 + $0x6c] sm:$0xf] %vm3940, %v3899
      %3969 = vst.msk [vmem:[%s731 + $0x70] sm:$0xf] %vm3940, %v3901
      %3970 = vst.msk [vmem:[%s731 + $0x74] sm:$0xf] %vm3940, %v3903
      %3971 = vst.msk [vmem:[%s731 + $0x78] sm:$0xf] %vm3940, %v3905
      %3972 = vst.msk [vmem:[%s731 + $0x7c] sm:$0xf] %vm3940, %v3907
      %v3973 = vld [vmem:[#allocation2] sm:$0xf]
      %v3974 = vld [vmem:[#allocation2 + $0x4] sm:$0xf]
      %v3975 = vld [vmem:[#allocation2 + $0x8] sm:$0xf]
      %v3976 = vld [vmem:[#allocation2 + $0xc] sm:$0xf]
      %v3977 = vld [vmem:[#allocation2 + $0x10] sm:$0xf]
      %v3978 = vld [vmem:[#allocation2 + $0x14] sm:$0xf]
      %v3979 = vld [vmem:[#allocation2 + $0x18] sm:$0xf]
      %v3980 = vld [vmem:[#allocation2 + $0x1c] sm:$0xf]
      %v3981 = vld [vmem:[#allocation2 + $0x20] sm:$0xf]
      %v3982 = vld [vmem:[#allocation2 + $0x24] sm:$0xf]
      %v3983 = vld [vmem:[#allocation2 + $0x28] sm:$0xf]
      %v3984 = vld [vmem:[#allocation2 + $0x2c] sm:$0xf]
      %v3985 = vld [vmem:[#allocation2 + $0x30] sm:$0xf]
      %v3986 = vld [vmem:[#allocation2 + $0x34] sm:$0xf]
      %v3987 = vld [vmem:[#allocation2 + $0x38] sm:$0xf]
      %v3988 = vld [vmem:[#allocation2 + $0x3c] sm:$0xf]
      %v3989 = vld [vmem:[#allocation2 + $0x40] sm:$0xf]
      %v3990 = vld [vmem:[#allocation2 + $0x44] sm:$0xf]
      %v3991 = vld [vmem:[#allocation2 + $0x48] sm:$0xf]
      %v3992 = vld [vmem:[#allocation2 + $0x4c] sm:$0xf]
      %v3993 = vld [vmem:[#allocation2 + $0x50] sm:$0xf]
      %v3994 = vld [vmem:[#allocation2 + $0x54] sm:$0xf]
      %v3995 = vld [vmem:[#allocation2 + $0x58] sm:$0xf]
      %v3996 = vld [vmem:[#allocation2 + $0x5c] sm:$0xf]
      %v3997 = vld [vmem:[#allocation2 + $0x60] sm:$0xf]
      %v3998 = vld [vmem:[#allocation2 + $0x64] sm:$0xf]
      %v3999 = vld [vmem:[#allocation2 + $0x68] sm:$0xf]
      %v4000 = vld [vmem:[#allocation2 + $0x6c] sm:$0xf]
      %v4001 = vld [vmem:[#allocation2 + $0x70] sm:$0xf]
      %v4002 = vld [vmem:[#allocation2 + $0x74] sm:$0xf]
      %v4003 = vld [vmem:[#allocation2 + $0x78] sm:$0xf]
      %v4004 = vld [vmem:[#allocation2 + $0x7c] sm:$0xf]
      %v4005 = vld [vmem:[%s1] sm:$0xf]
      %v4006 = vld [vmem:[%s1 + $0x4] sm:$0xf]
      %v4007 = vld [vmem:[%s1 + $0x8] sm:$0xf]
      %v4008 = vld [vmem:[%s1 + $0xc] sm:$0xf]
      %v4009 = vld [vmem:[%s1 + $0x10] sm:$0xf]
      %v4010 = vld [vmem:[%s1 + $0x14] sm:$0x3]
      %s4011 = scalar_lea.vmem [#allocation2], 8
      %v4012 = vld [vmem:[%s4011] sm:$0xf]
      %v4013 = vld [vmem:[%s4011 + $0x4] sm:$0xf]
      %v4014 = vld [vmem:[%s4011 + $0x8] sm:$0xf]
      %v4015 = vld [vmem:[%s4011 + $0xc] sm:$0xf]
      %v4016 = vld [vmem:[%s4011 + $0x10] sm:$0xf]
      %v4017 = vld [vmem:[%s4011 + $0x14] sm:$0xf]
      %v4018 = vld [vmem:[%s4011 + $0x18] sm:$0xf]
      %v4019 = vld [vmem:[%s4011 + $0x1c] sm:$0xf]
      %v4020 = vld [vmem:[%s4011 + $0x20] sm:$0xf]
      %v4021 = vld [vmem:[%s4011 + $0x24] sm:$0xf]
      %v4022 = vld [vmem:[%s4011 + $0x28] sm:$0xf]
      %v4023 = vld [vmem:[%s4011 + $0x2c] sm:$0xf]
      %v4024 = vld [vmem:[%s4011 + $0x30] sm:$0xf]
      %v4025 = vld [vmem:[%s4011 + $0x34] sm:$0xf]
      %v4026 = vld [vmem:[%s4011 + $0x38] sm:$0xf]
      %v4027 = vld [vmem:[%s4011 + $0x3c] sm:$0xf]
      %v4028 = vld [vmem:[%s4011 + $0x40] sm:$0xf]
      %v4029 = vld [vmem:[%s4011 + $0x44] sm:$0xf]
      %v4030 = vld [vmem:[%s4011 + $0x48] sm:$0xf]
      %v4031 = vld [vmem:[%s4011 + $0x4c] sm:$0xf]
      %v4032 = vld [vmem:[%s4011 + $0x50] sm:$0xf]
      %v4033 = vld [vmem:[%s4011 + $0x54] sm:$0xf]
      %v4034 = vld [vmem:[%s4011 + $0x58] sm:$0xf]
      %v4035 = vld [vmem:[%s4011 + $0x5c] sm:$0xf]
      %v4036 = vld [vmem:[%s4011 + $0x60] sm:$0xf]
      %v4037 = vld [vmem:[%s4011 + $0x64] sm:$0xf]
      %v4038 = vld [vmem:[%s4011 + $0x68] sm:$0xf]
      %v4039 = vld [vmem:[%s4011 + $0x6c] sm:$0xf]
      %v4040 = vld [vmem:[%s4011 + $0x70] sm:$0xf]
      %v4041 = vld [vmem:[%s4011 + $0x74] sm:$0xf]
      %v4042 = vld [vmem:[%s4011 + $0x78] sm:$0xf]
      %v4043 = vld [vmem:[%s4011 + $0x7c] sm:$0xf]
      %s4044 = scalar_lea.vmem %s1, 24
      %v4045 = vld [vmem:[%s4044] sm:$0xf]
      %v4046 = vld [vmem:[%s4044 + $0x4] sm:$0xf]
      %v4047 = vld [vmem:[%s4044 + $0x8] sm:$0xf]
      %v4048 = vld [vmem:[%s4044 + $0xc] sm:$0xf]
      %v4049 = vld [vmem:[%s4044 + $0x10] sm:$0xf]
      %v4050 = vld [vmem:[%s4044 + $0x14] sm:$0x3]
      %v4083 = vunpack.c.l.b16 %v4012
      %v4084 = vunpack.c.l.b16 %v4013
      %v4085 = vunpack.c.l.b16 %v4014
      %v4086 = vunpack.c.l.b16 %v4015
      %v4087 = vunpack.c.l.b16 %v4016
      %v4088 = vunpack.c.l.b16 %v4017
      %v4089 = vunpack.c.l.b16 %v4018
      %v4090 = vunpack.c.l.b16 %v4019
      %v4091 = vunpack.c.l.b16 %v4020
      %v4092 = vunpack.c.l.b16 %v4021
      %v4093 = vunpack.c.l.b16 %v4022
      %v4094 = vunpack.c.l.b16 %v4023
      %v4095 = vunpack.c.l.b16 %v4024
      %v4096 = vunpack.c.l.b16 %v4025
      %v4097 = vunpack.c.l.b16 %v4026
      %v4098 = vunpack.c.l.b16 %v4027
      %v4099 = vunpack.c.l.b16 %v4028
      %v4100 = vunpack.c.l.b16 %v4029
      %v4101 = vunpack.c.l.b16 %v4030
      %v4102 = vunpack.c.l.b16 %v4031
      %v4103 = vunpack.c.l.b16 %v4032
      %v4104 = vunpack.c.l.b16 %v4033
      %v4105 = vunpack.c.l.b16 %v4034
      %v4106 = vunpack.c.l.b16 %v4035
      %v4107 = vunpack.c.l.b16 %v4036
      %v4108 = vunpack.c.l.b16 %v4037
      %v4109 = vunpack.c.l.b16 %v4038
      %v4110 = vunpack.c.l.b16 %v4039
      %v4111 = vunpack.c.l.b16 %v4040
      %v4112 = vunpack.c.l.b16 %v4041
      %v4113 = vunpack.c.l.b16 %v4042
      %v4114 = vunpack.c.l.b16 %v4043
      %v4115 = vpack.c.b16 %v4084, %v4083
      %v4116 = vpack.c.b16 %v4086, %v4085
      %v4117 = vpack.c.b16 %v4088, %v4087
      %v4118 = vpack.c.b16 %v4090, %v4089
      %v4119 = vpack.c.b16 %v4092, %v4091
      %v4120 = vpack.c.b16 %v4094, %v4093
      %v4121 = vpack.c.b16 %v4096, %v4095
      %v4122 = vpack.c.b16 %v4098, %v4097
      %v4123 = vpack.c.b16 %v4100, %v4099
      %v4124 = vpack.c.b16 %v4102, %v4101
      %v4125 = vpack.c.b16 %v4104, %v4103
      %v4126 = vpack.c.b16 %v4106, %v4105
      %v4127 = vpack.c.b16 %v4108, %v4107
      %v4128 = vpack.c.b16 %v4110, %v4109
      %v4129 = vpack.c.b16 %v4112, %v4111
      %v4130 = vpack.c.b16 %v4114, %v4113
      %v4137 = vunpack.c.l.b16 %v4045
      %v4138 = vunpack.c.l.b16 %v4046
      %v4139 = vunpack.c.l.b16 %v4047
      %v4140 = vunpack.c.l.b16 %v4048
      %v4141 = vunpack.c.l.b16 %v4049
      %v4142 = vunpack.c.l.b16 %v4050
      %v4143 = vpack.c.b16 %v4138, %v4137
      %v4144 = vpack.c.b16 %v4140, %v4139
      %v4145 = vpack.c.b16 %v4142, %v4141
      %vm4148 = vcmask 359424
      %v4150 = vsel %vm4148, %v4115, 0
      %v4153 = vsel %vm4148, %v4116, 0
      %v4156 = vsel %vm4148, %v4117, 0
      %v4159 = vsel %vm4148, %v4118, 0
      %v4162 = vsel %vm4148, %v4119, 0
      %v4165 = vsel %vm4148, %v4120, 0
      %v4168 = vsel %vm4148, %v4121, 0
      %v4171 = vsel %vm4148, %v4122, 0
      %v4174 = vsel %vm4148, %v4123, 0
      %v4177 = vsel %vm4148, %v4124, 0
      %v4180 = vsel %vm4148, %v4125, 0
      %v4183 = vsel %vm4148, %v4126, 0
      %v4186 = vsel %vm4148, %v4127, 0
      %v4189 = vsel %vm4148, %v4128, 0
      %v4192 = vsel %vm4148, %v4129, 0
      %v4195 = vsel %vm4148, %v4130, 0
      %vm4197 = vcmask 1045504
      %v4199 = vsel %vm4197, %v4145, 0
      %4201 = vmatprep.subr.bf16.mxu0 0
      %4202 = vmatpush1.bf16.msra.mxu0 0
      %4203 = vmatprep.subr.bf16.mxu0 0
      %4204 = vmatpush1.bf16.msra.mxu0 0
      %4205 = vmatprep.subr.bf16.mxu0 0
      %4206 = vmatpush1.bf16.msra.mxu0 0
      %4207 = vmatprep.subr.bf16.mxu0 0
      %4208 = vmatpush1.bf16.msra.mxu0 0
      %4209 = vmatprep.subr.bf16.mxu0 0
      %4210 = vmatpush1.bf16.msra.mxu0 0
      %4211 = vmatprep.subr.bf16.mxu0 0
      %4212 = vmatpush1.bf16.msra.mxu0 %v4199
      %4213 = vmatprep.subr.bf16.mxu0 0
      %4214 = vmatpush1.bf16.msra.mxu0 %v4144
      %4215 = vmatprep.subr.bf16.mxu0 0
      %4216 = vmatpush1.bf16.msra.mxu0 %v4143
      %4217 = vmatprep.subr.bf16.mxu0 0
      %4218 = vmatpush2.bf16.msra.mxu0 0
      %4219 = vmatprep.subr.bf16.mxu0 0
      %4220 = vmatpush2.bf16.msra.mxu0 0
      %4221 = vmatprep.subr.bf16.mxu0 0
      %4222 = vmatpush2.bf16.msra.mxu0 0
      %4223 = vmatprep.subr.bf16.mxu0 0
      %4224 = vmatpush2.bf16.msra.mxu0 0
      %4225 = vmatprep.subr.bf16.mxu0 0
      %4226 = vmatpush2.bf16.msra.mxu0 0
      %4227 = vmatprep.subr.bf16.mxu0 0
      %4228 = vmatpush2.bf16.msra.mxu0 0
      %4229 = vmatprep.subr.bf16.mxu0 0
      %4230 = vmatpush2.bf16.msra.mxu0 0
      %4231 = vmatprep.subr.bf16.mxu0 0
      %4232 = vmatpush2.bf16.msra.mxu0 0
      %4233 = vmatprep.mubr.bf16.mxu0 0
      %4234 = vmatmul.mubr.bf16.gmra.mxu0 %v4150
      %v4235 = vpop.f32.mrf.mxu0
      %v4236 = vadd.f32 0.0, %v4235
      %v4237 = vpop.f32.mrf.mxu0
      %v4238 = vpop.f32.mrf.mxu0
      %v4239 = vadd.f32 0.0, %v4238
      %v4240 = vpop.f32.mrf.mxu0
      %4241 = vmatprep.mubr.bf16.mxu0 0
      %4242 = vmatmul.mubr.bf16.gmra.mxu0 %v4153
      %v4243 = vpop.f32.mrf.mxu0
      %v4244 = vadd.f32 0.0, %v4243
      %v4245 = vpop.f32.mrf.mxu0
      %v4246 = vpop.f32.mrf.mxu0
      %v4247 = vadd.f32 0.0, %v4246
      %v4248 = vpop.f32.mrf.mxu0
      %4249 = vmatprep.mubr.bf16.mxu0 0
      %4250 = vmatmul.mubr.bf16.gmra.mxu0 %v4156
      %v4251 = vpop.f32.mrf.mxu0
      %v4252 = vadd.f32 0.0, %v4251
      %v4253 = vpop.f32.mrf.mxu0
      %v4254 = vpop.f32.mrf.mxu0
      %v4255 = vadd.f32 0.0, %v4254
      %v4256 = vpop.f32.mrf.mxu0
      %4257 = vmatprep.mubr.bf16.mxu0 0
      %4258 = vmatmul.mubr.bf16.gmra.mxu0 %v4159
      %v4259 = vpop.f32.mrf.mxu0
      %v4260 = vadd.f32 0.0, %v4259
      %v4261 = vpop.f32.mrf.mxu0
      %v4262 = vpop.f32.mrf.mxu0
      %v4263 = vadd.f32 0.0, %v4262
      %v4264 = vpop.f32.mrf.mxu0
      %4265 = vmatprep.mubr.bf16.mxu0 0
      %4266 = vmatmul.mubr.bf16.gmra.mxu0 %v4162
      %v4267 = vpop.f32.mrf.mxu0
      %v4268 = vadd.f32 0.0, %v4267
      %v4269 = vpop.f32.mrf.mxu0
      %v4270 = vpop.f32.mrf.mxu0
      %v4271 = vadd.f32 0.0, %v4270
      %v4272 = vpop.f32.mrf.mxu0
      %4273 = vmatprep.mubr.bf16.mxu0 0
      %4274 = vmatmul.mubr.bf16.gmra.mxu0 %v4165
      %v4275 = vpop.f32.mrf.mxu0
      %v4276 = vadd.f32 0.0, %v4275
      %v4277 = vpop.f32.mrf.mxu0
      %v4278 = vpop.f32.mrf.mxu0
      %v4279 = vadd.f32 0.0, %v4278
      %v4280 = vpop.f32.mrf.mxu0
      %4281 = vmatprep.mubr.bf16.mxu0 0
      %4282 = vmatmul.mubr.bf16.gmra.mxu0 %v4168
      %v4283 = vpop.f32.mrf.mxu0
      %v4284 = vadd.f32 0.0, %v4283
      %v4285 = vpop.f32.mrf.mxu0
      %v4286 = vpop.f32.mrf.mxu0
      %v4287 = vadd.f32 0.0, %v4286
      %v4288 = vpop.f32.mrf.mxu0
      %4289 = vmatprep.mubr.bf16.mxu0 0
      %4290 = vmatmul.mubr.bf16.gmra.mxu0 %v4171
      %v4291 = vpop.f32.mrf.mxu0
      %v4292 = vadd.f32 0.0, %v4291
      %v4293 = vpop.f32.mrf.mxu0
      %v4294 = vpop.f32.mrf.mxu0
      %v4295 = vadd.f32 0.0, %v4294
      %v4296 = vpop.f32.mrf.mxu0
      %4297 = vmatprep.mubr.bf16.mxu0 0
      %4298 = vmatmul.mubr.bf16.gmra.mxu0 %v4174
      %v4299 = vpop.f32.mrf.mxu0
      %v4300 = vadd.f32 0.0, %v4299
      %v4301 = vpop.f32.mrf.mxu0
      %v4302 = vpop.f32.mrf.mxu0
      %v4303 = vadd.f32 0.0, %v4302
      %v4304 = vpop.f32.mrf.mxu0
      %4305 = vmatprep.mubr.bf16.mxu0 0
      %4306 = vmatmul.mubr.bf16.gmra.mxu0 %v4177
      %v4307 = vpop.f32.mrf.mxu0
      %v4308 = vadd.f32 0.0, %v4307
      %v4309 = vpop.f32.mrf.mxu0
      %v4310 = vpop.f32.mrf.mxu0
      %v4311 = vadd.f32 0.0, %v4310
      %v4312 = vpop.f32.mrf.mxu0
      %4313 = vmatprep.mubr.bf16.mxu0 0
      %4314 = vmatmul.mubr.bf16.gmra.mxu0 %v4180
      %v4315 = vpop.f32.mrf.mxu0
      %v4316 = vadd.f32 0.0, %v4315
      %v4317 = vpop.f32.mrf.mxu0
      %v4318 = vpop.f32.mrf.mxu0
      %v4319 = vadd.f32 0.0, %v4318
      %v4320 = vpop.f32.mrf.mxu0
      %4321 = vmatprep.mubr.bf16.mxu0 0
      %4322 = vmatmul.mubr.bf16.gmra.mxu0 %v4183
      %v4323 = vpop.f32.mrf.mxu0
      %v4324 = vadd.f32 0.0, %v4323
      %v4325 = vpop.f32.mrf.mxu0
      %v4326 = vpop.f32.mrf.mxu0
      %v4327 = vadd.f32 0.0, %v4326
      %v4328 = vpop.f32.mrf.mxu0
      %4329 = vmatprep.mubr.bf16.mxu0 0
      %4330 = vmatmul.mubr.bf16.gmra.mxu0 %v4186
      %v4331 = vpop.f32.mrf.mxu0
      %v4332 = vadd.f32 0.0, %v4331
      %v4333 = vpop.f32.mrf.mxu0
      %v4334 = vpop.f32.mrf.mxu0
      %v4335 = vadd.f32 0.0, %v4334
      %v4336 = vpop.f32.mrf.mxu0
      %4337 = vmatprep.mubr.bf16.mxu0 0
      %4338 = vmatmul.mubr.bf16.gmra.mxu0 %v4189
      %v4339 = vpop.f32.mrf.mxu0
      %v4340 = vadd.f32 0.0, %v4339
      %v4341 = vpop.f32.mrf.mxu0
      %v4342 = vpop.f32.mrf.mxu0
      %v4343 = vadd.f32 0.0, %v4342
      %v4344 = vpop.f32.mrf.mxu0
      %4345 = vmatprep.mubr.bf16.mxu0 0
      %4346 = vmatmul.mubr.bf16.gmra.mxu0 %v4192
      %v4347 = vpop.f32.mrf.mxu0
      %v4348 = vadd.f32 0.0, %v4347
      %v4349 = vpop.f32.mrf.mxu0
      %v4350 = vpop.f32.mrf.mxu0
      %v4351 = vadd.f32 0.0, %v4350
      %v4352 = vpop.f32.mrf.mxu0
      %4353 = vmatprep.mubr.bf16.mxu0 0
      %4354 = vmatmul.mubr.bf16.gmra.mxu0 %v4195
      %v4355 = vpop.f32.mrf.mxu0
      %v4356 = vadd.f32 0.0, %v4355
      %v4357 = vpop.f32.mrf.mxu0
      %v4358 = vpop.f32.mrf.mxu0
      %v4359 = vadd.f32 0.0, %v4358
      %v4360 = vpop.f32.mrf.mxu0
      %4361 = vdwg.mxu0
      %v4394 = vunpack.c.l.b16 %v3973
      %v4395 = vunpack.c.l.b16 %v3974
      %v4396 = vunpack.c.l.b16 %v3975
      %v4397 = vunpack.c.l.b16 %v3976
      %v4398 = vunpack.c.l.b16 %v3977
      %v4399 = vunpack.c.l.b16 %v3978
      %v4400 = vunpack.c.l.b16 %v3979
      %v4401 = vunpack.c.l.b16 %v3980
      %v4402 = vunpack.c.l.b16 %v3981
      %v4403 = vunpack.c.l.b16 %v3982
      %v4404 = vunpack.c.l.b16 %v3983
      %v4405 = vunpack.c.l.b16 %v3984
      %v4406 = vunpack.c.l.b16 %v3985
      %v4407 = vunpack.c.l.b16 %v3986
      %v4408 = vunpack.c.l.b16 %v3987
      %v4409 = vunpack.c.l.b16 %v3988
      %v4410 = vunpack.c.l.b16 %v3989
      %v4411 = vunpack.c.l.b16 %v3990
      %v4412 = vunpack.c.l.b16 %v3991
      %v4413 = vunpack.c.l.b16 %v3992
      %v4414 = vunpack.c.l.b16 %v3993
      %v4415 = vunpack.c.l.b16 %v3994
      %v4416 = vunpack.c.l.b16 %v3995
      %v4417 = vunpack.c.l.b16 %v3996
      %v4418 = vunpack.c.l.b16 %v3997
      %v4419 = vunpack.c.l.b16 %v3998
      %v4420 = vunpack.c.l.b16 %v3999
      %v4421 = vunpack.c.l.b16 %v4000
      %v4422 = vunpack.c.l.b16 %v4001
      %v4423 = vunpack.c.l.b16 %v4002
      %v4424 = vunpack.c.l.b16 %v4003
      %v4425 = vunpack.c.l.b16 %v4004
      %v4426 = vpack.c.b16 %v4395, %v4394
      %v4427 = vpack.c.b16 %v4397, %v4396
      %v4428 = vpack.c.b16 %v4399, %v4398
      %v4429 = vpack.c.b16 %v4401, %v4400
      %v4430 = vpack.c.b16 %v4403, %v4402
      %v4431 = vpack.c.b16 %v4405, %v4404
      %v4432 = vpack.c.b16 %v4407, %v4406
      %v4433 = vpack.c.b16 %v4409, %v4408
      %v4434 = vpack.c.b16 %v4411, %v4410
      %v4435 = vpack.c.b16 %v4413, %v4412
      %v4436 = vpack.c.b16 %v4415, %v4414
      %v4437 = vpack.c.b16 %v4417, %v4416
      %v4438 = vpack.c.b16 %v4419, %v4418
      %v4439 = vpack.c.b16 %v4421, %v4420
      %v4440 = vpack.c.b16 %v4423, %v4422
      %v4441 = vpack.c.b16 %v4425, %v4424
      %v4448 = vunpack.c.l.b16 %v4005
      %v4449 = vunpack.c.l.b16 %v4006
      %v4450 = vunpack.c.l.b16 %v4007
      %v4451 = vunpack.c.l.b16 %v4008
      %v4452 = vunpack.c.l.b16 %v4009
      %v4453 = vunpack.c.l.b16 %v4010
      %v4454 = vpack.c.b16 %v4449, %v4448
      %v4455 = vpack.c.b16 %v4451, %v4450
      %v4456 = vpack.c.b16 %v4453, %v4452
      %v4460 = vsel %vm4148, %v4426, 0
      %v4463 = vsel %vm4148, %v4427, 0
      %v4466 = vsel %vm4148, %v4428, 0
      %v4469 = vsel %vm4148, %v4429, 0
      %v4472 = vsel %vm4148, %v4430, 0
      %v4475 = vsel %vm4148, %v4431, 0
      %v4478 = vsel %vm4148, %v4432, 0
      %v4481 = vsel %vm4148, %v4433, 0
      %v4484 = vsel %vm4148, %v4434, 0
      %v4487 = vsel %vm4148, %v4435, 0
      %v4490 = vsel %vm4148, %v4436, 0
      %v4493 = vsel %vm4148, %v4437, 0
      %v4496 = vsel %vm4148, %v4438, 0
      %v4499 = vsel %vm4148, %v4439, 0
      %v4502 = vsel %vm4148, %v4440, 0
      %v4505 = vsel %vm4148, %v4441, 0
      %v4508 = vsel %vm4197, %v4456, 0
      %4510 = vmatprep.subr.bf16.mxu0 0
      %4511 = vmatpush1.bf16.msra.mxu0 0
      %4512 = vmatprep.subr.bf16.mxu0 0
      %4513 = vmatpush1.bf16.msra.mxu0 0
      %4514 = vmatprep.subr.bf16.mxu0 0
      %4515 = vmatpush1.bf16.msra.mxu0 0
      %4516 = vmatprep.subr.bf16.mxu0 0
      %4517 = vmatpush1.bf16.msra.mxu0 0
      %4518 = vmatprep.subr.bf16.mxu0 0
      %4519 = vmatpush1.bf16.msra.mxu0 0
      %4520 = vmatprep.subr.bf16.mxu0 0
      %4521 = vmatpush1.bf16.msra.mxu0 %v4508
      %4522 = vmatprep.subr.bf16.mxu0 0
      %4523 = vmatpush1.bf16.msra.mxu0 %v4455
      %4524 = vmatprep.subr.bf16.mxu0 0
      %4525 = vmatpush1.bf16.msra.mxu0 %v4454
      %4526 = vmatprep.subr.bf16.mxu0 0
      %4527 = vmatpush2.bf16.msra.mxu0 0
      %4528 = vmatprep.subr.bf16.mxu0 0
      %4529 = vmatpush2.bf16.msra.mxu0 0
      %4530 = vmatprep.subr.bf16.mxu0 0
      %4531 = vmatpush2.bf16.msra.mxu0 0
      %4532 = vmatprep.subr.bf16.mxu0 0
      %4533 = vmatpush2.bf16.msra.mxu0 0
      %4534 = vmatprep.subr.bf16.mxu0 0
      %4535 = vmatpush2.bf16.msra.mxu0 0
      %4536 = vmatprep.subr.bf16.mxu0 0
      %4537 = vmatpush2.bf16.msra.mxu0 0
      %4538 = vmatprep.subr.bf16.mxu0 0
      %4539 = vmatpush2.bf16.msra.mxu0 0
      %4540 = vmatprep.subr.bf16.mxu0 0
      %4541 = vmatpush2.bf16.msra.mxu0 0
      %4542 = vmatprep.mubr.bf16.mxu0 0
      %4543 = vmatmul.mubr.bf16.gmra.mxu0 %v4460
      %v4544 = vpop.f32.mrf.mxu0
      %v4545 = vadd.f32 %v4236, %v4544
      %v4546 = vpop.f32.mrf.mxu0
      %v4547 = vpop.f32.mrf.mxu0
      %v4548 = vadd.f32 %v4239, %v4547
      %v4549 = vpop.f32.mrf.mxu0
      %4550 = vmatprep.mubr.bf16.mxu0 0
      %4551 = vmatmul.mubr.bf16.gmra.mxu0 %v4463
      %v4552 = vpop.f32.mrf.mxu0
      %v4553 = vadd.f32 %v4244, %v4552
      %v4554 = vpop.f32.mrf.mxu0
      %v4555 = vpop.f32.mrf.mxu0
      %v4556 = vadd.f32 %v4247, %v4555
      %v4557 = vpop.f32.mrf.mxu0
      %4558 = vmatprep.mubr.bf16.mxu0 0
      %4559 = vmatmul.mubr.bf16.gmra.mxu0 %v4466
      %v4560 = vpop.f32.mrf.mxu0
      %v4561 = vadd.f32 %v4252, %v4560
      %v4562 = vpop.f32.mrf.mxu0
      %v4563 = vpop.f32.mrf.mxu0
      %v4564 = vadd.f32 %v4255, %v4563
      %v4565 = vpop.f32.mrf.mxu0
      %4566 = vmatprep.mubr.bf16.mxu0 0
      %4567 = vmatmul.mubr.bf16.gmra.mxu0 %v4469
      %v4568 = vpop.f32.mrf.mxu0
      %v4569 = vadd.f32 %v4260, %v4568
      %v4570 = vpop.f32.mrf.mxu0
      %v4571 = vpop.f32.mrf.mxu0
      %v4572 = vadd.f32 %v4263, %v4571
      %v4573 = vpop.f32.mrf.mxu0
      %4574 = vmatprep.mubr.bf16.mxu0 0
      %4575 = vmatmul.mubr.bf16.gmra.mxu0 %v4472
      %v4576 = vpop.f32.mrf.mxu0
      %v4577 = vadd.f32 %v4268, %v4576
      %v4578 = vpop.f32.mrf.mxu0
      %v4579 = vpop.f32.mrf.mxu0
      %v4580 = vadd.f32 %v4271, %v4579
      %v4581 = vpop.f32.mrf.mxu0
      %4582 = vmatprep.mubr.bf16.mxu0 0
      %4583 = vmatmul.mubr.bf16.gmra.mxu0 %v4475
      %v4584 = vpop.f32.mrf.mxu0
      %v4585 = vadd.f32 %v4276, %v4584
      %v4586 = vpop.f32.mrf.mxu0
      %v4587 = vpop.f32.mrf.mxu0
      %v4588 = vadd.f32 %v4279, %v4587
      %v4589 = vpop.f32.mrf.mxu0
      %4590 = vmatprep.mubr.bf16.mxu0 0
      %4591 = vmatmul.mubr.bf16.gmra.mxu0 %v4478
      %v4592 = vpop.f32.mrf.mxu0
      %v4593 = vadd.f32 %v4284, %v4592
      %v4594 = vpop.f32.mrf.mxu0
      %v4595 = vpop.f32.mrf.mxu0
      %v4596 = vadd.f32 %v4287, %v4595
      %v4597 = vpop.f32.mrf.mxu0
      %4598 = vmatprep.mubr.bf16.mxu0 0
      %4599 = vmatmul.mubr.bf16.gmra.mxu0 %v4481
      %v4600 = vpop.f32.mrf.mxu0
      %v4601 = vadd.f32 %v4292, %v4600
      %v4602 = vpop.f32.mrf.mxu0
      %v4603 = vpop.f32.mrf.mxu0
      %v4604 = vadd.f32 %v4295, %v4603
      %v4605 = vpop.f32.mrf.mxu0
      %4606 = vmatprep.mubr.bf16.mxu0 0
      %4607 = vmatmul.mubr.bf16.gmra.mxu0 %v4484
      %v4608 = vpop.f32.mrf.mxu0
      %v4609 = vadd.f32 %v4300, %v4608
      %v4610 = vpop.f32.mrf.mxu0
      %v4611 = vpop.f32.mrf.mxu0
      %v4612 = vadd.f32 %v4303, %v4611
      %v4613 = vpop.f32.mrf.mxu0
      %4614 = vmatprep.mubr.bf16.mxu0 0
      %4615 = vmatmul.mubr.bf16.gmra.mxu0 %v4487
      %v4616 = vpop.f32.mrf.mxu0
      %v4617 = vadd.f32 %v4308, %v4616
      %v4618 = vpop.f32.mrf.mxu0
      %v4619 = vpop.f32.mrf.mxu0
      %v4620 = vadd.f32 %v4311, %v4619
      %v4621 = vpop.f32.mrf.mxu0
      %4622 = vmatprep.mubr.bf16.mxu0 0
      %4623 = vmatmul.mubr.bf16.gmra.mxu0 %v4490
      %v4624 = vpop.f32.mrf.mxu0
      %v4625 = vadd.f32 %v4316, %v4624
      %v4626 = vpop.f32.mrf.mxu0
      %v4627 = vpop.f32.mrf.mxu0
      %v4628 = vadd.f32 %v4319, %v4627
      %v4629 = vpop.f32.mrf.mxu0
      %4630 = vmatprep.mubr.bf16.mxu0 0
      %4631 = vmatmul.mubr.bf16.gmra.mxu0 %v4493
      %v4632 = vpop.f32.mrf.mxu0
      %v4633 = vadd.f32 %v4324, %v4632
      %v4634 = vpop.f32.mrf.mxu0
      %v4635 = vpop.f32.mrf.mxu0
      %v4636 = vadd.f32 %v4327, %v4635
      %v4637 = vpop.f32.mrf.mxu0
      %4638 = vmatprep.mubr.bf16.mxu0 0
      %4639 = vmatmul.mubr.bf16.gmra.mxu0 %v4496
      %v4640 = vpop.f32.mrf.mxu0
      %v4641 = vadd.f32 %v4332, %v4640
      %v4642 = vpop.f32.mrf.mxu0
      %v4643 = vpop.f32.mrf.mxu0
      %v4644 = vadd.f32 %v4335, %v4643
      %v4645 = vpop.f32.mrf.mxu0
      %4646 = vmatprep.mubr.bf16.mxu0 0
      %4647 = vmatmul.mubr.bf16.gmra.mxu0 %v4499
      %v4648 = vpop.f32.mrf.mxu0
      %v4649 = vadd.f32 %v4340, %v4648
      %v4650 = vpop.f32.mrf.mxu0
      %v4651 = vpop.f32.mrf.mxu0
      %v4652 = vadd.f32 %v4343, %v4651
      %v4653 = vpop.f32.mrf.mxu0
      %4654 = vmatprep.mubr.bf16.mxu0 0
      %4655 = vmatmul.mubr.bf16.gmra.mxu0 %v4502
      %v4656 = vpop.f32.mrf.mxu0
      %v4657 = vadd.f32 %v4348, %v4656
      %v4658 = vpop.f32.mrf.mxu0
      %v4659 = vpop.f32.mrf.mxu0
      %v4660 = vadd.f32 %v4351, %v4659
      %v4661 = vpop.f32.mrf.mxu0
      %4662 = vmatprep.mubr.bf16.mxu0 0
      %4663 = vmatmul.mubr.bf16.gmra.mxu0 %v4505
      %v4664 = vpop.f32.mrf.mxu0
      %v4665 = vadd.f32 %v4356, %v4664
      %v4666 = vpop.f32.mrf.mxu0
      %v4667 = vpop.f32.mrf.mxu0
      %v4668 = vadd.f32 %v4359, %v4667
      %v4669 = vpop.f32.mrf.mxu0
      %4670 = vdwg.mxu0
      %s4671 = scalar_lea.vmem [#allocation2], 16
      %v4672 = vld [vmem:[%s4671] sm:$0xf]
      %v4673 = vld [vmem:[%s4671 + $0x4] sm:$0xf]
      %v4674 = vld [vmem:[%s4671 + $0x8] sm:$0xf]
      %v4675 = vld [vmem:[%s4671 + $0xc] sm:$0xf]
      %v4676 = vld [vmem:[%s4671 + $0x10] sm:$0xf]
      %v4677 = vld [vmem:[%s4671 + $0x14] sm:$0xf]
      %v4678 = vld [vmem:[%s4671 + $0x18] sm:$0xf]
      %v4679 = vld [vmem:[%s4671 + $0x1c] sm:$0xf]
      %v4680 = vld [vmem:[%s4671 + $0x20] sm:$0xf]
      %v4681 = vld [vmem:[%s4671 + $0x24] sm:$0xf]
      %v4682 = vld [vmem:[%s4671 + $0x28] sm:$0xf]
      %v4683 = vld [vmem:[%s4671 + $0x2c] sm:$0xf]
      %v4684 = vld [vmem:[%s4671 + $0x30] sm:$0xf]
      %v4685 = vld [vmem:[%s4671 + $0x34] sm:$0xf]
      %v4686 = vld [vmem:[%s4671 + $0x38] sm:$0xf]
      %v4687 = vld [vmem:[%s4671 + $0x3c] sm:$0xf]
      %v4688 = vld [vmem:[%s4671 + $0x40] sm:$0xf]
      %v4689 = vld [vmem:[%s4671 + $0x44] sm:$0xf]
      %v4690 = vld [vmem:[%s4671 + $0x48] sm:$0xf]
      %v4691 = vld [vmem:[%s4671 + $0x4c] sm:$0xf]
      %v4692 = vld [vmem:[%s4671 + $0x50] sm:$0xf]
      %v4693 = vld [vmem:[%s4671 + $0x54] sm:$0xf]
      %v4694 = vld [vmem:[%s4671 + $0x58] sm:$0xf]
      %v4695 = vld [vmem:[%s4671 + $0x5c] sm:$0xf]
      %v4696 = vld [vmem:[%s4671 + $0x60] sm:$0xf]
      %v4697 = vld [vmem:[%s4671 + $0x64] sm:$0xf]
      %v4698 = vld [vmem:[%s4671 + $0x68] sm:$0xf]
      %v4699 = vld [vmem:[%s4671 + $0x6c] sm:$0xf]
      %v4700 = vld [vmem:[%s4671 + $0x70] sm:$0xf]
      %v4701 = vld [vmem:[%s4671 + $0x74] sm:$0xf]
      %v4702 = vld [vmem:[%s4671 + $0x78] sm:$0xf]
      %v4703 = vld [vmem:[%s4671 + $0x7c] sm:$0xf]
      %s4704 = scalar_lea.vmem %s1, 48
      %v4705 = vld [vmem:[%s4704] sm:$0xf]
      %v4706 = vld [vmem:[%s4704 + $0x4] sm:$0xf]
      %v4707 = vld [vmem:[%s4704 + $0x8] sm:$0xf]
      %v4708 = vld [vmem:[%s4704 + $0xc] sm:$0xf]
      %v4709 = vld [vmem:[%s4704 + $0x10] sm:$0xf]
      %v4710 = vld [vmem:[%s4704 + $0x14] sm:$0x3]
      %v4743 = vunpack.c.l.b16 %v4672
      %v4744 = vunpack.c.l.b16 %v4673
      %v4745 = vunpack.c.l.b16 %v4674
      %v4746 = vunpack.c.l.b16 %v4675
      %v4747 = vunpack.c.l.b16 %v4676
      %v4748 = vunpack.c.l.b16 %v4677
      %v4749 = vunpack.c.l.b16 %v4678
      %v4750 = vunpack.c.l.b16 %v4679
      %v4751 = vunpack.c.l.b16 %v4680
      %v4752 = vunpack.c.l.b16 %v4681
      %v4753 = vunpack.c.l.b16 %v4682
      %v4754 = vunpack.c.l.b16 %v4683
      %v4755 = vunpack.c.l.b16 %v4684
      %v4756 = vunpack.c.l.b16 %v4685
      %v4757 = vunpack.c.l.b16 %v4686
      %v4758 = vunpack.c.l.b16 %v4687
      %v4759 = vunpack.c.l.b16 %v4688
      %v4760 = vunpack.c.l.b16 %v4689
      %v4761 = vunpack.c.l.b16 %v4690
      %v4762 = vunpack.c.l.b16 %v4691
      %v4763 = vunpack.c.l.b16 %v4692
      %v4764 = vunpack.c.l.b16 %v4693
      %v4765 = vunpack.c.l.b16 %v4694
      %v4766 = vunpack.c.l.b16 %v4695
      %v4767 = vunpack.c.l.b16 %v4696
      %v4768 = vunpack.c.l.b16 %v4697
      %v4769 = vunpack.c.l.b16 %v4698
      %v4770 = vunpack.c.l.b16 %v4699
      %v4771 = vunpack.c.l.b16 %v4700
      %v4772 = vunpack.c.l.b16 %v4701
      %v4773 = vunpack.c.l.b16 %v4702
      %v4774 = vunpack.c.l.b16 %v4703
      %v4775 = vpack.c.b16 %v4744, %v4743
      %v4776 = vpack.c.b16 %v4746, %v4745
      %v4777 = vpack.c.b16 %v4748, %v4747
      %v4778 = vpack.c.b16 %v4750, %v4749
      %v4779 = vpack.c.b16 %v4752, %v4751
      %v4780 = vpack.c.b16 %v4754, %v4753
      %v4781 = vpack.c.b16 %v4756, %v4755
      %v4782 = vpack.c.b16 %v4758, %v4757
      %v4783 = vpack.c.b16 %v4760, %v4759
      %v4784 = vpack.c.b16 %v4762, %v4761
      %v4785 = vpack.c.b16 %v4764, %v4763
      %v4786 = vpack.c.b16 %v4766, %v4765
      %v4787 = vpack.c.b16 %v4768, %v4767
      %v4788 = vpack.c.b16 %v4770, %v4769
      %v4789 = vpack.c.b16 %v4772, %v4771
      %v4790 = vpack.c.b16 %v4774, %v4773
      %v4797 = vunpack.c.l.b16 %v4705
      %v4798 = vunpack.c.l.b16 %v4706
      %v4799 = vunpack.c.l.b16 %v4707
      %v4800 = vunpack.c.l.b16 %v4708
      %v4801 = vunpack.c.l.b16 %v4709
      %v4802 = vunpack.c.l.b16 %v4710
      %v4803 = vpack.c.b16 %v4798, %v4797
      %v4804 = vpack.c.b16 %v4800, %v4799
      %v4805 = vpack.c.b16 %v4802, %v4801
      %v4809 = vsel %vm4148, %v4775, 0
      %v4812 = vsel %vm4148, %v4776, 0
      %v4815 = vsel %vm4148, %v4777, 0
      %v4818 = vsel %vm4148, %v4778, 0
      %v4821 = vsel %vm4148, %v4779, 0
      %v4824 = vsel %vm4148, %v4780, 0
      %v4827 = vsel %vm4148, %v4781, 0
      %v4830 = vsel %vm4148, %v4782, 0
      %v4833 = vsel %vm4148, %v4783, 0
      %v4836 = vsel %vm4148, %v4784, 0
      %v4839 = vsel %vm4148, %v4785, 0
      %v4842 = vsel %vm4148, %v4786, 0
      %v4845 = vsel %vm4148, %v4787, 0
      %v4848 = vsel %vm4148, %v4788, 0
      %v4851 = vsel %vm4148, %v4789, 0
      %v4854 = vsel %vm4148, %v4790, 0
      %v4857 = vsel %vm4197, %v4805, 0
      %4859 = vmatprep.subr.bf16.mxu0 0
      %4860 = vmatpush1.bf16.msra.mxu0 0
      %4861 = vmatprep.subr.bf16.mxu0 0
      %4862 = vmatpush1.bf16.msra.mxu0 0
      %4863 = vmatprep.subr.bf16.mxu0 0
      %4864 = vmatpush1.bf16.msra.mxu0 0
      %4865 = vmatprep.subr.bf16.mxu0 0
      %4866 = vmatpush1.bf16.msra.mxu0 0
      %4867 = vmatprep.subr.bf16.mxu0 0
      %4868 = vmatpush1.bf16.msra.mxu0 0
      %4869 = vmatprep.subr.bf16.mxu0 0
      %4870 = vmatpush1.bf16.msra.mxu0 %v4857
      %4871 = vmatprep.subr.bf16.mxu0 0
      %4872 = vmatpush1.bf16.msra.mxu0 %v4804
      %4873 = vmatprep.subr.bf16.mxu0 0
      %4874 = vmatpush1.bf16.msra.mxu0 %v4803
      %4875 = vmatprep.subr.bf16.mxu0 0
      %4876 = vmatpush2.bf16.msra.mxu0 0
      %4877 = vmatprep.subr.bf16.mxu0 0
      %4878 = vmatpush2.bf16.msra.mxu0 0
      %4879 = vmatprep.subr.bf16.mxu0 0
      %4880 = vmatpush2.bf16.msra.mxu0 0
      %4881 = vmatprep.subr.bf16.mxu0 0
      %4882 = vmatpush2.bf16.msra.mxu0 0
      %4883 = vmatprep.subr.bf16.mxu0 0
      %4884 = vmatpush2.bf16.msra.mxu0 0
      %4885 = vmatprep.subr.bf16.mxu0 0
      %4886 = vmatpush2.bf16.msra.mxu0 0
      %4887 = vmatprep.subr.bf16.mxu0 0
      %4888 = vmatpush2.bf16.msra.mxu0 0
      %4889 = vmatprep.subr.bf16.mxu0 0
      %4890 = vmatpush2.bf16.msra.mxu0 0
      %4891 = vmatprep.mubr.bf16.mxu0 0
      %4892 = vmatmul.mubr.bf16.gmra.mxu0 %v4809
      %v4893 = vpop.f32.mrf.mxu0
      %v4894 = vadd.f32 0.0, %v4893
      %v4895 = vpop.f32.mrf.mxu0
      %v4896 = vpop.f32.mrf.mxu0
      %v4897 = vadd.f32 0.0, %v4896
      %v4898 = vpop.f32.mrf.mxu0
      %4899 = vmatprep.mubr.bf16.mxu0 0
      %4900 = vmatmul.mubr.bf16.gmra.mxu0 %v4812
      %v4901 = vpop.f32.mrf.mxu0
      %v4902 = vadd.f32 0.0, %v4901
      %v4903 = vpop.f32.mrf.mxu0
      %v4904 = vpop.f32.mrf.mxu0
      %v4905 = vadd.f32 0.0, %v4904
      %v4906 = vpop.f32.mrf.mxu0
      %4907 = vmatprep.mubr.bf16.mxu0 0
      %4908 = vmatmul.mubr.bf16.gmra.mxu0 %v4815
      %v4909 = vpop.f32.mrf.mxu0
      %v4910 = vadd.f32 0.0, %v4909
      %v4911 = vpop.f32.mrf.mxu0
      %v4912 = vpop.f32.mrf.mxu0
      %v4913 = vadd.f32 0.0, %v4912
      %v4914 = vpop.f32.mrf.mxu0
      %4915 = vmatprep.mubr.bf16.mxu0 0
      %4916 = vmatmul.mubr.bf16.gmra.mxu0 %v4818
      %v4917 = vpop.f32.mrf.mxu0
      %v4918 = vadd.f32 0.0, %v4917
      %v4919 = vpop.f32.mrf.mxu0
      %v4920 = vpop.f32.mrf.mxu0
      %v4921 = vadd.f32 0.0, %v4920
      %v4922 = vpop.f32.mrf.mxu0
      %4923 = vmatprep.mubr.bf16.mxu0 0
      %4924 = vmatmul.mubr.bf16.gmra.mxu0 %v4821
      %v4925 = vpop.f32.mrf.mxu0
      %v4926 = vadd.f32 0.0, %v4925
      %v4927 = vpop.f32.mrf.mxu0
      %v4928 = vpop.f32.mrf.mxu0
      %v4929 = vadd.f32 0.0, %v4928
      %v4930 = vpop.f32.mrf.mxu0
      %4931 = vmatprep.mubr.bf16.mxu0 0
      %4932 = vmatmul.mubr.bf16.gmra.mxu0 %v4824
      %v4933 = vpop.f32.mrf.mxu0
      %v4934 = vadd.f32 0.0, %v4933
      %v4935 = vpop.f32.mrf.mxu0
      %v4936 = vpop.f32.mrf.mxu0
      %v4937 = vadd.f32 0.0, %v4936
      %v4938 = vpop.f32.mrf.mxu0
      %4939 = vmatprep.mubr.bf16.mxu0 0
      %4940 = vmatmul.mubr.bf16.gmra.mxu0 %v4827
      %v4941 = vpop.f32.mrf.mxu0
      %v4942 = vadd.f32 0.0, %v4941
      %v4943 = vpop.f32.mrf.mxu0
      %v4944 = vpop.f32.mrf.mxu0
      %v4945 = vadd.f32 0.0, %v4944
      %v4946 = vpop.f32.mrf.mxu0
      %4947 = vmatprep.mubr.bf16.mxu0 0
      %4948 = vmatmul.mubr.bf16.gmra.mxu0 %v4830
      %v4949 = vpop.f32.mrf.mxu0
      %v4950 = vadd.f32 0.0, %v4949
      %v4951 = vpop.f32.mrf.mxu0
      %v4952 = vpop.f32.mrf.mxu0
      %v4953 = vadd.f32 0.0, %v4952
      %v4954 = vpop.f32.mrf.mxu0
      %4955 = vmatprep.mubr.bf16.mxu0 0
      %4956 = vmatmul.mubr.bf16.gmra.mxu0 %v4833
      %v4957 = vpop.f32.mrf.mxu0
      %v4958 = vadd.f32 0.0, %v4957
      %v4959 = vpop.f32.mrf.mxu0
      %v4960 = vpop.f32.mrf.mxu0
      %v4961 = vadd.f32 0.0, %v4960
      %v4962 = vpop.f32.mrf.mxu0
      %4963 = vmatprep.mubr.bf16.mxu0 0
      %4964 = vmatmul.mubr.bf16.gmra.mxu0 %v4836
      %v4965 = vpop.f32.mrf.mxu0
      %v4966 = vadd.f32 0.0, %v4965
      %v4967 = vpop.f32.mrf.mxu0
      %v4968 = vpop.f32.mrf.mxu0
      %v4969 = vadd.f32 0.0, %v4968
      %v4970 = vpop.f32.mrf.mxu0
      %4971 = vmatprep.mubr.bf16.mxu0 0
      %4972 = vmatmul.mubr.bf16.gmra.mxu0 %v4839
      %v4973 = vpop.f32.mrf.mxu0
      %v4974 = vadd.f32 0.0, %v4973
      %v4975 = vpop.f32.mrf.mxu0
      %v4976 = vpop.f32.mrf.mxu0
      %v4977 = vadd.f32 0.0, %v4976
      %v4978 = vpop.f32.mrf.mxu0
      %4979 = vmatprep.mubr.bf16.mxu0 0
      %4980 = vmatmul.mubr.bf16.gmra.mxu0 %v4842
      %v4981 = vpop.f32.mrf.mxu0
      %v4982 = vadd.f32 0.0, %v4981
      %v4983 = vpop.f32.mrf.mxu0
      %v4984 = vpop.f32.mrf.mxu0
      %v4985 = vadd.f32 0.0, %v4984
      %v4986 = vpop.f32.mrf.mxu0
      %4987 = vmatprep.mubr.bf16.mxu0 0
      %4988 = vmatmul.mubr.bf16.gmra.mxu0 %v4845
      %v4989 = vpop.f32.mrf.mxu0
      %v4990 = vadd.f32 0.0, %v4989
      %v4991 = vpop.f32.mrf.mxu0
      %v4992 = vpop.f32.mrf.mxu0
      %v4993 = vadd.f32 0.0, %v4992
      %v4994 = vpop.f32.mrf.mxu0
      %4995 = vmatprep.mubr.bf16.mxu0 0
      %4996 = vmatmul.mubr.bf16.gmra.mxu0 %v4848
      %v4997 = vpop.f32.mrf.mxu0
      %v4998 = vadd.f32 0.0, %v4997
      %v4999 = vpop.f32.mrf.mxu0
      %v5000 = vpop.f32.mrf.mxu0
      %v5001 = vadd.f32 0.0, %v5000
      %v5002 = vpop.f32.mrf.mxu0
      %5003 = vmatprep.mubr.bf16.mxu0 0
      %5004 = vmatmul.mubr.bf16.gmra.mxu0 %v4851
      %v5005 = vpop.f32.mrf.mxu0
      %v5006 = vadd.f32 0.0, %v5005
      %v5007 = vpop.f32.mrf.mxu0
      %v5008 = vpop.f32.mrf.mxu0
      %v5009 = vadd.f32 0.0, %v5008
      %v5010 = vpop.f32.mrf.mxu0
      %5011 = vmatprep.mubr.bf16.mxu0 0
      %5012 = vmatmul.mubr.bf16.gmra.mxu0 %v4854
      %v5013 = vpop.f32.mrf.mxu0
      %v5014 = vadd.f32 0.0, %v5013
      %v5015 = vpop.f32.mrf.mxu0
      %v5016 = vpop.f32.mrf.mxu0
      %v5017 = vadd.f32 0.0, %v5016
      %v5018 = vpop.f32.mrf.mxu0
      %5019 = vdwg.mxu0
      %v5020 = vadd.f32 %v4545, %v4894
      %v5021 = vadd.f32 %v4548, %v4897
      %v5022 = vadd.f32 %v4553, %v4902
      %v5023 = vadd.f32 %v4556, %v4905
      %v5024 = vadd.f32 %v4561, %v4910
      %v5025 = vadd.f32 %v4564, %v4913
      %v5026 = vadd.f32 %v4569, %v4918
      %v5027 = vadd.f32 %v4572, %v4921
      %v5028 = vadd.f32 %v4577, %v4926
      %v5029 = vadd.f32 %v4580, %v4929
      %v5030 = vadd.f32 %v4585, %v4934
      %v5031 = vadd.f32 %v4588, %v4937
      %v5032 = vadd.f32 %v4593, %v4942
      %v5033 = vadd.f32 %v4596, %v4945
      %v5034 = vadd.f32 %v4601, %v4950
      %v5035 = vadd.f32 %v4604, %v4953
      %v5036 = vadd.f32 %v4609, %v4958
      %v5037 = vadd.f32 %v4612, %v4961
      %v5038 = vadd.f32 %v4617, %v4966
      %v5039 = vadd.f32 %v4620, %v4969
      %v5040 = vadd.f32 %v4625, %v4974
      %v5041 = vadd.f32 %v4628, %v4977
      %v5042 = vadd.f32 %v4633, %v4982
      %v5043 = vadd.f32 %v4636, %v4985
      %v5044 = vadd.f32 %v4641, %v4990
      %v5045 = vadd.f32 %v4644, %v4993
      %v5046 = vadd.f32 %v4649, %v4998
      %v5047 = vadd.f32 %v4652, %v5001
      %v5048 = vadd.f32 %v4657, %v5006
      %v5049 = vadd.f32 %v4660, %v5009
      %v5050 = vadd.f32 %v4665, %v5014
      %v5051 = vadd.f32 %v4668, %v5017
      %s5052 = scalar_lea.vmem [#allocation2], 24
      %v5053 = vld [vmem:[%s5052] sm:$0xf]
      %v5054 = vld [vmem:[%s5052 + $0x4] sm:$0xf]
      %v5055 = vld [vmem:[%s5052 + $0x8] sm:$0xf]
      %v5056 = vld [vmem:[%s5052 + $0xc] sm:$0xf]
      %v5057 = vld [vmem:[%s5052 + $0x10] sm:$0xf]
      %v5058 = vld [vmem:[%s5052 + $0x14] sm:$0xf]
      %v5059 = vld [vmem:[%s5052 + $0x18] sm:$0xf]
      %v5060 = vld [vmem:[%s5052 + $0x1c] sm:$0xf]
      %v5061 = vld [vmem:[%s5052 + $0x20] sm:$0xf]
      %v5062 = vld [vmem:[%s5052 + $0x24] sm:$0xf]
      %v5063 = vld [vmem:[%s5052 + $0x28] sm:$0xf]
      %v5064 = vld [vmem:[%s5052 + $0x2c] sm:$0xf]
      %v5065 = vld [vmem:[%s5052 + $0x30] sm:$0xf]
      %v5066 = vld [vmem:[%s5052 + $0x34] sm:$0xf]
      %v5067 = vld [vmem:[%s5052 + $0x38] sm:$0xf]
      %v5068 = vld [vmem:[%s5052 + $0x3c] sm:$0xf]
      %v5069 = vld [vmem:[%s5052 + $0x40] sm:$0xf]
      %v5070 = vld [vmem:[%s5052 + $0x44] sm:$0xf]
      %v5071 = vld [vmem:[%s5052 + $0x48] sm:$0xf]
      %v5072 = vld [vmem:[%s5052 + $0x4c] sm:$0xf]
      %v5073 = vld [vmem:[%s5052 + $0x50] sm:$0xf]
      %v5074 = vld [vmem:[%s5052 + $0x54] sm:$0xf]
      %v5075 = vld [vmem:[%s5052 + $0x58] sm:$0xf]
      %v5076 = vld [vmem:[%s5052 + $0x5c] sm:$0xf]
      %v5077 = vld [vmem:[%s5052 + $0x60] sm:$0xf]
      %v5078 = vld [vmem:[%s5052 + $0x64] sm:$0xf]
      %v5079 = vld [vmem:[%s5052 + $0x68] sm:$0xf]
      %v5080 = vld [vmem:[%s5052 + $0x6c] sm:$0xf]
      %v5081 = vld [vmem:[%s5052 + $0x70] sm:$0xf]
      %v5082 = vld [vmem:[%s5052 + $0x74] sm:$0xf]
      %v5083 = vld [vmem:[%s5052 + $0x78] sm:$0xf]
      %v5084 = vld [vmem:[%s5052 + $0x7c] sm:$0xf]
      %s5085 = scalar_lea.vmem %s1, 72
      %v5086 = vld [vmem:[%s5085] sm:$0xf]
      %v5087 = vld [vmem:[%s5085 + $0x4] sm:$0xf]
      %v5088 = vld [vmem:[%s5085 + $0x8] sm:$0xf]
      %v5089 = vld [vmem:[%s5085 + $0xc] sm:$0xf]
      %v5090 = vld [vmem:[%s5085 + $0x10] sm:$0xf]
      %v5091 = vld [vmem:[%s5085 + $0x14] sm:$0x3]
      %v5124 = vunpack.c.l.b16 %v5053
      %v5125 = vunpack.c.l.b16 %v5054
      %v5126 = vunpack.c.l.b16 %v5055
      %v5127 = vunpack.c.l.b16 %v5056
      %v5128 = vunpack.c.l.b16 %v5057
      %v5129 = vunpack.c.l.b16 %v5058
      %v5130 = vunpack.c.l.b16 %v5059
      %v5131 = vunpack.c.l.b16 %v5060
      %v5132 = vunpack.c.l.b16 %v5061
      %v5133 = vunpack.c.l.b16 %v5062
      %v5134 = vunpack.c.l.b16 %v5063
      %v5135 = vunpack.c.l.b16 %v5064
      %v5136 = vunpack.c.l.b16 %v5065
      %v5137 = vunpack.c.l.b16 %v5066
      %v5138 = vunpack.c.l.b16 %v5067
      %v5139 = vunpack.c.l.b16 %v5068
      %v5140 = vunpack.c.l.b16 %v5069
      %v5141 = vunpack.c.l.b16 %v5070
      %v5142 = vunpack.c.l.b16 %v5071
      %v5143 = vunpack.c.l.b16 %v5072
      %v5144 = vunpack.c.l.b16 %v5073
      %v5145 = vunpack.c.l.b16 %v5074
      %v5146 = vunpack.c.l.b16 %v5075
      %v5147 = vunpack.c.l.b16 %v5076
      %v5148 = vunpack.c.l.b16 %v5077
      %v5149 = vunpack.c.l.b16 %v5078
      %v5150 = vunpack.c.l.b16 %v5079
      %v5151 = vunpack.c.l.b16 %v5080
      %v5152 = vunpack.c.l.b16 %v5081
      %v5153 = vunpack.c.l.b16 %v5082
      %v5154 = vunpack.c.l.b16 %v5083
      %v5155 = vunpack.c.l.b16 %v5084
      %v5156 = vpack.c.b16 %v5125, %v5124
      %v5157 = vpack.c.b16 %v5127, %v5126
      %v5158 = vpack.c.b16 %v5129, %v5128
      %v5159 = vpack.c.b16 %v5131, %v5130
      %v5160 = vpack.c.b16 %v5133, %v5132
      %v5161 = vpack.c.b16 %v5135, %v5134
      %v5162 = vpack.c.b16 %v5137, %v5136
      %v5163 = vpack.c.b16 %v5139, %v5138
      %v5164 = vpack.c.b16 %v5141, %v5140
      %v5165 = vpack.c.b16 %v5143, %v5142
      %v5166 = vpack.c.b16 %v5145, %v5144
      %v5167 = vpack.c.b16 %v5147, %v5146
      %v5168 = vpack.c.b16 %v5149, %v5148
      %v5169 = vpack.c.b16 %v5151, %v5150
      %v5170 = vpack.c.b16 %v5153, %v5152
      %v5171 = vpack.c.b16 %v5155, %v5154
      %v5178 = vunpack.c.l.b16 %v5086
      %v5179 = vunpack.c.l.b16 %v5087
      %v5180 = vunpack.c.l.b16 %v5088
      %v5181 = vunpack.c.l.b16 %v5089
      %v5182 = vunpack.c.l.b16 %v5090
      %v5183 = vunpack.c.l.b16 %v5091
      %v5184 = vpack.c.b16 %v5179, %v5178
      %v5185 = vpack.c.b16 %v5181, %v5180
      %v5186 = vpack.c.b16 %v5183, %v5182
      %v5190 = vsel %vm4148, %v5156, 0
      %v5193 = vsel %vm4148, %v5157, 0
      %v5196 = vsel %vm4148, %v5158, 0
      %v5199 = vsel %vm4148, %v5159, 0
      %v5202 = vsel %vm4148, %v5160, 0
      %v5205 = vsel %vm4148, %v5161, 0
      %v5208 = vsel %vm4148, %v5162, 0
      %v5211 = vsel %vm4148, %v5163, 0
      %v5214 = vsel %vm4148, %v5164, 0
      %v5217 = vsel %vm4148, %v5165, 0
      %v5220 = vsel %vm4148, %v5166, 0
      %v5223 = vsel %vm4148, %v5167, 0
      %v5226 = vsel %vm4148, %v5168, 0
      %v5229 = vsel %vm4148, %v5169, 0
      %v5232 = vsel %vm4148, %v5170, 0
      %v5235 = vsel %vm4148, %v5171, 0
      %v5238 = vsel %vm4197, %v5186, 0
      %5240 = vmatprep.subr.bf16.mxu0 0
      %5241 = vmatpush1.bf16.msra.mxu0 0
      %5242 = vmatprep.subr.bf16.mxu0 0
      %5243 = vmatpush1.bf16.msra.mxu0 0
      %5244 = vmatprep.subr.bf16.mxu0 0
      %5245 = vmatpush1.bf16.msra.mxu0 0
      %5246 = vmatprep.subr.bf16.mxu0 0
      %5247 = vmatpush1.bf16.msra.mxu0 0
      %5248 = vmatprep.subr.bf16.mxu0 0
      %5249 = vmatpush1.bf16.msra.mxu0 0
      %5250 = vmatprep.subr.bf16.mxu0 0
      %5251 = vmatpush1.bf16.msra.mxu0 %v5238
      %5252 = vmatprep.subr.bf16.mxu0 0
      %5253 = vmatpush1.bf16.msra.mxu0 %v5185
      %5254 = vmatprep.subr.bf16.mxu0 0
      %5255 = vmatpush1.bf16.msra.mxu0 %v5184
      %5256 = vmatprep.subr.bf16.mxu0 0
      %5257 = vmatpush2.bf16.msra.mxu0 0
      %5258 = vmatprep.subr.bf16.mxu0 0
      %5259 = vmatpush2.bf16.msra.mxu0 0
      %5260 = vmatprep.subr.bf16.mxu0 0
      %5261 = vmatpush2.bf16.msra.mxu0 0
      %5262 = vmatprep.subr.bf16.mxu0 0
      %5263 = vmatpush2.bf16.msra.mxu0 0
      %5264 = vmatprep.subr.bf16.mxu0 0
      %5265 = vmatpush2.bf16.msra.mxu0 0
      %5266 = vmatprep.subr.bf16.mxu0 0
      %5267 = vmatpush2.bf16.msra.mxu0 0
      %5268 = vmatprep.subr.bf16.mxu0 0
      %5269 = vmatpush2.bf16.msra.mxu0 0
      %5270 = vmatprep.subr.bf16.mxu0 0
      %5271 = vmatpush2.bf16.msra.mxu0 0
      %5272 = vmatprep.mubr.bf16.mxu0 0
      %5273 = vmatmul.mubr.bf16.gmra.mxu0 %v5190
      %v5274 = vpop.f32.mrf.mxu0
      %v5275 = vadd.f32 0.0, %v5274
      %v5276 = vpop.f32.mrf.mxu0
      %v5277 = vpop.f32.mrf.mxu0
      %v5278 = vadd.f32 0.0, %v5277
      %v5279 = vpop.f32.mrf.mxu0
      %5280 = vmatprep.mubr.bf16.mxu0 0
      %5281 = vmatmul.mubr.bf16.gmra.mxu0 %v5193
      %v5282 = vpop.f32.mrf.mxu0
      %v5283 = vadd.f32 0.0, %v5282
      %v5284 = vpop.f32.mrf.mxu0
      %v5285 = vpop.f32.mrf.mxu0
      %v5286 = vadd.f32 0.0, %v5285
      %v5287 = vpop.f32.mrf.mxu0
      %5288 = vmatprep.mubr.bf16.mxu0 0
      %5289 = vmatmul.mubr.bf16.gmra.mxu0 %v5196
      %v5290 = vpop.f32.mrf.mxu0
      %v5291 = vadd.f32 0.0, %v5290
      %v5292 = vpop.f32.mrf.mxu0
      %v5293 = vpop.f32.mrf.mxu0
      %v5294 = vadd.f32 0.0, %v5293
      %v5295 = vpop.f32.mrf.mxu0
      %5296 = vmatprep.mubr.bf16.mxu0 0
      %5297 = vmatmul.mubr.bf16.gmra.mxu0 %v5199
      %v5298 = vpop.f32.mrf.mxu0
      %v5299 = vadd.f32 0.0, %v5298
      %v5300 = vpop.f32.mrf.mxu0
      %v5301 = vpop.f32.mrf.mxu0
      %v5302 = vadd.f32 0.0, %v5301
      %v5303 = vpop.f32.mrf.mxu0
      %5304 = vmatprep.mubr.bf16.mxu0 0
      %5305 = vmatmul.mubr.bf16.gmra.mxu0 %v5202
      %v5306 = vpop.f32.mrf.mxu0
      %v5307 = vadd.f32 0.0, %v5306
      %v5308 = vpop.f32.mrf.mxu0
      %v5309 = vpop.f32.mrf.mxu0
      %v5310 = vadd.f32 0.0, %v5309
      %v5311 = vpop.f32.mrf.mxu0
      %5312 = vmatprep.mubr.bf16.mxu0 0
      %5313 = vmatmul.mubr.bf16.gmra.mxu0 %v5205
      %v5314 = vpop.f32.mrf.mxu0
      %v5315 = vadd.f32 0.0, %v5314
      %v5316 = vpop.f32.mrf.mxu0
      %v5317 = vpop.f32.mrf.mxu0
      %v5318 = vadd.f32 0.0, %v5317
      %v5319 = vpop.f32.mrf.mxu0
      %5320 = vmatprep.mubr.bf16.mxu0 0
      %5321 = vmatmul.mubr.bf16.gmra.mxu0 %v5208
      %v5322 = vpop.f32.mrf.mxu0
      %v5323 = vadd.f32 0.0, %v5322
      %v5324 = vpop.f32.mrf.mxu0
      %v5325 = vpop.f32.mrf.mxu0
      %v5326 = vadd.f32 0.0, %v5325
      %v5327 = vpop.f32.mrf.mxu0
      %5328 = vmatprep.mubr.bf16.mxu0 0
      %5329 = vmatmul.mubr.bf16.gmra.mxu0 %v5211
      %v5330 = vpop.f32.mrf.mxu0
      %v5331 = vadd.f32 0.0, %v5330
      %v5332 = vpop.f32.mrf.mxu0
      %v5333 = vpop.f32.mrf.mxu0
      %v5334 = vadd.f32 0.0, %v5333
      %v5335 = vpop.f32.mrf.mxu0
      %5336 = vmatprep.mubr.bf16.mxu0 0
      %5337 = vmatmul.mubr.bf16.gmra.mxu0 %v5214
      %v5338 = vpop.f32.mrf.mxu0
      %v5339 = vadd.f32 0.0, %v5338
      %v5340 = vpop.f32.mrf.mxu0
      %v5341 = vpop.f32.mrf.mxu0
      %v5342 = vadd.f32 0.0, %v5341
      %v5343 = vpop.f32.mrf.mxu0
      %5344 = vmatprep.mubr.bf16.mxu0 0
      %5345 = vmatmul.mubr.bf16.gmra.mxu0 %v5217
      %v5346 = vpop.f32.mrf.mxu0
      %v5347 = vadd.f32 0.0, %v5346
      %v5348 = vpop.f32.mrf.mxu0
      %v5349 = vpop.f32.mrf.mxu0
      %v5350 = vadd.f32 0.0, %v5349
      %v5351 = vpop.f32.mrf.mxu0
      %5352 = vmatprep.mubr.bf16.mxu0 0
      %5353 = vmatmul.mubr.bf16.gmra.mxu0 %v5220
      %v5354 = vpop.f32.mrf.mxu0
      %v5355 = vadd.f32 0.0, %v5354
      %v5356 = vpop.f32.mrf.mxu0
      %v5357 = vpop.f32.mrf.mxu0
      %v5358 = vadd.f32 0.0, %v5357
      %v5359 = vpop.f32.mrf.mxu0
      %5360 = vmatprep.mubr.bf16.mxu0 0
      %5361 = vmatmul.mubr.bf16.gmra.mxu0 %v5223
      %v5362 = vpop.f32.mrf.mxu0
      %v5363 = vadd.f32 0.0, %v5362
      %v5364 = vpop.f32.mrf.mxu0
      %v5365 = vpop.f32.mrf.mxu0
      %v5366 = vadd.f32 0.0, %v5365
      %v5367 = vpop.f32.mrf.mxu0
      %5368 = vmatprep.mubr.bf16.mxu0 0
      %5369 = vmatmul.mubr.bf16.gmra.mxu0 %v5226
      %v5370 = vpop.f32.mrf.mxu0
      %v5371 = vadd.f32 0.0, %v5370
      %v5372 = vpop.f32.mrf.mxu0
      %v5373 = vpop.f32.mrf.mxu0
      %v5374 = vadd.f32 0.0, %v5373
      %v5375 = vpop.f32.mrf.mxu0
      %5376 = vmatprep.mubr.bf16.mxu0 0
      %5377 = vmatmul.mubr.bf16.gmra.mxu0 %v5229
      %v5378 = vpop.f32.mrf.mxu0
      %v5379 = vadd.f32 0.0, %v5378
      %v5380 = vpop.f32.mrf.mxu0
      %v5381 = vpop.f32.mrf.mxu0
      %v5382 = vadd.f32 0.0, %v5381
      %v5383 = vpop.f32.mrf.mxu0
      %5384 = vmatprep.mubr.bf16.mxu0 0
      %5385 = vmatmul.mubr.bf16.gmra.mxu0 %v5232
      %v5386 = vpop.f32.mrf.mxu0
      %v5387 = vadd.f32 0.0, %v5386
      %v5388 = vpop.f32.mrf.mxu0
      %v5389 = vpop.f32.mrf.mxu0
      %v5390 = vadd.f32 0.0, %v5389
      %v5391 = vpop.f32.mrf.mxu0
      %5392 = vmatprep.mubr.bf16.mxu0 0
      %5393 = vmatmul.mubr.bf16.gmra.mxu0 %v5235
      %v5394 = vpop.f32.mrf.mxu0
      %v5395 = vadd.f32 0.0, %v5394
      %v5396 = vpop.f32.mrf.mxu0
      %v5397 = vpop.f32.mrf.mxu0
      %v5398 = vadd.f32 0.0, %v5397
      %v5399 = vpop.f32.mrf.mxu0
      %5400 = vdwg.mxu0
      %v5401 = vadd.f32 %v5020, %v5275
      %v5402 = vadd.f32 %v5021, %v5278
      %v5403 = vadd.f32 %v5022, %v5283
      %v5404 = vadd.f32 %v5023, %v5286
      %v5405 = vadd.f32 %v5024, %v5291
      %v5406 = vadd.f32 %v5025, %v5294
      %v5407 = vadd.f32 %v5026, %v5299
      %v5408 = vadd.f32 %v5027, %v5302
      %v5409 = vadd.f32 %v5028, %v5307
      %v5410 = vadd.f32 %v5029, %v5310
      %v5411 = vadd.f32 %v5030, %v5315
      %v5412 = vadd.f32 %v5031, %v5318
      %v5413 = vadd.f32 %v5032, %v5323
      %v5414 = vadd.f32 %v5033, %v5326
      %v5415 = vadd.f32 %v5034, %v5331
      %v5416 = vadd.f32 %v5035, %v5334
      %v5417 = vadd.f32 %v5036, %v5339
      %v5418 = vadd.f32 %v5037, %v5342
      %v5419 = vadd.f32 %v5038, %v5347
      %v5420 = vadd.f32 %v5039, %v5350
      %v5421 = vadd.f32 %v5040, %v5355
      %v5422 = vadd.f32 %v5041, %v5358
      %v5423 = vadd.f32 %v5042, %v5363
      %v5424 = vadd.f32 %v5043, %v5366
      %v5425 = vadd.f32 %v5044, %v5371
      %v5426 = vadd.f32 %v5045, %v5374
      %v5427 = vadd.f32 %v5046, %v5379
      %v5428 = vadd.f32 %v5047, %v5382
      %v5429 = vadd.f32 %v5048, %v5387
      %v5430 = vadd.f32 %v5049, %v5390
      %v5431 = vadd.f32 %v5050, %v5395
      %v5432 = vadd.f32 %v5051, %v5398
      %s5433 = scalar_lea.vmem [#allocation2], 32
      %v5434 = vld [vmem:[%s5433] sm:$0xf]
      %v5435 = vld [vmem:[%s5433 + $0x4] sm:$0xf]
      %v5436 = vld [vmem:[%s5433 + $0x8] sm:$0xf]
      %v5437 = vld [vmem:[%s5433 + $0xc] sm:$0xf]
      %v5438 = vld [vmem:[%s5433 + $0x10] sm:$0xf]
      %v5439 = vld [vmem:[%s5433 + $0x14] sm:$0xf]
      %v5440 = vld [vmem:[%s5433 + $0x18] sm:$0xf]
      %v5441 = vld [vmem:[%s5433 + $0x1c] sm:$0xf]
      %v5442 = vld [vmem:[%s5433 + $0x20] sm:$0xf]
      %v5443 = vld [vmem:[%s5433 + $0x24] sm:$0xf]
      %v5444 = vld [vmem:[%s5433 + $0x28] sm:$0xf]
      %v5445 = vld [vmem:[%s5433 + $0x2c] sm:$0xf]
      %v5446 = vld [vmem:[%s5433 + $0x30] sm:$0xf]
      %v5447 = vld [vmem:[%s5433 + $0x34] sm:$0xf]
      %v5448 = vld [vmem:[%s5433 + $0x38] sm:$0xf]
      %v5449 = vld [vmem:[%s5433 + $0x3c] sm:$0xf]
      %v5450 = vld [vmem:[%s5433 + $0x40] sm:$0xf]
      %v5451 = vld [vmem:[%s5433 + $0x44] sm:$0xf]
      %v5452 = vld [vmem:[%s5433 + $0x48] sm:$0xf]
      %v5453 = vld [vmem:[%s5433 + $0x4c] sm:$0xf]
      %v5454 = vld [vmem:[%s5433 + $0x50] sm:$0xf]
      %v5455 = vld [vmem:[%s5433 + $0x54] sm:$0xf]
      %v5456 = vld [vmem:[%s5433 + $0x58] sm:$0xf]
      %v5457 = vld [vmem:[%s5433 + $0x5c] sm:$0xf]
      %v5458 = vld [vmem:[%s5433 + $0x60] sm:$0xf]
      %v5459 = vld [vmem:[%s5433 + $0x64] sm:$0xf]
      %v5460 = vld [vmem:[%s5433 + $0x68] sm:$0xf]
      %v5461 = vld [vmem:[%s5433 + $0x6c] sm:$0xf]
      %v5462 = vld [vmem:[%s5433 + $0x70] sm:$0xf]
      %v5463 = vld [vmem:[%s5433 + $0x74] sm:$0xf]
      %v5464 = vld [vmem:[%s5433 + $0x78] sm:$0xf]
      %v5465 = vld [vmem:[%s5433 + $0x7c] sm:$0xf]
      %s5466 = scalar_lea.vmem %s1, 96
      %v5467 = vld [vmem:[%s5466] sm:$0xf]
      %v5468 = vld [vmem:[%s5466 + $0x4] sm:$0xf]
      %v5469 = vld [vmem:[%s5466 + $0x8] sm:$0xf]
      %v5470 = vld [vmem:[%s5466 + $0xc] sm:$0xf]
      %v5471 = vld [vmem:[%s5466 + $0x10] sm:$0xf]
      %v5472 = vld [vmem:[%s5466 + $0x14] sm:$0x3]
      %v5505 = vunpack.c.l.b16 %v5434
      %v5506 = vunpack.c.l.b16 %v5435
      %v5507 = vunpack.c.l.b16 %v5436
      %v5508 = vunpack.c.l.b16 %v5437
      %v5509 = vunpack.c.l.b16 %v5438
      %v5510 = vunpack.c.l.b16 %v5439
      %v5511 = vunpack.c.l.b16 %v5440
      %v5512 = vunpack.c.l.b16 %v5441
      %v5513 = vunpack.c.l.b16 %v5442
      %v5514 = vunpack.c.l.b16 %v5443
      %v5515 = vunpack.c.l.b16 %v5444
      %v5516 = vunpack.c.l.b16 %v5445
      %v5517 = vunpack.c.l.b16 %v5446
      %v5518 = vunpack.c.l.b16 %v5447
      %v5519 = vunpack.c.l.b16 %v5448
      %v5520 = vunpack.c.l.b16 %v5449
      %v5521 = vunpack.c.l.b16 %v5450
      %v5522 = vunpack.c.l.b16 %v5451
      %v5523 = vunpack.c.l.b16 %v5452
      %v5524 = vunpack.c.l.b16 %v5453
      %v5525 = vunpack.c.l.b16 %v5454
      %v5526 = vunpack.c.l.b16 %v5455
      %v5527 = vunpack.c.l.b16 %v5456
      %v5528 = vunpack.c.l.b16 %v5457
      %v5529 = vunpack.c.l.b16 %v5458
      %v5530 = vunpack.c.l.b16 %v5459
      %v5531 = vunpack.c.l.b16 %v5460
      %v5532 = vunpack.c.l.b16 %v5461
      %v5533 = vunpack.c.l.b16 %v5462
      %v5534 = vunpack.c.l.b16 %v5463
      %v5535 = vunpack.c.l.b16 %v5464
      %v5536 = vunpack.c.l.b16 %v5465
      %v5537 = vpack.c.b16 %v5506, %v5505
      %v5538 = vpack.c.b16 %v5508, %v5507
      %v5539 = vpack.c.b16 %v5510, %v5509
      %v5540 = vpack.c.b16 %v5512, %v5511
      %v5541 = vpack.c.b16 %v5514, %v5513
      %v5542 = vpack.c.b16 %v5516, %v5515
      %v5543 = vpack.c.b16 %v5518, %v5517
      %v5544 = vpack.c.b16 %v5520, %v5519
      %v5545 = vpack.c.b16 %v5522, %v5521
      %v5546 = vpack.c.b16 %v5524, %v5523
      %v5547 = vpack.c.b16 %v5526, %v5525
      %v5548 = vpack.c.b16 %v5528, %v5527
      %v5549 = vpack.c.b16 %v5530, %v5529
      %v5550 = vpack.c.b16 %v5532, %v5531
      %v5551 = vpack.c.b16 %v5534, %v5533
      %v5552 = vpack.c.b16 %v5536, %v5535
      %v5559 = vunpack.c.l.b16 %v5467
      %v5560 = vunpack.c.l.b16 %v5468
      %v5561 = vunpack.c.l.b16 %v5469
      %v5562 = vunpack.c.l.b16 %v5470
      %v5563 = vunpack.c.l.b16 %v5471
      %v5564 = vunpack.c.l.b16 %v5472
      %v5565 = vpack.c.b16 %v5560, %v5559
      %v5566 = vpack.c.b16 %v5562, %v5561
      %v5567 = vpack.c.b16 %v5564, %v5563
      %v5571 = vsel %vm4148, %v5537, 0
      %v5574 = vsel %vm4148, %v5538, 0
      %v5577 = vsel %vm4148, %v5539, 0
      %v5580 = vsel %vm4148, %v5540, 0
      %v5583 = vsel %vm4148, %v5541, 0
      %v5586 = vsel %vm4148, %v5542, 0
      %v5589 = vsel %vm4148, %v5543, 0
      %v5592 = vsel %vm4148, %v5544, 0
      %v5595 = vsel %vm4148, %v5545, 0
      %v5598 = vsel %vm4148, %v5546, 0
      %v5601 = vsel %vm4148, %v5547, 0
      %v5604 = vsel %vm4148, %v5548, 0
      %v5607 = vsel %vm4148, %v5549, 0
      %v5610 = vsel %vm4148, %v5550, 0
      %v5613 = vsel %vm4148, %v5551, 0
      %v5616 = vsel %vm4148, %v5552, 0
      %v5619 = vsel %vm4197, %v5567, 0
      %5621 = vmatprep.subr.bf16.mxu0 0
      %5622 = vmatpush1.bf16.msra.mxu0 0
      %5623 = vmatprep.subr.bf16.mxu0 0
      %5624 = vmatpush1.bf16.msra.mxu0 0
      %5625 = vmatprep.subr.bf16.mxu0 0
      %5626 = vmatpush1.bf16.msra.mxu0 0
      %5627 = vmatprep.subr.bf16.mxu0 0
      %5628 = vmatpush1.bf16.msra.mxu0 0
      %5629 = vmatprep.subr.bf16.mxu0 0
      %5630 = vmatpush1.bf16.msra.mxu0 0
      %5631 = vmatprep.subr.bf16.mxu0 0
      %5632 = vmatpush1.bf16.msra.mxu0 %v5619
      %5633 = vmatprep.subr.bf16.mxu0 0
      %5634 = vmatpush1.bf16.msra.mxu0 %v5566
      %5635 = vmatprep.subr.bf16.mxu0 0
      %5636 = vmatpush1.bf16.msra.mxu0 %v5565
      %5637 = vmatprep.subr.bf16.mxu0 0
      %5638 = vmatpush2.bf16.msra.mxu0 0
      %5639 = vmatprep.subr.bf16.mxu0 0
      %5640 = vmatpush2.bf16.msra.mxu0 0
      %5641 = vmatprep.subr.bf16.mxu0 0
      %5642 = vmatpush2.bf16.msra.mxu0 0
      %5643 = vmatprep.subr.bf16.mxu0 0
      %5644 = vmatpush2.bf16.msra.mxu0 0
      %5645 = vmatprep.subr.bf16.mxu0 0
      %5646 = vmatpush2.bf16.msra.mxu0 0
      %5647 = vmatprep.subr.bf16.mxu0 0
      %5648 = vmatpush2.bf16.msra.mxu0 0
      %5649 = vmatprep.subr.bf16.mxu0 0
      %5650 = vmatpush2.bf16.msra.mxu0 0
      %5651 = vmatprep.subr.bf16.mxu0 0
      %5652 = vmatpush2.bf16.msra.mxu0 0
      %5653 = vmatprep.mubr.bf16.mxu0 0
      %5654 = vmatmul.mubr.bf16.gmra.mxu0 %v5571
      %v5655 = vpop.f32.mrf.mxu0
      %v5656 = vadd.f32 0.0, %v5655
      %v5657 = vpop.f32.mrf.mxu0
      %v5658 = vpop.f32.mrf.mxu0
      %v5659 = vadd.f32 0.0, %v5658
      %v5660 = vpop.f32.mrf.mxu0
      %5661 = vmatprep.mubr.bf16.mxu0 0
      %5662 = vmatmul.mubr.bf16.gmra.mxu0 %v5574
      %v5663 = vpop.f32.mrf.mxu0
      %v5664 = vadd.f32 0.0, %v5663
      %v5665 = vpop.f32.mrf.mxu0
      %v5666 = vpop.f32.mrf.mxu0
      %v5667 = vadd.f32 0.0, %v5666
      %v5668 = vpop.f32.mrf.mxu0
      %5669 = vmatprep.mubr.bf16.mxu0 0
      %5670 = vmatmul.mubr.bf16.gmra.mxu0 %v5577
      %v5671 = vpop.f32.mrf.mxu0
      %v5672 = vadd.f32 0.0, %v5671
      %v5673 = vpop.f32.mrf.mxu0
      %v5674 = vpop.f32.mrf.mxu0
      %v5675 = vadd.f32 0.0, %v5674
      %v5676 = vpop.f32.mrf.mxu0
      %5677 = vmatprep.mubr.bf16.mxu0 0
      %5678 = vmatmul.mubr.bf16.gmra.mxu0 %v5580
      %v5679 = vpop.f32.mrf.mxu0
      %v5680 = vadd.f32 0.0, %v5679
      %v5681 = vpop.f32.mrf.mxu0
      %v5682 = vpop.f32.mrf.mxu0
      %v5683 = vadd.f32 0.0, %v5682
      %v5684 = vpop.f32.mrf.mxu0
      %5685 = vmatprep.mubr.bf16.mxu0 0
      %5686 = vmatmul.mubr.bf16.gmra.mxu0 %v5583
      %v5687 = vpop.f32.mrf.mxu0
      %v5688 = vadd.f32 0.0, %v5687
      %v5689 = vpop.f32.mrf.mxu0
      %v5690 = vpop.f32.mrf.mxu0
      %v5691 = vadd.f32 0.0, %v5690
      %v5692 = vpop.f32.mrf.mxu0
      %5693 = vmatprep.mubr.bf16.mxu0 0
      %5694 = vmatmul.mubr.bf16.gmra.mxu0 %v5586
      %v5695 = vpop.f32.mrf.mxu0
      %v5696 = vadd.f32 0.0, %v5695
      %v5697 = vpop.f32.mrf.mxu0
      %v5698 = vpop.f32.mrf.mxu0
      %v5699 = vadd.f32 0.0, %v5698
      %v5700 = vpop.f32.mrf.mxu0
      %5701 = vmatprep.mubr.bf16.mxu0 0
      %5702 = vmatmul.mubr.bf16.gmra.mxu0 %v5589
      %v5703 = vpop.f32.mrf.mxu0
      %v5704 = vadd.f32 0.0, %v5703
      %v5705 = vpop.f32.mrf.mxu0
      %v5706 = vpop.f32.mrf.mxu0
      %v5707 = vadd.f32 0.0, %v5706
      %v5708 = vpop.f32.mrf.mxu0
      %5709 = vmatprep.mubr.bf16.mxu0 0
      %5710 = vmatmul.mubr.bf16.gmra.mxu0 %v5592
      %v5711 = vpop.f32.mrf.mxu0
      %v5712 = vadd.f32 0.0, %v5711
      %v5713 = vpop.f32.mrf.mxu0
      %v5714 = vpop.f32.mrf.mxu0
      %v5715 = vadd.f32 0.0, %v5714
      %v5716 = vpop.f32.mrf.mxu0
      %5717 = vmatprep.mubr.bf16.mxu0 0
      %5718 = vmatmul.mubr.bf16.gmra.mxu0 %v5595
      %v5719 = vpop.f32.mrf.mxu0
      %v5720 = vadd.f32 0.0, %v5719
      %v5721 = vpop.f32.mrf.mxu0
      %v5722 = vpop.f32.mrf.mxu0
      %v5723 = vadd.f32 0.0, %v5722
      %v5724 = vpop.f32.mrf.mxu0
      %5725 = vmatprep.mubr.bf16.mxu0 0
      %5726 = vmatmul.mubr.bf16.gmra.mxu0 %v5598
      %v5727 = vpop.f32.mrf.mxu0
      %v5728 = vadd.f32 0.0, %v5727
      %v5729 = vpop.f32.mrf.mxu0
      %v5730 = vpop.f32.mrf.mxu0
      %v5731 = vadd.f32 0.0, %v5730
      %v5732 = vpop.f32.mrf.mxu0
      %5733 = vmatprep.mubr.bf16.mxu0 0
      %5734 = vmatmul.mubr.bf16.gmra.mxu0 %v5601
      %v5735 = vpop.f32.mrf.mxu0
      %v5736 = vadd.f32 0.0, %v5735
      %v5737 = vpop.f32.mrf.mxu0
      %v5738 = vpop.f32.mrf.mxu0
      %v5739 = vadd.f32 0.0, %v5738
      %v5740 = vpop.f32.mrf.mxu0
      %5741 = vmatprep.mubr.bf16.mxu0 0
      %5742 = vmatmul.mubr.bf16.gmra.mxu0 %v5604
      %v5743 = vpop.f32.mrf.mxu0
      %v5744 = vadd.f32 0.0, %v5743
      %v5745 = vpop.f32.mrf.mxu0
      %v5746 = vpop.f32.mrf.mxu0
      %v5747 = vadd.f32 0.0, %v5746
      %v5748 = vpop.f32.mrf.mxu0
      %5749 = vmatprep.mubr.bf16.mxu0 0
      %5750 = vmatmul.mubr.bf16.gmra.mxu0 %v5607
      %v5751 = vpop.f32.mrf.mxu0
      %v5752 = vadd.f32 0.0, %v5751
      %v5753 = vpop.f32.mrf.mxu0
      %v5754 = vpop.f32.mrf.mxu0
      %v5755 = vadd.f32 0.0, %v5754
      %v5756 = vpop.f32.mrf.mxu0
      %5757 = vmatprep.mubr.bf16.mxu0 0
      %5758 = vmatmul.mubr.bf16.gmra.mxu0 %v5610
      %v5759 = vpop.f32.mrf.mxu0
      %v5760 = vadd.f32 0.0, %v5759
      %v5761 = vpop.f32.mrf.mxu0
      %v5762 = vpop.f32.mrf.mxu0
      %v5763 = vadd.f32 0.0, %v5762
      %v5764 = vpop.f32.mrf.mxu0
      %5765 = vmatprep.mubr.bf16.mxu0 0
      %5766 = vmatmul.mubr.bf16.gmra.mxu0 %v5613
      %v5767 = vpop.f32.mrf.mxu0
      %v5768 = vadd.f32 0.0, %v5767
      %v5769 = vpop.f32.mrf.mxu0
      %v5770 = vpop.f32.mrf.mxu0
      %v5771 = vadd.f32 0.0, %v5770
      %v5772 = vpop.f32.mrf.mxu0
      %5773 = vmatprep.mubr.bf16.mxu0 0
      %5774 = vmatmul.mubr.bf16.gmra.mxu0 %v5616
      %v5775 = vpop.f32.mrf.mxu0
      %v5776 = vadd.f32 0.0, %v5775
      %v5777 = vpop.f32.mrf.mxu0
      %v5778 = vpop.f32.mrf.mxu0
      %v5779 = vadd.f32 0.0, %v5778
      %v5780 = vpop.f32.mrf.mxu0
      %5781 = vdwg.mxu0
      %v5782 = vadd.f32 %v5401, %v5656
      %v5783 = vadd.f32 %v5402, %v5659
      %v5784 = vadd.f32 %v5403, %v5664
      %v5785 = vadd.f32 %v5404, %v5667
      %v5786 = vadd.f32 %v5405, %v5672
      %v5787 = vadd.f32 %v5406, %v5675
      %v5788 = vadd.f32 %v5407, %v5680
      %v5789 = vadd.f32 %v5408, %v5683
      %v5790 = vadd.f32 %v5409, %v5688
      %v5791 = vadd.f32 %v5410, %v5691
      %v5792 = vadd.f32 %v5411, %v5696
      %v5793 = vadd.f32 %v5412, %v5699
      %v5794 = vadd.f32 %v5413, %v5704
      %v5795 = vadd.f32 %v5414, %v5707
      %v5796 = vadd.f32 %v5415, %v5712
      %v5797 = vadd.f32 %v5416, %v5715
      %v5798 = vadd.f32 %v5417, %v5720
      %v5799 = vadd.f32 %v5418, %v5723
      %v5800 = vadd.f32 %v5419, %v5728
      %v5801 = vadd.f32 %v5420, %v5731
      %v5802 = vadd.f32 %v5421, %v5736
      %v5803 = vadd.f32 %v5422, %v5739
      %v5804 = vadd.f32 %v5423, %v5744
      %v5805 = vadd.f32 %v5424, %v5747
      %v5806 = vadd.f32 %v5425, %v5752
      %v5807 = vadd.f32 %v5426, %v5755
      %v5808 = vadd.f32 %v5427, %v5760
      %v5809 = vadd.f32 %v5428, %v5763
      %v5810 = vadd.f32 %v5429, %v5768
      %v5811 = vadd.f32 %v5430, %v5771
      %v5812 = vadd.f32 %v5431, %v5776
      %v5813 = vadd.f32 %v5432, %v5779
      %v5814 = vld [vmem:[%s731] sm:$0xf]
      %v5815 = vld [vmem:[%s731 + $0x4] sm:$0xf]
      %v5816 = vld [vmem:[%s731 + $0x8] sm:$0xf]
      %v5817 = vld [vmem:[%s731 + $0xc] sm:$0xf]
      %v5818 = vld [vmem:[%s731 + $0x10] sm:$0xf]
      %v5819 = vld [vmem:[%s731 + $0x14] sm:$0xf]
      %v5820 = vld [vmem:[%s731 + $0x18] sm:$0xf]
      %v5821 = vld [vmem:[%s731 + $0x1c] sm:$0xf]
      %v5822 = vld [vmem:[%s731 + $0x20] sm:$0xf]
      %v5823 = vld [vmem:[%s731 + $0x24] sm:$0xf]
      %v5824 = vld [vmem:[%s731 + $0x28] sm:$0xf]
      %v5825 = vld [vmem:[%s731 + $0x2c] sm:$0xf]
      %v5826 = vld [vmem:[%s731 + $0x30] sm:$0xf]
      %v5827 = vld [vmem:[%s731 + $0x34] sm:$0xf]
      %v5828 = vld [vmem:[%s731 + $0x38] sm:$0xf]
      %v5829 = vld [vmem:[%s731 + $0x3c] sm:$0xf]
      %v5830 = vld [vmem:[%s731 + $0x40] sm:$0xf]
      %v5831 = vld [vmem:[%s731 + $0x44] sm:$0xf]
      %v5832 = vld [vmem:[%s731 + $0x48] sm:$0xf]
      %v5833 = vld [vmem:[%s731 + $0x4c] sm:$0xf]
      %v5834 = vld [vmem:[%s731 + $0x50] sm:$0xf]
      %v5835 = vld [vmem:[%s731 + $0x54] sm:$0xf]
      %v5836 = vld [vmem:[%s731 + $0x58] sm:$0xf]
      %v5837 = vld [vmem:[%s731 + $0x5c] sm:$0xf]
      %v5838 = vld [vmem:[%s731 + $0x60] sm:$0xf]
      %v5839 = vld [vmem:[%s731 + $0x64] sm:$0xf]
      %v5840 = vld [vmem:[%s731 + $0x68] sm:$0xf]
      %v5841 = vld [vmem:[%s731 + $0x6c] sm:$0xf]
      %v5842 = vld [vmem:[%s731 + $0x70] sm:$0xf]
      %v5843 = vld [vmem:[%s731 + $0x74] sm:$0xf]
      %v5844 = vld [vmem:[%s731 + $0x78] sm:$0xf]
      %v5845 = vld [vmem:[%s731 + $0x7c] sm:$0xf]
      %s5846 = scalar_lea.vmem %s1, 120
      %v5847 = vld [vmem:[%s5846] sm:$0xf]
      %v5848 = vld [vmem:[%s5846 + $0x4] sm:$0xf]
      %v5849 = vld [vmem:[%s5846 + $0x8] sm:$0xf]
      %v5850 = vld [vmem:[%s5846 + $0xc] sm:$0xf]
      %v5851 = vld [vmem:[%s5846 + $0x10] sm:$0xf]
      %v5852 = vld [vmem:[%s5846 + $0x14] sm:$0x3]
      %v5885 = vunpack.c.l.b16 %v5814
      %v5886 = vunpack.c.l.b16 %v5815
      %v5887 = vunpack.c.l.b16 %v5816
      %v5888 = vunpack.c.l.b16 %v5817
      %v5889 = vunpack.c.l.b16 %v5818
      %v5890 = vunpack.c.l.b16 %v5819
      %v5891 = vunpack.c.l.b16 %v5820
      %v5892 = vunpack.c.l.b16 %v5821
      %v5893 = vunpack.c.l.b16 %v5822
      %v5894 = vunpack.c.l.b16 %v5823
      %v5895 = vunpack.c.l.b16 %v5824
      %v5896 = vunpack.c.l.b16 %v5825
      %v5897 = vunpack.c.l.b16 %v5826
      %v5898 = vunpack.c.l.b16 %v5827
      %v5899 = vunpack.c.l.b16 %v5828
      %v5900 = vunpack.c.l.b16 %v5829
      %v5901 = vunpack.c.l.b16 %v5830
      %v5902 = vunpack.c.l.b16 %v5831
      %v5903 = vunpack.c.l.b16 %v5832
      %v5904 = vunpack.c.l.b16 %v5833
      %v5905 = vunpack.c.l.b16 %v5834
      %v5906 = vunpack.c.l.b16 %v5835
      %v5907 = vunpack.c.l.b16 %v5836
      %v5908 = vunpack.c.l.b16 %v5837
      %v5909 = vunpack.c.l.b16 %v5838
      %v5910 = vunpack.c.l.b16 %v5839
      %v5911 = vunpack.c.l.b16 %v5840
      %v5912 = vunpack.c.l.b16 %v5841
      %v5913 = vunpack.c.l.b16 %v5842
      %v5914 = vunpack.c.l.b16 %v5843
      %v5915 = vunpack.c.l.b16 %v5844
      %v5916 = vunpack.c.l.b16 %v5845
      %v5917 = vpack.c.b16 %v5886, %v5885
      %v5918 = vpack.c.b16 %v5888, %v5887
      %v5919 = vpack.c.b16 %v5890, %v5889
      %v5920 = vpack.c.b16 %v5892, %v5891
      %v5921 = vpack.c.b16 %v5894, %v5893
      %v5922 = vpack.c.b16 %v5896, %v5895
      %v5923 = vpack.c.b16 %v5898, %v5897
      %v5924 = vpack.c.b16 %v5900, %v5899
      %v5925 = vpack.c.b16 %v5902, %v5901
      %v5926 = vpack.c.b16 %v5904, %v5903
      %v5927 = vpack.c.b16 %v5906, %v5905
      %v5928 = vpack.c.b16 %v5908, %v5907
      %v5929 = vpack.c.b16 %v5910, %v5909
      %v5930 = vpack.c.b16 %v5912, %v5911
      %v5931 = vpack.c.b16 %v5914, %v5913
      %v5932 = vpack.c.b16 %v5916, %v5915
      %v5939 = vunpack.c.l.b16 %v5847
      %v5940 = vunpack.c.l.b16 %v5848
      %v5941 = vunpack.c.l.b16 %v5849
      %v5942 = vunpack.c.l.b16 %v5850
      %v5943 = vunpack.c.l.b16 %v5851
      %v5944 = vunpack.c.l.b16 %v5852
      %v5945 = vpack.c.b16 %v5940, %v5939
      %v5946 = vpack.c.b16 %v5942, %v5941
      %v5947 = vpack.c.b16 %v5944, %v5943
      %v5951 = vsel %vm4148, %v5917, 0
      %v5954 = vsel %vm4148, %v5918, 0
      %v5957 = vsel %vm4148, %v5919, 0
      %v5960 = vsel %vm4148, %v5920, 0
      %v5963 = vsel %vm4148, %v5921, 0
      %v5966 = vsel %vm4148, %v5922, 0
      %v5969 = vsel %vm4148, %v5923, 0
      %v5972 = vsel %vm4148, %v5924, 0
      %v5975 = vsel %vm4148, %v5925, 0
      %v5978 = vsel %vm4148, %v5926, 0
      %v5981 = vsel %vm4148, %v5927, 0
      %v5984 = vsel %vm4148, %v5928, 0
      %v5987 = vsel %vm4148, %v5929, 0
      %v5990 = vsel %vm4148, %v5930, 0
      %v5993 = vsel %vm4148, %v5931, 0
      %v5996 = vsel %vm4148, %v5932, 0
      %v5999 = vsel %vm4197, %v5947, 0
      %6001 = vmatprep.subr.bf16.mxu0 0
      %6002 = vmatpush1.bf16.msra.mxu0 0
      %6003 = vmatprep.subr.bf16.mxu0 0
      %6004 = vmatpush1.bf16.msra.mxu0 0
      %6005 = vmatprep.subr.bf16.mxu0 0
      %6006 = vmatpush1.bf16.msra.mxu0 0
      %6007 = vmatprep.subr.bf16.mxu0 0
      %6008 = vmatpush1.bf16.msra.mxu0 0
      %6009 = vmatprep.subr.bf16.mxu0 0
      %6010 = vmatpush1.bf16.msra.mxu0 0
      %6011 = vmatprep.subr.bf16.mxu0 0
      %6012 = vmatpush1.bf16.msra.mxu0 %v5999
      %6013 = vmatprep.subr.bf16.mxu0 0
      %6014 = vmatpush1.bf16.msra.mxu0 %v5946
      %6015 = vmatprep.subr.bf16.mxu0 0
      %6016 = vmatpush1.bf16.msra.mxu0 %v5945
      %6017 = vmatprep.subr.bf16.mxu0 0
      %6018 = vmatpush2.bf16.msra.mxu0 0
      %6019 = vmatprep.subr.bf16.mxu0 0
      %6020 = vmatpush2.bf16.msra.mxu0 0
      %6021 = vmatprep.subr.bf16.mxu0 0
      %6022 = vmatpush2.bf16.msra.mxu0 0
      %6023 = vmatprep.subr.bf16.mxu0 0
      %6024 = vmatpush2.bf16.msra.mxu0 0
      %6025 = vmatprep.subr.bf16.mxu0 0
      %6026 = vmatpush2.bf16.msra.mxu0 0
      %6027 = vmatprep.subr.bf16.mxu0 0
      %6028 = vmatpush2.bf16.msra.mxu0 0
      %6029 = vmatprep.subr.bf16.mxu0 0
      %6030 = vmatpush2.bf16.msra.mxu0 0
      %6031 = vmatprep.subr.bf16.mxu0 0
      %6032 = vmatpush2.bf16.msra.mxu0 0
      %6033 = vmatprep.mubr.bf16.mxu0 0
      %6034 = vmatmul.mubr.bf16.gmra.mxu0 %v5951
      %v6035 = vpop.f32.mrf.mxu0
      %v6036 = vadd.f32 0.0, %v6035
      %v6037 = vpop.f32.mrf.mxu0
      %v6038 = vpop.f32.mrf.mxu0
      %v6039 = vadd.f32 0.0, %v6038
      %v6040 = vpop.f32.mrf.mxu0
      %6041 = vmatprep.mubr.bf16.mxu0 0
      %6042 = vmatmul.mubr.bf16.gmra.mxu0 %v5954
      %v6043 = vpop.f32.mrf.mxu0
      %v6044 = vadd.f32 0.0, %v6043
      %v6045 = vpop.f32.mrf.mxu0
      %v6046 = vpop.f32.mrf.mxu0
      %v6047 = vadd.f32 0.0, %v6046
      %v6048 = vpop.f32.mrf.mxu0
      %6049 = vmatprep.mubr.bf16.mxu0 0
      %6050 = vmatmul.mubr.bf16.gmra.mxu0 %v5957
      %v6051 = vpop.f32.mrf.mxu0
      %v6052 = vadd.f32 0.0, %v6051
      %v6053 = vpop.f32.mrf.mxu0
      %v6054 = vpop.f32.mrf.mxu0
      %v6055 = vadd.f32 0.0, %v6054
      %v6056 = vpop.f32.mrf.mxu0
      %6057 = vmatprep.mubr.bf16.mxu0 0
      %6058 = vmatmul.mubr.bf16.gmra.mxu0 %v5960
      %v6059 = vpop.f32.mrf.mxu0
      %v6060 = vadd.f32 0.0, %v6059
      %v6061 = vpop.f32.mrf.mxu0
      %v6062 = vpop.f32.mrf.mxu0
      %v6063 = vadd.f32 0.0, %v6062
      %v6064 = vpop.f32.mrf.mxu0
      %6065 = vmatprep.mubr.bf16.mxu0 0
      %6066 = vmatmul.mubr.bf16.gmra.mxu0 %v5963
      %v6067 = vpop.f32.mrf.mxu0
      %v6068 = vadd.f32 0.0, %v6067
      %v6069 = vpop.f32.mrf.mxu0
      %v6070 = vpop.f32.mrf.mxu0
      %v6071 = vadd.f32 0.0, %v6070
      %v6072 = vpop.f32.mrf.mxu0
      %6073 = vmatprep.mubr.bf16.mxu0 0
      %6074 = vmatmul.mubr.bf16.gmra.mxu0 %v5966
      %v6075 = vpop.f32.mrf.mxu0
      %v6076 = vadd.f32 0.0, %v6075
      %v6077 = vpop.f32.mrf.mxu0
      %v6078 = vpop.f32.mrf.mxu0
      %v6079 = vadd.f32 0.0, %v6078
      %v6080 = vpop.f32.mrf.mxu0
      %6081 = vmatprep.mubr.bf16.mxu0 0
      %6082 = vmatmul.mubr.bf16.gmra.mxu0 %v5969
      %v6083 = vpop.f32.mrf.mxu0
      %v6084 = vadd.f32 0.0, %v6083
      %v6085 = vpop.f32.mrf.mxu0
      %v6086 = vpop.f32.mrf.mxu0
      %v6087 = vadd.f32 0.0, %v6086
      %v6088 = vpop.f32.mrf.mxu0
      %6089 = vmatprep.mubr.bf16.mxu0 0
      %6090 = vmatmul.mubr.bf16.gmra.mxu0 %v5972
      %v6091 = vpop.f32.mrf.mxu0
      %v6092 = vadd.f32 0.0, %v6091
      %v6093 = vpop.f32.mrf.mxu0
      %v6094 = vpop.f32.mrf.mxu0
      %v6095 = vadd.f32 0.0, %v6094
      %v6096 = vpop.f32.mrf.mxu0
      %6097 = vmatprep.mubr.bf16.mxu0 0
      %6098 = vmatmul.mubr.bf16.gmra.mxu0 %v5975
      %v6099 = vpop.f32.mrf.mxu0
      %v6100 = vadd.f32 0.0, %v6099
      %v6101 = vpop.f32.mrf.mxu0
      %v6102 = vpop.f32.mrf.mxu0
      %v6103 = vadd.f32 0.0, %v6102
      %v6104 = vpop.f32.mrf.mxu0
      %6105 = vmatprep.mubr.bf16.mxu0 0
      %6106 = vmatmul.mubr.bf16.gmra.mxu0 %v5978
      %v6107 = vpop.f32.mrf.mxu0
      %v6108 = vadd.f32 0.0, %v6107
      %v6109 = vpop.f32.mrf.mxu0
      %v6110 = vpop.f32.mrf.mxu0
      %v6111 = vadd.f32 0.0, %v6110
      %v6112 = vpop.f32.mrf.mxu0
      %6113 = vmatprep.mubr.bf16.mxu0 0
      %6114 = vmatmul.mubr.bf16.gmra.mxu0 %v5981
      %v6115 = vpop.f32.mrf.mxu0
      %v6116 = vadd.f32 0.0, %v6115
      %v6117 = vpop.f32.mrf.mxu0
      %v6118 = vpop.f32.mrf.mxu0
      %v6119 = vadd.f32 0.0, %v6118
      %v6120 = vpop.f32.mrf.mxu0
      %6121 = vmatprep.mubr.bf16.mxu0 0
      %6122 = vmatmul.mubr.bf16.gmra.mxu0 %v5984
      %v6123 = vpop.f32.mrf.mxu0
      %v6124 = vadd.f32 0.0, %v6123
      %v6125 = vpop.f32.mrf.mxu0
      %v6126 = vpop.f32.mrf.mxu0
      %v6127 = vadd.f32 0.0, %v6126
      %v6128 = vpop.f32.mrf.mxu0
      %6129 = vmatprep.mubr.bf16.mxu0 0
      %6130 = vmatmul.mubr.bf16.gmra.mxu0 %v5987
      %v6131 = vpop.f32.mrf.mxu0
      %v6132 = vadd.f32 0.0, %v6131
      %v6133 = vpop.f32.mrf.mxu0
      %v6134 = vpop.f32.mrf.mxu0
      %v6135 = vadd.f32 0.0, %v6134
      %v6136 = vpop.f32.mrf.mxu0
      %6137 = vmatprep.mubr.bf16.mxu0 0
      %6138 = vmatmul.mubr.bf16.gmra.mxu0 %v5990
      %v6139 = vpop.f32.mrf.mxu0
      %v6140 = vadd.f32 0.0, %v6139
      %v6141 = vpop.f32.mrf.mxu0
      %v6142 = vpop.f32.mrf.mxu0
      %v6143 = vadd.f32 0.0, %v6142
      %v6144 = vpop.f32.mrf.mxu0
      %6145 = vmatprep.mubr.bf16.mxu0 0
      %6146 = vmatmul.mubr.bf16.gmra.mxu0 %v5993
      %v6147 = vpop.f32.mrf.mxu0
      %v6148 = vadd.f32 0.0, %v6147
      %v6149 = vpop.f32.mrf.mxu0
      %v6150 = vpop.f32.mrf.mxu0
      %v6151 = vadd.f32 0.0, %v6150
      %v6152 = vpop.f32.mrf.mxu0
      %6153 = vmatprep.mubr.bf16.mxu0 0
      %6154 = vmatmul.mubr.bf16.gmra.mxu0 %v5996
      %v6155 = vpop.f32.mrf.mxu0
      %v6156 = vadd.f32 0.0, %v6155
      %v6157 = vpop.f32.mrf.mxu0
      %v6158 = vpop.f32.mrf.mxu0
      %v6159 = vadd.f32 0.0, %v6158
      %v6160 = vpop.f32.mrf.mxu0
      %6161 = vdwg.mxu0
      %v6162 = vadd.f32 %v5782, %v6036
      %v6163 = vadd.f32 %v5783, %v6039
      %v6164 = vadd.f32 %v5784, %v6044
      %v6165 = vadd.f32 %v5785, %v6047
      %v6166 = vadd.f32 %v5786, %v6052
      %v6167 = vadd.f32 %v5787, %v6055
      %v6168 = vadd.f32 %v5788, %v6060
      %v6169 = vadd.f32 %v5789, %v6063
      %v6170 = vadd.f32 %v5790, %v6068
      %v6171 = vadd.f32 %v5791, %v6071
      %v6172 = vadd.f32 %v5792, %v6076
      %v6173 = vadd.f32 %v5793, %v6079
      %v6174 = vadd.f32 %v5794, %v6084
      %v6175 = vadd.f32 %v5795, %v6087
      %v6176 = vadd.f32 %v5796, %v6092
      %v6177 = vadd.f32 %v5797, %v6095
      %v6178 = vadd.f32 %v5798, %v6100
      %v6179 = vadd.f32 %v5799, %v6103
      %v6180 = vadd.f32 %v5800, %v6108
      %v6181 = vadd.f32 %v5801, %v6111
      %v6182 = vadd.f32 %v5802, %v6116
      %v6183 = vadd.f32 %v5803, %v6119
      %v6184 = vadd.f32 %v5804, %v6124
      %v6185 = vadd.f32 %v5805, %v6127
      %v6186 = vadd.f32 %v5806, %v6132
      %v6187 = vadd.f32 %v5807, %v6135
      %v6188 = vadd.f32 %v5808, %v6140
      %v6189 = vadd.f32 %v5809, %v6143
      %v6190 = vadd.f32 %v5810, %v6148
      %v6191 = vadd.f32 %v5811, %v6151
      %v6192 = vadd.f32 %v5812, %v6156
      %v6193 = vadd.f32 %v5813, %v6159
      %s6194 = scalar_lea.vmem [#allocation2], 48
      %v6195 = vld [vmem:[%s6194] sm:$0xf]
      %v6196 = vld [vmem:[%s6194 + $0x4] sm:$0xf]
      %v6197 = vld [vmem:[%s6194 + $0x8] sm:$0xf]
      %v6198 = vld [vmem:[%s6194 + $0xc] sm:$0xf]
      %v6199 = vld [vmem:[%s6194 + $0x10] sm:$0xf]
      %v6200 = vld [vmem:[%s6194 + $0x14] sm:$0xf]
      %v6201 = vld [vmem:[%s6194 + $0x18] sm:$0xf]
      %v6202 = vld [vmem:[%s6194 + $0x1c] sm:$0xf]
      %v6203 = vld [vmem:[%s6194 + $0x20] sm:$0xf]
      %v6204 = vld [vmem:[%s6194 + $0x24] sm:$0xf]
      %v6205 = vld [vmem:[%s6194 + $0x28] sm:$0xf]
      %v6206 = vld [vmem:[%s6194 + $0x2c] sm:$0xf]
      %v6207 = vld [vmem:[%s6194 + $0x30] sm:$0xf]
      %v6208 = vld [vmem:[%s6194 + $0x34] sm:$0xf]
      %v6209 = vld [vmem:[%s6194 + $0x38] sm:$0xf]
      %v6210 = vld [vmem:[%s6194 + $0x3c] sm:$0xf]
      %v6211 = vld [vmem:[%s6194 + $0x40] sm:$0xf]
      %v6212 = vld [vmem:[%s6194 + $0x44] sm:$0xf]
      %v6213 = vld [vmem:[%s6194 + $0x48] sm:$0xf]
      %v6214 = vld [vmem:[%s6194 + $0x4c] sm:$0xf]
      %v6215 = vld [vmem:[%s6194 + $0x50] sm:$0xf]
      %v6216 = vld [vmem:[%s6194 + $0x54] sm:$0xf]
      %v6217 = vld [vmem:[%s6194 + $0x58] sm:$0xf]
      %v6218 = vld [vmem:[%s6194 + $0x5c] sm:$0xf]
      %v6219 = vld [vmem:[%s6194 + $0x60] sm:$0xf]
      %v6220 = vld [vmem:[%s6194 + $0x64] sm:$0xf]
      %v6221 = vld [vmem:[%s6194 + $0x68] sm:$0xf]
      %v6222 = vld [vmem:[%s6194 + $0x6c] sm:$0xf]
      %v6223 = vld [vmem:[%s6194 + $0x70] sm:$0xf]
      %v6224 = vld [vmem:[%s6194 + $0x74] sm:$0xf]
      %v6225 = vld [vmem:[%s6194 + $0x78] sm:$0xf]
      %v6226 = vld [vmem:[%s6194 + $0x7c] sm:$0xf]
      %s6227 = scalar_lea.vmem %s1, 144
      %v6228 = vld [vmem:[%s6227] sm:$0xf]
      %v6229 = vld [vmem:[%s6227 + $0x4] sm:$0xf]
      %v6230 = vld [vmem:[%s6227 + $0x8] sm:$0xf]
      %v6231 = vld [vmem:[%s6227 + $0xc] sm:$0xf]
      %v6232 = vld [vmem:[%s6227 + $0x10] sm:$0xf]
      %v6233 = vld [vmem:[%s6227 + $0x14] sm:$0x3]
      %v6266 = vunpack.c.l.b16 %v6195
      %v6267 = vunpack.c.l.b16 %v6196
      %v6268 = vunpack.c.l.b16 %v6197
      %v6269 = vunpack.c.l.b16 %v6198
      %v6270 = vunpack.c.l.b16 %v6199
      %v6271 = vunpack.c.l.b16 %v6200
      %v6272 = vunpack.c.l.b16 %v6201
      %v6273 = vunpack.c.l.b16 %v6202
      %v6274 = vunpack.c.l.b16 %v6203
      %v6275 = vunpack.c.l.b16 %v6204
      %v6276 = vunpack.c.l.b16 %v6205
      %v6277 = vunpack.c.l.b16 %v6206
      %v6278 = vunpack.c.l.b16 %v6207
      %v6279 = vunpack.c.l.b16 %v6208
      %v6280 = vunpack.c.l.b16 %v6209
      %v6281 = vunpack.c.l.b16 %v6210
      %v6282 = vunpack.c.l.b16 %v6211
      %v6283 = vunpack.c.l.b16 %v6212
      %v6284 = vunpack.c.l.b16 %v6213
      %v6285 = vunpack.c.l.b16 %v6214
      %v6286 = vunpack.c.l.b16 %v6215
      %v6287 = vunpack.c.l.b16 %v6216
      %v6288 = vunpack.c.l.b16 %v6217
      %v6289 = vunpack.c.l.b16 %v6218
      %v6290 = vunpack.c.l.b16 %v6219
      %v6291 = vunpack.c.l.b16 %v6220
      %v6292 = vunpack.c.l.b16 %v6221
      %v6293 = vunpack.c.l.b16 %v6222
      %v6294 = vunpack.c.l.b16 %v6223
      %v6295 = vunpack.c.l.b16 %v6224
      %v6296 = vunpack.c.l.b16 %v6225
      %v6297 = vunpack.c.l.b16 %v6226
      %v6298 = vpack.c.b16 %v6267, %v6266
      %v6299 = vpack.c.b16 %v6269, %v6268
      %v6300 = vpack.c.b16 %v6271, %v6270
      %v6301 = vpack.c.b16 %v6273, %v6272
      %v6302 = vpack.c.b16 %v6275, %v6274
      %v6303 = vpack.c.b16 %v6277, %v6276
      %v6304 = vpack.c.b16 %v6279, %v6278
      %v6305 = vpack.c.b16 %v6281, %v6280
      %v6306 = vpack.c.b16 %v6283, %v6282
      %v6307 = vpack.c.b16 %v6285, %v6284
      %v6308 = vpack.c.b16 %v6287, %v6286
      %v6309 = vpack.c.b16 %v6289, %v6288
      %v6310 = vpack.c.b16 %v6291, %v6290
      %v6311 = vpack.c.b16 %v6293, %v6292
      %v6312 = vpack.c.b16 %v6295, %v6294
      %v6313 = vpack.c.b16 %v6297, %v6296
      %v6320 = vunpack.c.l.b16 %v6228
      %v6321 = vunpack.c.l.b16 %v6229
      %v6322 = vunpack.c.l.b16 %v6230
      %v6323 = vunpack.c.l.b16 %v6231
      %v6324 = vunpack.c.l.b16 %v6232
      %v6325 = vunpack.c.l.b16 %v6233
      %v6326 = vpack.c.b16 %v6321, %v6320
      %v6327 = vpack.c.b16 %v6323, %v6322
      %v6328 = vpack.c.b16 %v6325, %v6324
      %v6332 = vsel %vm4148, %v6298, 0
      %v6335 = vsel %vm4148, %v6299, 0
      %v6338 = vsel %vm4148, %v6300, 0
      %v6341 = vsel %vm4148, %v6301, 0
      %v6344 = vsel %vm4148, %v6302, 0
      %v6347 = vsel %vm4148, %v6303, 0
      %v6350 = vsel %vm4148, %v6304, 0
      %v6353 = vsel %vm4148, %v6305, 0
      %v6356 = vsel %vm4148, %v6306, 0
      %v6359 = vsel %vm4148, %v6307, 0
      %v6362 = vsel %vm4148, %v6308, 0
      %v6365 = vsel %vm4148, %v6309, 0
      %v6368 = vsel %vm4148, %v6310, 0
      %v6371 = vsel %vm4148, %v6311, 0
      %v6374 = vsel %vm4148, %v6312, 0
      %v6377 = vsel %vm4148, %v6313, 0
      %v6380 = vsel %vm4197, %v6328, 0
      %6382 = vmatprep.subr.bf16.mxu0 0
      %6383 = vmatpush1.bf16.msra.mxu0 0
      %6384 = vmatprep.subr.bf16.mxu0 0
      %6385 = vmatpush1.bf16.msra.mxu0 0
      %6386 = vmatprep.subr.bf16.mxu0 0
      %6387 = vmatpush1.bf16.msra.mxu0 0
      %6388 = vmatprep.subr.bf16.mxu0 0
      %6389 = vmatpush1.bf16.msra.mxu0 0
      %6390 = vmatprep.subr.bf16.mxu0 0
      %6391 = vmatpush1.bf16.msra.mxu0 0
      %6392 = vmatprep.subr.bf16.mxu0 0
      %6393 = vmatpush1.bf16.msra.mxu0 %v6380
      %6394 = vmatprep.subr.bf16.mxu0 0
      %6395 = vmatpush1.bf16.msra.mxu0 %v6327
      %6396 = vmatprep.subr.bf16.mxu0 0
      %6397 = vmatpush1.bf16.msra.mxu0 %v6326
      %6398 = vmatprep.subr.bf16.mxu0 0
      %6399 = vmatpush2.bf16.msra.mxu0 0
      %6400 = vmatprep.subr.bf16.mxu0 0
      %6401 = vmatpush2.bf16.msra.mxu0 0
      %6402 = vmatprep.subr.bf16.mxu0 0
      %6403 = vmatpush2.bf16.msra.mxu0 0
      %6404 = vmatprep.subr.bf16.mxu0 0
      %6405 = vmatpush2.bf16.msra.mxu0 0
      %6406 = vmatprep.subr.bf16.mxu0 0
      %6407 = vmatpush2.bf16.msra.mxu0 0
      %6408 = vmatprep.subr.bf16.mxu0 0
      %6409 = vmatpush2.bf16.msra.mxu0 0
      %6410 = vmatprep.subr.bf16.mxu0 0
      %6411 = vmatpush2.bf16.msra.mxu0 0
      %6412 = vmatprep.subr.bf16.mxu0 0
      %6413 = vmatpush2.bf16.msra.mxu0 0
      %6414 = vmatprep.mubr.bf16.mxu0 0
      %6415 = vmatmul.mubr.bf16.gmra.mxu0 %v6332
      %v6416 = vpop.f32.mrf.mxu0
      %v6417 = vadd.f32 0.0, %v6416
      %v6418 = vpop.f32.mrf.mxu0
      %v6419 = vpop.f32.mrf.mxu0
      %v6420 = vadd.f32 0.0, %v6419
      %v6421 = vpop.f32.mrf.mxu0
      %6422 = vmatprep.mubr.bf16.mxu0 0
      %6423 = vmatmul.mubr.bf16.gmra.mxu0 %v6335
      %v6424 = vpop.f32.mrf.mxu0
      %v6425 = vadd.f32 0.0, %v6424
      %v6426 = vpop.f32.mrf.mxu0
      %v6427 = vpop.f32.mrf.mxu0
      %v6428 = vadd.f32 0.0, %v6427
      %v6429 = vpop.f32.mrf.mxu0
      %6430 = vmatprep.mubr.bf16.mxu0 0
      %6431 = vmatmul.mubr.bf16.gmra.mxu0 %v6338
      %v6432 = vpop.f32.mrf.mxu0
      %v6433 = vadd.f32 0.0, %v6432
      %v6434 = vpop.f32.mrf.mxu0
      %v6435 = vpop.f32.mrf.mxu0
      %v6436 = vadd.f32 0.0, %v6435
      %v6437 = vpop.f32.mrf.mxu0
      %6438 = vmatprep.mubr.bf16.mxu0 0
      %6439 = vmatmul.mubr.bf16.gmra.mxu0 %v6341
      %v6440 = vpop.f32.mrf.mxu0
      %v6441 = vadd.f32 0.0, %v6440
      %v6442 = vpop.f32.mrf.mxu0
      %v6443 = vpop.f32.mrf.mxu0
      %v6444 = vadd.f32 0.0, %v6443
      %v6445 = vpop.f32.mrf.mxu0
      %6446 = vmatprep.mubr.bf16.mxu0 0
      %6447 = vmatmul.mubr.bf16.gmra.mxu0 %v6344
      %v6448 = vpop.f32.mrf.mxu0
      %v6449 = vadd.f32 0.0, %v6448
      %v6450 = vpop.f32.mrf.mxu0
      %v6451 = vpop.f32.mrf.mxu0
      %v6452 = vadd.f32 0.0, %v6451
      %v6453 = vpop.f32.mrf.mxu0
      %6454 = vmatprep.mubr.bf16.mxu0 0
      %6455 = vmatmul.mubr.bf16.gmra.mxu0 %v6347
      %v6456 = vpop.f32.mrf.mxu0
      %v6457 = vadd.f32 0.0, %v6456
      %v6458 = vpop.f32.mrf.mxu0
      %v6459 = vpop.f32.mrf.mxu0
      %v6460 = vadd.f32 0.0, %v6459
      %v6461 = vpop.f32.mrf.mxu0
      %6462 = vmatprep.mubr.bf16.mxu0 0
      %6463 = vmatmul.mubr.bf16.gmra.mxu0 %v6350
      %v6464 = vpop.f32.mrf.mxu0
      %v6465 = vadd.f32 0.0, %v6464
      %v6466 = vpop.f32.mrf.mxu0
      %v6467 = vpop.f32.mrf.mxu0
      %v6468 = vadd.f32 0.0, %v6467
      %v6469 = vpop.f32.mrf.mxu0
      %6470 = vmatprep.mubr.bf16.mxu0 0
      %6471 = vmatmul.mubr.bf16.gmra.mxu0 %v6353
      %v6472 = vpop.f32.mrf.mxu0
      %v6473 = vadd.f32 0.0, %v6472
      %v6474 = vpop.f32.mrf.mxu0
      %v6475 = vpop.f32.mrf.mxu0
      %v6476 = vadd.f32 0.0, %v6475
      %v6477 = vpop.f32.mrf.mxu0
      %6478 = vmatprep.mubr.bf16.mxu0 0
      %6479 = vmatmul.mubr.bf16.gmra.mxu0 %v6356
      %v6480 = vpop.f32.mrf.mxu0
      %v6481 = vadd.f32 0.0, %v6480
      %v6482 = vpop.f32.mrf.mxu0
      %v6483 = vpop.f32.mrf.mxu0
      %v6484 = vadd.f32 0.0, %v6483
      %v6485 = vpop.f32.mrf.mxu0
      %6486 = vmatprep.mubr.bf16.mxu0 0
      %6487 = vmatmul.mubr.bf16.gmra.mxu0 %v6359
      %v6488 = vpop.f32.mrf.mxu0
      %v6489 = vadd.f32 0.0, %v6488
      %v6490 = vpop.f32.mrf.mxu0
      %v6491 = vpop.f32.mrf.mxu0
      %v6492 = vadd.f32 0.0, %v6491
      %v6493 = vpop.f32.mrf.mxu0
      %6494 = vmatprep.mubr.bf16.mxu0 0
      %6495 = vmatmul.mubr.bf16.gmra.mxu0 %v6362
      %v6496 = vpop.f32.mrf.mxu0
      %v6497 = vadd.f32 0.0, %v6496
      %v6498 = vpop.f32.mrf.mxu0
      %v6499 = vpop.f32.mrf.mxu0
      %v6500 = vadd.f32 0.0, %v6499
      %v6501 = vpop.f32.mrf.mxu0
      %6502 = vmatprep.mubr.bf16.mxu0 0
      %6503 = vmatmul.mubr.bf16.gmra.mxu0 %v6365
      %v6504 = vpop.f32.mrf.mxu0
      %v6505 = vadd.f32 0.0, %v6504
      %v6506 = vpop.f32.mrf.mxu0
      %v6507 = vpop.f32.mrf.mxu0
      %v6508 = vadd.f32 0.0, %v6507
      %v6509 = vpop.f32.mrf.mxu0
      %6510 = vmatprep.mubr.bf16.mxu0 0
      %6511 = vmatmul.mubr.bf16.gmra.mxu0 %v6368
      %v6512 = vpop.f32.mrf.mxu0
      %v6513 = vadd.f32 0.0, %v6512
      %v6514 = vpop.f32.mrf.mxu0
      %v6515 = vpop.f32.mrf.mxu0
      %v6516 = vadd.f32 0.0, %v6515
      %v6517 = vpop.f32.mrf.mxu0
      %6518 = vmatprep.mubr.bf16.mxu0 0
      %6519 = vmatmul.mubr.bf16.gmra.mxu0 %v6371
      %v6520 = vpop.f32.mrf.mxu0
      %v6521 = vadd.f32 0.0, %v6520
      %v6522 = vpop.f32.mrf.mxu0
      %v6523 = vpop.f32.mrf.mxu0
      %v6524 = vadd.f32 0.0, %v6523
      %v6525 = vpop.f32.mrf.mxu0
      %6526 = vmatprep.mubr.bf16.mxu0 0
      %6527 = vmatmul.mubr.bf16.gmra.mxu0 %v6374
      %v6528 = vpop.f32.mrf.mxu0
      %v6529 = vadd.f32 0.0, %v6528
      %v6530 = vpop.f32.mrf.mxu0
      %v6531 = vpop.f32.mrf.mxu0
      %v6532 = vadd.f32 0.0, %v6531
      %v6533 = vpop.f32.mrf.mxu0
      %6534 = vmatprep.mubr.bf16.mxu0 0
      %6535 = vmatmul.mubr.bf16.gmra.mxu0 %v6377
      %v6536 = vpop.f32.mrf.mxu0
      %v6537 = vadd.f32 0.0, %v6536
      %v6538 = vpop.f32.mrf.mxu0
      %v6539 = vpop.f32.mrf.mxu0
      %v6540 = vadd.f32 0.0, %v6539
      %v6541 = vpop.f32.mrf.mxu0
      %6542 = vdwg.mxu0
      %v6543 = vadd.f32 %v6162, %v6417
      %v6544 = vadd.f32 %v6163, %v6420
      %v6545 = vadd.f32 %v6164, %v6425
      %v6546 = vadd.f32 %v6165, %v6428
      %v6547 = vadd.f32 %v6166, %v6433
      %v6548 = vadd.f32 %v6167, %v6436
      %v6549 = vadd.f32 %v6168, %v6441
      %v6550 = vadd.f32 %v6169, %v6444
      %v6551 = vadd.f32 %v6170, %v6449
      %v6552 = vadd.f32 %v6171, %v6452
      %v6553 = vadd.f32 %v6172, %v6457
      %v6554 = vadd.f32 %v6173, %v6460
      %v6555 = vadd.f32 %v6174, %v6465
      %v6556 = vadd.f32 %v6175, %v6468
      %v6557 = vadd.f32 %v6176, %v6473
      %v6558 = vadd.f32 %v6177, %v6476
      %v6559 = vadd.f32 %v6178, %v6481
      %v6560 = vadd.f32 %v6179, %v6484
      %v6561 = vadd.f32 %v6180, %v6489
      %v6562 = vadd.f32 %v6181, %v6492
      %v6563 = vadd.f32 %v6182, %v6497
      %v6564 = vadd.f32 %v6183, %v6500
      %v6565 = vadd.f32 %v6184, %v6505
      %v6566 = vadd.f32 %v6185, %v6508
      %v6567 = vadd.f32 %v6186, %v6513
      %v6568 = vadd.f32 %v6187, %v6516
      %v6569 = vadd.f32 %v6188, %v6521
      %v6570 = vadd.f32 %v6189, %v6524
      %v6571 = vadd.f32 %v6190, %v6529
      %v6572 = vadd.f32 %v6191, %v6532
      %v6573 = vadd.f32 %v6192, %v6537
      %v6574 = vadd.f32 %v6193, %v6540
      %s6575 = scalar_lea.vmem [#allocation2], 56
      %v6576 = vld [vmem:[%s6575] sm:$0xf]
      %v6577 = vld [vmem:[%s6575 + $0x4] sm:$0xf]
      %v6578 = vld [vmem:[%s6575 + $0x8] sm:$0xf]
      %v6579 = vld [vmem:[%s6575 + $0xc] sm:$0xf]
      %v6580 = vld [vmem:[%s6575 + $0x10] sm:$0xf]
      %v6581 = vld [vmem:[%s6575 + $0x14] sm:$0xf]
      %v6582 = vld [vmem:[%s6575 + $0x18] sm:$0xf]
      %v6583 = vld [vmem:[%s6575 + $0x1c] sm:$0xf]
      %v6584 = vld [vmem:[%s6575 + $0x20] sm:$0xf]
      %v6585 = vld [vmem:[%s6575 + $0x24] sm:$0xf]
      %v6586 = vld [vmem:[%s6575 + $0x28] sm:$0xf]
      %v6587 = vld [vmem:[%s6575 + $0x2c] sm:$0xf]
      %v6588 = vld [vmem:[%s6575 + $0x30] sm:$0xf]
      %v6589 = vld [vmem:[%s6575 + $0x34] sm:$0xf]
      %v6590 = vld [vmem:[%s6575 + $0x38] sm:$0xf]
      %v6591 = vld [vmem:[%s6575 + $0x3c] sm:$0xf]
      %v6592 = vld [vmem:[%s6575 + $0x40] sm:$0xf]
      %v6593 = vld [vmem:[%s6575 + $0x44] sm:$0xf]
      %v6594 = vld [vmem:[%s6575 + $0x48] sm:$0xf]
      %v6595 = vld [vmem:[%s6575 + $0x4c] sm:$0xf]
      %v6596 = vld [vmem:[%s6575 + $0x50] sm:$0xf]
      %v6597 = vld [vmem:[%s6575 + $0x54] sm:$0xf]
      %v6598 = vld [vmem:[%s6575 + $0x58] sm:$0xf]
      %v6599 = vld [vmem:[%s6575 + $0x5c] sm:$0xf]
      %v6600 = vld [vmem:[%s6575 + $0x60] sm:$0xf]
      %v6601 = vld [vmem:[%s6575 + $0x64] sm:$0xf]
      %v6602 = vld [vmem:[%s6575 + $0x68] sm:$0xf]
      %v6603 = vld [vmem:[%s6575 + $0x6c] sm:$0xf]
      %v6604 = vld [vmem:[%s6575 + $0x70] sm:$0xf]
      %v6605 = vld [vmem:[%s6575 + $0x74] sm:$0xf]
      %v6606 = vld [vmem:[%s6575 + $0x78] sm:$0xf]
      %v6607 = vld [vmem:[%s6575 + $0x7c] sm:$0xf]
      %s6608 = scalar_lea.vmem %s1, 168
      %v6609 = vld [vmem:[%s6608] sm:$0xf]
      %v6610 = vld [vmem:[%s6608 + $0x4] sm:$0xf]
      %v6611 = vld [vmem:[%s6608 + $0x8] sm:$0xf]
      %v6612 = vld [vmem:[%s6608 + $0xc] sm:$0xf]
      %v6613 = vld [vmem:[%s6608 + $0x10] sm:$0xf]
      %v6614 = vld [vmem:[%s6608 + $0x14] sm:$0x3]
      %v6647 = vunpack.c.l.b16 %v6576
      %v6648 = vunpack.c.l.b16 %v6577
      %v6649 = vunpack.c.l.b16 %v6578
      %v6650 = vunpack.c.l.b16 %v6579
      %v6651 = vunpack.c.l.b16 %v6580
      %v6652 = vunpack.c.l.b16 %v6581
      %v6653 = vunpack.c.l.b16 %v6582
      %v6654 = vunpack.c.l.b16 %v6583
      %v6655 = vunpack.c.l.b16 %v6584
      %v6656 = vunpack.c.l.b16 %v6585
      %v6657 = vunpack.c.l.b16 %v6586
      %v6658 = vunpack.c.l.b16 %v6587
      %v6659 = vunpack.c.l.b16 %v6588
      %v6660 = vunpack.c.l.b16 %v6589
      %v6661 = vunpack.c.l.b16 %v6590
      %v6662 = vunpack.c.l.b16 %v6591
      %v6663 = vunpack.c.l.b16 %v6592
      %v6664 = vunpack.c.l.b16 %v6593
      %v6665 = vunpack.c.l.b16 %v6594
      %v6666 = vunpack.c.l.b16 %v6595
      %v6667 = vunpack.c.l.b16 %v6596
      %v6668 = vunpack.c.l.b16 %v6597
      %v6669 = vunpack.c.l.b16 %v6598
      %v6670 = vunpack.c.l.b16 %v6599
      %v6671 = vunpack.c.l.b16 %v6600
      %v6672 = vunpack.c.l.b16 %v6601
      %v6673 = vunpack.c.l.b16 %v6602
      %v6674 = vunpack.c.l.b16 %v6603
      %v6675 = vunpack.c.l.b16 %v6604
      %v6676 = vunpack.c.l.b16 %v6605
      %v6677 = vunpack.c.l.b16 %v6606
      %v6678 = vunpack.c.l.b16 %v6607
      %v6679 = vpack.c.b16 %v6648, %v6647
      %v6680 = vpack.c.b16 %v6650, %v6649
      %v6681 = vpack.c.b16 %v6652, %v6651
      %v6682 = vpack.c.b16 %v6654, %v6653
      %v6683 = vpack.c.b16 %v6656, %v6655
      %v6684 = vpack.c.b16 %v6658, %v6657
      %v6685 = vpack.c.b16 %v6660, %v6659
      %v6686 = vpack.c.b16 %v6662, %v6661
      %v6687 = vpack.c.b16 %v6664, %v6663
      %v6688 = vpack.c.b16 %v6666, %v6665
      %v6689 = vpack.c.b16 %v6668, %v6667
      %v6690 = vpack.c.b16 %v6670, %v6669
      %v6691 = vpack.c.b16 %v6672, %v6671
      %v6692 = vpack.c.b16 %v6674, %v6673
      %v6693 = vpack.c.b16 %v6676, %v6675
      %v6694 = vpack.c.b16 %v6678, %v6677
      %v6701 = vunpack.c.l.b16 %v6609
      %v6702 = vunpack.c.l.b16 %v6610
      %v6703 = vunpack.c.l.b16 %v6611
      %v6704 = vunpack.c.l.b16 %v6612
      %v6705 = vunpack.c.l.b16 %v6613
      %v6706 = vunpack.c.l.b16 %v6614
      %v6707 = vpack.c.b16 %v6702, %v6701
      %v6708 = vpack.c.b16 %v6704, %v6703
      %v6709 = vpack.c.b16 %v6706, %v6705
      %v6713 = vsel %vm4148, %v6679, 0
      %v6716 = vsel %vm4148, %v6680, 0
      %v6719 = vsel %vm4148, %v6681, 0
      %v6722 = vsel %vm4148, %v6682, 0
      %v6725 = vsel %vm4148, %v6683, 0
      %v6728 = vsel %vm4148, %v6684, 0
      %v6731 = vsel %vm4148, %v6685, 0
      %v6734 = vsel %vm4148, %v6686, 0
      %v6737 = vsel %vm4148, %v6687, 0
      %v6740 = vsel %vm4148, %v6688, 0
      %v6743 = vsel %vm4148, %v6689, 0
      %v6746 = vsel %vm4148, %v6690, 0
      %v6749 = vsel %vm4148, %v6691, 0
      %v6752 = vsel %vm4148, %v6692, 0
      %v6755 = vsel %vm4148, %v6693, 0
      %v6758 = vsel %vm4148, %v6694, 0
      %v6761 = vsel %vm4197, %v6709, 0
      %6763 = vmatprep.subr.bf16.mxu0 0
      %6764 = vmatpush1.bf16.msra.mxu0 0
      %6765 = vmatprep.subr.bf16.mxu0 0
      %6766 = vmatpush1.bf16.msra.mxu0 0
      %6767 = vmatprep.subr.bf16.mxu0 0
      %6768 = vmatpush1.bf16.msra.mxu0 0
      %6769 = vmatprep.subr.bf16.mxu0 0
      %6770 = vmatpush1.bf16.msra.mxu0 0
      %6771 = vmatprep.subr.bf16.mxu0 0
      %6772 = vmatpush1.bf16.msra.mxu0 0
      %6773 = vmatprep.subr.bf16.mxu0 0
      %6774 = vmatpush1.bf16.msra.mxu0 %v6761
      %6775 = vmatprep.subr.bf16.mxu0 0
      %6776 = vmatpush1.bf16.msra.mxu0 %v6708
      %6777 = vmatprep.subr.bf16.mxu0 0
      %6778 = vmatpush1.bf16.msra.mxu0 %v6707
      %6779 = vmatprep.subr.bf16.mxu0 0
      %6780 = vmatpush2.bf16.msra.mxu0 0
      %6781 = vmatprep.subr.bf16.mxu0 0
      %6782 = vmatpush2.bf16.msra.mxu0 0
      %6783 = vmatprep.subr.bf16.mxu0 0
      %6784 = vmatpush2.bf16.msra.mxu0 0
      %6785 = vmatprep.subr.bf16.mxu0 0
      %6786 = vmatpush2.bf16.msra.mxu0 0
      %6787 = vmatprep.subr.bf16.mxu0 0
      %6788 = vmatpush2.bf16.msra.mxu0 0
      %6789 = vmatprep.subr.bf16.mxu0 0
      %6790 = vmatpush2.bf16.msra.mxu0 0
      %6791 = vmatprep.subr.bf16.mxu0 0
      %6792 = vmatpush2.bf16.msra.mxu0 0
      %6793 = vmatprep.subr.bf16.mxu0 0
      %6794 = vmatpush2.bf16.msra.mxu0 0
      %6795 = vmatprep.mubr.bf16.mxu0 0
      %6796 = vmatmul.mubr.bf16.gmra.mxu0 %v6713
      %v6797 = vpop.f32.mrf.mxu0
      %v6798 = vadd.f32 0.0, %v6797
      %v6799 = vpop.f32.mrf.mxu0
      %v6800 = vpop.f32.mrf.mxu0
      %v6801 = vadd.f32 0.0, %v6800
      %v6802 = vpop.f32.mrf.mxu0
      %6803 = vmatprep.mubr.bf16.mxu0 0
      %6804 = vmatmul.mubr.bf16.gmra.mxu0 %v6716
      %v6805 = vpop.f32.mrf.mxu0
      %v6806 = vadd.f32 0.0, %v6805
      %v6807 = vpop.f32.mrf.mxu0
      %v6808 = vpop.f32.mrf.mxu0
      %v6809 = vadd.f32 0.0, %v6808
      %v6810 = vpop.f32.mrf.mxu0
      %6811 = vmatprep.mubr.bf16.mxu0 0
      %6812 = vmatmul.mubr.bf16.gmra.mxu0 %v6719
      %v6813 = vpop.f32.mrf.mxu0
      %v6814 = vadd.f32 0.0, %v6813
      %v6815 = vpop.f32.mrf.mxu0
      %v6816 = vpop.f32.mrf.mxu0
      %v6817 = vadd.f32 0.0, %v6816
      %v6818 = vpop.f32.mrf.mxu0
      %6819 = vmatprep.mubr.bf16.mxu0 0
      %6820 = vmatmul.mubr.bf16.gmra.mxu0 %v6722
      %v6821 = vpop.f32.mrf.mxu0
      %v6822 = vadd.f32 0.0, %v6821
      %v6823 = vpop.f32.mrf.mxu0
      %v6824 = vpop.f32.mrf.mxu0
      %v6825 = vadd.f32 0.0, %v6824
      %v6826 = vpop.f32.mrf.mxu0
      %6827 = vmatprep.mubr.bf16.mxu0 0
      %6828 = vmatmul.mubr.bf16.gmra.mxu0 %v6725
      %v6829 = vpop.f32.mrf.mxu0
      %v6830 = vadd.f32 0.0, %v6829
      %v6831 = vpop.f32.mrf.mxu0
      %v6832 = vpop.f32.mrf.mxu0
      %v6833 = vadd.f32 0.0, %v6832
      %v6834 = vpop.f32.mrf.mxu0
      %6835 = vmatprep.mubr.bf16.mxu0 0
      %6836 = vmatmul.mubr.bf16.gmra.mxu0 %v6728
      %v6837 = vpop.f32.mrf.mxu0
      %v6838 = vadd.f32 0.0, %v6837
      %v6839 = vpop.f32.mrf.mxu0
      %v6840 = vpop.f32.mrf.mxu0
      %v6841 = vadd.f32 0.0, %v6840
      %v6842 = vpop.f32.mrf.mxu0
      %6843 = vmatprep.mubr.bf16.mxu0 0
      %6844 = vmatmul.mubr.bf16.gmra.mxu0 %v6731
      %v6845 = vpop.f32.mrf.mxu0
      %v6846 = vadd.f32 0.0, %v6845
      %v6847 = vpop.f32.mrf.mxu0
      %v6848 = vpop.f32.mrf.mxu0
      %v6849 = vadd.f32 0.0, %v6848
      %v6850 = vpop.f32.mrf.mxu0
      %6851 = vmatprep.mubr.bf16.mxu0 0
      %6852 = vmatmul.mubr.bf16.gmra.mxu0 %v6734
      %v6853 = vpop.f32.mrf.mxu0
      %v6854 = vadd.f32 0.0, %v6853
      %v6855 = vpop.f32.mrf.mxu0
      %v6856 = vpop.f32.mrf.mxu0
      %v6857 = vadd.f32 0.0, %v6856
      %v6858 = vpop.f32.mrf.mxu0
      %6859 = vmatprep.mubr.bf16.mxu0 0
      %6860 = vmatmul.mubr.bf16.gmra.mxu0 %v6737
      %v6861 = vpop.f32.mrf.mxu0
      %v6862 = vadd.f32 0.0, %v6861
      %v6863 = vpop.f32.mrf.mxu0
      %v6864 = vpop.f32.mrf.mxu0
      %v6865 = vadd.f32 0.0, %v6864
      %v6866 = vpop.f32.mrf.mxu0
      %6867 = vmatprep.mubr.bf16.mxu0 0
      %6868 = vmatmul.mubr.bf16.gmra.mxu0 %v6740
      %v6869 = vpop.f32.mrf.mxu0
      %v6870 = vadd.f32 0.0, %v6869
      %v6871 = vpop.f32.mrf.mxu0
      %v6872 = vpop.f32.mrf.mxu0
      %v6873 = vadd.f32 0.0, %v6872
      %v6874 = vpop.f32.mrf.mxu0
      %6875 = vmatprep.mubr.bf16.mxu0 0
      %6876 = vmatmul.mubr.bf16.gmra.mxu0 %v6743
      %v6877 = vpop.f32.mrf.mxu0
      %v6878 = vadd.f32 0.0, %v6877
      %v6879 = vpop.f32.mrf.mxu0
      %v6880 = vpop.f32.mrf.mxu0
      %v6881 = vadd.f32 0.0, %v6880
      %v6882 = vpop.f32.mrf.mxu0
      %6883 = vmatprep.mubr.bf16.mxu0 0
      %6884 = vmatmul.mubr.bf16.gmra.mxu0 %v6746
      %v6885 = vpop.f32.mrf.mxu0
      %v6886 = vadd.f32 0.0, %v6885
      %v6887 = vpop.f32.mrf.mxu0
      %v6888 = vpop.f32.mrf.mxu0
      %v6889 = vadd.f32 0.0, %v6888
      %v6890 = vpop.f32.mrf.mxu0
      %6891 = vmatprep.mubr.bf16.mxu0 0
      %6892 = vmatmul.mubr.bf16.gmra.mxu0 %v6749
      %v6893 = vpop.f32.mrf.mxu0
      %v6894 = vadd.f32 0.0, %v6893
      %v6895 = vpop.f32.mrf.mxu0
      %v6896 = vpop.f32.mrf.mxu0
      %v6897 = vadd.f32 0.0, %v6896
      %v6898 = vpop.f32.mrf.mxu0
      %6899 = vmatprep.mubr.bf16.mxu0 0
      %6900 = vmatmul.mubr.bf16.gmra.mxu0 %v6752
      %v6901 = vpop.f32.mrf.mxu0
      %v6902 = vadd.f32 0.0, %v6901
      %v6903 = vpop.f32.mrf.mxu0
      %v6904 = vpop.f32.mrf.mxu0
      %v6905 = vadd.f32 0.0, %v6904
      %v6906 = vpop.f32.mrf.mxu0
      %6907 = vmatprep.mubr.bf16.mxu0 0
      %6908 = vmatmul.mubr.bf16.gmra.mxu0 %v6755
      %v6909 = vpop.f32.mrf.mxu0
      %v6910 = vadd.f32 0.0, %v6909
      %v6911 = vpop.f32.mrf.mxu0
      %v6912 = vpop.f32.mrf.mxu0
      %v6913 = vadd.f32 0.0, %v6912
      %v6914 = vpop.f32.mrf.mxu0
      %6915 = vmatprep.mubr.bf16.mxu0 0
      %6916 = vmatmul.mubr.bf16.gmra.mxu0 %v6758
      %v6917 = vpop.f32.mrf.mxu0
      %v6918 = vadd.f32 0.0, %v6917
      %v6919 = vpop.f32.mrf.mxu0
      %v6920 = vpop.f32.mrf.mxu0
      %v6921 = vadd.f32 0.0, %v6920
      %v6922 = vpop.f32.mrf.mxu0
      %6923 = vdwg.mxu0
      %v6924 = vadd.f32 %v6543, %v6798
      %v6925 = vadd.f32 %v6544, %v6801
      %v6926 = vadd.f32 %v6545, %v6806
      %v6927 = vadd.f32 %v6546, %v6809
      %v6928 = vadd.f32 %v6547, %v6814
      %v6929 = vadd.f32 %v6548, %v6817
      %v6930 = vadd.f32 %v6549, %v6822
      %v6931 = vadd.f32 %v6550, %v6825
      %v6932 = vadd.f32 %v6551, %v6830
      %v6933 = vadd.f32 %v6552, %v6833
      %v6934 = vadd.f32 %v6553, %v6838
      %v6935 = vadd.f32 %v6554, %v6841
      %v6936 = vadd.f32 %v6555, %v6846
      %v6937 = vadd.f32 %v6556, %v6849
      %v6938 = vadd.f32 %v6557, %v6854
      %v6939 = vadd.f32 %v6558, %v6857
      %v6940 = vadd.f32 %v6559, %v6862
      %v6941 = vadd.f32 %v6560, %v6865
      %v6942 = vadd.f32 %v6561, %v6870
      %v6943 = vadd.f32 %v6562, %v6873
      %v6944 = vadd.f32 %v6563, %v6878
      %v6945 = vadd.f32 %v6564, %v6881
      %v6946 = vadd.f32 %v6565, %v6886
      %v6947 = vadd.f32 %v6566, %v6889
      %v6948 = vadd.f32 %v6567, %v6894
      %v6949 = vadd.f32 %v6568, %v6897
      %v6950 = vadd.f32 %v6569, %v6902
      %v6951 = vadd.f32 %v6570, %v6905
      %v6952 = vadd.f32 %v6571, %v6910
      %v6953 = vadd.f32 %v6572, %v6913
      %v6954 = vadd.f32 %v6573, %v6918
      %v6955 = vadd.f32 %v6574, %v6921
      %s6956 = scalar_lea.vmem [#allocation2], 64
      %v6957 = vld [vmem:[%s6956] sm:$0xf]
      %v6958 = vld [vmem:[%s6956 + $0x4] sm:$0xf]
      %v6959 = vld [vmem:[%s6956 + $0x8] sm:$0xf]
      %v6960 = vld [vmem:[%s6956 + $0xc] sm:$0xf]
      %v6961 = vld [vmem:[%s6956 + $0x10] sm:$0xf]
      %v6962 = vld [vmem:[%s6956 + $0x14] sm:$0xf]
      %v6963 = vld [vmem:[%s6956 + $0x18] sm:$0xf]
      %v6964 = vld [vmem:[%s6956 + $0x1c] sm:$0xf]
      %v6965 = vld [vmem:[%s6956 + $0x20] sm:$0xf]
      %v6966 = vld [vmem:[%s6956 + $0x24] sm:$0xf]
      %v6967 = vld [vmem:[%s6956 + $0x28] sm:$0xf]
      %v6968 = vld [vmem:[%s6956 + $0x2c] sm:$0xf]
      %v6969 = vld [vmem:[%s6956 + $0x30] sm:$0xf]
      %v6970 = vld [vmem:[%s6956 + $0x34] sm:$0xf]
      %v6971 = vld [vmem:[%s6956 + $0x38] sm:$0xf]
      %v6972 = vld [vmem:[%s6956 + $0x3c] sm:$0xf]
      %v6973 = vld [vmem:[%s6956 + $0x40] sm:$0xf]
      %v6974 = vld [vmem:[%s6956 + $0x44] sm:$0xf]
      %v6975 = vld [vmem:[%s6956 + $0x48] sm:$0xf]
      %v6976 = vld [vmem:[%s6956 + $0x4c] sm:$0xf]
      %v6977 = vld [vmem:[%s6956 + $0x50] sm:$0xf]
      %v6978 = vld [vmem:[%s6956 + $0x54] sm:$0xf]
      %v6979 = vld [vmem:[%s6956 + $0x58] sm:$0xf]
      %v6980 = vld [vmem:[%s6956 + $0x5c] sm:$0xf]
      %v6981 = vld [vmem:[%s6956 + $0x60] sm:$0xf]
      %v6982 = vld [vmem:[%s6956 + $0x64] sm:$0xf]
      %v6983 = vld [vmem:[%s6956 + $0x68] sm:$0xf]
      %v6984 = vld [vmem:[%s6956 + $0x6c] sm:$0xf]
      %v6985 = vld [vmem:[%s6956 + $0x70] sm:$0xf]
      %v6986 = vld [vmem:[%s6956 + $0x74] sm:$0xf]
      %v6987 = vld [vmem:[%s6956 + $0x78] sm:$0xf]
      %v6988 = vld [vmem:[%s6956 + $0x7c] sm:$0xf]
      %s6989 = scalar_lea.vmem %s1, 192
      %v6990 = vld [vmem:[%s6989] sm:$0xf]
      %v6991 = vld [vmem:[%s6989 + $0x4] sm:$0xf]
      %v6992 = vld [vmem:[%s6989 + $0x8] sm:$0xf]
      %v6993 = vld [vmem:[%s6989 + $0xc] sm:$0xf]
      %v6994 = vld [vmem:[%s6989 + $0x10] sm:$0xf]
      %v6995 = vld [vmem:[%s6989 + $0x14] sm:$0x3]
      %v7028 = vunpack.c.l.b16 %v6957
      %v7029 = vunpack.c.l.b16 %v6958
      %v7030 = vunpack.c.l.b16 %v6959
      %v7031 = vunpack.c.l.b16 %v6960
      %v7032 = vunpack.c.l.b16 %v6961
      %v7033 = vunpack.c.l.b16 %v6962
      %v7034 = vunpack.c.l.b16 %v6963
      %v7035 = vunpack.c.l.b16 %v6964
      %v7036 = vunpack.c.l.b16 %v6965
      %v7037 = vunpack.c.l.b16 %v6966
      %v7038 = vunpack.c.l.b16 %v6967
      %v7039 = vunpack.c.l.b16 %v6968
      %v7040 = vunpack.c.l.b16 %v6969
      %v7041 = vunpack.c.l.b16 %v6970
      %v7042 = vunpack.c.l.b16 %v6971
      %v7043 = vunpack.c.l.b16 %v6972
      %v7044 = vunpack.c.l.b16 %v6973
      %v7045 = vunpack.c.l.b16 %v6974
      %v7046 = vunpack.c.l.b16 %v6975
      %v7047 = vunpack.c.l.b16 %v6976
      %v7048 = vunpack.c.l.b16 %v6977
      %v7049 = vunpack.c.l.b16 %v6978
      %v7050 = vunpack.c.l.b16 %v6979
      %v7051 = vunpack.c.l.b16 %v6980
      %v7052 = vunpack.c.l.b16 %v6981
      %v7053 = vunpack.c.l.b16 %v6982
      %v7054 = vunpack.c.l.b16 %v6983
      %v7055 = vunpack.c.l.b16 %v6984
      %v7056 = vunpack.c.l.b16 %v6985
      %v7057 = vunpack.c.l.b16 %v6986
      %v7058 = vunpack.c.l.b16 %v6987
      %v7059 = vunpack.c.l.b16 %v6988
      %v7060 = vpack.c.b16 %v7029, %v7028
      %v7061 = vpack.c.b16 %v7031, %v7030
      %v7062 = vpack.c.b16 %v7033, %v7032
      %v7063 = vpack.c.b16 %v7035, %v7034
      %v7064 = vpack.c.b16 %v7037, %v7036
      %v7065 = vpack.c.b16 %v7039, %v7038
      %v7066 = vpack.c.b16 %v7041, %v7040
      %v7067 = vpack.c.b16 %v7043, %v7042
      %v7068 = vpack.c.b16 %v7045, %v7044
      %v7069 = vpack.c.b16 %v7047, %v7046
      %v7070 = vpack.c.b16 %v7049, %v7048
      %v7071 = vpack.c.b16 %v7051, %v7050
      %v7072 = vpack.c.b16 %v7053, %v7052
      %v7073 = vpack.c.b16 %v7055, %v7054
      %v7074 = vpack.c.b16 %v7057, %v7056
      %v7075 = vpack.c.b16 %v7059, %v7058
      %v7082 = vunpack.c.l.b16 %v6990
      %v7083 = vunpack.c.l.b16 %v6991
      %v7084 = vunpack.c.l.b16 %v6992
      %v7085 = vunpack.c.l.b16 %v6993
      %v7086 = vunpack.c.l.b16 %v6994
      %v7087 = vunpack.c.l.b16 %v6995
      %v7088 = vpack.c.b16 %v7083, %v7082
      %v7089 = vpack.c.b16 %v7085, %v7084
      %v7090 = vpack.c.b16 %v7087, %v7086
      %v7094 = vsel %vm4148, %v7060, 0
      %v7097 = vsel %vm4148, %v7061, 0
      %v7100 = vsel %vm4148, %v7062, 0
      %v7103 = vsel %vm4148, %v7063, 0
      %v7106 = vsel %vm4148, %v7064, 0
      %v7109 = vsel %vm4148, %v7065, 0
      %v7112 = vsel %vm4148, %v7066, 0
      %v7115 = vsel %vm4148, %v7067, 0
      %v7118 = vsel %vm4148, %v7068, 0
      %v7121 = vsel %vm4148, %v7069, 0
      %v7124 = vsel %vm4148, %v7070, 0
      %v7127 = vsel %vm4148, %v7071, 0
      %v7130 = vsel %vm4148, %v7072, 0
      %v7133 = vsel %vm4148, %v7073, 0
      %v7136 = vsel %vm4148, %v7074, 0
      %v7139 = vsel %vm4148, %v7075, 0
      %v7142 = vsel %vm4197, %v7090, 0
      %7144 = vmatprep.subr.bf16.mxu0 0
      %7145 = vmatpush1.bf16.msra.mxu0 0
      %7146 = vmatprep.subr.bf16.mxu0 0
      %7147 = vmatpush1.bf16.msra.mxu0 0
      %7148 = vmatprep.subr.bf16.mxu0 0
      %7149 = vmatpush1.bf16.msra.mxu0 0
      %7150 = vmatprep.subr.bf16.mxu0 0
      %7151 = vmatpush1.bf16.msra.mxu0 0
      %7152 = vmatprep.subr.bf16.mxu0 0
      %7153 = vmatpush1.bf16.msra.mxu0 0
      %7154 = vmatprep.subr.bf16.mxu0 0
      %7155 = vmatpush1.bf16.msra.mxu0 %v7142
      %7156 = vmatprep.subr.bf16.mxu0 0
      %7157 = vmatpush1.bf16.msra.mxu0 %v7089
      %7158 = vmatprep.subr.bf16.mxu0 0
      %7159 = vmatpush1.bf16.msra.mxu0 %v7088
      %7160 = vmatprep.subr.bf16.mxu0 0
      %7161 = vmatpush2.bf16.msra.mxu0 0
      %7162 = vmatprep.subr.bf16.mxu0 0
      %7163 = vmatpush2.bf16.msra.mxu0 0
      %7164 = vmatprep.subr.bf16.mxu0 0
      %7165 = vmatpush2.bf16.msra.mxu0 0
      %7166 = vmatprep.subr.bf16.mxu0 0
      %7167 = vmatpush2.bf16.msra.mxu0 0
      %7168 = vmatprep.subr.bf16.mxu0 0
      %7169 = vmatpush2.bf16.msra.mxu0 0
      %7170 = vmatprep.subr.bf16.mxu0 0
      %7171 = vmatpush2.bf16.msra.mxu0 0
      %7172 = vmatprep.subr.bf16.mxu0 0
      %7173 = vmatpush2.bf16.msra.mxu0 0
      %7174 = vmatprep.subr.bf16.mxu0 0
      %7175 = vmatpush2.bf16.msra.mxu0 0
      %7176 = vmatprep.mubr.bf16.mxu0 0
      %7177 = vmatmul.mubr.bf16.gmra.mxu0 %v7094
      %v7178 = vpop.f32.mrf.mxu0
      %v7179 = vadd.f32 0.0, %v7178
      %v7180 = vpop.f32.mrf.mxu0
      %v7181 = vpop.f32.mrf.mxu0
      %v7182 = vadd.f32 0.0, %v7181
      %v7183 = vpop.f32.mrf.mxu0
      %7184 = vmatprep.mubr.bf16.mxu0 0
      %7185 = vmatmul.mubr.bf16.gmra.mxu0 %v7097
      %v7186 = vpop.f32.mrf.mxu0
      %v7187 = vadd.f32 0.0, %v7186
      %v7188 = vpop.f32.mrf.mxu0
      %v7189 = vpop.f32.mrf.mxu0
      %v7190 = vadd.f32 0.0, %v7189
      %v7191 = vpop.f32.mrf.mxu0
      %7192 = vmatprep.mubr.bf16.mxu0 0
      %7193 = vmatmul.mubr.bf16.gmra.mxu0 %v7100
      %v7194 = vpop.f32.mrf.mxu0
      %v7195 = vadd.f32 0.0, %v7194
      %v7196 = vpop.f32.mrf.mxu0
      %v7197 = vpop.f32.mrf.mxu0
      %v7198 = vadd.f32 0.0, %v7197
      %v7199 = vpop.f32.mrf.mxu0
      %7200 = vmatprep.mubr.bf16.mxu0 0
      %7201 = vmatmul.mubr.bf16.gmra.mxu0 %v7103
      %v7202 = vpop.f32.mrf.mxu0
      %v7203 = vadd.f32 0.0, %v7202
      %v7204 = vpop.f32.mrf.mxu0
      %v7205 = vpop.f32.mrf.mxu0
      %v7206 = vadd.f32 0.0, %v7205
      %v7207 = vpop.f32.mrf.mxu0
      %7208 = vmatprep.mubr.bf16.mxu0 0
      %7209 = vmatmul.mubr.bf16.gmra.mxu0 %v7106
      %v7210 = vpop.f32.mrf.mxu0
      %v7211 = vadd.f32 0.0, %v7210
      %v7212 = vpop.f32.mrf.mxu0
      %v7213 = vpop.f32.mrf.mxu0
      %v7214 = vadd.f32 0.0, %v7213
      %v7215 = vpop.f32.mrf.mxu0
      %7216 = vmatprep.mubr.bf16.mxu0 0
      %7217 = vmatmul.mubr.bf16.gmra.mxu0 %v7109
      %v7218 = vpop.f32.mrf.mxu0
      %v7219 = vadd.f32 0.0, %v7218
      %v7220 = vpop.f32.mrf.mxu0
      %v7221 = vpop.f32.mrf.mxu0
      %v7222 = vadd.f32 0.0, %v7221
      %v7223 = vpop.f32.mrf.mxu0
      %7224 = vmatprep.mubr.bf16.mxu0 0
      %7225 = vmatmul.mubr.bf16.gmra.mxu0 %v7112
      %v7226 = vpop.f32.mrf.mxu0
      %v7227 = vadd.f32 0.0, %v7226
      %v7228 = vpop.f32.mrf.mxu0
      %v7229 = vpop.f32.mrf.mxu0
      %v7230 = vadd.f32 0.0, %v7229
      %v7231 = vpop.f32.mrf.mxu0
      %7232 = vmatprep.mubr.bf16.mxu0 0
      %7233 = vmatmul.mubr.bf16.gmra.mxu0 %v7115
      %v7234 = vpop.f32.mrf.mxu0
      %v7235 = vadd.f32 0.0, %v7234
      %v7236 = vpop.f32.mrf.mxu0
      %v7237 = vpop.f32.mrf.mxu0
      %v7238 = vadd.f32 0.0, %v7237
      %v7239 = vpop.f32.mrf.mxu0
      %7240 = vmatprep.mubr.bf16.mxu0 0
      %7241 = vmatmul.mubr.bf16.gmra.mxu0 %v7118
      %v7242 = vpop.f32.mrf.mxu0
      %v7243 = vadd.f32 0.0, %v7242
      %v7244 = vpop.f32.mrf.mxu0
      %v7245 = vpop.f32.mrf.mxu0
      %v7246 = vadd.f32 0.0, %v7245
      %v7247 = vpop.f32.mrf.mxu0
      %7248 = vmatprep.mubr.bf16.mxu0 0
      %7249 = vmatmul.mubr.bf16.gmra.mxu0 %v7121
      %v7250 = vpop.f32.mrf.mxu0
      %v7251 = vadd.f32 0.0, %v7250
      %v7252 = vpop.f32.mrf.mxu0
      %v7253 = vpop.f32.mrf.mxu0
      %v7254 = vadd.f32 0.0, %v7253
      %v7255 = vpop.f32.mrf.mxu0
      %7256 = vmatprep.mubr.bf16.mxu0 0
      %7257 = vmatmul.mubr.bf16.gmra.mxu0 %v7124
      %v7258 = vpop.f32.mrf.mxu0
      %v7259 = vadd.f32 0.0, %v7258
      %v7260 = vpop.f32.mrf.mxu0
      %v7261 = vpop.f32.mrf.mxu0
      %v7262 = vadd.f32 0.0, %v7261
      %v7263 = vpop.f32.mrf.mxu0
      %7264 = vmatprep.mubr.bf16.mxu0 0
      %7265 = vmatmul.mubr.bf16.gmra.mxu0 %v7127
      %v7266 = vpop.f32.mrf.mxu0
      %v7267 = vadd.f32 0.0, %v7266
      %v7268 = vpop.f32.mrf.mxu0
      %v7269 = vpop.f32.mrf.mxu0
      %v7270 = vadd.f32 0.0, %v7269
      %v7271 = vpop.f32.mrf.mxu0
      %7272 = vmatprep.mubr.bf16.mxu0 0
      %7273 = vmatmul.mubr.bf16.gmra.mxu0 %v7130
      %v7274 = vpop.f32.mrf.mxu0
      %v7275 = vadd.f32 0.0, %v7274
      %v7276 = vpop.f32.mrf.mxu0
      %v7277 = vpop.f32.mrf.mxu0
      %v7278 = vadd.f32 0.0, %v7277
      %v7279 = vpop.f32.mrf.mxu0
      %7280 = vmatprep.mubr.bf16.mxu0 0
      %7281 = vmatmul.mubr.bf16.gmra.mxu0 %v7133
      %v7282 = vpop.f32.mrf.mxu0
      %v7283 = vadd.f32 0.0, %v7282
      %v7284 = vpop.f32.mrf.mxu0
      %v7285 = vpop.f32.mrf.mxu0
      %v7286 = vadd.f32 0.0, %v7285
      %v7287 = vpop.f32.mrf.mxu0
      %7288 = vmatprep.mubr.bf16.mxu0 0
      %7289 = vmatmul.mubr.bf16.gmra.mxu0 %v7136
      %v7290 = vpop.f32.mrf.mxu0
      %v7291 = vadd.f32 0.0, %v7290
      %v7292 = vpop.f32.mrf.mxu0
      %v7293 = vpop.f32.mrf.mxu0
      %v7294 = vadd.f32 0.0, %v7293
      %v7295 = vpop.f32.mrf.mxu0
      %7296 = vmatprep.mubr.bf16.mxu0 0
      %7297 = vmatmul.mubr.bf16.gmra.mxu0 %v7139
      %v7298 = vpop.f32.mrf.mxu0
      %v7299 = vadd.f32 0.0, %v7298
      %v7300 = vpop.f32.mrf.mxu0
      %v7301 = vpop.f32.mrf.mxu0
      %v7302 = vadd.f32 0.0, %v7301
      %v7303 = vpop.f32.mrf.mxu0
      %7304 = vdwg.mxu0
      %v7305 = vadd.f32 %v6924, %v7179
      %v7306 = vadd.f32 %v6925, %v7182
      %v7307 = vadd.f32 %v6926, %v7187
      %v7308 = vadd.f32 %v6927, %v7190
      %v7309 = vadd.f32 %v6928, %v7195
      %v7310 = vadd.f32 %v6929, %v7198
      %v7311 = vadd.f32 %v6930, %v7203
      %v7312 = vadd.f32 %v6931, %v7206
      %v7313 = vadd.f32 %v6932, %v7211
      %v7314 = vadd.f32 %v6933, %v7214
      %v7315 = vadd.f32 %v6934, %v7219
      %v7316 = vadd.f32 %v6935, %v7222
      %v7317 = vadd.f32 %v6936, %v7227
      %v7318 = vadd.f32 %v6937, %v7230
      %v7319 = vadd.f32 %v6938, %v7235
      %v7320 = vadd.f32 %v6939, %v7238
      %v7321 = vadd.f32 %v6940, %v7243
      %v7322 = vadd.f32 %v6941, %v7246
      %v7323 = vadd.f32 %v6942, %v7251
      %v7324 = vadd.f32 %v6943, %v7254
      %v7325 = vadd.f32 %v6944, %v7259
      %v7326 = vadd.f32 %v6945, %v7262
      %v7327 = vadd.f32 %v6946, %v7267
      %v7328 = vadd.f32 %v6947, %v7270
      %v7329 = vadd.f32 %v6948, %v7275
      %v7330 = vadd.f32 %v6949, %v7278
      %v7331 = vadd.f32 %v6950, %v7283
      %v7332 = vadd.f32 %v6951, %v7286
      %v7333 = vadd.f32 %v6952, %v7291
      %v7334 = vadd.f32 %v6953, %v7294
      %v7335 = vadd.f32 %v6954, %v7299
      %v7336 = vadd.f32 %v6955, %v7302
      %s7337 = scalar_lea.vmem [#allocation2], 72
      %v7338 = vld [vmem:[%s7337] sm:$0xf]
      %v7339 = vld [vmem:[%s7337 + $0x4] sm:$0xf]
      %v7340 = vld [vmem:[%s7337 + $0x8] sm:$0xf]
      %v7341 = vld [vmem:[%s7337 + $0xc] sm:$0xf]
      %v7342 = vld [vmem:[%s7337 + $0x10] sm:$0xf]
      %v7343 = vld [vmem:[%s7337 + $0x14] sm:$0xf]
      %v7344 = vld [vmem:[%s7337 + $0x18] sm:$0xf]
      %v7345 = vld [vmem:[%s7337 + $0x1c] sm:$0xf]
      %v7346 = vld [vmem:[%s7337 + $0x20] sm:$0xf]
      %v7347 = vld [vmem:[%s7337 + $0x24] sm:$0xf]
      %v7348 = vld [vmem:[%s7337 + $0x28] sm:$0xf]
      %v7349 = vld [vmem:[%s7337 + $0x2c] sm:$0xf]
      %v7350 = vld [vmem:[%s7337 + $0x30] sm:$0xf]
      %v7351 = vld [vmem:[%s7337 + $0x34] sm:$0xf]
      %v7352 = vld [vmem:[%s7337 + $0x38] sm:$0xf]
      %v7353 = vld [vmem:[%s7337 + $0x3c] sm:$0xf]
      %v7354 = vld [vmem:[%s7337 + $0x40] sm:$0xf]
      %v7355 = vld [vmem:[%s7337 + $0x44] sm:$0xf]
      %v7356 = vld [vmem:[%s7337 + $0x48] sm:$0xf]
      %v7357 = vld [vmem:[%s7337 + $0x4c] sm:$0xf]
      %v7358 = vld [vmem:[%s7337 + $0x50] sm:$0xf]
      %v7359 = vld [vmem:[%s7337 + $0x54] sm:$0xf]
      %v7360 = vld [vmem:[%s7337 + $0x58] sm:$0xf]
      %v7361 = vld [vmem:[%s7337 + $0x5c] sm:$0xf]
      %v7362 = vld [vmem:[%s7337 + $0x60] sm:$0xf]
      %v7363 = vld [vmem:[%s7337 + $0x64] sm:$0xf]
      %v7364 = vld [vmem:[%s7337 + $0x68] sm:$0xf]
      %v7365 = vld [vmem:[%s7337 + $0x6c] sm:$0xf]
      %v7366 = vld [vmem:[%s7337 + $0x70] sm:$0xf]
      %v7367 = vld [vmem:[%s7337 + $0x74] sm:$0xf]
      %v7368 = vld [vmem:[%s7337 + $0x78] sm:$0xf]
      %v7369 = vld [vmem:[%s7337 + $0x7c] sm:$0xf]
      %s7370 = scalar_lea.vmem %s1, 216
      %v7371 = vld [vmem:[%s7370] sm:$0xf]
      %v7372 = vld [vmem:[%s7370 + $0x4] sm:$0xf]
      %v7373 = vld [vmem:[%s7370 + $0x8] sm:$0xf]
      %v7374 = vld [vmem:[%s7370 + $0xc] sm:$0xf]
      %v7375 = vld [vmem:[%s7370 + $0x10] sm:$0xf]
      %v7376 = vld [vmem:[%s7370 + $0x14] sm:$0x3]
      %v7409 = vunpack.c.l.b16 %v7338
      %v7410 = vunpack.c.l.b16 %v7339
      %v7411 = vunpack.c.l.b16 %v7340
      %v7412 = vunpack.c.l.b16 %v7341
      %v7413 = vunpack.c.l.b16 %v7342
      %v7414 = vunpack.c.l.b16 %v7343
      %v7415 = vunpack.c.l.b16 %v7344
      %v7416 = vunpack.c.l.b16 %v7345
      %v7417 = vunpack.c.l.b16 %v7346
      %v7418 = vunpack.c.l.b16 %v7347
      %v7419 = vunpack.c.l.b16 %v7348
      %v7420 = vunpack.c.l.b16 %v7349
      %v7421 = vunpack.c.l.b16 %v7350
      %v7422 = vunpack.c.l.b16 %v7351
      %v7423 = vunpack.c.l.b16 %v7352
      %v7424 = vunpack.c.l.b16 %v7353
      %v7425 = vunpack.c.l.b16 %v7354
      %v7426 = vunpack.c.l.b16 %v7355
      %v7427 = vunpack.c.l.b16 %v7356
      %v7428 = vunpack.c.l.b16 %v7357
      %v7429 = vunpack.c.l.b16 %v7358
      %v7430 = vunpack.c.l.b16 %v7359
      %v7431 = vunpack.c.l.b16 %v7360
      %v7432 = vunpack.c.l.b16 %v7361
      %v7433 = vunpack.c.l.b16 %v7362
      %v7434 = vunpack.c.l.b16 %v7363
      %v7435 = vunpack.c.l.b16 %v7364
      %v7436 = vunpack.c.l.b16 %v7365
      %v7437 = vunpack.c.l.b16 %v7366
      %v7438 = vunpack.c.l.b16 %v7367
      %v7439 = vunpack.c.l.b16 %v7368
      %v7440 = vunpack.c.l.b16 %v7369
      %v7441 = vpack.c.b16 %v7410, %v7409
      %v7442 = vpack.c.b16 %v7412, %v7411
      %v7443 = vpack.c.b16 %v7414, %v7413
      %v7444 = vpack.c.b16 %v7416, %v7415
      %v7445 = vpack.c.b16 %v7418, %v7417
      %v7446 = vpack.c.b16 %v7420, %v7419
      %v7447 = vpack.c.b16 %v7422, %v7421
      %v7448 = vpack.c.b16 %v7424, %v7423
      %v7449 = vpack.c.b16 %v7426, %v7425
      %v7450 = vpack.c.b16 %v7428, %v7427
      %v7451 = vpack.c.b16 %v7430, %v7429
      %v7452 = vpack.c.b16 %v7432, %v7431
      %v7453 = vpack.c.b16 %v7434, %v7433
      %v7454 = vpack.c.b16 %v7436, %v7435
      %v7455 = vpack.c.b16 %v7438, %v7437
      %v7456 = vpack.c.b16 %v7440, %v7439
      %v7463 = vunpack.c.l.b16 %v7371
      %v7464 = vunpack.c.l.b16 %v7372
      %v7465 = vunpack.c.l.b16 %v7373
      %v7466 = vunpack.c.l.b16 %v7374
      %v7467 = vunpack.c.l.b16 %v7375
      %v7468 = vunpack.c.l.b16 %v7376
      %v7469 = vpack.c.b16 %v7464, %v7463
      %v7470 = vpack.c.b16 %v7466, %v7465
      %v7471 = vpack.c.b16 %v7468, %v7467
      %v7475 = vsel %vm4148, %v7441, 0
      %v7478 = vsel %vm4148, %v7442, 0
      %v7481 = vsel %vm4148, %v7443, 0
      %v7484 = vsel %vm4148, %v7444, 0
      %v7487 = vsel %vm4148, %v7445, 0
      %v7490 = vsel %vm4148, %v7446, 0
      %v7493 = vsel %vm4148, %v7447, 0
      %v7496 = vsel %vm4148, %v7448, 0
      %v7499 = vsel %vm4148, %v7449, 0
      %v7502 = vsel %vm4148, %v7450, 0
      %v7505 = vsel %vm4148, %v7451, 0
      %v7508 = vsel %vm4148, %v7452, 0
      %v7511 = vsel %vm4148, %v7453, 0
      %v7514 = vsel %vm4148, %v7454, 0
      %v7517 = vsel %vm4148, %v7455, 0
      %v7520 = vsel %vm4148, %v7456, 0
      %v7523 = vsel %vm4197, %v7471, 0
      %7525 = vmatprep.subr.bf16.mxu0 0
      %7526 = vmatpush1.bf16.msra.mxu0 0
      %7527 = vmatprep.subr.bf16.mxu0 0
      %7528 = vmatpush1.bf16.msra.mxu0 0
      %7529 = vmatprep.subr.bf16.mxu0 0
      %7530 = vmatpush1.bf16.msra.mxu0 0
      %7531 = vmatprep.subr.bf16.mxu0 0
      %7532 = vmatpush1.bf16.msra.mxu0 0
      %7533 = vmatprep.subr.bf16.mxu0 0
      %7534 = vmatpush1.bf16.msra.mxu0 0
      %7535 = vmatprep.subr.bf16.mxu0 0
      %7536 = vmatpush1.bf16.msra.mxu0 %v7523
      %7537 = vmatprep.subr.bf16.mxu0 0
      %7538 = vmatpush1.bf16.msra.mxu0 %v7470
      %7539 = vmatprep.subr.bf16.mxu0 0
      %7540 = vmatpush1.bf16.msra.mxu0 %v7469
      %7541 = vmatprep.subr.bf16.mxu0 0
      %7542 = vmatpush2.bf16.msra.mxu0 0
      %7543 = vmatprep.subr.bf16.mxu0 0
      %7544 = vmatpush2.bf16.msra.mxu0 0
      %7545 = vmatprep.subr.bf16.mxu0 0
      %7546 = vmatpush2.bf16.msra.mxu0 0
      %7547 = vmatprep.subr.bf16.mxu0 0
      %7548 = vmatpush2.bf16.msra.mxu0 0
      %7549 = vmatprep.subr.bf16.mxu0 0
      %7550 = vmatpush2.bf16.msra.mxu0 0
      %7551 = vmatprep.subr.bf16.mxu0 0
      %7552 = vmatpush2.bf16.msra.mxu0 0
      %7553 = vmatprep.subr.bf16.mxu0 0
      %7554 = vmatpush2.bf16.msra.mxu0 0
      %7555 = vmatprep.subr.bf16.mxu0 0
      %7556 = vmatpush2.bf16.msra.mxu0 0
      %7557 = vmatprep.mubr.bf16.mxu0 0
      %7558 = vmatmul.mubr.bf16.gmra.mxu0 %v7475
      %v7559 = vpop.f32.mrf.mxu0
      %v7560 = vadd.f32 0.0, %v7559
      %v7561 = vpop.f32.mrf.mxu0
      %v7562 = vpop.f32.mrf.mxu0
      %v7563 = vadd.f32 0.0, %v7562
      %v7564 = vpop.f32.mrf.mxu0
      %7565 = vmatprep.mubr.bf16.mxu0 0
      %7566 = vmatmul.mubr.bf16.gmra.mxu0 %v7478
      %v7567 = vpop.f32.mrf.mxu0
      %v7568 = vadd.f32 0.0, %v7567
      %v7569 = vpop.f32.mrf.mxu0
      %v7570 = vpop.f32.mrf.mxu0
      %v7571 = vadd.f32 0.0, %v7570
      %v7572 = vpop.f32.mrf.mxu0
      %7573 = vmatprep.mubr.bf16.mxu0 0
      %7574 = vmatmul.mubr.bf16.gmra.mxu0 %v7481
      %v7575 = vpop.f32.mrf.mxu0
      %v7576 = vadd.f32 0.0, %v7575
      %v7577 = vpop.f32.mrf.mxu0
      %v7578 = vpop.f32.mrf.mxu0
      %v7579 = vadd.f32 0.0, %v7578
      %v7580 = vpop.f32.mrf.mxu0
      %7581 = vmatprep.mubr.bf16.mxu0 0
      %7582 = vmatmul.mubr.bf16.gmra.mxu0 %v7484
      %v7583 = vpop.f32.mrf.mxu0
      %v7584 = vadd.f32 0.0, %v7583
      %v7585 = vpop.f32.mrf.mxu0
      %v7586 = vpop.f32.mrf.mxu0
      %v7587 = vadd.f32 0.0, %v7586
      %v7588 = vpop.f32.mrf.mxu0
      %7589 = vmatprep.mubr.bf16.mxu0 0
      %7590 = vmatmul.mubr.bf16.gmra.mxu0 %v7487
      %v7591 = vpop.f32.mrf.mxu0
      %v7592 = vadd.f32 0.0, %v7591
      %v7593 = vpop.f32.mrf.mxu0
      %v7594 = vpop.f32.mrf.mxu0
      %v7595 = vadd.f32 0.0, %v7594
      %v7596 = vpop.f32.mrf.mxu0
      %7597 = vmatprep.mubr.bf16.mxu0 0
      %7598 = vmatmul.mubr.bf16.gmra.mxu0 %v7490
      %v7599 = vpop.f32.mrf.mxu0
      %v7600 = vadd.f32 0.0, %v7599
      %v7601 = vpop.f32.mrf.mxu0
      %v7602 = vpop.f32.mrf.mxu0
      %v7603 = vadd.f32 0.0, %v7602
      %v7604 = vpop.f32.mrf.mxu0
      %7605 = vmatprep.mubr.bf16.mxu0 0
      %7606 = vmatmul.mubr.bf16.gmra.mxu0 %v7493
      %v7607 = vpop.f32.mrf.mxu0
      %v7608 = vadd.f32 0.0, %v7607
      %v7609 = vpop.f32.mrf.mxu0
      %v7610 = vpop.f32.mrf.mxu0
      %v7611 = vadd.f32 0.0, %v7610
      %v7612 = vpop.f32.mrf.mxu0
      %7613 = vmatprep.mubr.bf16.mxu0 0
      %7614 = vmatmul.mubr.bf16.gmra.mxu0 %v7496
      %v7615 = vpop.f32.mrf.mxu0
      %v7616 = vadd.f32 0.0, %v7615
      %v7617 = vpop.f32.mrf.mxu0
      %v7618 = vpop.f32.mrf.mxu0
      %v7619 = vadd.f32 0.0, %v7618
      %v7620 = vpop.f32.mrf.mxu0
      %7621 = vmatprep.mubr.bf16.mxu0 0
      %7622 = vmatmul.mubr.bf16.gmra.mxu0 %v7499
      %v7623 = vpop.f32.mrf.mxu0
      %v7624 = vadd.f32 0.0, %v7623
      %v7625 = vpop.f32.mrf.mxu0
      %v7626 = vpop.f32.mrf.mxu0
      %v7627 = vadd.f32 0.0, %v7626
      %v7628 = vpop.f32.mrf.mxu0
      %7629 = vmatprep.mubr.bf16.mxu0 0
      %7630 = vmatmul.mubr.bf16.gmra.mxu0 %v7502
      %v7631 = vpop.f32.mrf.mxu0
      %v7632 = vadd.f32 0.0, %v7631
      %v7633 = vpop.f32.mrf.mxu0
      %v7634 = vpop.f32.mrf.mxu0
      %v7635 = vadd.f32 0.0, %v7634
      %v7636 = vpop.f32.mrf.mxu0
      %7637 = vmatprep.mubr.bf16.mxu0 0
      %7638 = vmatmul.mubr.bf16.gmra.mxu0 %v7505
      %v7639 = vpop.f32.mrf.mxu0
      %v7640 = vadd.f32 0.0, %v7639
      %v7641 = vpop.f32.mrf.mxu0
      %v7642 = vpop.f32.mrf.mxu0
      %v7643 = vadd.f32 0.0, %v7642
      %v7644 = vpop.f32.mrf.mxu0
      %7645 = vmatprep.mubr.bf16.mxu0 0
      %7646 = vmatmul.mubr.bf16.gmra.mxu0 %v7508
      %v7647 = vpop.f32.mrf.mxu0
      %v7648 = vadd.f32 0.0, %v7647
      %v7649 = vpop.f32.mrf.mxu0
      %v7650 = vpop.f32.mrf.mxu0
      %v7651 = vadd.f32 0.0, %v7650
      %v7652 = vpop.f32.mrf.mxu0
      %7653 = vmatprep.mubr.bf16.mxu0 0
      %7654 = vmatmul.mubr.bf16.gmra.mxu0 %v7511
      %v7655 = vpop.f32.mrf.mxu0
      %v7656 = vadd.f32 0.0, %v7655
      %v7657 = vpop.f32.mrf.mxu0
      %v7658 = vpop.f32.mrf.mxu0
      %v7659 = vadd.f32 0.0, %v7658
      %v7660 = vpop.f32.mrf.mxu0
      %7661 = vmatprep.mubr.bf16.mxu0 0
      %7662 = vmatmul.mubr.bf16.gmra.mxu0 %v7514
      %v7663 = vpop.f32.mrf.mxu0
      %v7664 = vadd.f32 0.0, %v7663
      %v7665 = vpop.f32.mrf.mxu0
      %v7666 = vpop.f32.mrf.mxu0
      %v7667 = vadd.f32 0.0, %v7666
      %v7668 = vpop.f32.mrf.mxu0
      %7669 = vmatprep.mubr.bf16.mxu0 0
      %7670 = vmatmul.mubr.bf16.gmra.mxu0 %v7517
      %v7671 = vpop.f32.mrf.mxu0
      %v7672 = vadd.f32 0.0, %v7671
      %v7673 = vpop.f32.mrf.mxu0
      %v7674 = vpop.f32.mrf.mxu0
      %v7675 = vadd.f32 0.0, %v7674
      %v7676 = vpop.f32.mrf.mxu0
      %7677 = vmatprep.mubr.bf16.mxu0 0
      %7678 = vmatmul.mubr.bf16.gmra.mxu0 %v7520
      %v7679 = vpop.f32.mrf.mxu0
      %v7680 = vadd.f32 0.0, %v7679
      %v7681 = vpop.f32.mrf.mxu0
      %v7682 = vpop.f32.mrf.mxu0
      %v7683 = vadd.f32 0.0, %v7682
      %v7684 = vpop.f32.mrf.mxu0
      %7685 = vdwg.mxu0
      %v7686 = vadd.f32 %v7305, %v7560
      %v7687 = vadd.f32 %v7306, %v7563
      %v7688 = vadd.f32 %v7307, %v7568
      %v7689 = vadd.f32 %v7308, %v7571
      %v7690 = vadd.f32 %v7309, %v7576
      %v7691 = vadd.f32 %v7310, %v7579
      %v7692 = vadd.f32 %v7311, %v7584
      %v7693 = vadd.f32 %v7312, %v7587
      %v7694 = vadd.f32 %v7313, %v7592
      %v7695 = vadd.f32 %v7314, %v7595
      %v7696 = vadd.f32 %v7315, %v7600
      %v7697 = vadd.f32 %v7316, %v7603
      %v7698 = vadd.f32 %v7317, %v7608
      %v7699 = vadd.f32 %v7318, %v7611
      %v7700 = vadd.f32 %v7319, %v7616
      %v7701 = vadd.f32 %v7320, %v7619
      %v7702 = vadd.f32 %v7321, %v7624
      %v7703 = vadd.f32 %v7322, %v7627
      %v7704 = vadd.f32 %v7323, %v7632
      %v7705 = vadd.f32 %v7324, %v7635
      %v7706 = vadd.f32 %v7325, %v7640
      %v7707 = vadd.f32 %v7326, %v7643
      %v7708 = vadd.f32 %v7327, %v7648
      %v7709 = vadd.f32 %v7328, %v7651
      %v7710 = vadd.f32 %v7329, %v7656
      %v7711 = vadd.f32 %v7330, %v7659
      %v7712 = vadd.f32 %v7331, %v7664
      %v7713 = vadd.f32 %v7332, %v7667
      %v7714 = vadd.f32 %v7333, %v7672
      %v7715 = vadd.f32 %v7334, %v7675
      %v7716 = vadd.f32 %v7335, %v7680
      %v7717 = vadd.f32 %v7336, %v7683
      %s7718 = scalar_lea.vmem [#allocation2], 80
      %v7719 = vld [vmem:[%s7718] sm:$0xf]
      %v7720 = vld [vmem:[%s7718 + $0x4] sm:$0xf]
      %v7721 = vld [vmem:[%s7718 + $0x8] sm:$0xf]
      %v7722 = vld [vmem:[%s7718 + $0xc] sm:$0xf]
      %v7723 = vld [vmem:[%s7718 + $0x10] sm:$0xf]
      %v7724 = vld [vmem:[%s7718 + $0x14] sm:$0xf]
      %v7725 = vld [vmem:[%s7718 + $0x18] sm:$0xf]
      %v7726 = vld [vmem:[%s7718 + $0x1c] sm:$0xf]
      %v7727 = vld [vmem:[%s7718 + $0x20] sm:$0xf]
      %v7728 = vld [vmem:[%s7718 + $0x24] sm:$0xf]
      %v7729 = vld [vmem:[%s7718 + $0x28] sm:$0xf]
      %v7730 = vld [vmem:[%s7718 + $0x2c] sm:$0xf]
      %v7731 = vld [vmem:[%s7718 + $0x30] sm:$0xf]
      %v7732 = vld [vmem:[%s7718 + $0x34] sm:$0xf]
      %v7733 = vld [vmem:[%s7718 + $0x38] sm:$0xf]
      %v7734 = vld [vmem:[%s7718 + $0x3c] sm:$0xf]
      %v7735 = vld [vmem:[%s7718 + $0x40] sm:$0xf]
      %v7736 = vld [vmem:[%s7718 + $0x44] sm:$0xf]
      %v7737 = vld [vmem:[%s7718 + $0x48] sm:$0xf]
      %v7738 = vld [vmem:[%s7718 + $0x4c] sm:$0xf]
      %v7739 = vld [vmem:[%s7718 + $0x50] sm:$0xf]
      %v7740 = vld [vmem:[%s7718 + $0x54] sm:$0xf]
      %v7741 = vld [vmem:[%s7718 + $0x58] sm:$0xf]
      %v7742 = vld [vmem:[%s7718 + $0x5c] sm:$0xf]
      %v7743 = vld [vmem:[%s7718 + $0x60] sm:$0xf]
      %v7744 = vld [vmem:[%s7718 + $0x64] sm:$0xf]
      %v7745 = vld [vmem:[%s7718 + $0x68] sm:$0xf]
      %v7746 = vld [vmem:[%s7718 + $0x6c] sm:$0xf]
      %v7747 = vld [vmem:[%s7718 + $0x70] sm:$0xf]
      %v7748 = vld [vmem:[%s7718 + $0x74] sm:$0xf]
      %v7749 = vld [vmem:[%s7718 + $0x78] sm:$0xf]
      %v7750 = vld [vmem:[%s7718 + $0x7c] sm:$0xf]
      %s7751 = scalar_lea.vmem %s1, 240
      %v7752 = vld [vmem:[%s7751] sm:$0xf]
      %v7753 = vld [vmem:[%s7751 + $0x4] sm:$0xf]
      %v7754 = vld [vmem:[%s7751 + $0x8] sm:$0xf]
      %v7755 = vld [vmem:[%s7751 + $0xc] sm:$0xf]
      %v7756 = vld [vmem:[%s7751 + $0x10] sm:$0xf]
      %v7757 = vld [vmem:[%s7751 + $0x14] sm:$0x3]
      %v7790 = vunpack.c.l.b16 %v7719
      %v7791 = vunpack.c.l.b16 %v7720
      %v7792 = vunpack.c.l.b16 %v7721
      %v7793 = vunpack.c.l.b16 %v7722
      %v7794 = vunpack.c.l.b16 %v7723
      %v7795 = vunpack.c.l.b16 %v7724
      %v7796 = vunpack.c.l.b16 %v7725
      %v7797 = vunpack.c.l.b16 %v7726
      %v7798 = vunpack.c.l.b16 %v7727
      %v7799 = vunpack.c.l.b16 %v7728
      %v7800 = vunpack.c.l.b16 %v7729
      %v7801 = vunpack.c.l.b16 %v7730
      %v7802 = vunpack.c.l.b16 %v7731
      %v7803 = vunpack.c.l.b16 %v7732
      %v7804 = vunpack.c.l.b16 %v7733
      %v7805 = vunpack.c.l.b16 %v7734
      %v7806 = vunpack.c.l.b16 %v7735
      %v7807 = vunpack.c.l.b16 %v7736
      %v7808 = vunpack.c.l.b16 %v7737
      %v7809 = vunpack.c.l.b16 %v7738
      %v7810 = vunpack.c.l.b16 %v7739
      %v7811 = vunpack.c.l.b16 %v7740
      %v7812 = vunpack.c.l.b16 %v7741
      %v7813 = vunpack.c.l.b16 %v7742
      %v7814 = vunpack.c.l.b16 %v7743
      %v7815 = vunpack.c.l.b16 %v7744
      %v7816 = vunpack.c.l.b16 %v7745
      %v7817 = vunpack.c.l.b16 %v7746
      %v7818 = vunpack.c.l.b16 %v7747
      %v7819 = vunpack.c.l.b16 %v7748
      %v7820 = vunpack.c.l.b16 %v7749
      %v7821 = vunpack.c.l.b16 %v7750
      %v7822 = vpack.c.b16 %v7791, %v7790
      %v7823 = vpack.c.b16 %v7793, %v7792
      %v7824 = vpack.c.b16 %v7795, %v7794
      %v7825 = vpack.c.b16 %v7797, %v7796
      %v7826 = vpack.c.b16 %v7799, %v7798
      %v7827 = vpack.c.b16 %v7801, %v7800
      %v7828 = vpack.c.b16 %v7803, %v7802
      %v7829 = vpack.c.b16 %v7805, %v7804
      %v7830 = vpack.c.b16 %v7807, %v7806
      %v7831 = vpack.c.b16 %v7809, %v7808
      %v7832 = vpack.c.b16 %v7811, %v7810
      %v7833 = vpack.c.b16 %v7813, %v7812
      %v7834 = vpack.c.b16 %v7815, %v7814
      %v7835 = vpack.c.b16 %v7817, %v7816
      %v7836 = vpack.c.b16 %v7819, %v7818
      %v7837 = vpack.c.b16 %v7821, %v7820
      %v7844 = vunpack.c.l.b16 %v7752
      %v7845 = vunpack.c.l.b16 %v7753
      %v7846 = vunpack.c.l.b16 %v7754
      %v7847 = vunpack.c.l.b16 %v7755
      %v7848 = vunpack.c.l.b16 %v7756
      %v7849 = vunpack.c.l.b16 %v7757
      %v7850 = vpack.c.b16 %v7845, %v7844
      %v7851 = vpack.c.b16 %v7847, %v7846
      %v7852 = vpack.c.b16 %v7849, %v7848
      %v7856 = vsel %vm4148, %v7822, 0
      %v7859 = vsel %vm4148, %v7823, 0
      %v7862 = vsel %vm4148, %v7824, 0
      %v7865 = vsel %vm4148, %v7825, 0
      %v7868 = vsel %vm4148, %v7826, 0
      %v7871 = vsel %vm4148, %v7827, 0
      %v7874 = vsel %vm4148, %v7828, 0
      %v7877 = vsel %vm4148, %v7829, 0
      %v7880 = vsel %vm4148, %v7830, 0
      %v7883 = vsel %vm4148, %v7831, 0
      %v7886 = vsel %vm4148, %v7832, 0
      %v7889 = vsel %vm4148, %v7833, 0
      %v7892 = vsel %vm4148, %v7834, 0
      %v7895 = vsel %vm4148, %v7835, 0
      %v7898 = vsel %vm4148, %v7836, 0
      %v7901 = vsel %vm4148, %v7837, 0
      %v7904 = vsel %vm4197, %v7852, 0
      %7906 = vmatprep.subr.bf16.mxu0 0
      %7907 = vmatpush1.bf16.msra.mxu0 0
      %7908 = vmatprep.subr.bf16.mxu0 0
      %7909 = vmatpush1.bf16.msra.mxu0 0
      %7910 = vmatprep.subr.bf16.mxu0 0
      %7911 = vmatpush1.bf16.msra.mxu0 0
      %7912 = vmatprep.subr.bf16.mxu0 0
      %7913 = vmatpush1.bf16.msra.mxu0 0
      %7914 = vmatprep.subr.bf16.mxu0 0
      %7915 = vmatpush1.bf16.msra.mxu0 0
      %7916 = vmatprep.subr.bf16.mxu0 0
      %7917 = vmatpush1.bf16.msra.mxu0 %v7904
      %7918 = vmatprep.subr.bf16.mxu0 0
      %7919 = vmatpush1.bf16.msra.mxu0 %v7851
      %7920 = vmatprep.subr.bf16.mxu0 0
      %7921 = vmatpush1.bf16.msra.mxu0 %v7850
      %7922 = vmatprep.subr.bf16.mxu0 0
      %7923 = vmatpush2.bf16.msra.mxu0 0
      %7924 = vmatprep.subr.bf16.mxu0 0
      %7925 = vmatpush2.bf16.msra.mxu0 0
      %7926 = vmatprep.subr.bf16.mxu0 0
      %7927 = vmatpush2.bf16.msra.mxu0 0
      %7928 = vmatprep.subr.bf16.mxu0 0
      %7929 = vmatpush2.bf16.msra.mxu0 0
      %7930 = vmatprep.subr.bf16.mxu0 0
      %7931 = vmatpush2.bf16.msra.mxu0 0
      %7932 = vmatprep.subr.bf16.mxu0 0
      %7933 = vmatpush2.bf16.msra.mxu0 0
      %7934 = vmatprep.subr.bf16.mxu0 0
      %7935 = vmatpush2.bf16.msra.mxu0 0
      %7936 = vmatprep.subr.bf16.mxu0 0
      %7937 = vmatpush2.bf16.msra.mxu0 0
      %7938 = vmatprep.mubr.bf16.mxu0 0
      %7939 = vmatmul.mubr.bf16.gmra.mxu0 %v7856
      %v7940 = vpop.f32.mrf.mxu0
      %v7941 = vadd.f32 0.0, %v7940
      %v7942 = vpop.f32.mrf.mxu0
      %v7943 = vpop.f32.mrf.mxu0
      %v7944 = vadd.f32 0.0, %v7943
      %v7945 = vpop.f32.mrf.mxu0
      %7946 = vmatprep.mubr.bf16.mxu0 0
      %7947 = vmatmul.mubr.bf16.gmra.mxu0 %v7859
      %v7948 = vpop.f32.mrf.mxu0
      %v7949 = vadd.f32 0.0, %v7948
      %v7950 = vpop.f32.mrf.mxu0
      %v7951 = vpop.f32.mrf.mxu0
      %v7952 = vadd.f32 0.0, %v7951
      %v7953 = vpop.f32.mrf.mxu0
      %7954 = vmatprep.mubr.bf16.mxu0 0
      %7955 = vmatmul.mubr.bf16.gmra.mxu0 %v7862
      %v7956 = vpop.f32.mrf.mxu0
      %v7957 = vadd.f32 0.0, %v7956
      %v7958 = vpop.f32.mrf.mxu0
      %v7959 = vpop.f32.mrf.mxu0
      %v7960 = vadd.f32 0.0, %v7959
      %v7961 = vpop.f32.mrf.mxu0
      %7962 = vmatprep.mubr.bf16.mxu0 0
      %7963 = vmatmul.mubr.bf16.gmra.mxu0 %v7865
      %v7964 = vpop.f32.mrf.mxu0
      %v7965 = vadd.f32 0.0, %v7964
      %v7966 = vpop.f32.mrf.mxu0
      %v7967 = vpop.f32.mrf.mxu0
      %v7968 = vadd.f32 0.0, %v7967
      %v7969 = vpop.f32.mrf.mxu0
      %7970 = vmatprep.mubr.bf16.mxu0 0
      %7971 = vmatmul.mubr.bf16.gmra.mxu0 %v7868
      %v7972 = vpop.f32.mrf.mxu0
      %v7973 = vadd.f32 0.0, %v7972
      %v7974 = vpop.f32.mrf.mxu0
      %v7975 = vpop.f32.mrf.mxu0
      %v7976 = vadd.f32 0.0, %v7975
      %v7977 = vpop.f32.mrf.mxu0
      %7978 = vmatprep.mubr.bf16.mxu0 0
      %7979 = vmatmul.mubr.bf16.gmra.mxu0 %v7871
      %v7980 = vpop.f32.mrf.mxu0
      %v7981 = vadd.f32 0.0, %v7980
      %v7982 = vpop.f32.mrf.mxu0
      %v7983 = vpop.f32.mrf.mxu0
      %v7984 = vadd.f32 0.0, %v7983
      %v7985 = vpop.f32.mrf.mxu0
      %7986 = vmatprep.mubr.bf16.mxu0 0
      %7987 = vmatmul.mubr.bf16.gmra.mxu0 %v7874
      %v7988 = vpop.f32.mrf.mxu0
      %v7989 = vadd.f32 0.0, %v7988
      %v7990 = vpop.f32.mrf.mxu0
      %v7991 = vpop.f32.mrf.mxu0
      %v7992 = vadd.f32 0.0, %v7991
      %v7993 = vpop.f32.mrf.mxu0
      %7994 = vmatprep.mubr.bf16.mxu0 0
      %7995 = vmatmul.mubr.bf16.gmra.mxu0 %v7877
      %v7996 = vpop.f32.mrf.mxu0
      %v7997 = vadd.f32 0.0, %v7996
      %v7998 = vpop.f32.mrf.mxu0
      %v7999 = vpop.f32.mrf.mxu0
      %v8000 = vadd.f32 0.0, %v7999
      %v8001 = vpop.f32.mrf.mxu0
      %8002 = vmatprep.mubr.bf16.mxu0 0
      %8003 = vmatmul.mubr.bf16.gmra.mxu0 %v7880
      %v8004 = vpop.f32.mrf.mxu0
      %v8005 = vadd.f32 0.0, %v8004
      %v8006 = vpop.f32.mrf.mxu0
      %v8007 = vpop.f32.mrf.mxu0
      %v8008 = vadd.f32 0.0, %v8007
      %v8009 = vpop.f32.mrf.mxu0
      %8010 = vmatprep.mubr.bf16.mxu0 0
      %8011 = vmatmul.mubr.bf16.gmra.mxu0 %v7883
      %v8012 = vpop.f32.mrf.mxu0
      %v8013 = vadd.f32 0.0, %v8012
      %v8014 = vpop.f32.mrf.mxu0
      %v8015 = vpop.f32.mrf.mxu0
      %v8016 = vadd.f32 0.0, %v8015
      %v8017 = vpop.f32.mrf.mxu0
      %8018 = vmatprep.mubr.bf16.mxu0 0
      %8019 = vmatmul.mubr.bf16.gmra.mxu0 %v7886
      %v8020 = vpop.f32.mrf.mxu0
      %v8021 = vadd.f32 0.0, %v8020
      %v8022 = vpop.f32.mrf.mxu0
      %v8023 = vpop.f32.mrf.mxu0
      %v8024 = vadd.f32 0.0, %v8023
      %v8025 = vpop.f32.mrf.mxu0
      %8026 = vmatprep.mubr.bf16.mxu0 0
      %8027 = vmatmul.mubr.bf16.gmra.mxu0 %v7889
      %v8028 = vpop.f32.mrf.mxu0
      %v8029 = vadd.f32 0.0, %v8028
      %v8030 = vpop.f32.mrf.mxu0
      %v8031 = vpop.f32.mrf.mxu0
      %v8032 = vadd.f32 0.0, %v8031
      %v8033 = vpop.f32.mrf.mxu0
      %8034 = vmatprep.mubr.bf16.mxu0 0
      %8035 = vmatmul.mubr.bf16.gmra.mxu0 %v7892
      %v8036 = vpop.f32.mrf.mxu0
      %v8037 = vadd.f32 0.0, %v8036
      %v8038 = vpop.f32.mrf.mxu0
      %v8039 = vpop.f32.mrf.mxu0
      %v8040 = vadd.f32 0.0, %v8039
      %v8041 = vpop.f32.mrf.mxu0
      %8042 = vmatprep.mubr.bf16.mxu0 0
      %8043 = vmatmul.mubr.bf16.gmra.mxu0 %v7895
      %v8044 = vpop.f32.mrf.mxu0
      %v8045 = vadd.f32 0.0, %v8044
      %v8046 = vpop.f32.mrf.mxu0
      %v8047 = vpop.f32.mrf.mxu0
      %v8048 = vadd.f32 0.0, %v8047
      %v8049 = vpop.f32.mrf.mxu0
      %8050 = vmatprep.mubr.bf16.mxu0 0
      %8051 = vmatmul.mubr.bf16.gmra.mxu0 %v7898
      %v8052 = vpop.f32.mrf.mxu0
      %v8053 = vadd.f32 0.0, %v8052
      %v8054 = vpop.f32.mrf.mxu0
      %v8055 = vpop.f32.mrf.mxu0
      %v8056 = vadd.f32 0.0, %v8055
      %v8057 = vpop.f32.mrf.mxu0
      %8058 = vmatprep.mubr.bf16.mxu0 0
      %8059 = vmatmul.mubr.bf16.gmra.mxu0 %v7901
      %v8060 = vpop.f32.mrf.mxu0
      %v8061 = vadd.f32 0.0, %v8060
      %v8062 = vpop.f32.mrf.mxu0
      %v8063 = vpop.f32.mrf.mxu0
      %v8064 = vadd.f32 0.0, %v8063
      %v8065 = vpop.f32.mrf.mxu0
      %8066 = vdwg.mxu0
      %v8067 = vadd.f32 %v7686, %v7941
      %v8068 = vadd.f32 %v7687, %v7944
      %v8069 = vadd.f32 %v7688, %v7949
      %v8070 = vadd.f32 %v7689, %v7952
      %v8071 = vadd.f32 %v7690, %v7957
      %v8072 = vadd.f32 %v7691, %v7960
      %v8073 = vadd.f32 %v7692, %v7965
      %v8074 = vadd.f32 %v7693, %v7968
      %v8075 = vadd.f32 %v7694, %v7973
      %v8076 = vadd.f32 %v7695, %v7976
      %v8077 = vadd.f32 %v7696, %v7981
      %v8078 = vadd.f32 %v7697, %v7984
      %v8079 = vadd.f32 %v7698, %v7989
      %v8080 = vadd.f32 %v7699, %v7992
      %v8081 = vadd.f32 %v7700, %v7997
      %v8082 = vadd.f32 %v7701, %v8000
      %v8083 = vadd.f32 %v7702, %v8005
      %v8084 = vadd.f32 %v7703, %v8008
      %v8085 = vadd.f32 %v7704, %v8013
      %v8086 = vadd.f32 %v7705, %v8016
      %v8087 = vadd.f32 %v7706, %v8021
      %v8088 = vadd.f32 %v7707, %v8024
      %v8089 = vadd.f32 %v7708, %v8029
      %v8090 = vadd.f32 %v7709, %v8032
      %v8091 = vadd.f32 %v7710, %v8037
      %v8092 = vadd.f32 %v7711, %v8040
      %v8093 = vadd.f32 %v7712, %v8045
      %v8094 = vadd.f32 %v7713, %v8048
      %v8095 = vadd.f32 %v7714, %v8053
      %v8096 = vadd.f32 %v7715, %v8056
      %v8097 = vadd.f32 %v7716, %v8061
      %v8098 = vadd.f32 %v7717, %v8064
      %v8099 = vld [vmem:[%s2] sm:$0x1]
      %v8101 = vlaneseq
      %v8102 = vshrl.u32 %v8101, 7
      %v8103 = vsub.s32 0, %v8102
      %v8104 = vrot.slane %v8099, %v8103
      %v8106 = vmul.f32 %v8067, %v8104
      %v8107 = vmul.f32 %v8068, %v8104
      %v8108 = vmul.f32 %v8069, %v8104
      %v8109 = vmul.f32 %v8070, %v8104
      %v8110 = vmul.f32 %v8071, %v8104
      %v8111 = vmul.f32 %v8072, %v8104
      %v8112 = vmul.f32 %v8073, %v8104
      %v8113 = vmul.f32 %v8074, %v8104
      %v8114 = vmul.f32 %v8075, %v8104
      %v8115 = vmul.f32 %v8076, %v8104
      %v8116 = vmul.f32 %v8077, %v8104
      %v8117 = vmul.f32 %v8078, %v8104
      %v8118 = vmul.f32 %v8079, %v8104
      %v8119 = vmul.f32 %v8080, %v8104
      %v8120 = vmul.f32 %v8081, %v8104
      %v8121 = vmul.f32 %v8082, %v8104
      %v8122 = vmul.f32 %v8083, %v8104
      %v8123 = vmul.f32 %v8084, %v8104
      %v8124 = vmul.f32 %v8085, %v8104
      %v8125 = vmul.f32 %v8086, %v8104
      %v8126 = vmul.f32 %v8087, %v8104
      %v8127 = vmul.f32 %v8088, %v8104
      %v8128 = vmul.f32 %v8089, %v8104
      %v8129 = vmul.f32 %v8090, %v8104
      %v8130 = vmul.f32 %v8091, %v8104
      %v8131 = vmul.f32 %v8092, %v8104
      %v8132 = vmul.f32 %v8093, %v8104
      %v8133 = vmul.f32 %v8094, %v8104
      %v8134 = vmul.f32 %v8095, %v8104
      %v8135 = vmul.f32 %v8096, %v8104
      %v8136 = vmul.f32 %v8097, %v8104
      %v8137 = vmul.f32 %v8098, %v8104
      %v8138 = vld [vmem:[%s3] sm:$0x1]
      %v8140 = vlaneseq
      %v8141 = vshrl.u32 %v8140, 7
      %v8142 = vsub.s32 0, %v8141
      %v8143 = vrot.slane %v8138, %v8142
      %v8145 = vadd.f32 %v8106, %v8143
      %v8146 = vadd.f32 %v8107, %v8143
      %v8147 = vadd.f32 %v8108, %v8143
      %v8148 = vadd.f32 %v8109, %v8143
      %v8149 = vadd.f32 %v8110, %v8143
      %v8150 = vadd.f32 %v8111, %v8143
      %v8151 = vadd.f32 %v8112, %v8143
      %v8152 = vadd.f32 %v8113, %v8143
      %v8153 = vadd.f32 %v8114, %v8143
      %v8154 = vadd.f32 %v8115, %v8143
      %v8155 = vadd.f32 %v8116, %v8143
      %v8156 = vadd.f32 %v8117, %v8143
      %v8157 = vadd.f32 %v8118, %v8143
      %v8158 = vadd.f32 %v8119, %v8143
      %v8159 = vadd.f32 %v8120, %v8143
      %v8160 = vadd.f32 %v8121, %v8143
      %v8161 = vadd.f32 %v8122, %v8143
      %v8162 = vadd.f32 %v8123, %v8143
      %v8163 = vadd.f32 %v8124, %v8143
      %v8164 = vadd.f32 %v8125, %v8143
      %v8165 = vadd.f32 %v8126, %v8143
      %v8166 = vadd.f32 %v8127, %v8143
      %v8167 = vadd.f32 %v8128, %v8143
      %v8168 = vadd.f32 %v8129, %v8143
      %v8169 = vadd.f32 %v8130, %v8143
      %v8170 = vadd.f32 %v8131, %v8143
      %v8171 = vadd.f32 %v8132, %v8143
      %v8172 = vadd.f32 %v8133, %v8143
      %v8173 = vadd.f32 %v8134, %v8143
      %v8174 = vadd.f32 %v8135, %v8143
      %v8175 = vadd.f32 %v8136, %v8143
      %v8176 = vadd.f32 %v8137, %v8143
      %v8177 = vmax.f32 %v8145, 0.0
      %v8178 = vmax.f32 %v8146, 0.0
      %v8179 = vmax.f32 %v8147, 0.0
      %v8180 = vmax.f32 %v8148, 0.0
      %v8181 = vmax.f32 %v8149, 0.0
      %v8182 = vmax.f32 %v8150, 0.0
      %v8183 = vmax.f32 %v8151, 0.0
      %v8184 = vmax.f32 %v8152, 0.0
      %v8185 = vmax.f32 %v8153, 0.0
      %v8186 = vmax.f32 %v8154, 0.0
      %v8187 = vmax.f32 %v8155, 0.0
      %v8188 = vmax.f32 %v8156, 0.0
      %v8189 = vmax.f32 %v8157, 0.0
      %v8190 = vmax.f32 %v8158, 0.0
      %v8191 = vmax.f32 %v8159, 0.0
      %v8192 = vmax.f32 %v8160, 0.0
      %v8193 = vmax.f32 %v8161, 0.0
      %v8194 = vmax.f32 %v8162, 0.0
      %v8195 = vmax.f32 %v8163, 0.0
      %v8196 = vmax.f32 %v8164, 0.0
      %v8197 = vmax.f32 %v8165, 0.0
      %v8198 = vmax.f32 %v8166, 0.0
      %v8199 = vmax.f32 %v8167, 0.0
      %v8200 = vmax.f32 %v8168, 0.0
      %v8201 = vmax.f32 %v8169, 0.0
      %v8202 = vmax.f32 %v8170, 0.0
      %v8203 = vmax.f32 %v8171, 0.0
      %v8204 = vmax.f32 %v8172, 0.0
      %v8205 = vmax.f32 %v8173, 0.0
      %v8206 = vmax.f32 %v8174, 0.0
      %v8207 = vmax.f32 %v8175, 0.0
      %v8208 = vmax.f32 %v8176, 0.0
      %vm8209 = vcmask 93184
      %8210 = vst.msk [vmem:[#allocation3] sm:$0xf] %vm8209, 0
      %8211 = vst.msk [vmem:[#allocation3 + $0x4] sm:$0xf] %vm8209, 0
      %s8212 = scalar_lea.vmem [#allocation3], 136
      %8213 = vst.msk [vmem:[%s8212] sm:$0xf] %vm8209, 0
      %8214 = vst.msk [vmem:[%s8212 + $0x4] sm:$0xf] %vm8209, 0
      %vm8247 = vcmask 1040384
      %v8248 = vrot.slane %v8177, 7
      %v8249 = vrot.slane %v8178, 7
      %v8250 = vsel %vm8247, %v8248, %v8249
      %v8251 = vrot.slane %v8179, 7
      %v8252 = vrot.slane %v8180, 7
      %v8253 = vsel %vm8247, %v8251, %v8252
      %v8254 = vrot.slane %v8181, 7
      %v8255 = vrot.slane %v8182, 7
      %v8256 = vsel %vm8247, %v8254, %v8255
      %v8257 = vrot.slane %v8183, 7
      %v8258 = vrot.slane %v8184, 7
      %v8259 = vsel %vm8247, %v8257, %v8258
      %v8260 = vrot.slane %v8185, 7
      %v8261 = vrot.slane %v8186, 7
      %v8262 = vsel %vm8247, %v8260, %v8261
      %v8263 = vrot.slane %v8187, 7
      %v8264 = vrot.slane %v8188, 7
      %v8265 = vsel %vm8247, %v8263, %v8264
      %v8266 = vrot.slane %v8189, 7
      %v8267 = vrot.slane %v8190, 7
      %v8268 = vsel %vm8247, %v8266, %v8267
      %v8269 = vrot.slane %v8191, 7
      %v8270 = vrot.slane %v8192, 7
      %v8271 = vsel %vm8247, %v8269, %v8270
      %v8272 = vrot.slane %v8193, 7
      %v8273 = vrot.slane %v8194, 7
      %v8274 = vsel %vm8247, %v8272, %v8273
      %v8275 = vrot.slane %v8195, 7
      %v8276 = vrot.slane %v8196, 7
      %v8277 = vsel %vm8247, %v8275, %v8276
      %v8278 = vrot.slane %v8197, 7
      %v8279 = vrot.slane %v8198, 7
      %v8280 = vsel %vm8247, %v8278, %v8279
      %v8281 = vrot.slane %v8199, 7
      %v8282 = vrot.slane %v8200, 7
      %v8283 = vsel %vm8247, %v8281, %v8282
      %v8284 = vrot.slane %v8201, 7
      %v8285 = vrot.slane %v8202, 7
      %v8286 = vsel %vm8247, %v8284, %v8285
      %v8287 = vrot.slane %v8203, 7
      %v8288 = vrot.slane %v8204, 7
      %v8289 = vsel %vm8247, %v8287, %v8288
      %v8290 = vrot.slane %v8205, 7
      %v8291 = vrot.slane %v8206, 7
      %v8292 = vsel %vm8247, %v8290, %v8291
      %v8293 = vrot.slane %v8207, 7
      %v8294 = vrot.slane %v8208, 7
      %v8295 = vsel %vm8247, %v8293, %v8294
      %v8344 = vsel %vm8247, 0.0, %v8248
      %v8345 = vsel %vm8247, 0.0, %v8251
      %v8346 = vsel %vm8247, 0.0, %v8254
      %v8347 = vsel %vm8247, 0.0, %v8257
      %v8348 = vsel %vm8247, 0.0, %v8260
      %v8349 = vsel %vm8247, 0.0, %v8263
      %v8350 = vsel %vm8247, 0.0, %v8266
      %v8351 = vsel %vm8247, 0.0, %v8269
      %v8352 = vsel %vm8247, 0.0, %v8272
      %v8353 = vsel %vm8247, 0.0, %v8275
      %v8354 = vsel %vm8247, 0.0, %v8278
      %v8355 = vsel %vm8247, 0.0, %v8281
      %v8356 = vsel %vm8247, 0.0, %v8284
      %v8357 = vsel %vm8247, 0.0, %v8287
      %v8358 = vsel %vm8247, 0.0, %v8290
      %v8359 = vsel %vm8247, 0.0, %v8293
      %v8360 = vsel %vm8247, %v8249, 0.0
      %v8361 = vsel %vm8247, %v8252, 0.0
      %v8362 = vsel %vm8247, %v8255, 0.0
      %v8363 = vsel %vm8247, %v8258, 0.0
      %v8364 = vsel %vm8247, %v8261, 0.0
      %v8365 = vsel %vm8247, %v8264, 0.0
      %v8366 = vsel %vm8247, %v8267, 0.0
      %v8367 = vsel %vm8247, %v8270, 0.0
      %v8368 = vsel %vm8247, %v8273, 0.0
      %v8369 = vsel %vm8247, %v8276, 0.0
      %v8370 = vsel %vm8247, %v8279, 0.0
      %v8371 = vsel %vm8247, %v8282, 0.0
      %v8372 = vsel %vm8247, %v8285, 0.0
      %v8373 = vsel %vm8247, %v8288, 0.0
      %v8374 = vsel %vm8247, %v8291, 0.0
      %v8375 = vsel %vm8247, %v8294, 0.0
      %v8376 = vpack.c.bf16 %v8250, %v8344
      %v8377 = vpack.c.bf16 %v8253, %v8345
      %v8378 = vpack.c.bf16 %v8256, %v8346
      %v8379 = vpack.c.bf16 %v8259, %v8347
      %v8380 = vpack.c.bf16 %v8262, %v8348
      %v8381 = vpack.c.bf16 %v8265, %v8349
      %v8382 = vpack.c.bf16 %v8268, %v8350
      %v8383 = vpack.c.bf16 %v8271, %v8351
      %v8384 = vpack.c.bf16 %v8274, %v8352
      %v8385 = vpack.c.bf16 %v8277, %v8353
      %v8386 = vpack.c.bf16 %v8280, %v8354
      %v8387 = vpack.c.bf16 %v8283, %v8355
      %v8388 = vpack.c.bf16 %v8286, %v8356
      %v8389 = vpack.c.bf16 %v8289, %v8357
      %v8390 = vpack.c.bf16 %v8292, %v8358
      %v8391 = vpack.c.bf16 %v8295, %v8359
      %v8408 = vunpack.c.l.b16 %v8376
      %v8409 = vunpack.c.h.b16 %v8376
      %v8410 = vunpack.c.l.b16 %v8377
      %v8411 = vunpack.c.h.b16 %v8377
      %v8412 = vunpack.c.l.b16 %v8378
      %v8413 = vunpack.c.h.b16 %v8378
      %v8414 = vunpack.c.l.b16 %v8379
      %v8415 = vunpack.c.h.b16 %v8379
      %v8416 = vunpack.c.l.b16 %v8380
      %v8417 = vunpack.c.h.b16 %v8380
      %v8418 = vunpack.c.l.b16 %v8381
      %v8419 = vunpack.c.h.b16 %v8381
      %v8420 = vunpack.c.l.b16 %v8382
      %v8421 = vunpack.c.h.b16 %v8382
      %v8422 = vunpack.c.l.b16 %v8383
      %v8423 = vunpack.c.h.b16 %v8383
      %v8424 = vunpack.c.l.b16 %v8384
      %v8425 = vunpack.c.h.b16 %v8384
      %v8426 = vunpack.c.l.b16 %v8385
      %v8427 = vunpack.c.h.b16 %v8385
      %v8428 = vunpack.c.l.b16 %v8386
      %v8429 = vunpack.c.h.b16 %v8386
      %v8430 = vunpack.c.l.b16 %v8387
      %v8431 = vunpack.c.h.b16 %v8387
      %v8432 = vunpack.c.l.b16 %v8388
      %v8433 = vunpack.c.h.b16 %v8388
      %v8434 = vunpack.c.l.b16 %v8389
      %v8435 = vunpack.c.h.b16 %v8389
      %v8436 = vunpack.c.l.b16 %v8390
      %v8437 = vunpack.c.h.b16 %v8390
      %v8438 = vunpack.c.l.b16 %v8391
      %v8439 = vunpack.c.h.b16 %v8391
      %v8440 = vpack.c.b16 %v8408, %v8408
      %v8441 = vpack.c.b16 %v8409, %v8409
      %v8442 = vpack.c.b16 %v8410, %v8410
      %v8443 = vpack.c.b16 %v8411, %v8411
      %v8444 = vpack.c.b16 %v8412, %v8412
      %v8445 = vpack.c.b16 %v8413, %v8413
      %v8446 = vpack.c.b16 %v8414, %v8414
      %v8447 = vpack.c.b16 %v8415, %v8415
      %v8448 = vpack.c.b16 %v8416, %v8416
      %v8449 = vpack.c.b16 %v8417, %v8417
      %v8450 = vpack.c.b16 %v8418, %v8418
      %v8451 = vpack.c.b16 %v8419, %v8419
      %v8452 = vpack.c.b16 %v8420, %v8420
      %v8453 = vpack.c.b16 %v8421, %v8421
      %v8454 = vpack.c.b16 %v8422, %v8422
      %v8455 = vpack.c.b16 %v8423, %v8423
      %v8456 = vpack.c.b16 %v8424, %v8424
      %v8457 = vpack.c.b16 %v8425, %v8425
      %v8458 = vpack.c.b16 %v8426, %v8426
      %v8459 = vpack.c.b16 %v8427, %v8427
      %v8460 = vpack.c.b16 %v8428, %v8428
      %v8461 = vpack.c.b16 %v8429, %v8429
      %v8462 = vpack.c.b16 %v8430, %v8430
      %v8463 = vpack.c.b16 %v8431, %v8431
      %v8464 = vpack.c.b16 %v8432, %v8432
      %v8465 = vpack.c.b16 %v8433, %v8433
      %v8466 = vpack.c.b16 %v8434, %v8434
      %v8467 = vpack.c.b16 %v8435, %v8435
      %v8468 = vpack.c.b16 %v8436, %v8436
      %v8469 = vpack.c.b16 %v8437, %v8437
      %v8470 = vpack.c.b16 %v8438, %v8438
      %v8471 = vpack.c.b16 %v8439, %v8439
      %s8504 = scalar_lea.vmem [#allocation3], 8
      %8505 = vst.msk [vmem:[%s8504] sm:$0xf] %vm732, %v8440
      %8506 = vst.msk [vmem:[%s8504 + $0x4] sm:$0xf] %vm732, %v8441
      %8507 = vst.msk [vmem:[%s8504 + $0x8] sm:$0xf] %vm732, %v8442
      %8508 = vst.msk [vmem:[%s8504 + $0xc] sm:$0xf] %vm732, %v8443
      %8509 = vst.msk [vmem:[%s8504 + $0x10] sm:$0xf] %vm732, %v8444
      %8510 = vst.msk [vmem:[%s8504 + $0x14] sm:$0xf] %vm732, %v8445
      %8511 = vst.msk [vmem:[%s8504 + $0x18] sm:$0xf] %vm732, %v8446
      %8512 = vst.msk [vmem:[%s8504 + $0x1c] sm:$0xf] %vm732, %v8447
      %8513 = vst.msk [vmem:[%s8504 + $0x20] sm:$0xf] %vm732, %v8448
      %8514 = vst.msk [vmem:[%s8504 + $0x24] sm:$0xf] %vm732, %v8449
      %8515 = vst.msk [vmem:[%s8504 + $0x28] sm:$0xf] %vm732, %v8450
      %8516 = vst.msk [vmem:[%s8504 + $0x2c] sm:$0xf] %vm732, %v8451
      %8517 = vst.msk [vmem:[%s8504 + $0x30] sm:$0xf] %vm732, %v8452
      %8518 = vst.msk [vmem:[%s8504 + $0x34] sm:$0xf] %vm732, %v8453
      %8519 = vst.msk [vmem:[%s8504 + $0x38] sm:$0xf] %vm732, %v8454
      %8520 = vst.msk [vmem:[%s8504 + $0x3c] sm:$0xf] %vm732, %v8455
      %8521 = vst.msk [vmem:[%s8504 + $0x40] sm:$0xf] %vm732, %v8456
      %8522 = vst.msk [vmem:[%s8504 + $0x44] sm:$0xf] %vm732, %v8457
      %8523 = vst.msk [vmem:[%s8504 + $0x48] sm:$0xf] %vm732, %v8458
      %8524 = vst.msk [vmem:[%s8504 + $0x4c] sm:$0xf] %vm732, %v8459
      %8525 = vst.msk [vmem:[%s8504 + $0x50] sm:$0xf] %vm732, %v8460
      %8526 = vst.msk [vmem:[%s8504 + $0x54] sm:$0xf] %vm732, %v8461
      %8527 = vst.msk [vmem:[%s8504 + $0x58] sm:$0xf] %vm732, %v8462
      %8528 = vst.msk [vmem:[%s8504 + $0x5c] sm:$0xf] %vm732, %v8463
      %8529 = vst.msk [vmem:[%s8504 + $0x60] sm:$0xf] %vm732, %v8464
      %8530 = vst.msk [vmem:[%s8504 + $0x64] sm:$0xf] %vm732, %v8465
      %8531 = vst.msk [vmem:[%s8504 + $0x68] sm:$0xf] %vm732, %v8466
      %8532 = vst.msk [vmem:[%s8504 + $0x6c] sm:$0xf] %vm732, %v8467
      %8533 = vst.msk [vmem:[%s8504 + $0x70] sm:$0xf] %vm732, %v8468
      %8534 = vst.msk [vmem:[%s8504 + $0x74] sm:$0xf] %vm732, %v8469
      %8535 = vst.msk [vmem:[%s8504 + $0x78] sm:$0xf] %vm732, %v8470
      %8536 = vst.msk [vmem:[%s8504 + $0x7c] sm:$0xf] %vm732, %v8471
      %v8537 = vpack.c.bf16 %v8360, %v8360
      %v8538 = vpack.c.bf16 %v8361, %v8361
      %v8539 = vpack.c.bf16 %v8362, %v8362
      %v8540 = vpack.c.bf16 %v8363, %v8363
      %v8541 = vpack.c.bf16 %v8364, %v8364
      %v8542 = vpack.c.bf16 %v8365, %v8365
      %v8543 = vpack.c.bf16 %v8366, %v8366
      %v8544 = vpack.c.bf16 %v8367, %v8367
      %v8545 = vpack.c.bf16 %v8368, %v8368
      %v8546 = vpack.c.bf16 %v8369, %v8369
      %v8547 = vpack.c.bf16 %v8370, %v8370
      %v8548 = vpack.c.bf16 %v8371, %v8371
      %v8549 = vpack.c.bf16 %v8372, %v8372
      %v8550 = vpack.c.bf16 %v8373, %v8373
      %v8551 = vpack.c.bf16 %v8374, %v8374
      %v8552 = vpack.c.bf16 %v8375, %v8375
      %v8569 = vunpack.c.l.b16 %v8537
      %v8570 = vunpack.c.l.b16 %v8538
      %v8571 = vunpack.c.l.b16 %v8539
      %v8572 = vunpack.c.l.b16 %v8540
      %v8573 = vunpack.c.l.b16 %v8541
      %v8574 = vunpack.c.l.b16 %v8542
      %v8575 = vunpack.c.l.b16 %v8543
      %v8576 = vunpack.c.l.b16 %v8544
      %v8577 = vunpack.c.l.b16 %v8545
      %v8578 = vunpack.c.l.b16 %v8546
      %v8579 = vunpack.c.l.b16 %v8547
      %v8580 = vunpack.c.l.b16 %v8548
      %v8581 = vunpack.c.l.b16 %v8549
      %v8582 = vunpack.c.l.b16 %v8550
      %v8583 = vunpack.c.l.b16 %v8551
      %v8584 = vunpack.c.l.b16 %v8552
      %v8585 = vpack.c.b16 %v8569, %v8569
      %v8586 = vpack.c.b16 %v8570, %v8570
      %v8587 = vpack.c.b16 %v8571, %v8571
      %v8588 = vpack.c.b16 %v8572, %v8572
      %v8589 = vpack.c.b16 %v8573, %v8573
      %v8590 = vpack.c.b16 %v8574, %v8574
      %v8591 = vpack.c.b16 %v8575, %v8575
      %v8592 = vpack.c.b16 %v8576, %v8576
      %v8593 = vpack.c.b16 %v8577, %v8577
      %v8594 = vpack.c.b16 %v8578, %v8578
      %v8595 = vpack.c.b16 %v8579, %v8579
      %v8596 = vpack.c.b16 %v8580, %v8580
      %v8597 = vpack.c.b16 %v8581, %v8581
      %v8598 = vpack.c.b16 %v8582, %v8582
      %v8599 = vpack.c.b16 %v8583, %v8583
      %v8600 = vpack.c.b16 %v8584, %v8584
      %v8602 = vshrl.u32 %v8440, 16
      %v8604 = vrot.slane %v8602, 4
      %v8605 = vshll.u32 %v8440, 16
      %v8607 = vrot.slane %v8605, 5
      %v8608 = vor.u32 %v8604, %v8607
      %v8609 = vrot.slane %v8608, 4
      %v8611 = vshll.u32 %v8441, 16
      %v8613 = vrot.slane %v8611, 5
      %v8614 = vsel %vm831, %v8609, %v8613
      %v8615 = vshrl.u32 %v8441, 16
      %v8617 = vrot.slane %v8615, 4
      %v8618 = vor.u32 %v8617, %v8613
      %v8619 = vrot.slane %v8618, 4
      %v8621 = vshll.u32 %v8585, 16
      %v8623 = vrot.slane %v8621, 5
      %v8624 = vsel %vm831, %v8619, %v8623
      %v8626 = vshrl.u32 %v8442, 16
      %v8628 = vrot.slane %v8626, 4
      %v8629 = vshll.u32 %v8442, 16
      %v8631 = vrot.slane %v8629, 5
      %v8632 = vor.u32 %v8628, %v8631
      %v8633 = vrot.slane %v8632, 4
      %v8635 = vshll.u32 %v8443, 16
      %v8637 = vrot.slane %v8635, 5
      %v8638 = vsel %vm831, %v8633, %v8637
      %v8639 = vshrl.u32 %v8443, 16
      %v8641 = vrot.slane %v8639, 4
      %v8642 = vor.u32 %v8641, %v8637
      %v8643 = vrot.slane %v8642, 4
      %v8645 = vshll.u32 %v8586, 16
      %v8647 = vrot.slane %v8645, 5
      %v8648 = vsel %vm831, %v8643, %v8647
      %v8650 = vshrl.u32 %v8444, 16
      %v8652 = vrot.slane %v8650, 4
      %v8653 = vshll.u32 %v8444, 16
      %v8655 = vrot.slane %v8653, 5
      %v8656 = vor.u32 %v8652, %v8655
      %v8657 = vrot.slane %v8656, 4
      %v8659 = vshll.u32 %v8445, 16
      %v8661 = vrot.slane %v8659, 5
      %v8662 = vsel %vm831, %v8657, %v8661
      %v8663 = vshrl.u32 %v8445, 16
      %v8665 = vrot.slane %v8663, 4
      %v8666 = vor.u32 %v8665, %v8661
      %v8667 = vrot.slane %v8666, 4
      %v8669 = vshll.u32 %v8587, 16
      %v8671 = vrot.slane %v8669, 5
      %v8672 = vsel %vm831, %v8667, %v8671
      %v8674 = vshrl.u32 %v8446, 16
      %v8676 = vrot.slane %v8674, 4
      %v8677 = vshll.u32 %v8446, 16
      %v8679 = vrot.slane %v8677, 5
      %v8680 = vor.u32 %v8676, %v8679
      %v8681 = vrot.slane %v8680, 4
      %v8683 = vshll.u32 %v8447, 16
      %v8685 = vrot.slane %v8683, 5
      %v8686 = vsel %vm831, %v8681, %v8685
      %v8687 = vshrl.u32 %v8447, 16
      %v8689 = vrot.slane %v8687, 4
      %v8690 = vor.u32 %v8689, %v8685
      %v8691 = vrot.slane %v8690, 4
      %v8693 = vshll.u32 %v8588, 16
      %v8695 = vrot.slane %v8693, 5
      %v8696 = vsel %vm831, %v8691, %v8695
      %v8698 = vshrl.u32 %v8448, 16
      %v8700 = vrot.slane %v8698, 4
      %v8701 = vshll.u32 %v8448, 16
      %v8703 = vrot.slane %v8701, 5
      %v8704 = vor.u32 %v8700, %v8703
      %v8705 = vrot.slane %v8704, 4
      %v8707 = vshll.u32 %v8449, 16
      %v8709 = vrot.slane %v8707, 5
      %v8710 = vsel %vm831, %v8705, %v8709
      %v8711 = vshrl.u32 %v8449, 16
      %v8713 = vrot.slane %v8711, 4
      %v8714 = vor.u32 %v8713, %v8709
      %v8715 = vrot.slane %v8714, 4
      %v8717 = vshll.u32 %v8589, 16
      %v8719 = vrot.slane %v8717, 5
      %v8720 = vsel %vm831, %v8715, %v8719
      %v8722 = vshrl.u32 %v8450, 16
      %v8724 = vrot.slane %v8722, 4
      %v8725 = vshll.u32 %v8450, 16
      %v8727 = vrot.slane %v8725, 5
      %v8728 = vor.u32 %v8724, %v8727
      %v8729 = vrot.slane %v8728, 4
      %v8731 = vshll.u32 %v8451, 16
      %v8733 = vrot.slane %v8731, 5
      %v8734 = vsel %vm831, %v8729, %v8733
      %v8735 = vshrl.u32 %v8451, 16
      %v8737 = vrot.slane %v8735, 4
      %v8738 = vor.u32 %v8737, %v8733
      %v8739 = vrot.slane %v8738, 4
      %v8741 = vshll.u32 %v8590, 16
      %v8743 = vrot.slane %v8741, 5
      %v8744 = vsel %vm831, %v8739, %v8743
      %v8746 = vshrl.u32 %v8452, 16
      %v8748 = vrot.slane %v8746, 4
      %v8749 = vshll.u32 %v8452, 16
      %v8751 = vrot.slane %v8749, 5
      %v8752 = vor.u32 %v8748, %v8751
      %v8753 = vrot.slane %v8752, 4
      %v8755 = vshll.u32 %v8453, 16
      %v8757 = vrot.slane %v8755, 5
      %v8758 = vsel %vm831, %v8753, %v8757
      %v8759 = vshrl.u32 %v8453, 16
      %v8761 = vrot.slane %v8759, 4
      %v8762 = vor.u32 %v8761, %v8757
      %v8763 = vrot.slane %v8762, 4
      %v8765 = vshll.u32 %v8591, 16
      %v8767 = vrot.slane %v8765, 5
      %v8768 = vsel %vm831, %v8763, %v8767
      %v8770 = vshrl.u32 %v8454, 16
      %v8772 = vrot.slane %v8770, 4
      %v8773 = vshll.u32 %v8454, 16
      %v8775 = vrot.slane %v8773, 5
      %v8776 = vor.u32 %v8772, %v8775
      %v8777 = vrot.slane %v8776, 4
      %v8779 = vshll.u32 %v8455, 16
      %v8781 = vrot.slane %v8779, 5
      %v8782 = vsel %vm831, %v8777, %v8781
      %v8783 = vshrl.u32 %v8455, 16
      %v8785 = vrot.slane %v8783, 4
      %v8786 = vor.u32 %v8785, %v8781
      %v8787 = vrot.slane %v8786, 4
      %v8789 = vshll.u32 %v8592, 16
      %v8791 = vrot.slane %v8789, 5
      %v8792 = vsel %vm831, %v8787, %v8791
      %v8794 = vshrl.u32 %v8456, 16
      %v8796 = vrot.slane %v8794, 4
      %v8797 = vshll.u32 %v8456, 16
      %v8799 = vrot.slane %v8797, 5
      %v8800 = vor.u32 %v8796, %v8799
      %v8801 = vrot.slane %v8800, 4
      %v8803 = vshll.u32 %v8457, 16
      %v8805 = vrot.slane %v8803, 5
      %v8806 = vsel %vm831, %v8801, %v8805
      %v8807 = vshrl.u32 %v8457, 16
      %v8809 = vrot.slane %v8807, 4
      %v8810 = vor.u32 %v8809, %v8805
      %v8811 = vrot.slane %v8810, 4
      %v8813 = vshll.u32 %v8593, 16
      %v8815 = vrot.slane %v8813, 5
      %v8816 = vsel %vm831, %v8811, %v8815
      %v8818 = vshrl.u32 %v8458, 16
      %v8820 = vrot.slane %v8818, 4
      %v8821 = vshll.u32 %v8458, 16
      %v8823 = vrot.slane %v8821, 5
      %v8824 = vor.u32 %v8820, %v8823
      %v8825 = vrot.slane %v8824, 4
      %v8827 = vshll.u32 %v8459, 16
      %v8829 = vrot.slane %v8827, 5
      %v8830 = vsel %vm831, %v8825, %v8829
      %v8831 = vshrl.u32 %v8459, 16
      %v8833 = vrot.slane %v8831, 4
      %v8834 = vor.u32 %v8833, %v8829
      %v8835 = vrot.slane %v8834, 4
      %v8837 = vshll.u32 %v8594, 16
      %v8839 = vrot.slane %v8837, 5
      %v8840 = vsel %vm831, %v8835, %v8839
      %v8842 = vshrl.u32 %v8460, 16
      %v8844 = vrot.slane %v8842, 4
      %v8845 = vshll.u32 %v8460, 16
      %v8847 = vrot.slane %v8845, 5
      %v8848 = vor.u32 %v8844, %v8847
      %v8849 = vrot.slane %v8848, 4
      %v8851 = vshll.u32 %v8461, 16
      %v8853 = vrot.slane %v8851, 5
      %v8854 = vsel %vm831, %v8849, %v8853
      %v8855 = vshrl.u32 %v8461, 16
      %v8857 = vrot.slane %v8855, 4
      %v8858 = vor.u32 %v8857, %v8853
      %v8859 = vrot.slane %v8858, 4
      %v8861 = vshll.u32 %v8595, 16
      %v8863 = vrot.slane %v8861, 5
      %v8864 = vsel %vm831, %v8859, %v8863
      %v8866 = vshrl.u32 %v8462, 16
      %v8868 = vrot.slane %v8866, 4
      %v8869 = vshll.u32 %v8462, 16
      %v8871 = vrot.slane %v8869, 5
      %v8872 = vor.u32 %v8868, %v8871
      %v8873 = vrot.slane %v8872, 4
      %v8875 = vshll.u32 %v8463, 16
      %v8877 = vrot.slane %v8875, 5
      %v8878 = vsel %vm831, %v8873, %v8877
      %v8879 = vshrl.u32 %v8463, 16
      %v8881 = vrot.slane %v8879, 4
      %v8882 = vor.u32 %v8881, %v8877
      %v8883 = vrot.slane %v8882, 4
      %v8885 = vshll.u32 %v8596, 16
      %v8887 = vrot.slane %v8885, 5
      %v8888 = vsel %vm831, %v8883, %v8887
      %v8890 = vshrl.u32 %v8464, 16
      %v8892 = vrot.slane %v8890, 4
      %v8893 = vshll.u32 %v8464, 16
      %v8895 = vrot.slane %v8893, 5
      %v8896 = vor.u32 %v8892, %v8895
      %v8897 = vrot.slane %v8896, 4
      %v8899 = vshll.u32 %v8465, 16
      %v8901 = vrot.slane %v8899, 5
      %v8902 = vsel %vm831, %v8897, %v8901
      %v8903 = vshrl.u32 %v8465, 16
      %v8905 = vrot.slane %v8903, 4
      %v8906 = vor.u32 %v8905, %v8901
      %v8907 = vrot.slane %v8906, 4
      %v8909 = vshll.u32 %v8597, 16
      %v8911 = vrot.slane %v8909, 5
      %v8912 = vsel %vm831, %v8907, %v8911
      %v8914 = vshrl.u32 %v8466, 16
      %v8916 = vrot.slane %v8914, 4
      %v8917 = vshll.u32 %v8466, 16
      %v8919 = vrot.slane %v8917, 5
      %v8920 = vor.u32 %v8916, %v8919
      %v8921 = vrot.slane %v8920, 4
      %v8923 = vshll.u32 %v8467, 16
      %v8925 = vrot.slane %v8923, 5
      %v8926 = vsel %vm831, %v8921, %v8925
      %v8927 = vshrl.u32 %v8467, 16
      %v8929 = vrot.slane %v8927, 4
      %v8930 = vor.u32 %v8929, %v8925
      %v8931 = vrot.slane %v8930, 4
      %v8933 = vshll.u32 %v8598, 16
      %v8935 = vrot.slane %v8933, 5
      %v8936 = vsel %vm831, %v8931, %v8935
      %v8938 = vshrl.u32 %v8468, 16
      %v8940 = vrot.slane %v8938, 4
      %v8941 = vshll.u32 %v8468, 16
      %v8943 = vrot.slane %v8941, 5
      %v8944 = vor.u32 %v8940, %v8943
      %v8945 = vrot.slane %v8944, 4
      %v8947 = vshll.u32 %v8469, 16
      %v8949 = vrot.slane %v8947, 5
      %v8950 = vsel %vm831, %v8945, %v8949
      %v8951 = vshrl.u32 %v8469, 16
      %v8953 = vrot.slane %v8951, 4
      %v8954 = vor.u32 %v8953, %v8949
      %v8955 = vrot.slane %v8954, 4
      %v8957 = vshll.u32 %v8599, 16
      %v8959 = vrot.slane %v8957, 5
      %v8960 = vsel %vm831, %v8955, %v8959
      %v8962 = vshrl.u32 %v8470, 16
      %v8964 = vrot.slane %v8962, 4
      %v8965 = vshll.u32 %v8470, 16
      %v8967 = vrot.slane %v8965, 5
      %v8968 = vor.u32 %v8964, %v8967
      %v8969 = vrot.slane %v8968, 4
      %v8971 = vshll.u32 %v8471, 16
      %v8973 = vrot.slane %v8971, 5
      %v8974 = vsel %vm831, %v8969, %v8973
      %v8975 = vshrl.u32 %v8471, 16
      %v8977 = vrot.slane %v8975, 4
      %v8978 = vor.u32 %v8977, %v8973
      %v8979 = vrot.slane %v8978, 4
      %v8981 = vshll.u32 %v8600, 16
      %v8983 = vrot.slane %v8981, 5
      %v8984 = vsel %vm831, %v8979, %v8983
      %8985 = vrot.lane.b32.xlu0 %v8614, 4
      %v8986 = vpop.permute.xlu0 %8985
      %8987 = vrot.lane.b32.xlu0 %v8624, 4
      %v8988 = vpop.permute.xlu0 %8987
      %8989 = vrot.lane.b32.xlu0 %v8638, 4
      %v8990 = vpop.permute.xlu0 %8989
      %8991 = vrot.lane.b32.xlu0 %v8648, 4
      %v8992 = vpop.permute.xlu0 %8991
      %8993 = vrot.lane.b32.xlu0 %v8662, 4
      %v8994 = vpop.permute.xlu0 %8993
      %8995 = vrot.lane.b32.xlu0 %v8672, 4
      %v8996 = vpop.permute.xlu0 %8995
      %8997 = vrot.lane.b32.xlu0 %v8686, 4
      %v8998 = vpop.permute.xlu0 %8997
      %8999 = vrot.lane.b32.xlu0 %v8696, 4
      %v9000 = vpop.permute.xlu0 %8999
      %9001 = vrot.lane.b32.xlu0 %v8710, 4
      %v9002 = vpop.permute.xlu0 %9001
      %9003 = vrot.lane.b32.xlu0 %v8720, 4
      %v9004 = vpop.permute.xlu0 %9003
      %9005 = vrot.lane.b32.xlu0 %v8734, 4
      %v9006 = vpop.permute.xlu0 %9005
      %9007 = vrot.lane.b32.xlu0 %v8744, 4
      %v9008 = vpop.permute.xlu0 %9007
      %9009 = vrot.lane.b32.xlu0 %v8758, 4
      %v9010 = vpop.permute.xlu0 %9009
      %9011 = vrot.lane.b32.xlu0 %v8768, 4
      %v9012 = vpop.permute.xlu0 %9011
      %9013 = vrot.lane.b32.xlu0 %v8782, 4
      %v9014 = vpop.permute.xlu0 %9013
      %9015 = vrot.lane.b32.xlu0 %v8792, 4
      %v9016 = vpop.permute.xlu0 %9015
      %9017 = vrot.lane.b32.xlu0 %v8806, 4
      %v9018 = vpop.permute.xlu0 %9017
      %9019 = vrot.lane.b32.xlu0 %v8816, 4
      %v9020 = vpop.permute.xlu0 %9019
      %9021 = vrot.lane.b32.xlu0 %v8830, 4
      %v9022 = vpop.permute.xlu0 %9021
      %9023 = vrot.lane.b32.xlu0 %v8840, 4
      %v9024 = vpop.permute.xlu0 %9023
      %9025 = vrot.lane.b32.xlu0 %v8854, 4
      %v9026 = vpop.permute.xlu0 %9025
      %9027 = vrot.lane.b32.xlu0 %v8864, 4
      %v9028 = vpop.permute.xlu0 %9027
      %9029 = vrot.lane.b32.xlu0 %v8878, 4
      %v9030 = vpop.permute.xlu0 %9029
      %9031 = vrot.lane.b32.xlu0 %v8888, 4
      %v9032 = vpop.permute.xlu0 %9031
      %9033 = vrot.lane.b32.xlu0 %v8902, 4
      %v9034 = vpop.permute.xlu0 %9033
      %9035 = vrot.lane.b32.xlu0 %v8912, 4
      %v9036 = vpop.permute.xlu0 %9035
      %9037 = vrot.lane.b32.xlu0 %v8926, 4
      %v9038 = vpop.permute.xlu0 %9037
      %9039 = vrot.lane.b32.xlu0 %v8936, 4
      %v9040 = vpop.permute.xlu0 %9039
      %9041 = vrot.lane.b32.xlu0 %v8950, 4
      %v9042 = vpop.permute.xlu0 %9041
      %9043 = vrot.lane.b32.xlu0 %v8960, 4
      %v9044 = vpop.permute.xlu0 %9043
      %9045 = vrot.lane.b32.xlu0 %v8974, 4
      %v9046 = vpop.permute.xlu0 %9045
      %9047 = vrot.lane.b32.xlu0 %v8984, 4
      %v9048 = vpop.permute.xlu0 %9047
      %9081 = vst.msk [vmem:[%s8504] sm:$0xf] %vm1312, %v8986
      %9082 = vst.msk [vmem:[%s8504 + $0x4] sm:$0xf] %vm1312, %v8988
      %9083 = vst.msk [vmem:[%s8504 + $0x8] sm:$0xf] %vm1312, %v8990
      %9084 = vst.msk [vmem:[%s8504 + $0xc] sm:$0xf] %vm1312, %v8992
      %9085 = vst.msk [vmem:[%s8504 + $0x10] sm:$0xf] %vm1312, %v8994
      %9086 = vst.msk [vmem:[%s8504 + $0x14] sm:$0xf] %vm1312, %v8996
      %9087 = vst.msk [vmem:[%s8504 + $0x18] sm:$0xf] %vm1312, %v8998
      %9088 = vst.msk [vmem:[%s8504 + $0x1c] sm:$0xf] %vm1312, %v9000
      %9089 = vst.msk [vmem:[%s8504 + $0x20] sm:$0xf] %vm1312, %v9002
      %9090 = vst.msk [vmem:[%s8504 + $0x24] sm:$0xf] %vm1312, %v9004
      %9091 = vst.msk [vmem:[%s8504 + $0x28] sm:$0xf] %vm1312, %v9006
      %9092 = vst.msk [vmem:[%s8504 + $0x2c] sm:$0xf] %vm1312, %v9008
      %9093 = vst.msk [vmem:[%s8504 + $0x30] sm:$0xf] %vm1312, %v9010
      %9094 = vst.msk [vmem:[%s8504 + $0x34] sm:$0xf] %vm1312, %v9012
      %9095 = vst.msk [vmem:[%s8504 + $0x38] sm:$0xf] %vm1312, %v9014
      %9096 = vst.msk [vmem:[%s8504 + $0x3c] sm:$0xf] %vm1312, %v9016
      %9097 = vst.msk [vmem:[%s8504 + $0x40] sm:$0xf] %vm1312, %v9018
      %9098 = vst.msk [vmem:[%s8504 + $0x44] sm:$0xf] %vm1312, %v9020
      %9099 = vst.msk [vmem:[%s8504 + $0x48] sm:$0xf] %vm1312, %v9022
      %9100 = vst.msk [vmem:[%s8504 + $0x4c] sm:$0xf] %vm1312, %v9024
      %9101 = vst.msk [vmem:[%s8504 + $0x50] sm:$0xf] %vm1312, %v9026
      %9102 = vst.msk [vmem:[%s8504 + $0x54] sm:$0xf] %vm1312, %v9028
      %9103 = vst.msk [vmem:[%s8504 + $0x58] sm:$0xf] %vm1312, %v9030
      %9104 = vst.msk [vmem:[%s8504 + $0x5c] sm:$0xf] %vm1312, %v9032
      %9105 = vst.msk [vmem:[%s8504 + $0x60] sm:$0xf] %vm1312, %v9034
      %9106 = vst.msk [vmem:[%s8504 + $0x64] sm:$0xf] %vm1312, %v9036
      %9107 = vst.msk [vmem:[%s8504 + $0x68] sm:$0xf] %vm1312, %v9038
      %9108 = vst.msk [vmem:[%s8504 + $0x6c] sm:$0xf] %vm1312, %v9040
      %9109 = vst.msk [vmem:[%s8504 + $0x70] sm:$0xf] %vm1312, %v9042
      %9110 = vst.msk [vmem:[%s8504 + $0x74] sm:$0xf] %vm1312, %v9044
      %9111 = vst.msk [vmem:[%s8504 + $0x78] sm:$0xf] %vm1312, %v9046
      %9112 = vst.msk [vmem:[%s8504 + $0x7c] sm:$0xf] %vm1312, %v9048
      %v9113 = vrot.slane %v8440, 5
      %v9114 = vrot.slane %v9113, 4
      %v9115 = vrot.slane %v8441, 5
      %v9116 = vsel %vm1347, %v9114, %v9115
      %v9117 = vrot.slane %v9115, 4
      %v9118 = vrot.slane %v8585, 5
      %v9119 = vsel %vm1347, %v9117, %v9118
      %v9120 = vrot.slane %v8442, 5
      %v9121 = vrot.slane %v9120, 4
      %v9122 = vrot.slane %v8443, 5
      %v9123 = vsel %vm1347, %v9121, %v9122
      %v9124 = vrot.slane %v9122, 4
      %v9125 = vrot.slane %v8586, 5
      %v9126 = vsel %vm1347, %v9124, %v9125
      %v9127 = vrot.slane %v8444, 5
      %v9128 = vrot.slane %v9127, 4
      %v9129 = vrot.slane %v8445, 5
      %v9130 = vsel %vm1347, %v9128, %v9129
      %v9131 = vrot.slane %v9129, 4
      %v9132 = vrot.slane %v8587, 5
      %v9133 = vsel %vm1347, %v9131, %v9132
      %v9134 = vrot.slane %v8446, 5
      %v9135 = vrot.slane %v9134, 4
      %v9136 = vrot.slane %v8447, 5
      %v9137 = vsel %vm1347, %v9135, %v9136
      %v9138 = vrot.slane %v9136, 4
      %v9139 = vrot.slane %v8588, 5
      %v9140 = vsel %vm1347, %v9138, %v9139
      %v9141 = vrot.slane %v8448, 5
      %v9142 = vrot.slane %v9141, 4
      %v9143 = vrot.slane %v8449, 5
      %v9144 = vsel %vm1347, %v9142, %v9143
      %v9145 = vrot.slane %v9143, 4
      %v9146 = vrot.slane %v8589, 5
      %v9147 = vsel %vm1347, %v9145, %v9146
      %v9148 = vrot.slane %v8450, 5
      %v9149 = vrot.slane %v9148, 4
      %v9150 = vrot.slane %v8451, 5
      %v9151 = vsel %vm1347, %v9149, %v9150
      %v9152 = vrot.slane %v9150, 4
      %v9153 = vrot.slane %v8590, 5
      %v9154 = vsel %vm1347, %v9152, %v9153
      %v9155 = vrot.slane %v8452, 5
      %v9156 = vrot.slane %v9155, 4
      %v9157 = vrot.slane %v8453, 5
      %v9158 = vsel %vm1347, %v9156, %v9157
      %v9159 = vrot.slane %v9157, 4
      %v9160 = vrot.slane %v8591, 5
      %v9161 = vsel %vm1347, %v9159, %v9160
      %v9162 = vrot.slane %v8454, 5
      %v9163 = vrot.slane %v9162, 4
      %v9164 = vrot.slane %v8455, 5
      %v9165 = vsel %vm1347, %v9163, %v9164
      %v9166 = vrot.slane %v9164, 4
      %v9167 = vrot.slane %v8592, 5
      %v9168 = vsel %vm1347, %v9166, %v9167
      %v9169 = vrot.slane %v8456, 5
      %v9170 = vrot.slane %v9169, 4
      %v9171 = vrot.slane %v8457, 5
      %v9172 = vsel %vm1347, %v9170, %v9171
      %v9173 = vrot.slane %v9171, 4
      %v9174 = vrot.slane %v8593, 5
      %v9175 = vsel %vm1347, %v9173, %v9174
      %v9176 = vrot.slane %v8458, 5
      %v9177 = vrot.slane %v9176, 4
      %v9178 = vrot.slane %v8459, 5
      %v9179 = vsel %vm1347, %v9177, %v9178
      %v9180 = vrot.slane %v9178, 4
      %v9181 = vrot.slane %v8594, 5
      %v9182 = vsel %vm1347, %v9180, %v9181
      %v9183 = vrot.slane %v8460, 5
      %v9184 = vrot.slane %v9183, 4
      %v9185 = vrot.slane %v8461, 5
      %v9186 = vsel %vm1347, %v9184, %v9185
      %v9187 = vrot.slane %v9185, 4
      %v9188 = vrot.slane %v8595, 5
      %v9189 = vsel %vm1347, %v9187, %v9188
      %v9190 = vrot.slane %v8462, 5
      %v9191 = vrot.slane %v9190, 4
      %v9192 = vrot.slane %v8463, 5
      %v9193 = vsel %vm1347, %v9191, %v9192
      %v9194 = vrot.slane %v9192, 4
      %v9195 = vrot.slane %v8596, 5
      %v9196 = vsel %vm1347, %v9194, %v9195
      %v9197 = vrot.slane %v8464, 5
      %v9198 = vrot.slane %v9197, 4
      %v9199 = vrot.slane %v8465, 5
      %v9200 = vsel %vm1347, %v9198, %v9199
      %v9201 = vrot.slane %v9199, 4
      %v9202 = vrot.slane %v8597, 5
      %v9203 = vsel %vm1347, %v9201, %v9202
      %v9204 = vrot.slane %v8466, 5
      %v9205 = vrot.slane %v9204, 4
      %v9206 = vrot.slane %v8467, 5
      %v9207 = vsel %vm1347, %v9205, %v9206
      %v9208 = vrot.slane %v9206, 4
      %v9209 = vrot.slane %v8598, 5
      %v9210 = vsel %vm1347, %v9208, %v9209
      %v9211 = vrot.slane %v8468, 5
      %v9212 = vrot.slane %v9211, 4
      %v9213 = vrot.slane %v8469, 5
      %v9214 = vsel %vm1347, %v9212, %v9213
      %v9215 = vrot.slane %v9213, 4
      %v9216 = vrot.slane %v8599, 5
      %v9217 = vsel %vm1347, %v9215, %v9216
      %v9218 = vrot.slane %v8470, 5
      %v9219 = vrot.slane %v9218, 4
      %v9220 = vrot.slane %v8471, 5
      %v9221 = vsel %vm1347, %v9219, %v9220
      %v9222 = vrot.slane %v9220, 4
      %v9223 = vrot.slane %v8600, 5
      %v9224 = vsel %vm1347, %v9222, %v9223
      %9225 = vrot.lane.b32.xlu0 %v9116, 8
      %v9226 = vpop.permute.xlu0 %9225
      %9227 = vrot.lane.b32.xlu0 %v9119, 8
      %v9228 = vpop.permute.xlu0 %9227
      %9229 = vrot.lane.b32.xlu0 %v9123, 8
      %v9230 = vpop.permute.xlu0 %9229
      %9231 = vrot.lane.b32.xlu0 %v9126, 8
      %v9232 = vpop.permute.xlu0 %9231
      %9233 = vrot.lane.b32.xlu0 %v9130, 8
      %v9234 = vpop.permute.xlu0 %9233
      %9235 = vrot.lane.b32.xlu0 %v9133, 8
      %v9236 = vpop.permute.xlu0 %9235
      %9237 = vrot.lane.b32.xlu0 %v9137, 8
      %v9238 = vpop.permute.xlu0 %9237
      %9239 = vrot.lane.b32.xlu0 %v9140, 8
      %v9240 = vpop.permute.xlu0 %9239
      %9241 = vrot.lane.b32.xlu0 %v9144, 8
      %v9242 = vpop.permute.xlu0 %9241
      %9243 = vrot.lane.b32.xlu0 %v9147, 8
      %v9244 = vpop.permute.xlu0 %9243
      %9245 = vrot.lane.b32.xlu0 %v9151, 8
      %v9246 = vpop.permute.xlu0 %9245
      %9247 = vrot.lane.b32.xlu0 %v9154, 8
      %v9248 = vpop.permute.xlu0 %9247
      %9249 = vrot.lane.b32.xlu0 %v9158, 8
      %v9250 = vpop.permute.xlu0 %9249
      %9251 = vrot.lane.b32.xlu0 %v9161, 8
      %v9252 = vpop.permute.xlu0 %9251
      %9253 = vrot.lane.b32.xlu0 %v9165, 8
      %v9254 = vpop.permute.xlu0 %9253
      %9255 = vrot.lane.b32.xlu0 %v9168, 8
      %v9256 = vpop.permute.xlu0 %9255
      %9257 = vrot.lane.b32.xlu0 %v9172, 8
      %v9258 = vpop.permute.xlu0 %9257
      %9259 = vrot.lane.b32.xlu0 %v9175, 8
      %v9260 = vpop.permute.xlu0 %9259
      %9261 = vrot.lane.b32.xlu0 %v9179, 8
      %v9262 = vpop.permute.xlu0 %9261
      %9263 = vrot.lane.b32.xlu0 %v9182, 8
      %v9264 = vpop.permute.xlu0 %9263
      %9265 = vrot.lane.b32.xlu0 %v9186, 8
      %v9266 = vpop.permute.xlu0 %9265
      %9267 = vrot.lane.b32.xlu0 %v9189, 8
      %v9268 = vpop.permute.xlu0 %9267
      %9269 = vrot.lane.b32.xlu0 %v9193, 8
      %v9270 = vpop.permute.xlu0 %9269
      %9271 = vrot.lane.b32.xlu0 %v9196, 8
      %v9272 = vpop.permute.xlu0 %9271
      %9273 = vrot.lane.b32.xlu0 %v9200, 8
      %v9274 = vpop.permute.xlu0 %9273
      %9275 = vrot.lane.b32.xlu0 %v9203, 8
      %v9276 = vpop.permute.xlu0 %9275
      %9277 = vrot.lane.b32.xlu0 %v9207, 8
      %v9278 = vpop.permute.xlu0 %9277
      %9279 = vrot.lane.b32.xlu0 %v9210, 8
      %v9280 = vpop.permute.xlu0 %9279
      %9281 = vrot.lane.b32.xlu0 %v9214, 8
      %v9282 = vpop.permute.xlu0 %9281
      %9283 = vrot.lane.b32.xlu0 %v9217, 8
      %v9284 = vpop.permute.xlu0 %9283
      %9285 = vrot.lane.b32.xlu0 %v9221, 8
      %v9286 = vpop.permute.xlu0 %9285
      %9287 = vrot.lane.b32.xlu0 %v9224, 8
      %v9288 = vpop.permute.xlu0 %9287
      %9321 = vst.msk [vmem:[%s8504] sm:$0xf] %vm1556, %v9226
      %9322 = vst.msk [vmem:[%s8504 + $0x4] sm:$0xf] %vm1556, %v9228
      %9323 = vst.msk [vmem:[%s8504 + $0x8] sm:$0xf] %vm1556, %v9230
      %9324 = vst.msk [vmem:[%s8504 + $0xc] sm:$0xf] %vm1556, %v9232
      %9325 = vst.msk [vmem:[%s8504 + $0x10] sm:$0xf] %vm1556, %v9234
      %9326 = vst.msk [vmem:[%s8504 + $0x14] sm:$0xf] %vm1556, %v9236
      %9327 = vst.msk [vmem:[%s8504 + $0x18] sm:$0xf] %vm1556, %v9238
      %9328 = vst.msk [vmem:[%s8504 + $0x1c] sm:$0xf] %vm1556, %v9240
      %9329 = vst.msk [vmem:[%s8504 + $0x20] sm:$0xf] %vm1556, %v9242
      %9330 = vst.msk [vmem:[%s8504 + $0x24] sm:$0xf] %vm1556, %v9244
      %9331 = vst.msk [vmem:[%s8504 + $0x28] sm:$0xf] %vm1556, %v9246
      %9332 = vst.msk [vmem:[%s8504 + $0x2c] sm:$0xf] %vm1556, %v9248
      %9333 = vst.msk [vmem:[%s8504 + $0x30] sm:$0xf] %vm1556, %v9250
      %9334 = vst.msk [vmem:[%s8504 + $0x34] sm:$0xf] %vm1556, %v9252
      %9335 = vst.msk [vmem:[%s8504 + $0x38] sm:$0xf] %vm1556, %v9254
      %9336 = vst.msk [vmem:[%s8504 + $0x3c] sm:$0xf] %vm1556, %v9256
      %9337 = vst.msk [vmem:[%s8504 + $0x40] sm:$0xf] %vm1556, %v9258
      %9338 = vst.msk [vmem:[%s8504 + $0x44] sm:$0xf] %vm1556, %v9260
      %9339 = vst.msk [vmem:[%s8504 + $0x48] sm:$0xf] %vm1556, %v9262
      %9340 = vst.msk [vmem:[%s8504 + $0x4c] sm:$0xf] %vm1556, %v9264
      %9341 = vst.msk [vmem:[%s8504 + $0x50] sm:$0xf] %vm1556, %v9266
      %9342 = vst.msk [vmem:[%s8504 + $0x54] sm:$0xf] %vm1556, %v9268
      %9343 = vst.msk [vmem:[%s8504 + $0x58] sm:$0xf] %vm1556, %v9270
      %9344 = vst.msk [vmem:[%s8504 + $0x5c] sm:$0xf] %vm1556, %v9272
      %9345 = vst.msk [vmem:[%s8504 + $0x60] sm:$0xf] %vm1556, %v9274
      %9346 = vst.msk [vmem:[%s8504 + $0x64] sm:$0xf] %vm1556, %v9276
      %9347 = vst.msk [vmem:[%s8504 + $0x68] sm:$0xf] %vm1556, %v9278
      %9348 = vst.msk [vmem:[%s8504 + $0x6c] sm:$0xf] %vm1556, %v9280
      %9349 = vst.msk [vmem:[%s8504 + $0x70] sm:$0xf] %vm1556, %v9282
      %9350 = vst.msk [vmem:[%s8504 + $0x74] sm:$0xf] %vm1556, %v9284
      %9351 = vst.msk [vmem:[%s8504 + $0x78] sm:$0xf] %vm1556, %v9286
      %9352 = vst.msk [vmem:[%s8504 + $0x7c] sm:$0xf] %vm1556, %v9288
      %v9353 = vld [vmem:[#allocation3] sm:$0xf]
      %v9354 = vld [vmem:[#allocation3 + $0x4] sm:$0xf]
      %v9355 = vld [vmem:[#allocation3 + $0x8] sm:$0xf]
      %v9356 = vld [vmem:[#allocation3 + $0xc] sm:$0xf]
      %v9357 = vld [vmem:[#allocation3 + $0x10] sm:$0xf]
      %v9358 = vld [vmem:[#allocation3 + $0x14] sm:$0xf]
      %v9359 = vld [vmem:[#allocation3 + $0x18] sm:$0xf]
      %v9360 = vld [vmem:[#allocation3 + $0x1c] sm:$0xf]
      %v9361 = vld [vmem:[#allocation3 + $0x20] sm:$0xf]
      %v9362 = vld [vmem:[#allocation3 + $0x24] sm:$0xf]
      %v9363 = vld [vmem:[#allocation3 + $0x28] sm:$0xf]
      %v9364 = vld [vmem:[#allocation3 + $0x2c] sm:$0xf]
      %v9365 = vld [vmem:[#allocation3 + $0x30] sm:$0xf]
      %v9366 = vld [vmem:[#allocation3 + $0x34] sm:$0xf]
      %v9367 = vld [vmem:[#allocation3 + $0x38] sm:$0xf]
      %v9368 = vld [vmem:[#allocation3 + $0x3c] sm:$0xf]
      %v9369 = vld [vmem:[#allocation3 + $0x40] sm:$0xf]
      %v9370 = vld [vmem:[#allocation3 + $0x44] sm:$0xf]
      %v9371 = vld [vmem:[#allocation3 + $0x48] sm:$0xf]
      %v9372 = vld [vmem:[#allocation3 + $0x4c] sm:$0xf]
      %v9373 = vld [vmem:[#allocation3 + $0x50] sm:$0xf]
      %v9374 = vld [vmem:[#allocation3 + $0x54] sm:$0xf]
      %v9375 = vld [vmem:[#allocation3 + $0x58] sm:$0xf]
      %v9376 = vld [vmem:[#allocation3 + $0x5c] sm:$0xf]
      %v9377 = vld [vmem:[#allocation3 + $0x60] sm:$0xf]
      %v9378 = vld [vmem:[#allocation3 + $0x64] sm:$0xf]
      %v9379 = vld [vmem:[#allocation3 + $0x68] sm:$0xf]
      %v9380 = vld [vmem:[#allocation3 + $0x6c] sm:$0xf]
      %v9381 = vld [vmem:[#allocation3 + $0x70] sm:$0xf]
      %v9382 = vld [vmem:[#allocation3 + $0x74] sm:$0xf]
      %v9383 = vld [vmem:[#allocation3 + $0x78] sm:$0xf]
      %v9384 = vld [vmem:[#allocation3 + $0x7c] sm:$0xf]
      %v9385 = vld [vmem:[%s4] sm:$0xf]
      %v9386 = vld [vmem:[%s4 + $0x4] sm:$0x3]
      %v9387 = vld [vmem:[%s8504] sm:$0xf]
      %v9388 = vld [vmem:[%s8504 + $0x4] sm:$0xf]
      %v9389 = vld [vmem:[%s8504 + $0x8] sm:$0xf]
      %v9390 = vld [vmem:[%s8504 + $0xc] sm:$0xf]
      %v9391 = vld [vmem:[%s8504 + $0x10] sm:$0xf]
      %v9392 = vld [vmem:[%s8504 + $0x14] sm:$0xf]
      %v9393 = vld [vmem:[%s8504 + $0x18] sm:$0xf]
      %v9394 = vld [vmem:[%s8504 + $0x1c] sm:$0xf]
      %v9395 = vld [vmem:[%s8504 + $0x20] sm:$0xf]
      %v9396 = vld [vmem:[%s8504 + $0x24] sm:$0xf]
      %v9397 = vld [vmem:[%s8504 + $0x28] sm:$0xf]
      %v9398 = vld [vmem:[%s8504 + $0x2c] sm:$0xf]
      %v9399 = vld [vmem:[%s8504 + $0x30] sm:$0xf]
      %v9400 = vld [vmem:[%s8504 + $0x34] sm:$0xf]
      %v9401 = vld [vmem:[%s8504 + $0x38] sm:$0xf]
      %v9402 = vld [vmem:[%s8504 + $0x3c] sm:$0xf]
      %v9403 = vld [vmem:[%s8504 + $0x40] sm:$0xf]
      %v9404 = vld [vmem:[%s8504 + $0x44] sm:$0xf]
      %v9405 = vld [vmem:[%s8504 + $0x48] sm:$0xf]
      %v9406 = vld [vmem:[%s8504 + $0x4c] sm:$0xf]
      %v9407 = vld [vmem:[%s8504 + $0x50] sm:$0xf]
      %v9408 = vld [vmem:[%s8504 + $0x54] sm:$0xf]
      %v9409 = vld [vmem:[%s8504 + $0x58] sm:$0xf]
      %v9410 = vld [vmem:[%s8504 + $0x5c] sm:$0xf]
      %v9411 = vld [vmem:[%s8504 + $0x60] sm:$0xf]
      %v9412 = vld [vmem:[%s8504 + $0x64] sm:$0xf]
      %v9413 = vld [vmem:[%s8504 + $0x68] sm:$0xf]
      %v9414 = vld [vmem:[%s8504 + $0x6c] sm:$0xf]
      %v9415 = vld [vmem:[%s8504 + $0x70] sm:$0xf]
      %v9416 = vld [vmem:[%s8504 + $0x74] sm:$0xf]
      %v9417 = vld [vmem:[%s8504 + $0x78] sm:$0xf]
      %v9418 = vld [vmem:[%s8504 + $0x7c] sm:$0xf]
      %s9419 = scalar_lea.vmem %s4, 8
      %v9420 = vld [vmem:[%s9419] sm:$0xf]
      %v9421 = vld [vmem:[%s9419 + $0x4] sm:$0x3]
      %v9454 = vunpack.c.l.b16 %v9387
      %v9455 = vunpack.c.l.b16 %v9388
      %v9456 = vunpack.c.l.b16 %v9389
      %v9457 = vunpack.c.l.b16 %v9390
      %v9458 = vunpack.c.l.b16 %v9391
      %v9459 = vunpack.c.l.b16 %v9392
      %v9460 = vunpack.c.l.b16 %v9393
      %v9461 = vunpack.c.l.b16 %v9394
      %v9462 = vunpack.c.l.b16 %v9395
      %v9463 = vunpack.c.l.b16 %v9396
      %v9464 = vunpack.c.l.b16 %v9397
      %v9465 = vunpack.c.l.b16 %v9398
      %v9466 = vunpack.c.l.b16 %v9399
      %v9467 = vunpack.c.l.b16 %v9400
      %v9468 = vunpack.c.l.b16 %v9401
      %v9469 = vunpack.c.l.b16 %v9402
      %v9470 = vunpack.c.l.b16 %v9403
      %v9471 = vunpack.c.l.b16 %v9404
      %v9472 = vunpack.c.l.b16 %v9405
      %v9473 = vunpack.c.l.b16 %v9406
      %v9474 = vunpack.c.l.b16 %v9407
      %v9475 = vunpack.c.l.b16 %v9408
      %v9476 = vunpack.c.l.b16 %v9409
      %v9477 = vunpack.c.l.b16 %v9410
      %v9478 = vunpack.c.l.b16 %v9411
      %v9479 = vunpack.c.l.b16 %v9412
      %v9480 = vunpack.c.l.b16 %v9413
      %v9481 = vunpack.c.l.b16 %v9414
      %v9482 = vunpack.c.l.b16 %v9415
      %v9483 = vunpack.c.l.b16 %v9416
      %v9484 = vunpack.c.l.b16 %v9417
      %v9485 = vunpack.c.l.b16 %v9418
      %v9486 = vpack.c.b16 %v9455, %v9454
      %v9487 = vpack.c.b16 %v9457, %v9456
      %v9488 = vpack.c.b16 %v9459, %v9458
      %v9489 = vpack.c.b16 %v9461, %v9460
      %v9490 = vpack.c.b16 %v9463, %v9462
      %v9491 = vpack.c.b16 %v9465, %v9464
      %v9492 = vpack.c.b16 %v9467, %v9466
      %v9493 = vpack.c.b16 %v9469, %v9468
      %v9494 = vpack.c.b16 %v9471, %v9470
      %v9495 = vpack.c.b16 %v9473, %v9472
      %v9496 = vpack.c.b16 %v9475, %v9474
      %v9497 = vpack.c.b16 %v9477, %v9476
      %v9498 = vpack.c.b16 %v9479, %v9478
      %v9499 = vpack.c.b16 %v9481, %v9480
      %v9500 = vpack.c.b16 %v9483, %v9482
      %v9501 = vpack.c.b16 %v9485, %v9484
      %v9504 = vunpack.c.l.b16 %v9420
      %v9505 = vunpack.c.l.b16 %v9421
      %v9506 = vpack.c.b16 %v9505, %v9504
      %vm9507 = vcmask 97280
      %v9509 = vsel %vm9507, %v9486, 0
      %v9512 = vsel %vm9507, %v9487, 0
      %v9515 = vsel %vm9507, %v9488, 0
      %v9518 = vsel %vm9507, %v9489, 0
      %v9521 = vsel %vm9507, %v9490, 0
      %v9524 = vsel %vm9507, %v9491, 0
      %v9527 = vsel %vm9507, %v9492, 0
      %v9530 = vsel %vm9507, %v9493, 0
      %v9533 = vsel %vm9507, %v9494, 0
      %v9536 = vsel %vm9507, %v9495, 0
      %v9539 = vsel %vm9507, %v9496, 0
      %v9542 = vsel %vm9507, %v9497, 0
      %v9545 = vsel %vm9507, %v9498, 0
      %v9548 = vsel %vm9507, %v9499, 0
      %v9551 = vsel %vm9507, %v9500, 0
      %v9554 = vsel %vm9507, %v9501, 0
      %v9557 = vsel %vm4197, %v9506, 0
      %9559 = vmatprep.subr.bf16.mxu0 0
      %9560 = vmatpush1.bf16.msra.mxu0 0
      %9561 = vmatprep.subr.bf16.mxu0 0
      %9562 = vmatpush1.bf16.msra.mxu0 0
      %9563 = vmatprep.subr.bf16.mxu0 0
      %9564 = vmatpush1.bf16.msra.mxu0 0
      %9565 = vmatprep.subr.bf16.mxu0 0
      %9566 = vmatpush1.bf16.msra.mxu0 0
      %9567 = vmatprep.subr.bf16.mxu0 0
      %9568 = vmatpush1.bf16.msra.mxu0 0
      %9569 = vmatprep.subr.bf16.mxu0 0
      %9570 = vmatpush1.bf16.msra.mxu0 0
      %9571 = vmatprep.subr.bf16.mxu0 0
      %9572 = vmatpush1.bf16.msra.mxu0 0
      %9573 = vmatprep.subr.bf16.mxu0 0
      %9574 = vmatpush1.bf16.msra.mxu0 %v9557
      %9575 = vmatprep.subr.bf16.mxu0 0
      %9576 = vmatpush2.bf16.msra.mxu0 0
      %9577 = vmatprep.subr.bf16.mxu0 0
      %9578 = vmatpush2.bf16.msra.mxu0 0
      %9579 = vmatprep.subr.bf16.mxu0 0
      %9580 = vmatpush2.bf16.msra.mxu0 0
      %9581 = vmatprep.subr.bf16.mxu0 0
      %9582 = vmatpush2.bf16.msra.mxu0 0
      %9583 = vmatprep.subr.bf16.mxu0 0
      %9584 = vmatpush2.bf16.msra.mxu0 0
      %9585 = vmatprep.subr.bf16.mxu0 0
      %9586 = vmatpush2.bf16.msra.mxu0 0
      %9587 = vmatprep.subr.bf16.mxu0 0
      %9588 = vmatpush2.bf16.msra.mxu0 0
      %9589 = vmatprep.subr.bf16.mxu0 0
      %9590 = vmatpush2.bf16.msra.mxu0 0
      %9591 = vmatprep.mubr.bf16.mxu0 0
      %9592 = vmatmul.mubr.bf16.gmra.mxu0 %v9509
      %v9593 = vpop.f32.mrf.mxu0
      %v9594 = vadd.f32 0.0, %v9593
      %v9595 = vpop.f32.mrf.mxu0
      %v9596 = vpop.f32.mrf.mxu0
      %v9597 = vadd.f32 0.0, %v9596
      %v9598 = vpop.f32.mrf.mxu0
      %9599 = vmatprep.mubr.bf16.mxu0 0
      %9600 = vmatmul.mubr.bf16.gmra.mxu0 %v9512
      %v9601 = vpop.f32.mrf.mxu0
      %v9602 = vadd.f32 0.0, %v9601
      %v9603 = vpop.f32.mrf.mxu0
      %v9604 = vpop.f32.mrf.mxu0
      %v9605 = vadd.f32 0.0, %v9604
      %v9606 = vpop.f32.mrf.mxu0
      %9607 = vmatprep.mubr.bf16.mxu0 0
      %9608 = vmatmul.mubr.bf16.gmra.mxu0 %v9515
      %v9609 = vpop.f32.mrf.mxu0
      %v9610 = vadd.f32 0.0, %v9609
      %v9611 = vpop.f32.mrf.mxu0
      %v9612 = vpop.f32.mrf.mxu0
      %v9613 = vadd.f32 0.0, %v9612
      %v9614 = vpop.f32.mrf.mxu0
      %9615 = vmatprep.mubr.bf16.mxu0 0
      %9616 = vmatmul.mubr.bf16.gmra.mxu0 %v9518
      %v9617 = vpop.f32.mrf.mxu0
      %v9618 = vadd.f32 0.0, %v9617
      %v9619 = vpop.f32.mrf.mxu0
      %v9620 = vpop.f32.mrf.mxu0
      %v9621 = vadd.f32 0.0, %v9620
      %v9622 = vpop.f32.mrf.mxu0
      %9623 = vmatprep.mubr.bf16.mxu0 0
      %9624 = vmatmul.mubr.bf16.gmra.mxu0 %v9521
      %v9625 = vpop.f32.mrf.mxu0
      %v9626 = vadd.f32 0.0, %v9625
      %v9627 = vpop.f32.mrf.mxu0
      %v9628 = vpop.f32.mrf.mxu0
      %v9629 = vadd.f32 0.0, %v9628
      %v9630 = vpop.f32.mrf.mxu0
      %9631 = vmatprep.mubr.bf16.mxu0 0
      %9632 = vmatmul.mubr.bf16.gmra.mxu0 %v9524
      %v9633 = vpop.f32.mrf.mxu0
      %v9634 = vadd.f32 0.0, %v9633
      %v9635 = vpop.f32.mrf.mxu0
      %v9636 = vpop.f32.mrf.mxu0
      %v9637 = vadd.f32 0.0, %v9636
      %v9638 = vpop.f32.mrf.mxu0
      %9639 = vmatprep.mubr.bf16.mxu0 0
      %9640 = vmatmul.mubr.bf16.gmra.mxu0 %v9527
      %v9641 = vpop.f32.mrf.mxu0
      %v9642 = vadd.f32 0.0, %v9641
      %v9643 = vpop.f32.mrf.mxu0
      %v9644 = vpop.f32.mrf.mxu0
      %v9645 = vadd.f32 0.0, %v9644
      %v9646 = vpop.f32.mrf.mxu0
      %9647 = vmatprep.mubr.bf16.mxu0 0
      %9648 = vmatmul.mubr.bf16.gmra.mxu0 %v9530
      %v9649 = vpop.f32.mrf.mxu0
      %v9650 = vadd.f32 0.0, %v9649
      %v9651 = vpop.f32.mrf.mxu0
      %v9652 = vpop.f32.mrf.mxu0
      %v9653 = vadd.f32 0.0, %v9652
      %v9654 = vpop.f32.mrf.mxu0
      %9655 = vmatprep.mubr.bf16.mxu0 0
      %9656 = vmatmul.mubr.bf16.gmra.mxu0 %v9533
      %v9657 = vpop.f32.mrf.mxu0
      %v9658 = vadd.f32 0.0, %v9657
      %v9659 = vpop.f32.mrf.mxu0
      %v9660 = vpop.f32.mrf.mxu0
      %v9661 = vadd.f32 0.0, %v9660
      %v9662 = vpop.f32.mrf.mxu0
      %9663 = vmatprep.mubr.bf16.mxu0 0
      %9664 = vmatmul.mubr.bf16.gmra.mxu0 %v9536
      %v9665 = vpop.f32.mrf.mxu0
      %v9666 = vadd.f32 0.0, %v9665
      %v9667 = vpop.f32.mrf.mxu0
      %v9668 = vpop.f32.mrf.mxu0
      %v9669 = vadd.f32 0.0, %v9668
      %v9670 = vpop.f32.mrf.mxu0
      %9671 = vmatprep.mubr.bf16.mxu0 0
      %9672 = vmatmul.mubr.bf16.gmra.mxu0 %v9539
      %v9673 = vpop.f32.mrf.mxu0
      %v9674 = vadd.f32 0.0, %v9673
      %v9675 = vpop.f32.mrf.mxu0
      %v9676 = vpop.f32.mrf.mxu0
      %v9677 = vadd.f32 0.0, %v9676
      %v9678 = vpop.f32.mrf.mxu0
      %9679 = vmatprep.mubr.bf16.mxu0 0
      %9680 = vmatmul.mubr.bf16.gmra.mxu0 %v9542
      %v9681 = vpop.f32.mrf.mxu0
      %v9682 = vadd.f32 0.0, %v9681
      %v9683 = vpop.f32.mrf.mxu0
      %v9684 = vpop.f32.mrf.mxu0
      %v9685 = vadd.f32 0.0, %v9684
      %v9686 = vpop.f32.mrf.mxu0
      %9687 = vmatprep.mubr.bf16.mxu0 0
      %9688 = vmatmul.mubr.bf16.gmra.mxu0 %v9545
      %v9689 = vpop.f32.mrf.mxu0
      %v9690 = vadd.f32 0.0, %v9689
      %v9691 = vpop.f32.mrf.mxu0
      %v9692 = vpop.f32.mrf.mxu0
      %v9693 = vadd.f32 0.0, %v9692
      %v9694 = vpop.f32.mrf.mxu0
      %9695 = vmatprep.mubr.bf16.mxu0 0
      %9696 = vmatmul.mubr.bf16.gmra.mxu0 %v9548
      %v9697 = vpop.f32.mrf.mxu0
      %v9698 = vadd.f32 0.0, %v9697
      %v9699 = vpop.f32.mrf.mxu0
      %v9700 = vpop.f32.mrf.mxu0
      %v9701 = vadd.f32 0.0, %v9700
      %v9702 = vpop.f32.mrf.mxu0
      %9703 = vmatprep.mubr.bf16.mxu0 0
      %9704 = vmatmul.mubr.bf16.gmra.mxu0 %v9551
      %v9705 = vpop.f32.mrf.mxu0
      %v9706 = vadd.f32 0.0, %v9705
      %v9707 = vpop.f32.mrf.mxu0
      %v9708 = vpop.f32.mrf.mxu0
      %v9709 = vadd.f32 0.0, %v9708
      %v9710 = vpop.f32.mrf.mxu0
      %9711 = vmatprep.mubr.bf16.mxu0 0
      %9712 = vmatmul.mubr.bf16.gmra.mxu0 %v9554
      %v9713 = vpop.f32.mrf.mxu0
      %v9714 = vadd.f32 0.0, %v9713
      %v9715 = vpop.f32.mrf.mxu0
      %v9716 = vpop.f32.mrf.mxu0
      %v9717 = vadd.f32 0.0, %v9716
      %v9718 = vpop.f32.mrf.mxu0
      %9719 = vdwg.mxu0
      %v9752 = vunpack.c.l.b16 %v9353
      %v9753 = vunpack.c.l.b16 %v9354
      %v9754 = vunpack.c.l.b16 %v9355
      %v9755 = vunpack.c.l.b16 %v9356
      %v9756 = vunpack.c.l.b16 %v9357
      %v9757 = vunpack.c.l.b16 %v9358
      %v9758 = vunpack.c.l.b16 %v9359
      %v9759 = vunpack.c.l.b16 %v9360
      %v9760 = vunpack.c.l.b16 %v9361
      %v9761 = vunpack.c.l.b16 %v9362
      %v9762 = vunpack.c.l.b16 %v9363
      %v9763 = vunpack.c.l.b16 %v9364
      %v9764 = vunpack.c.l.b16 %v9365
      %v9765 = vunpack.c.l.b16 %v9366
      %v9766 = vunpack.c.l.b16 %v9367
      %v9767 = vunpack.c.l.b16 %v9368
      %v9768 = vunpack.c.l.b16 %v9369
      %v9769 = vunpack.c.l.b16 %v9370
      %v9770 = vunpack.c.l.b16 %v9371
      %v9771 = vunpack.c.l.b16 %v9372
      %v9772 = vunpack.c.l.b16 %v9373
      %v9773 = vunpack.c.l.b16 %v9374
      %v9774 = vunpack.c.l.b16 %v9375
      %v9775 = vunpack.c.l.b16 %v9376
      %v9776 = vunpack.c.l.b16 %v9377
      %v9777 = vunpack.c.l.b16 %v9378
      %v9778 = vunpack.c.l.b16 %v9379
      %v9779 = vunpack.c.l.b16 %v9380
      %v9780 = vunpack.c.l.b16 %v9381
      %v9781 = vunpack.c.l.b16 %v9382
      %v9782 = vunpack.c.l.b16 %v9383
      %v9783 = vunpack.c.l.b16 %v9384
      %v9784 = vpack.c.b16 %v9753, %v9752
      %v9785 = vpack.c.b16 %v9755, %v9754
      %v9786 = vpack.c.b16 %v9757, %v9756
      %v9787 = vpack.c.b16 %v9759, %v9758
      %v9788 = vpack.c.b16 %v9761, %v9760
      %v9789 = vpack.c.b16 %v9763, %v9762
      %v9790 = vpack.c.b16 %v9765, %v9764
      %v9791 = vpack.c.b16 %v9767, %v9766
      %v9792 = vpack.c.b16 %v9769, %v9768
      %v9793 = vpack.c.b16 %v9771, %v9770
      %v9794 = vpack.c.b16 %v9773, %v9772
      %v9795 = vpack.c.b16 %v9775, %v9774
      %v9796 = vpack.c.b16 %v9777, %v9776
      %v9797 = vpack.c.b16 %v9779, %v9778
      %v9798 = vpack.c.b16 %v9781, %v9780
      %v9799 = vpack.c.b16 %v9783, %v9782
      %v9802 = vunpack.c.l.b16 %v9385
      %v9803 = vunpack.c.l.b16 %v9386
      %v9804 = vpack.c.b16 %v9803, %v9802
      %v9806 = vsel %vm9507, %v9784, 0
      %v9809 = vsel %vm9507, %v9785, 0
      %v9812 = vsel %vm9507, %v9786, 0
      %v9815 = vsel %vm9507, %v9787, 0
      %v9818 = vsel %vm9507, %v9788, 0
      %v9821 = vsel %vm9507, %v9789, 0
      %v9824 = vsel %vm9507, %v9790, 0
      %v9827 = vsel %vm9507, %v9791, 0
      %v9830 = vsel %vm9507, %v9792, 0
      %v9833 = vsel %vm9507, %v9793, 0
      %v9836 = vsel %vm9507, %v9794, 0
      %v9839 = vsel %vm9507, %v9795, 0
      %v9842 = vsel %vm9507, %v9796, 0
      %v9845 = vsel %vm9507, %v9797, 0
      %v9848 = vsel %vm9507, %v9798, 0
      %v9851 = vsel %vm9507, %v9799, 0
      %v9854 = vsel %vm4197, %v9804, 0
      %9856 = vmatprep.subr.bf16.mxu0 0
      %9857 = vmatpush1.bf16.msra.mxu0 0
      %9858 = vmatprep.subr.bf16.mxu0 0
      %9859 = vmatpush1.bf16.msra.mxu0 0
      %9860 = vmatprep.subr.bf16.mxu0 0
      %9861 = vmatpush1.bf16.msra.mxu0 0
      %9862 = vmatprep.subr.bf16.mxu0 0
      %9863 = vmatpush1.bf16.msra.mxu0 0
      %9864 = vmatprep.subr.bf16.mxu0 0
      %9865 = vmatpush1.bf16.msra.mxu0 0
      %9866 = vmatprep.subr.bf16.mxu0 0
      %9867 = vmatpush1.bf16.msra.mxu0 0
      %9868 = vmatprep.subr.bf16.mxu0 0
      %9869 = vmatpush1.bf16.msra.mxu0 0
      %9870 = vmatprep.subr.bf16.mxu0 0
      %9871 = vmatpush1.bf16.msra.mxu0 %v9854
      %9872 = vmatprep.subr.bf16.mxu0 0
      %9873 = vmatpush2.bf16.msra.mxu0 0
      %9874 = vmatprep.subr.bf16.mxu0 0
      %9875 = vmatpush2.bf16.msra.mxu0 0
      %9876 = vmatprep.subr.bf16.mxu0 0
      %9877 = vmatpush2.bf16.msra.mxu0 0
      %9878 = vmatprep.subr.bf16.mxu0 0
      %9879 = vmatpush2.bf16.msra.mxu0 0
      %9880 = vmatprep.subr.bf16.mxu0 0
      %9881 = vmatpush2.bf16.msra.mxu0 0
      %9882 = vmatprep.subr.bf16.mxu0 0
      %9883 = vmatpush2.bf16.msra.mxu0 0
      %9884 = vmatprep.subr.bf16.mxu0 0
      %9885 = vmatpush2.bf16.msra.mxu0 0
      %9886 = vmatprep.subr.bf16.mxu0 0
      %9887 = vmatpush2.bf16.msra.mxu0 0
      %9888 = vmatprep.mubr.bf16.mxu0 0
      %9889 = vmatmul.mubr.bf16.gmra.mxu0 %v9806
      %v9890 = vpop.f32.mrf.mxu0
      %v9891 = vadd.f32 %v9594, %v9890
      %v9892 = vpop.f32.mrf.mxu0
      %v9893 = vpop.f32.mrf.mxu0
      %v9894 = vadd.f32 %v9597, %v9893
      %v9895 = vpop.f32.mrf.mxu0
      %9896 = vmatprep.mubr.bf16.mxu0 0
      %9897 = vmatmul.mubr.bf16.gmra.mxu0 %v9809
      %v9898 = vpop.f32.mrf.mxu0
      %v9899 = vadd.f32 %v9602, %v9898
      %v9900 = vpop.f32.mrf.mxu0
      %v9901 = vpop.f32.mrf.mxu0
      %v9902 = vadd.f32 %v9605, %v9901
      %v9903 = vpop.f32.mrf.mxu0
      %9904 = vmatprep.mubr.bf16.mxu0 0
      %9905 = vmatmul.mubr.bf16.gmra.mxu0 %v9812
      %v9906 = vpop.f32.mrf.mxu0
      %v9907 = vadd.f32 %v9610, %v9906
      %v9908 = vpop.f32.mrf.mxu0
      %v9909 = vpop.f32.mrf.mxu0
      %v9910 = vadd.f32 %v9613, %v9909
      %v9911 = vpop.f32.mrf.mxu0
      %9912 = vmatprep.mubr.bf16.mxu0 0
      %9913 = vmatmul.mubr.bf16.gmra.mxu0 %v9815
      %v9914 = vpop.f32.mrf.mxu0
      %v9915 = vadd.f32 %v9618, %v9914
      %v9916 = vpop.f32.mrf.mxu0
      %v9917 = vpop.f32.mrf.mxu0
      %v9918 = vadd.f32 %v9621, %v9917
      %v9919 = vpop.f32.mrf.mxu0
      %9920 = vmatprep.mubr.bf16.mxu0 0
      %9921 = vmatmul.mubr.bf16.gmra.mxu0 %v9818
      %v9922 = vpop.f32.mrf.mxu0
      %v9923 = vadd.f32 %v9626, %v9922
      %v9924 = vpop.f32.mrf.mxu0
      %v9925 = vpop.f32.mrf.mxu0
      %v9926 = vadd.f32 %v9629, %v9925
      %v9927 = vpop.f32.mrf.mxu0
      %9928 = vmatprep.mubr.bf16.mxu0 0
      %9929 = vmatmul.mubr.bf16.gmra.mxu0 %v9821
      %v9930 = vpop.f32.mrf.mxu0
      %v9931 = vadd.f32 %v9634, %v9930
      %v9932 = vpop.f32.mrf.mxu0
      %v9933 = vpop.f32.mrf.mxu0
      %v9934 = vadd.f32 %v9637, %v9933
      %v9935 = vpop.f32.mrf.mxu0
      %9936 = vmatprep.mubr.bf16.mxu0 0
      %9937 = vmatmul.mubr.bf16.gmra.mxu0 %v9824
      %v9938 = vpop.f32.mrf.mxu0
      %v9939 = vadd.f32 %v9642, %v9938
      %v9940 = vpop.f32.mrf.mxu0
      %v9941 = vpop.f32.mrf.mxu0
      %v9942 = vadd.f32 %v9645, %v9941
      %v9943 = vpop.f32.mrf.mxu0
      %9944 = vmatprep.mubr.bf16.mxu0 0
      %9945 = vmatmul.mubr.bf16.gmra.mxu0 %v9827
      %v9946 = vpop.f32.mrf.mxu0
      %v9947 = vadd.f32 %v9650, %v9946
      %v9948 = vpop.f32.mrf.mxu0
      %v9949 = vpop.f32.mrf.mxu0
      %v9950 = vadd.f32 %v9653, %v9949
      %v9951 = vpop.f32.mrf.mxu0
      %9952 = vmatprep.mubr.bf16.mxu0 0
      %9953 = vmatmul.mubr.bf16.gmra.mxu0 %v9830
      %v9954 = vpop.f32.mrf.mxu0
      %v9955 = vadd.f32 %v9658, %v9954
      %v9956 = vpop.f32.mrf.mxu0
      %v9957 = vpop.f32.mrf.mxu0
      %v9958 = vadd.f32 %v9661, %v9957
      %v9959 = vpop.f32.mrf.mxu0
      %9960 = vmatprep.mubr.bf16.mxu0 0
      %9961 = vmatmul.mubr.bf16.gmra.mxu0 %v9833
      %v9962 = vpop.f32.mrf.mxu0
      %v9963 = vadd.f32 %v9666, %v9962
      %v9964 = vpop.f32.mrf.mxu0
      %v9965 = vpop.f32.mrf.mxu0
      %v9966 = vadd.f32 %v9669, %v9965
      %v9967 = vpop.f32.mrf.mxu0
      %9968 = vmatprep.mubr.bf16.mxu0 0
      %9969 = vmatmul.mubr.bf16.gmra.mxu0 %v9836
      %v9970 = vpop.f32.mrf.mxu0
      %v9971 = vadd.f32 %v9674, %v9970
      %v9972 = vpop.f32.mrf.mxu0
      %v9973 = vpop.f32.mrf.mxu0
      %v9974 = vadd.f32 %v9677, %v9973
      %v9975 = vpop.f32.mrf.mxu0
      %9976 = vmatprep.mubr.bf16.mxu0 0
      %9977 = vmatmul.mubr.bf16.gmra.mxu0 %v9839
      %v9978 = vpop.f32.mrf.mxu0
      %v9979 = vadd.f32 %v9682, %v9978
      %v9980 = vpop.f32.mrf.mxu0
      %v9981 = vpop.f32.mrf.mxu0
      %v9982 = vadd.f32 %v9685, %v9981
      %v9983 = vpop.f32.mrf.mxu0
      %9984 = vmatprep.mubr.bf16.mxu0 0
      %9985 = vmatmul.mubr.bf16.gmra.mxu0 %v9842
      %v9986 = vpop.f32.mrf.mxu0
      %v9987 = vadd.f32 %v9690, %v9986
      %v9988 = vpop.f32.mrf.mxu0
      %v9989 = vpop.f32.mrf.mxu0
      %v9990 = vadd.f32 %v9693, %v9989
      %v9991 = vpop.f32.mrf.mxu0
      %9992 = vmatprep.mubr.bf16.mxu0 0
      %9993 = vmatmul.mubr.bf16.gmra.mxu0 %v9845
      %v9994 = vpop.f32.mrf.mxu0
      %v9995 = vadd.f32 %v9698, %v9994
      %v9996 = vpop.f32.mrf.mxu0
      %v9997 = vpop.f32.mrf.mxu0
      %v9998 = vadd.f32 %v9701, %v9997
      %v9999 = vpop.f32.mrf.mxu0
      %10000 = vmatprep.mubr.bf16.mxu0 0
      %10001 = vmatmul.mubr.bf16.gmra.mxu0 %v9848
      %v10002 = vpop.f32.mrf.mxu0
      %v10003 = vadd.f32 %v9706, %v10002
      %v10004 = vpop.f32.mrf.mxu0
      %v10005 = vpop.f32.mrf.mxu0
      %v10006 = vadd.f32 %v9709, %v10005
      %v10007 = vpop.f32.mrf.mxu0
      %10008 = vmatprep.mubr.bf16.mxu0 0
      %10009 = vmatmul.mubr.bf16.gmra.mxu0 %v9851
      %v10010 = vpop.f32.mrf.mxu0
      %v10011 = vadd.f32 %v9714, %v10010
      %v10012 = vpop.f32.mrf.mxu0
      %v10013 = vpop.f32.mrf.mxu0
      %v10014 = vadd.f32 %v9717, %v10013
      %v10015 = vpop.f32.mrf.mxu0
      %10016 = vdwg.mxu0
      %s10017 = scalar_lea.vmem [#allocation3], 16
      %v10018 = vld [vmem:[%s10017] sm:$0xf]
      %v10019 = vld [vmem:[%s10017 + $0x4] sm:$0xf]
      %v10020 = vld [vmem:[%s10017 + $0x8] sm:$0xf]
      %v10021 = vld [vmem:[%s10017 + $0xc] sm:$0xf]
      %v10022 = vld [vmem:[%s10017 + $0x10] sm:$0xf]
      %v10023 = vld [vmem:[%s10017 + $0x14] sm:$0xf]
      %v10024 = vld [vmem:[%s10017 + $0x18] sm:$0xf]
      %v10025 = vld [vmem:[%s10017 + $0x1c] sm:$0xf]
      %v10026 = vld [vmem:[%s10017 + $0x20] sm:$0xf]
      %v10027 = vld [vmem:[%s10017 + $0x24] sm:$0xf]
      %v10028 = vld [vmem:[%s10017 + $0x28] sm:$0xf]
      %v10029 = vld [vmem:[%s10017 + $0x2c] sm:$0xf]
      %v10030 = vld [vmem:[%s10017 + $0x30] sm:$0xf]
      %v10031 = vld [vmem:[%s10017 + $0x34] sm:$0xf]
      %v10032 = vld [vmem:[%s10017 + $0x38] sm:$0xf]
      %v10033 = vld [vmem:[%s10017 + $0x3c] sm:$0xf]
      %v10034 = vld [vmem:[%s10017 + $0x40] sm:$0xf]
      %v10035 = vld [vmem:[%s10017 + $0x44] sm:$0xf]
      %v10036 = vld [vmem:[%s10017 + $0x48] sm:$0xf]
      %v10037 = vld [vmem:[%s10017 + $0x4c] sm:$0xf]
      %v10038 = vld [vmem:[%s10017 + $0x50] sm:$0xf]
      %v10039 = vld [vmem:[%s10017 + $0x54] sm:$0xf]
      %v10040 = vld [vmem:[%s10017 + $0x58] sm:$0xf]
      %v10041 = vld [vmem:[%s10017 + $0x5c] sm:$0xf]
      %v10042 = vld [vmem:[%s10017 + $0x60] sm:$0xf]
      %v10043 = vld [vmem:[%s10017 + $0x64] sm:$0xf]
      %v10044 = vld [vmem:[%s10017 + $0x68] sm:$0xf]
      %v10045 = vld [vmem:[%s10017 + $0x6c] sm:$0xf]
      %v10046 = vld [vmem:[%s10017 + $0x70] sm:$0xf]
      %v10047 = vld [vmem:[%s10017 + $0x74] sm:$0xf]
      %v10048 = vld [vmem:[%s10017 + $0x78] sm:$0xf]
      %v10049 = vld [vmem:[%s10017 + $0x7c] sm:$0xf]
      %s10050 = scalar_lea.vmem %s4, 16
      %v10051 = vld [vmem:[%s10050] sm:$0xf]
      %v10052 = vld [vmem:[%s10050 + $0x4] sm:$0x3]
      %v10085 = vunpack.c.l.b16 %v10018
      %v10086 = vunpack.c.l.b16 %v10019
      %v10087 = vunpack.c.l.b16 %v10020
      %v10088 = vunpack.c.l.b16 %v10021
      %v10089 = vunpack.c.l.b16 %v10022
      %v10090 = vunpack.c.l.b16 %v10023
      %v10091 = vunpack.c.l.b16 %v10024
      %v10092 = vunpack.c.l.b16 %v10025
      %v10093 = vunpack.c.l.b16 %v10026
      %v10094 = vunpack.c.l.b16 %v10027
      %v10095 = vunpack.c.l.b16 %v10028
      %v10096 = vunpack.c.l.b16 %v10029
      %v10097 = vunpack.c.l.b16 %v10030
      %v10098 = vunpack.c.l.b16 %v10031
      %v10099 = vunpack.c.l.b16 %v10032
      %v10100 = vunpack.c.l.b16 %v10033
      %v10101 = vunpack.c.l.b16 %v10034
      %v10102 = vunpack.c.l.b16 %v10035
      %v10103 = vunpack.c.l.b16 %v10036
      %v10104 = vunpack.c.l.b16 %v10037
      %v10105 = vunpack.c.l.b16 %v10038
      %v10106 = vunpack.c.l.b16 %v10039
      %v10107 = vunpack.c.l.b16 %v10040
      %v10108 = vunpack.c.l.b16 %v10041
      %v10109 = vunpack.c.l.b16 %v10042
      %v10110 = vunpack.c.l.b16 %v10043
      %v10111 = vunpack.c.l.b16 %v10044
      %v10112 = vunpack.c.l.b16 %v10045
      %v10113 = vunpack.c.l.b16 %v10046
      %v10114 = vunpack.c.l.b16 %v10047
      %v10115 = vunpack.c.l.b16 %v10048
      %v10116 = vunpack.c.l.b16 %v10049
      %v10117 = vpack.c.b16 %v10086, %v10085
      %v10118 = vpack.c.b16 %v10088, %v10087
      %v10119 = vpack.c.b16 %v10090, %v10089
      %v10120 = vpack.c.b16 %v10092, %v10091
      %v10121 = vpack.c.b16 %v10094, %v10093
      %v10122 = vpack.c.b16 %v10096, %v10095
      %v10123 = vpack.c.b16 %v10098, %v10097
      %v10124 = vpack.c.b16 %v10100, %v10099
      %v10125 = vpack.c.b16 %v10102, %v10101
      %v10126 = vpack.c.b16 %v10104, %v10103
      %v10127 = vpack.c.b16 %v10106, %v10105
      %v10128 = vpack.c.b16 %v10108, %v10107
      %v10129 = vpack.c.b16 %v10110, %v10109
      %v10130 = vpack.c.b16 %v10112, %v10111
      %v10131 = vpack.c.b16 %v10114, %v10113
      %v10132 = vpack.c.b16 %v10116, %v10115
      %v10135 = vunpack.c.l.b16 %v10051
      %v10136 = vunpack.c.l.b16 %v10052
      %v10137 = vpack.c.b16 %v10136, %v10135
      %v10139 = vsel %vm9507, %v10117, 0
      %v10142 = vsel %vm9507, %v10118, 0
      %v10145 = vsel %vm9507, %v10119, 0
      %v10148 = vsel %vm9507, %v10120, 0
      %v10151 = vsel %vm9507, %v10121, 0
      %v10154 = vsel %vm9507, %v10122, 0
      %v10157 = vsel %vm9507, %v10123, 0
      %v10160 = vsel %vm9507, %v10124, 0
      %v10163 = vsel %vm9507, %v10125, 0
      %v10166 = vsel %vm9507, %v10126, 0
      %v10169 = vsel %vm9507, %v10127, 0
      %v10172 = vsel %vm9507, %v10128, 0
      %v10175 = vsel %vm9507, %v10129, 0
      %v10178 = vsel %vm9507, %v10130, 0
      %v10181 = vsel %vm9507, %v10131, 0
      %v10184 = vsel %vm9507, %v10132, 0
      %v10187 = vsel %vm4197, %v10137, 0
      %10189 = vmatprep.subr.bf16.mxu0 0
      %10190 = vmatpush1.bf16.msra.mxu0 0
      %10191 = vmatprep.subr.bf16.mxu0 0
      %10192 = vmatpush1.bf16.msra.mxu0 0
      %10193 = vmatprep.subr.bf16.mxu0 0
      %10194 = vmatpush1.bf16.msra.mxu0 0
      %10195 = vmatprep.subr.bf16.mxu0 0
      %10196 = vmatpush1.bf16.msra.mxu0 0
      %10197 = vmatprep.subr.bf16.mxu0 0
      %10198 = vmatpush1.bf16.msra.mxu0 0
      %10199 = vmatprep.subr.bf16.mxu0 0
      %10200 = vmatpush1.bf16.msra.mxu0 0
      %10201 = vmatprep.subr.bf16.mxu0 0
      %10202 = vmatpush1.bf16.msra.mxu0 0
      %10203 = vmatprep.subr.bf16.mxu0 0
      %10204 = vmatpush1.bf16.msra.mxu0 %v10187
      %10205 = vmatprep.subr.bf16.mxu0 0
      %10206 = vmatpush2.bf16.msra.mxu0 0
      %10207 = vmatprep.subr.bf16.mxu0 0
      %10208 = vmatpush2.bf16.msra.mxu0 0
      %10209 = vmatprep.subr.bf16.mxu0 0
      %10210 = vmatpush2.bf16.msra.mxu0 0
      %10211 = vmatprep.subr.bf16.mxu0 0
      %10212 = vmatpush2.bf16.msra.mxu0 0
      %10213 = vmatprep.subr.bf16.mxu0 0
      %10214 = vmatpush2.bf16.msra.mxu0 0
      %10215 = vmatprep.subr.bf16.mxu0 0
      %10216 = vmatpush2.bf16.msra.mxu0 0
      %10217 = vmatprep.subr.bf16.mxu0 0
      %10218 = vmatpush2.bf16.msra.mxu0 0
      %10219 = vmatprep.subr.bf16.mxu0 0
      %10220 = vmatpush2.bf16.msra.mxu0 0
      %10221 = vmatprep.mubr.bf16.mxu0 0
      %10222 = vmatmul.mubr.bf16.gmra.mxu0 %v10139
      %v10223 = vpop.f32.mrf.mxu0
      %v10224 = vadd.f32 0.0, %v10223
      %v10225 = vpop.f32.mrf.mxu0
      %v10226 = vpop.f32.mrf.mxu0
      %v10227 = vadd.f32 0.0, %v10226
      %v10228 = vpop.f32.mrf.mxu0
      %10229 = vmatprep.mubr.bf16.mxu0 0
      %10230 = vmatmul.mubr.bf16.gmra.mxu0 %v10142
      %v10231 = vpop.f32.mrf.mxu0
      %v10232 = vadd.f32 0.0, %v10231
      %v10233 = vpop.f32.mrf.mxu0
      %v10234 = vpop.f32.mrf.mxu0
      %v10235 = vadd.f32 0.0, %v10234
      %v10236 = vpop.f32.mrf.mxu0
      %10237 = vmatprep.mubr.bf16.mxu0 0
      %10238 = vmatmul.mubr.bf16.gmra.mxu0 %v10145
      %v10239 = vpop.f32.mrf.mxu0
      %v10240 = vadd.f32 0.0, %v10239
      %v10241 = vpop.f32.mrf.mxu0
      %v10242 = vpop.f32.mrf.mxu0
      %v10243 = vadd.f32 0.0, %v10242
      %v10244 = vpop.f32.mrf.mxu0
      %10245 = vmatprep.mubr.bf16.mxu0 0
      %10246 = vmatmul.mubr.bf16.gmra.mxu0 %v10148
      %v10247 = vpop.f32.mrf.mxu0
      %v10248 = vadd.f32 0.0, %v10247
      %v10249 = vpop.f32.mrf.mxu0
      %v10250 = vpop.f32.mrf.mxu0
      %v10251 = vadd.f32 0.0, %v10250
      %v10252 = vpop.f32.mrf.mxu0
      %10253 = vmatprep.mubr.bf16.mxu0 0
      %10254 = vmatmul.mubr.bf16.gmra.mxu0 %v10151
      %v10255 = vpop.f32.mrf.mxu0
      %v10256 = vadd.f32 0.0, %v10255
      %v10257 = vpop.f32.mrf.mxu0
      %v10258 = vpop.f32.mrf.mxu0
      %v10259 = vadd.f32 0.0, %v10258
      %v10260 = vpop.f32.mrf.mxu0
      %10261 = vmatprep.mubr.bf16.mxu0 0
      %10262 = vmatmul.mubr.bf16.gmra.mxu0 %v10154
      %v10263 = vpop.f32.mrf.mxu0
      %v10264 = vadd.f32 0.0, %v10263
      %v10265 = vpop.f32.mrf.mxu0
      %v10266 = vpop.f32.mrf.mxu0
      %v10267 = vadd.f32 0.0, %v10266
      %v10268 = vpop.f32.mrf.mxu0
      %10269 = vmatprep.mubr.bf16.mxu0 0
      %10270 = vmatmul.mubr.bf16.gmra.mxu0 %v10157
      %v10271 = vpop.f32.mrf.mxu0
      %v10272 = vadd.f32 0.0, %v10271
      %v10273 = vpop.f32.mrf.mxu0
      %v10274 = vpop.f32.mrf.mxu0
      %v10275 = vadd.f32 0.0, %v10274
      %v10276 = vpop.f32.mrf.mxu0
      %10277 = vmatprep.mubr.bf16.mxu0 0
      %10278 = vmatmul.mubr.bf16.gmra.mxu0 %v10160
      %v10279 = vpop.f32.mrf.mxu0
      %v10280 = vadd.f32 0.0, %v10279
      %v10281 = vpop.f32.mrf.mxu0
      %v10282 = vpop.f32.mrf.mxu0
      %v10283 = vadd.f32 0.0, %v10282
      %v10284 = vpop.f32.mrf.mxu0
      %10285 = vmatprep.mubr.bf16.mxu0 0
      %10286 = vmatmul.mubr.bf16.gmra.mxu0 %v10163
      %v10287 = vpop.f32.mrf.mxu0
      %v10288 = vadd.f32 0.0, %v10287
      %v10289 = vpop.f32.mrf.mxu0
      %v10290 = vpop.f32.mrf.mxu0
      %v10291 = vadd.f32 0.0, %v10290
      %v10292 = vpop.f32.mrf.mxu0
      %10293 = vmatprep.mubr.bf16.mxu0 0
      %10294 = vmatmul.mubr.bf16.gmra.mxu0 %v10166
      %v10295 = vpop.f32.mrf.mxu0
      %v10296 = vadd.f32 0.0, %v10295
      %v10297 = vpop.f32.mrf.mxu0
      %v10298 = vpop.f32.mrf.mxu0
      %v10299 = vadd.f32 0.0, %v10298
      %v10300 = vpop.f32.mrf.mxu0
      %10301 = vmatprep.mubr.bf16.mxu0 0
      %10302 = vmatmul.mubr.bf16.gmra.mxu0 %v10169
      %v10303 = vpop.f32.mrf.mxu0
      %v10304 = vadd.f32 0.0, %v10303
      %v10305 = vpop.f32.mrf.mxu0
      %v10306 = vpop.f32.mrf.mxu0
      %v10307 = vadd.f32 0.0, %v10306
      %v10308 = vpop.f32.mrf.mxu0
      %10309 = vmatprep.mubr.bf16.mxu0 0
      %10310 = vmatmul.mubr.bf16.gmra.mxu0 %v10172
      %v10311 = vpop.f32.mrf.mxu0
      %v10312 = vadd.f32 0.0, %v10311
      %v10313 = vpop.f32.mrf.mxu0
      %v10314 = vpop.f32.mrf.mxu0
      %v10315 = vadd.f32 0.0, %v10314
      %v10316 = vpop.f32.mrf.mxu0
      %10317 = vmatprep.mubr.bf16.mxu0 0
      %10318 = vmatmul.mubr.bf16.gmra.mxu0 %v10175
      %v10319 = vpop.f32.mrf.mxu0
      %v10320 = vadd.f32 0.0, %v10319
      %v10321 = vpop.f32.mrf.mxu0
      %v10322 = vpop.f32.mrf.mxu0
      %v10323 = vadd.f32 0.0, %v10322
      %v10324 = vpop.f32.mrf.mxu0
      %10325 = vmatprep.mubr.bf16.mxu0 0
      %10326 = vmatmul.mubr.bf16.gmra.mxu0 %v10178
      %v10327 = vpop.f32.mrf.mxu0
      %v10328 = vadd.f32 0.0, %v10327
      %v10329 = vpop.f32.mrf.mxu0
      %v10330 = vpop.f32.mrf.mxu0
      %v10331 = vadd.f32 0.0, %v10330
      %v10332 = vpop.f32.mrf.mxu0
      %10333 = vmatprep.mubr.bf16.mxu0 0
      %10334 = vmatmul.mubr.bf16.gmra.mxu0 %v10181
      %v10335 = vpop.f32.mrf.mxu0
      %v10336 = vadd.f32 0.0, %v10335
      %v10337 = vpop.f32.mrf.mxu0
      %v10338 = vpop.f32.mrf.mxu0
      %v10339 = vadd.f32 0.0, %v10338
      %v10340 = vpop.f32.mrf.mxu0
      %10341 = vmatprep.mubr.bf16.mxu0 0
      %10342 = vmatmul.mubr.bf16.gmra.mxu0 %v10184
      %v10343 = vpop.f32.mrf.mxu0
      %v10344 = vadd.f32 0.0, %v10343
      %v10345 = vpop.f32.mrf.mxu0
      %v10346 = vpop.f32.mrf.mxu0
      %v10347 = vadd.f32 0.0, %v10346
      %v10348 = vpop.f32.mrf.mxu0
      %10349 = vdwg.mxu0
      %v10350 = vadd.f32 %v9891, %v10224
      %v10351 = vadd.f32 %v9894, %v10227
      %v10352 = vadd.f32 %v9899, %v10232
      %v10353 = vadd.f32 %v9902, %v10235
      %v10354 = vadd.f32 %v9907, %v10240
      %v10355 = vadd.f32 %v9910, %v10243
      %v10356 = vadd.f32 %v9915, %v10248
      %v10357 = vadd.f32 %v9918, %v10251
      %v10358 = vadd.f32 %v9923, %v10256
      %v10359 = vadd.f32 %v9926, %v10259
      %v10360 = vadd.f32 %v9931, %v10264
      %v10361 = vadd.f32 %v9934, %v10267
      %v10362 = vadd.f32 %v9939, %v10272
      %v10363 = vadd.f32 %v9942, %v10275
      %v10364 = vadd.f32 %v9947, %v10280
      %v10365 = vadd.f32 %v9950, %v10283
      %v10366 = vadd.f32 %v9955, %v10288
      %v10367 = vadd.f32 %v9958, %v10291
      %v10368 = vadd.f32 %v9963, %v10296
      %v10369 = vadd.f32 %v9966, %v10299
      %v10370 = vadd.f32 %v9971, %v10304
      %v10371 = vadd.f32 %v9974, %v10307
      %v10372 = vadd.f32 %v9979, %v10312
      %v10373 = vadd.f32 %v9982, %v10315
      %v10374 = vadd.f32 %v9987, %v10320
      %v10375 = vadd.f32 %v9990, %v10323
      %v10376 = vadd.f32 %v9995, %v10328
      %v10377 = vadd.f32 %v9998, %v10331
      %v10378 = vadd.f32 %v10003, %v10336
      %v10379 = vadd.f32 %v10006, %v10339
      %v10380 = vadd.f32 %v10011, %v10344
      %v10381 = vadd.f32 %v10014, %v10347
      %v10382 = vld [vmem:[%s5] sm:$0x1]
      %v10384 = vlaneseq
      %v10385 = vshrl.u32 %v10384, 7
      %v10386 = vsub.s32 0, %v10385
      %v10387 = vrot.slane %v10382, %v10386
      %v10389 = vmul.f32 %v10350, %v10387
      %v10390 = vmul.f32 %v10351, %v10387
      %v10391 = vmul.f32 %v10352, %v10387
      %v10392 = vmul.f32 %v10353, %v10387
      %v10393 = vmul.f32 %v10354, %v10387
      %v10394 = vmul.f32 %v10355, %v10387
      %v10395 = vmul.f32 %v10356, %v10387
      %v10396 = vmul.f32 %v10357, %v10387
      %v10397 = vmul.f32 %v10358, %v10387
      %v10398 = vmul.f32 %v10359, %v10387
      %v10399 = vmul.f32 %v10360, %v10387
      %v10400 = vmul.f32 %v10361, %v10387
      %v10401 = vmul.f32 %v10362, %v10387
      %v10402 = vmul.f32 %v10363, %v10387
      %v10403 = vmul.f32 %v10364, %v10387
      %v10404 = vmul.f32 %v10365, %v10387
      %v10405 = vmul.f32 %v10366, %v10387
      %v10406 = vmul.f32 %v10367, %v10387
      %v10407 = vmul.f32 %v10368, %v10387
      %v10408 = vmul.f32 %v10369, %v10387
      %v10409 = vmul.f32 %v10370, %v10387
      %v10410 = vmul.f32 %v10371, %v10387
      %v10411 = vmul.f32 %v10372, %v10387
      %v10412 = vmul.f32 %v10373, %v10387
      %v10413 = vmul.f32 %v10374, %v10387
      %v10414 = vmul.f32 %v10375, %v10387
      %v10415 = vmul.f32 %v10376, %v10387
      %v10416 = vmul.f32 %v10377, %v10387
      %v10417 = vmul.f32 %v10378, %v10387
      %v10418 = vmul.f32 %v10379, %v10387
      %v10419 = vmul.f32 %v10380, %v10387
      %v10420 = vmul.f32 %v10381, %v10387
      %v10421 = vld [vmem:[%s6] sm:$0x1]
      %v10423 = vlaneseq
      %v10424 = vshrl.u32 %v10423, 7
      %v10425 = vsub.s32 0, %v10424
      %v10426 = vrot.slane %v10421, %v10425
      %v10428 = vadd.f32 %v10389, %v10426
      %v10429 = vadd.f32 %v10390, %v10426
      %v10430 = vadd.f32 %v10391, %v10426
      %v10431 = vadd.f32 %v10392, %v10426
      %v10432 = vadd.f32 %v10393, %v10426
      %v10433 = vadd.f32 %v10394, %v10426
      %v10434 = vadd.f32 %v10395, %v10426
      %v10435 = vadd.f32 %v10396, %v10426
      %v10436 = vadd.f32 %v10397, %v10426
      %v10437 = vadd.f32 %v10398, %v10426
      %v10438 = vadd.f32 %v10399, %v10426
      %v10439 = vadd.f32 %v10400, %v10426
      %v10440 = vadd.f32 %v10401, %v10426
      %v10441 = vadd.f32 %v10402, %v10426
      %v10442 = vadd.f32 %v10403, %v10426
      %v10443 = vadd.f32 %v10404, %v10426
      %v10444 = vadd.f32 %v10405, %v10426
      %v10445 = vadd.f32 %v10406, %v10426
      %v10446 = vadd.f32 %v10407, %v10426
      %v10447 = vadd.f32 %v10408, %v10426
      %v10448 = vadd.f32 %v10409, %v10426
      %v10449 = vadd.f32 %v10410, %v10426
      %v10450 = vadd.f32 %v10411, %v10426
      %v10451 = vadd.f32 %v10412, %v10426
      %v10452 = vadd.f32 %v10413, %v10426
      %v10453 = vadd.f32 %v10414, %v10426
      %v10454 = vadd.f32 %v10415, %v10426
      %v10455 = vadd.f32 %v10416, %v10426
      %v10456 = vadd.f32 %v10417, %v10426
      %v10457 = vadd.f32 %v10418, %v10426
      %v10458 = vadd.f32 %v10419, %v10426
      %v10459 = vadd.f32 %v10420, %v10426
      %v10460 = vmax.f32 %v10428, 0.0
      %v10461 = vmax.f32 %v10429, 0.0
      %v10462 = vmax.f32 %v10430, 0.0
      %v10463 = vmax.f32 %v10431, 0.0
      %v10464 = vmax.f32 %v10432, 0.0
      %v10465 = vmax.f32 %v10433, 0.0
      %v10466 = vmax.f32 %v10434, 0.0
      %v10467 = vmax.f32 %v10435, 0.0
      %v10468 = vmax.f32 %v10436, 0.0
      %v10469 = vmax.f32 %v10437, 0.0
      %v10470 = vmax.f32 %v10438, 0.0
      %v10471 = vmax.f32 %v10439, 0.0
      %v10472 = vmax.f32 %v10440, 0.0
      %v10473 = vmax.f32 %v10441, 0.0
      %v10474 = vmax.f32 %v10442, 0.0
      %v10475 = vmax.f32 %v10443, 0.0
      %v10476 = vmax.f32 %v10444, 0.0
      %v10477 = vmax.f32 %v10445, 0.0
      %v10478 = vmax.f32 %v10446, 0.0
      %v10479 = vmax.f32 %v10447, 0.0
      %v10480 = vmax.f32 %v10448, 0.0
      %v10481 = vmax.f32 %v10449, 0.0
      %v10482 = vmax.f32 %v10450, 0.0
      %v10483 = vmax.f32 %v10451, 0.0
      %v10484 = vmax.f32 %v10452, 0.0
      %v10485 = vmax.f32 %v10453, 0.0
      %v10486 = vmax.f32 %v10454, 0.0
      %v10487 = vmax.f32 %v10455, 0.0
      %v10488 = vmax.f32 %v10456, 0.0
      %v10489 = vmax.f32 %v10457, 0.0
      %v10490 = vmax.f32 %v10458, 0.0
      %v10491 = vmax.f32 %v10459, 0.0
      %10492 = vst.msk [vmem:[#allocation3] sm:$0xf] %vm8209, 0
      %10493 = vst.msk [vmem:[#allocation3 + $0x4] sm:$0xf] %vm8209, 0
      %10494 = vst.msk [vmem:[%s8212] sm:$0xf] %vm8209, 0
      %10495 = vst.msk [vmem:[%s8212 + $0x4] sm:$0xf] %vm8209, 0
      %v10528 = vrot.slane %v10460, 7
      %v10529 = vrot.slane %v10461, 7
      %v10530 = vsel %vm8247, %v10528, %v10529
      %v10531 = vrot.slane %v10462, 7
      %v10532 = vrot.slane %v10463, 7
      %v10533 = vsel %vm8247, %v10531, %v10532
      %v10534 = vrot.slane %v10464, 7
      %v10535 = vrot.slane %v10465, 7
      %v10536 = vsel %vm8247, %v10534, %v10535
      %v10537 = vrot.slane %v10466, 7
      %v10538 = vrot.slane %v10467, 7
      %v10539 = vsel %vm8247, %v10537, %v10538
      %v10540 = vrot.slane %v10468, 7
      %v10541 = vrot.slane %v10469, 7
      %v10542 = vsel %vm8247, %v10540, %v10541
      %v10543 = vrot.slane %v10470, 7
      %v10544 = vrot.slane %v10471, 7
      %v10545 = vsel %vm8247, %v10543, %v10544
      %v10546 = vrot.slane %v10472, 7
      %v10547 = vrot.slane %v10473, 7
      %v10548 = vsel %vm8247, %v10546, %v10547
      %v10549 = vrot.slane %v10474, 7
      %v10550 = vrot.slane %v10475, 7
      %v10551 = vsel %vm8247, %v10549, %v10550
      %v10552 = vrot.slane %v10476, 7
      %v10553 = vrot.slane %v10477, 7
      %v10554 = vsel %vm8247, %v10552, %v10553
      %v10555 = vrot.slane %v10478, 7
      %v10556 = vrot.slane %v10479, 7
      %v10557 = vsel %vm8247, %v10555, %v10556
      %v10558 = vrot.slane %v10480, 7
      %v10559 = vrot.slane %v10481, 7
      %v10560 = vsel %vm8247, %v10558, %v10559
      %v10561 = vrot.slane %v10482, 7
      %v10562 = vrot.slane %v10483, 7
      %v10563 = vsel %vm8247, %v10561, %v10562
      %v10564 = vrot.slane %v10484, 7
      %v10565 = vrot.slane %v10485, 7
      %v10566 = vsel %vm8247, %v10564, %v10565
      %v10567 = vrot.slane %v10486, 7
      %v10568 = vrot.slane %v10487, 7
      %v10569 = vsel %vm8247, %v10567, %v10568
      %v10570 = vrot.slane %v10488, 7
      %v10571 = vrot.slane %v10489, 7
      %v10572 = vsel %vm8247, %v10570, %v10571
      %v10573 = vrot.slane %v10490, 7
      %v10574 = vrot.slane %v10491, 7
      %v10575 = vsel %vm8247, %v10573, %v10574
      %v10624 = vsel %vm8247, 0.0, %v10528
      %v10625 = vsel %vm8247, 0.0, %v10531
      %v10626 = vsel %vm8247, 0.0, %v10534
      %v10627 = vsel %vm8247, 0.0, %v10537
      %v10628 = vsel %vm8247, 0.0, %v10540
      %v10629 = vsel %vm8247, 0.0, %v10543
      %v10630 = vsel %vm8247, 0.0, %v10546
      %v10631 = vsel %vm8247, 0.0, %v10549
      %v10632 = vsel %vm8247, 0.0, %v10552
      %v10633 = vsel %vm8247, 0.0, %v10555
      %v10634 = vsel %vm8247, 0.0, %v10558
      %v10635 = vsel %vm8247, 0.0, %v10561
      %v10636 = vsel %vm8247, 0.0, %v10564
      %v10637 = vsel %vm8247, 0.0, %v10567
      %v10638 = vsel %vm8247, 0.0, %v10570
      %v10639 = vsel %vm8247, 0.0, %v10573
      %v10640 = vsel %vm8247, %v10529, 0.0
      %v10641 = vsel %vm8247, %v10532, 0.0
      %v10642 = vsel %vm8247, %v10535, 0.0
      %v10643 = vsel %vm8247, %v10538, 0.0
      %v10644 = vsel %vm8247, %v10541, 0.0
      %v10645 = vsel %vm8247, %v10544, 0.0
      %v10646 = vsel %vm8247, %v10547, 0.0
      %v10647 = vsel %vm8247, %v10550, 0.0
      %v10648 = vsel %vm8247, %v10553, 0.0
      %v10649 = vsel %vm8247, %v10556, 0.0
      %v10650 = vsel %vm8247, %v10559, 0.0
      %v10651 = vsel %vm8247, %v10562, 0.0
      %v10652 = vsel %vm8247, %v10565, 0.0
      %v10653 = vsel %vm8247, %v10568, 0.0
      %v10654 = vsel %vm8247, %v10571, 0.0
      %v10655 = vsel %vm8247, %v10574, 0.0
      %v10656 = vpack.c.bf16 %v10530, %v10624
      %v10657 = vpack.c.bf16 %v10533, %v10625
      %v10658 = vpack.c.bf16 %v10536, %v10626
      %v10659 = vpack.c.bf16 %v10539, %v10627
      %v10660 = vpack.c.bf16 %v10542, %v10628
      %v10661 = vpack.c.bf16 %v10545, %v10629
      %v10662 = vpack.c.bf16 %v10548, %v10630
      %v10663 = vpack.c.bf16 %v10551, %v10631
      %v10664 = vpack.c.bf16 %v10554, %v10632
      %v10665 = vpack.c.bf16 %v10557, %v10633
      %v10666 = vpack.c.bf16 %v10560, %v10634
      %v10667 = vpack.c.bf16 %v10563, %v10635
      %v10668 = vpack.c.bf16 %v10566, %v10636
      %v10669 = vpack.c.bf16 %v10569, %v10637
      %v10670 = vpack.c.bf16 %v10572, %v10638
      %v10671 = vpack.c.bf16 %v10575, %v10639
      %v10688 = vunpack.c.l.b16 %v10656
      %v10689 = vunpack.c.h.b16 %v10656
      %v10690 = vunpack.c.l.b16 %v10657
      %v10691 = vunpack.c.h.b16 %v10657
      %v10692 = vunpack.c.l.b16 %v10658
      %v10693 = vunpack.c.h.b16 %v10658
      %v10694 = vunpack.c.l.b16 %v10659
      %v10695 = vunpack.c.h.b16 %v10659
      %v10696 = vunpack.c.l.b16 %v10660
      %v10697 = vunpack.c.h.b16 %v10660
      %v10698 = vunpack.c.l.b16 %v10661
      %v10699 = vunpack.c.h.b16 %v10661
      %v10700 = vunpack.c.l.b16 %v10662
      %v10701 = vunpack.c.h.b16 %v10662
      %v10702 = vunpack.c.l.b16 %v10663
      %v10703 = vunpack.c.h.b16 %v10663
      %v10704 = vunpack.c.l.b16 %v10664
      %v10705 = vunpack.c.h.b16 %v10664
      %v10706 = vunpack.c.l.b16 %v10665
      %v10707 = vunpack.c.h.b16 %v10665
      %v10708 = vunpack.c.l.b16 %v10666
      %v10709 = vunpack.c.h.b16 %v10666
      %v10710 = vunpack.c.l.b16 %v10667
      %v10711 = vunpack.c.h.b16 %v10667
      %v10712 = vunpack.c.l.b16 %v10668
      %v10713 = vunpack.c.h.b16 %v10668
      %v10714 = vunpack.c.l.b16 %v10669
      %v10715 = vunpack.c.h.b16 %v10669
      %v10716 = vunpack.c.l.b16 %v10670
      %v10717 = vunpack.c.h.b16 %v10670
      %v10718 = vunpack.c.l.b16 %v10671
      %v10719 = vunpack.c.h.b16 %v10671
      %v10720 = vpack.c.b16 %v10688, %v10688
      %v10721 = vpack.c.b16 %v10689, %v10689
      %v10722 = vpack.c.b16 %v10690, %v10690
      %v10723 = vpack.c.b16 %v10691, %v10691
      %v10724 = vpack.c.b16 %v10692, %v10692
      %v10725 = vpack.c.b16 %v10693, %v10693
      %v10726 = vpack.c.b16 %v10694, %v10694
      %v10727 = vpack.c.b16 %v10695, %v10695
      %v10728 = vpack.c.b16 %v10696, %v10696
      %v10729 = vpack.c.b16 %v10697, %v10697
      %v10730 = vpack.c.b16 %v10698, %v10698
      %v10731 = vpack.c.b16 %v10699, %v10699
      %v10732 = vpack.c.b16 %v10700, %v10700
      %v10733 = vpack.c.b16 %v10701, %v10701
      %v10734 = vpack.c.b16 %v10702, %v10702
      %v10735 = vpack.c.b16 %v10703, %v10703
      %v10736 = vpack.c.b16 %v10704, %v10704
      %v10737 = vpack.c.b16 %v10705, %v10705
      %v10738 = vpack.c.b16 %v10706, %v10706
      %v10739 = vpack.c.b16 %v10707, %v10707
      %v10740 = vpack.c.b16 %v10708, %v10708
      %v10741 = vpack.c.b16 %v10709, %v10709
      %v10742 = vpack.c.b16 %v10710, %v10710
      %v10743 = vpack.c.b16 %v10711, %v10711
      %v10744 = vpack.c.b16 %v10712, %v10712
      %v10745 = vpack.c.b16 %v10713, %v10713
      %v10746 = vpack.c.b16 %v10714, %v10714
      %v10747 = vpack.c.b16 %v10715, %v10715
      %v10748 = vpack.c.b16 %v10716, %v10716
      %v10749 = vpack.c.b16 %v10717, %v10717
      %v10750 = vpack.c.b16 %v10718, %v10718
      %v10751 = vpack.c.b16 %v10719, %v10719
      %10784 = vst.msk [vmem:[%s8504] sm:$0xf] %vm732, %v10720
      %10785 = vst.msk [vmem:[%s8504 + $0x4] sm:$0xf] %vm732, %v10721
      %10786 = vst.msk [vmem:[%s8504 + $0x8] sm:$0xf] %vm732, %v10722
      %10787 = vst.msk [vmem:[%s8504 + $0xc] sm:$0xf] %vm732, %v10723
      %10788 = vst.msk [vmem:[%s8504 + $0x10] sm:$0xf] %vm732, %v10724
      %10789 = vst.msk [vmem:[%s8504 + $0x14] sm:$0xf] %vm732, %v10725
      %10790 = vst.msk [vmem:[%s8504 + $0x18] sm:$0xf] %vm732, %v10726
      %10791 = vst.msk [vmem:[%s8504 + $0x1c] sm:$0xf] %vm732, %v10727
      %10792 = vst.msk [vmem:[%s8504 + $0x20] sm:$0xf] %vm732, %v10728
      %10793 = vst.msk [vmem:[%s8504 + $0x24] sm:$0xf] %vm732, %v10729
      %10794 = vst.msk [vmem:[%s8504 + $0x28] sm:$0xf] %vm732, %v10730
      %10795 = vst.msk [vmem:[%s8504 + $0x2c] sm:$0xf] %vm732, %v10731
      %10796 = vst.msk [vmem:[%s8504 + $0x30] sm:$0xf] %vm732, %v10732
      %10797 = vst.msk [vmem:[%s8504 + $0x34] sm:$0xf] %vm732, %v10733
      %10798 = vst.msk [vmem:[%s8504 + $0x38] sm:$0xf] %vm732, %v10734
      %10799 = vst.msk [vmem:[%s8504 + $0x3c] sm:$0xf] %vm732, %v10735
      %10800 = vst.msk [vmem:[%s8504 + $0x40] sm:$0xf] %vm732, %v10736
      %10801 = vst.msk [vmem:[%s8504 + $0x44] sm:$0xf] %vm732, %v10737
      %10802 = vst.msk [vmem:[%s8504 + $0x48] sm:$0xf] %vm732, %v10738
      %10803 = vst.msk [vmem:[%s8504 + $0x4c] sm:$0xf] %vm732, %v10739
      %10804 = vst.msk [vmem:[%s8504 + $0x50] sm:$0xf] %vm732, %v10740
      %10805 = vst.msk [vmem:[%s8504 + $0x54] sm:$0xf] %vm732, %v10741
      %10806 = vst.msk [vmem:[%s8504 + $0x58] sm:$0xf] %vm732, %v10742
      %10807 = vst.msk [vmem:[%s8504 + $0x5c] sm:$0xf] %vm732, %v10743
      %10808 = vst.msk [vmem:[%s8504 + $0x60] sm:$0xf] %vm732, %v10744
      %10809 = vst.msk [vmem:[%s8504 + $0x64] sm:$0xf] %vm732, %v10745
      %10810 = vst.msk [vmem:[%s8504 + $0x68] sm:$0xf] %vm732, %v10746
      %10811 = vst.msk [vmem:[%s8504 + $0x6c] sm:$0xf] %vm732, %v10747
      %10812 = vst.msk [vmem:[%s8504 + $0x70] sm:$0xf] %vm732, %v10748
      %10813 = vst.msk [vmem:[%s8504 + $0x74] sm:$0xf] %vm732, %v10749
      %10814 = vst.msk [vmem:[%s8504 + $0x78] sm:$0xf] %vm732, %v10750
      %10815 = vst.msk [vmem:[%s8504 + $0x7c] sm:$0xf] %vm732, %v10751
      %v10816 = vpack.c.bf16 %v10640, %v10640
      %v10817 = vpack.c.bf16 %v10641, %v10641
      %v10818 = vpack.c.bf16 %v10642, %v10642
      %v10819 = vpack.c.bf16 %v10643, %v10643
      %v10820 = vpack.c.bf16 %v10644, %v10644
      %v10821 = vpack.c.bf16 %v10645, %v10645
      %v10822 = vpack.c.bf16 %v10646, %v10646
      %v10823 = vpack.c.bf16 %v10647, %v10647
      %v10824 = vpack.c.bf16 %v10648, %v10648
      %v10825 = vpack.c.bf16 %v10649, %v10649
      %v10826 = vpack.c.bf16 %v10650, %v10650
      %v10827 = vpack.c.bf16 %v10651, %v10651
      %v10828 = vpack.c.bf16 %v10652, %v10652
      %v10829 = vpack.c.bf16 %v10653, %v10653
      %v10830 = vpack.c.bf16 %v10654, %v10654
      %v10831 = vpack.c.bf16 %v10655, %v10655
      %v10848 = vunpack.c.l.b16 %v10816
      %v10849 = vunpack.c.l.b16 %v10817
      %v10850 = vunpack.c.l.b16 %v10818
      %v10851 = vunpack.c.l.b16 %v10819
      %v10852 = vunpack.c.l.b16 %v10820
      %v10853 = vunpack.c.l.b16 %v10821
      %v10854 = vunpack.c.l.b16 %v10822
      %v10855 = vunpack.c.l.b16 %v10823
      %v10856 = vunpack.c.l.b16 %v10824
      %v10857 = vunpack.c.l.b16 %v10825
      %v10858 = vunpack.c.l.b16 %v10826
      %v10859 = vunpack.c.l.b16 %v10827
      %v10860 = vunpack.c.l.b16 %v10828
      %v10861 = vunpack.c.l.b16 %v10829
      %v10862 = vunpack.c.l.b16 %v10830
      %v10863 = vunpack.c.l.b16 %v10831
      %v10864 = vpack.c.b16 %v10848, %v10848
      %v10865 = vpack.c.b16 %v10849, %v10849
      %v10866 = vpack.c.b16 %v10850, %v10850
      %v10867 = vpack.c.b16 %v10851, %v10851
      %v10868 = vpack.c.b16 %v10852, %v10852
      %v10869 = vpack.c.b16 %v10853, %v10853
      %v10870 = vpack.c.b16 %v10854, %v10854
      %v10871 = vpack.c.b16 %v10855, %v10855
      %v10872 = vpack.c.b16 %v10856, %v10856
      %v10873 = vpack.c.b16 %v10857, %v10857
      %v10874 = vpack.c.b16 %v10858, %v10858
      %v10875 = vpack.c.b16 %v10859, %v10859
      %v10876 = vpack.c.b16 %v10860, %v10860
      %v10877 = vpack.c.b16 %v10861, %v10861
      %v10878 = vpack.c.b16 %v10862, %v10862
      %v10879 = vpack.c.b16 %v10863, %v10863
      %v10881 = vshrl.u32 %v10720, 16
      %v10883 = vrot.slane %v10881, 4
      %v10884 = vshll.u32 %v10720, 16
      %v10886 = vrot.slane %v10884, 5
      %v10887 = vor.u32 %v10883, %v10886
      %v10888 = vrot.slane %v10887, 4
      %v10890 = vshll.u32 %v10721, 16
      %v10892 = vrot.slane %v10890, 5
      %v10893 = vsel %vm831, %v10888, %v10892
      %v10894 = vshrl.u32 %v10721, 16
      %v10896 = vrot.slane %v10894, 4
      %v10897 = vor.u32 %v10896, %v10892
      %v10898 = vrot.slane %v10897, 4
      %v10900 = vshll.u32 %v10864, 16
      %v10902 = vrot.slane %v10900, 5
      %v10903 = vsel %vm831, %v10898, %v10902
      %v10905 = vshrl.u32 %v10722, 16
      %v10907 = vrot.slane %v10905, 4
      %v10908 = vshll.u32 %v10722, 16
      %v10910 = vrot.slane %v10908, 5
      %v10911 = vor.u32 %v10907, %v10910
      %v10912 = vrot.slane %v10911, 4
      %v10914 = vshll.u32 %v10723, 16
      %v10916 = vrot.slane %v10914, 5
      %v10917 = vsel %vm831, %v10912, %v10916
      %v10918 = vshrl.u32 %v10723, 16
      %v10920 = vrot.slane %v10918, 4
      %v10921 = vor.u32 %v10920, %v10916
      %v10922 = vrot.slane %v10921, 4
      %v10924 = vshll.u32 %v10865, 16
      %v10926 = vrot.slane %v10924, 5
      %v10927 = vsel %vm831, %v10922, %v10926
      %v10929 = vshrl.u32 %v10724, 16
      %v10931 = vrot.slane %v10929, 4
      %v10932 = vshll.u32 %v10724, 16
      %v10934 = vrot.slane %v10932, 5
      %v10935 = vor.u32 %v10931, %v10934
      %v10936 = vrot.slane %v10935, 4
      %v10938 = vshll.u32 %v10725, 16
      %v10940 = vrot.slane %v10938, 5
      %v10941 = vsel %vm831, %v10936, %v10940
      %v10942 = vshrl.u32 %v10725, 16
      %v10944 = vrot.slane %v10942, 4
      %v10945 = vor.u32 %v10944, %v10940
      %v10946 = vrot.slane %v10945, 4
      %v10948 = vshll.u32 %v10866, 16
      %v10950 = vrot.slane %v10948, 5
      %v10951 = vsel %vm831, %v10946, %v10950
      %v10953 = vshrl.u32 %v10726, 16
      %v10955 = vrot.slane %v10953, 4
      %v10956 = vshll.u32 %v10726, 16
      %v10958 = vrot.slane %v10956, 5
      %v10959 = vor.u32 %v10955, %v10958
      %v10960 = vrot.slane %v10959, 4
      %v10962 = vshll.u32 %v10727, 16
      %v10964 = vrot.slane %v10962, 5
      %v10965 = vsel %vm831, %v10960, %v10964
      %v10966 = vshrl.u32 %v10727, 16
      %v10968 = vrot.slane %v10966, 4
      %v10969 = vor.u32 %v10968, %v10964
      %v10970 = vrot.slane %v10969, 4
      %v10972 = vshll.u32 %v10867, 16
      %v10974 = vrot.slane %v10972, 5
      %v10975 = vsel %vm831, %v10970, %v10974
      %v10977 = vshrl.u32 %v10728, 16
      %v10979 = vrot.slane %v10977, 4
      %v10980 = vshll.u32 %v10728, 16
      %v10982 = vrot.slane %v10980, 5
      %v10983 = vor.u32 %v10979, %v10982
      %v10984 = vrot.slane %v10983, 4
      %v10986 = vshll.u32 %v10729, 16
      %v10988 = vrot.slane %v10986, 5
      %v10989 = vsel %vm831, %v10984, %v10988
      %v10990 = vshrl.u32 %v10729, 16
      %v10992 = vrot.slane %v10990, 4
      %v10993 = vor.u32 %v10992, %v10988
      %v10994 = vrot.slane %v10993, 4
      %v10996 = vshll.u32 %v10868, 16
      %v10998 = vrot.slane %v10996, 5
      %v10999 = vsel %vm831, %v10994, %v10998
      %v11001 = vshrl.u32 %v10730, 16
      %v11003 = vrot.slane %v11001, 4
      %v11004 = vshll.u32 %v10730, 16
      %v11006 = vrot.slane %v11004, 5
      %v11007 = vor.u32 %v11003, %v11006
      %v11008 = vrot.slane %v11007, 4
      %v11010 = vshll.u32 %v10731, 16
      %v11012 = vrot.slane %v11010, 5
      %v11013 = vsel %vm831, %v11008, %v11012
      %v11014 = vshrl.u32 %v10731, 16
      %v11016 = vrot.slane %v11014, 4
      %v11017 = vor.u32 %v11016, %v11012
      %v11018 = vrot.slane %v11017, 4
      %v11020 = vshll.u32 %v10869, 16
      %v11022 = vrot.slane %v11020, 5
      %v11023 = vsel %vm831, %v11018, %v11022
      %v11025 = vshrl.u32 %v10732, 16
      %v11027 = vrot.slane %v11025, 4
      %v11028 = vshll.u32 %v10732, 16
      %v11030 = vrot.slane %v11028, 5
      %v11031 = vor.u32 %v11027, %v11030
      %v11032 = vrot.slane %v11031, 4
      %v11034 = vshll.u32 %v10733, 16
      %v11036 = vrot.slane %v11034, 5
      %v11037 = vsel %vm831, %v11032, %v11036
      %v11038 = vshrl.u32 %v10733, 16
      %v11040 = vrot.slane %v11038, 4
      %v11041 = vor.u32 %v11040, %v11036
      %v11042 = vrot.slane %v11041, 4
      %v11044 = vshll.u32 %v10870, 16
      %v11046 = vrot.slane %v11044, 5
      %v11047 = vsel %vm831, %v11042, %v11046
      %v11049 = vshrl.u32 %v10734, 16
      %v11051 = vrot.slane %v11049, 4
      %v11052 = vshll.u32 %v10734, 16
      %v11054 = vrot.slane %v11052, 5
      %v11055 = vor.u32 %v11051, %v11054
      %v11056 = vrot.slane %v11055, 4
      %v11058 = vshll.u32 %v10735, 16
      %v11060 = vrot.slane %v11058, 5
      %v11061 = vsel %vm831, %v11056, %v11060
      %v11062 = vshrl.u32 %v10735, 16
      %v11064 = vrot.slane %v11062, 4
      %v11065 = vor.u32 %v11064, %v11060
      %v11066 = vrot.slane %v11065, 4
      %v11068 = vshll.u32 %v10871, 16
      %v11070 = vrot.slane %v11068, 5
      %v11071 = vsel %vm831, %v11066, %v11070
      %v11073 = vshrl.u32 %v10736, 16
      %v11075 = vrot.slane %v11073, 4
      %v11076 = vshll.u32 %v10736, 16
      %v11078 = vrot.slane %v11076, 5
      %v11079 = vor.u32 %v11075, %v11078
      %v11080 = vrot.slane %v11079, 4
      %v11082 = vshll.u32 %v10737, 16
      %v11084 = vrot.slane %v11082, 5
      %v11085 = vsel %vm831, %v11080, %v11084
      %v11086 = vshrl.u32 %v10737, 16
      %v11088 = vrot.slane %v11086, 4
      %v11089 = vor.u32 %v11088, %v11084
      %v11090 = vrot.slane %v11089, 4
      %v11092 = vshll.u32 %v10872, 16
      %v11094 = vrot.slane %v11092, 5
      %v11095 = vsel %vm831, %v11090, %v11094
      %v11097 = vshrl.u32 %v10738, 16
      %v11099 = vrot.slane %v11097, 4
      %v11100 = vshll.u32 %v10738, 16
      %v11102 = vrot.slane %v11100, 5
      %v11103 = vor.u32 %v11099, %v11102
      %v11104 = vrot.slane %v11103, 4
      %v11106 = vshll.u32 %v10739, 16
      %v11108 = vrot.slane %v11106, 5
      %v11109 = vsel %vm831, %v11104, %v11108
      %v11110 = vshrl.u32 %v10739, 16
      %v11112 = vrot.slane %v11110, 4
      %v11113 = vor.u32 %v11112, %v11108
      %v11114 = vrot.slane %v11113, 4
      %v11116 = vshll.u32 %v10873, 16
      %v11118 = vrot.slane %v11116, 5
      %v11119 = vsel %vm831, %v11114, %v11118
      %v11121 = vshrl.u32 %v10740, 16
      %v11123 = vrot.slane %v11121, 4
      %v11124 = vshll.u32 %v10740, 16
      %v11126 = vrot.slane %v11124, 5
      %v11127 = vor.u32 %v11123, %v11126
      %v11128 = vrot.slane %v11127, 4
      %v11130 = vshll.u32 %v10741, 16
      %v11132 = vrot.slane %v11130, 5
      %v11133 = vsel %vm831, %v11128, %v11132
      %v11134 = vshrl.u32 %v10741, 16
      %v11136 = vrot.slane %v11134, 4
      %v11137 = vor.u32 %v11136, %v11132
      %v11138 = vrot.slane %v11137, 4
      %v11140 = vshll.u32 %v10874, 16
      %v11142 = vrot.slane %v11140, 5
      %v11143 = vsel %vm831, %v11138, %v11142
      %v11145 = vshrl.u32 %v10742, 16
      %v11147 = vrot.slane %v11145, 4
      %v11148 = vshll.u32 %v10742, 16
      %v11150 = vrot.slane %v11148, 5
      %v11151 = vor.u32 %v11147, %v11150
      %v11152 = vrot.slane %v11151, 4
      %v11154 = vshll.u32 %v10743, 16
      %v11156 = vrot.slane %v11154, 5
      %v11157 = vsel %vm831, %v11152, %v11156
      %v11158 = vshrl.u32 %v10743, 16
      %v11160 = vrot.slane %v11158, 4
      %v11161 = vor.u32 %v11160, %v11156
      %v11162 = vrot.slane %v11161, 4
      %v11164 = vshll.u32 %v10875, 16
      %v11166 = vrot.slane %v11164, 5
      %v11167 = vsel %vm831, %v11162, %v11166
      %v11169 = vshrl.u32 %v10744, 16
      %v11171 = vrot.slane %v11169, 4
      %v11172 = vshll.u32 %v10744, 16
      %v11174 = vrot.slane %v11172, 5
      %v11175 = vor.u32 %v11171, %v11174
      %v11176 = vrot.slane %v11175, 4
      %v11178 = vshll.u32 %v10745, 16
      %v11180 = vrot.slane %v11178, 5
      %v11181 = vsel %vm831, %v11176, %v11180
      %v11182 = vshrl.u32 %v10745, 16
      %v11184 = vrot.slane %v11182, 4
      %v11185 = vor.u32 %v11184, %v11180
      %v11186 = vrot.slane %v11185, 4
      %v11188 = vshll.u32 %v10876, 16
      %v11190 = vrot.slane %v11188, 5
      %v11191 = vsel %vm831, %v11186, %v11190
      %v11193 = vshrl.u32 %v10746, 16
      %v11195 = vrot.slane %v11193, 4
      %v11196 = vshll.u32 %v10746, 16
      %v11198 = vrot.slane %v11196, 5
      %v11199 = vor.u32 %v11195, %v11198
      %v11200 = vrot.slane %v11199, 4
      %v11202 = vshll.u32 %v10747, 16
      %v11204 = vrot.slane %v11202, 5
      %v11205 = vsel %vm831, %v11200, %v11204
      %v11206 = vshrl.u32 %v10747, 16
      %v11208 = vrot.slane %v11206, 4
      %v11209 = vor.u32 %v11208, %v11204
      %v11210 = vrot.slane %v11209, 4
      %v11212 = vshll.u32 %v10877, 16
      %v11214 = vrot.slane %v11212, 5
      %v11215 = vsel %vm831, %v11210, %v11214
      %v11217 = vshrl.u32 %v10748, 16
      %v11219 = vrot.slane %v11217, 4
      %v11220 = vshll.u32 %v10748, 16
      %v11222 = vrot.slane %v11220, 5
      %v11223 = vor.u32 %v11219, %v11222
      %v11224 = vrot.slane %v11223, 4
      %v11226 = vshll.u32 %v10749, 16
      %v11228 = vrot.slane %v11226, 5
      %v11229 = vsel %vm831, %v11224, %v11228
      %v11230 = vshrl.u32 %v10749, 16
      %v11232 = vrot.slane %v11230, 4
      %v11233 = vor.u32 %v11232, %v11228
      %v11234 = vrot.slane %v11233, 4
      %v11236 = vshll.u32 %v10878, 16
      %v11238 = vrot.slane %v11236, 5
      %v11239 = vsel %vm831, %v11234, %v11238
      %v11241 = vshrl.u32 %v10750, 16
      %v11243 = vrot.slane %v11241, 4
      %v11244 = vshll.u32 %v10750, 16
      %v11246 = vrot.slane %v11244, 5
      %v11247 = vor.u32 %v11243, %v11246
      %v11248 = vrot.slane %v11247, 4
      %v11250 = vshll.u32 %v10751, 16
      %v11252 = vrot.slane %v11250, 5
      %v11253 = vsel %vm831, %v11248, %v11252
      %v11254 = vshrl.u32 %v10751, 16
      %v11256 = vrot.slane %v11254, 4
      %v11257 = vor.u32 %v11256, %v11252
      %v11258 = vrot.slane %v11257, 4
      %v11260 = vshll.u32 %v10879, 16
      %v11262 = vrot.slane %v11260, 5
      %v11263 = vsel %vm831, %v11258, %v11262
      %11264 = vrot.lane.b32.xlu0 %v10893, 4
      %v11265 = vpop.permute.xlu0 %11264
      %11266 = vrot.lane.b32.xlu0 %v10903, 4
      %v11267 = vpop.permute.xlu0 %11266
      %11268 = vrot.lane.b32.xlu0 %v10917, 4
      %v11269 = vpop.permute.xlu0 %11268
      %11270 = vrot.lane.b32.xlu0 %v10927, 4
      %v11271 = vpop.permute.xlu0 %11270
      %11272 = vrot.lane.b32.xlu0 %v10941, 4
      %v11273 = vpop.permute.xlu0 %11272
      %11274 = vrot.lane.b32.xlu0 %v10951, 4
      %v11275 = vpop.permute.xlu0 %11274
      %11276 = vrot.lane.b32.xlu0 %v10965, 4
      %v11277 = vpop.permute.xlu0 %11276
      %11278 = vrot.lane.b32.xlu0 %v10975, 4
      %v11279 = vpop.permute.xlu0 %11278
      %11280 = vrot.lane.b32.xlu0 %v10989, 4
      %v11281 = vpop.permute.xlu0 %11280
      %11282 = vrot.lane.b32.xlu0 %v10999, 4
      %v11283 = vpop.permute.xlu0 %11282
      %11284 = vrot.lane.b32.xlu0 %v11013, 4
      %v11285 = vpop.permute.xlu0 %11284
      %11286 = vrot.lane.b32.xlu0 %v11023, 4
      %v11287 = vpop.permute.xlu0 %11286
      %11288 = vrot.lane.b32.xlu0 %v11037, 4
      %v11289 = vpop.permute.xlu0 %11288
      %11290 = vrot.lane.b32.xlu0 %v11047, 4
      %v11291 = vpop.permute.xlu0 %11290
      %11292 = vrot.lane.b32.xlu0 %v11061, 4
      %v11293 = vpop.permute.xlu0 %11292
      %11294 = vrot.lane.b32.xlu0 %v11071, 4
      %v11295 = vpop.permute.xlu0 %11294
      %11296 = vrot.lane.b32.xlu0 %v11085, 4
      %v11297 = vpop.permute.xlu0 %11296
      %11298 = vrot.lane.b32.xlu0 %v11095, 4
      %v11299 = vpop.permute.xlu0 %11298
      %11300 = vrot.lane.b32.xlu0 %v11109, 4
      %v11301 = vpop.permute.xlu0 %11300
      %11302 = vrot.lane.b32.xlu0 %v11119, 4
      %v11303 = vpop.permute.xlu0 %11302
      %11304 = vrot.lane.b32.xlu0 %v11133, 4
      %v11305 = vpop.permute.xlu0 %11304
      %11306 = vrot.lane.b32.xlu0 %v11143, 4
      %v11307 = vpop.permute.xlu0 %11306
      %11308 = vrot.lane.b32.xlu0 %v11157, 4
      %v11309 = vpop.permute.xlu0 %11308
      %11310 = vrot.lane.b32.xlu0 %v11167, 4
      %v11311 = vpop.permute.xlu0 %11310
      %11312 = vrot.lane.b32.xlu0 %v11181, 4
      %v11313 = vpop.permute.xlu0 %11312
      %11314 = vrot.lane.b32.xlu0 %v11191, 4
      %v11315 = vpop.permute.xlu0 %11314
      %11316 = vrot.lane.b32.xlu0 %v11205, 4
      %v11317 = vpop.permute.xlu0 %11316
      %11318 = vrot.lane.b32.xlu0 %v11215, 4
      %v11319 = vpop.permute.xlu0 %11318
      %11320 = vrot.lane.b32.xlu0 %v11229, 4
      %v11321 = vpop.permute.xlu0 %11320
      %11322 = vrot.lane.b32.xlu0 %v11239, 4
      %v11323 = vpop.permute.xlu0 %11322
      %11324 = vrot.lane.b32.xlu0 %v11253, 4
      %v11325 = vpop.permute.xlu0 %11324
      %11326 = vrot.lane.b32.xlu0 %v11263, 4
      %v11327 = vpop.permute.xlu0 %11326
      %11360 = vst.msk [vmem:[%s8504] sm:$0xf] %vm1312, %v11265
      %11361 = vst.msk [vmem:[%s8504 + $0x4] sm:$0xf] %vm1312, %v11267
      %11362 = vst.msk [vmem:[%s8504 + $0x8] sm:$0xf] %vm1312, %v11269
      %11363 = vst.msk [vmem:[%s8504 + $0xc] sm:$0xf] %vm1312, %v11271
      %11364 = vst.msk [vmem:[%s8504 + $0x10] sm:$0xf] %vm1312, %v11273
      %11365 = vst.msk [vmem:[%s8504 + $0x14] sm:$0xf] %vm1312, %v11275
      %11366 = vst.msk [vmem:[%s8504 + $0x18] sm:$0xf] %vm1312, %v11277
      %11367 = vst.msk [vmem:[%s8504 + $0x1c] sm:$0xf] %vm1312, %v11279
      %11368 = vst.msk [vmem:[%s8504 + $0x20] sm:$0xf] %vm1312, %v11281
      %11369 = vst.msk [vmem:[%s8504 + $0x24] sm:$0xf] %vm1312, %v11283
      %11370 = vst.msk [vmem:[%s8504 + $0x28] sm:$0xf] %vm1312, %v11285
      %11371 = vst.msk [vmem:[%s8504 + $0x2c] sm:$0xf] %vm1312, %v11287
      %11372 = vst.msk [vmem:[%s8504 + $0x30] sm:$0xf] %vm1312, %v11289
      %11373 = vst.msk [vmem:[%s8504 + $0x34] sm:$0xf] %vm1312, %v11291
      %11374 = vst.msk [vmem:[%s8504 + $0x38] sm:$0xf] %vm1312, %v11293
      %11375 = vst.msk [vmem:[%s8504 + $0x3c] sm:$0xf] %vm1312, %v11295
      %11376 = vst.msk [vmem:[%s8504 + $0x40] sm:$0xf] %vm1312, %v11297
      %11377 = vst.msk [vmem:[%s8504 + $0x44] sm:$0xf] %vm1312, %v11299
      %11378 = vst.msk [vmem:[%s8504 + $0x48] sm:$0xf] %vm1312, %v11301
      %11379 = vst.msk [vmem:[%s8504 + $0x4c] sm:$0xf] %vm1312, %v11303
      %11380 = vst.msk [vmem:[%s8504 + $0x50] sm:$0xf] %vm1312, %v11305
      %11381 = vst.msk [vmem:[%s8504 + $0x54] sm:$0xf] %vm1312, %v11307
      %11382 = vst.msk [vmem:[%s8504 + $0x58] sm:$0xf] %vm1312, %v11309
      %11383 = vst.msk [vmem:[%s8504 + $0x5c] sm:$0xf] %vm1312, %v11311
      %11384 = vst.msk [vmem:[%s8504 + $0x60] sm:$0xf] %vm1312, %v11313
      %11385 = vst.msk [vmem:[%s8504 + $0x64] sm:$0xf] %vm1312, %v11315
      %11386 = vst.msk [vmem:[%s8504 + $0x68] sm:$0xf] %vm1312, %v11317
      %11387 = vst.msk [vmem:[%s8504 + $0x6c] sm:$0xf] %vm1312, %v11319
      %11388 = vst.msk [vmem:[%s8504 + $0x70] sm:$0xf] %vm1312, %v11321
      %11389 = vst.msk [vmem:[%s8504 + $0x74] sm:$0xf] %vm1312, %v11323
      %11390 = vst.msk [vmem:[%s8504 + $0x78] sm:$0xf] %vm1312, %v11325
      %11391 = vst.msk [vmem:[%s8504 + $0x7c] sm:$0xf] %vm1312, %v11327
      %v11392 = vrot.slane %v10720, 5
      %v11393 = vrot.slane %v11392, 4
      %v11394 = vrot.slane %v10721, 5
      %v11395 = vsel %vm1347, %v11393, %v11394
      %v11396 = vrot.slane %v11394, 4
      %v11397 = vrot.slane %v10864, 5
      %v11398 = vsel %vm1347, %v11396, %v11397
      %v11399 = vrot.slane %v10722, 5
      %v11400 = vrot.slane %v11399, 4
      %v11401 = vrot.slane %v10723, 5
      %v11402 = vsel %vm1347, %v11400, %v11401
      %v11403 = vrot.slane %v11401, 4
      %v11404 = vrot.slane %v10865, 5
      %v11405 = vsel %vm1347, %v11403, %v11404
      %v11406 = vrot.slane %v10724, 5
      %v11407 = vrot.slane %v11406, 4
      %v11408 = vrot.slane %v10725, 5
      %v11409 = vsel %vm1347, %v11407, %v11408
      %v11410 = vrot.slane %v11408, 4
      %v11411 = vrot.slane %v10866, 5
      %v11412 = vsel %vm1347, %v11410, %v11411
      %v11413 = vrot.slane %v10726, 5
      %v11414 = vrot.slane %v11413, 4
      %v11415 = vrot.slane %v10727, 5
      %v11416 = vsel %vm1347, %v11414, %v11415
      %v11417 = vrot.slane %v11415, 4
      %v11418 = vrot.slane %v10867, 5
      %v11419 = vsel %vm1347, %v11417, %v11418
      %v11420 = vrot.slane %v10728, 5
      %v11421 = vrot.slane %v11420, 4
      %v11422 = vrot.slane %v10729, 5
      %v11423 = vsel %vm1347, %v11421, %v11422
      %v11424 = vrot.slane %v11422, 4
      %v11425 = vrot.slane %v10868, 5
      %v11426 = vsel %vm1347, %v11424, %v11425
      %v11427 = vrot.slane %v10730, 5
      %v11428 = vrot.slane %v11427, 4
      %v11429 = vrot.slane %v10731, 5
      %v11430 = vsel %vm1347, %v11428, %v11429
      %v11431 = vrot.slane %v11429, 4
      %v11432 = vrot.slane %v10869, 5
      %v11433 = vsel %vm1347, %v11431, %v11432
      %v11434 = vrot.slane %v10732, 5
      %v11435 = vrot.slane %v11434, 4
      %v11436 = vrot.slane %v10733, 5
      %v11437 = vsel %vm1347, %v11435, %v11436
      %v11438 = vrot.slane %v11436, 4
      %v11439 = vrot.slane %v10870, 5
      %v11440 = vsel %vm1347, %v11438, %v11439
      %v11441 = vrot.slane %v10734, 5
      %v11442 = vrot.slane %v11441, 4
      %v11443 = vrot.slane %v10735, 5
      %v11444 = vsel %vm1347, %v11442, %v11443
      %v11445 = vrot.slane %v11443, 4
      %v11446 = vrot.slane %v10871, 5
      %v11447 = vsel %vm1347, %v11445, %v11446
      %v11448 = vrot.slane %v10736, 5
      %v11449 = vrot.slane %v11448, 4
      %v11450 = vrot.slane %v10737, 5
      %v11451 = vsel %vm1347, %v11449, %v11450
      %v11452 = vrot.slane %v11450, 4
      %v11453 = vrot.slane %v10872, 5
      %v11454 = vsel %vm1347, %v11452, %v11453
      %v11455 = vrot.slane %v10738, 5
      %v11456 = vrot.slane %v11455, 4
      %v11457 = vrot.slane %v10739, 5
      %v11458 = vsel %vm1347, %v11456, %v11457
      %v11459 = vrot.slane %v11457, 4
      %v11460 = vrot.slane %v10873, 5
      %v11461 = vsel %vm1347, %v11459, %v11460
      %v11462 = vrot.slane %v10740, 5
      %v11463 = vrot.slane %v11462, 4
      %v11464 = vrot.slane %v10741, 5
      %v11465 = vsel %vm1347, %v11463, %v11464
      %v11466 = vrot.slane %v11464, 4
      %v11467 = vrot.slane %v10874, 5
      %v11468 = vsel %vm1347, %v11466, %v11467
      %v11469 = vrot.slane %v10742, 5
      %v11470 = vrot.slane %v11469, 4
      %v11471 = vrot.slane %v10743, 5
      %v11472 = vsel %vm1347, %v11470, %v11471
      %v11473 = vrot.slane %v11471, 4
      %v11474 = vrot.slane %v10875, 5
      %v11475 = vsel %vm1347, %v11473, %v11474
      %v11476 = vrot.slane %v10744, 5
      %v11477 = vrot.slane %v11476, 4
      %v11478 = vrot.slane %v10745, 5
      %v11479 = vsel %vm1347, %v11477, %v11478
      %v11480 = vrot.slane %v11478, 4
      %v11481 = vrot.slane %v10876, 5
      %v11482 = vsel %vm1347, %v11480, %v11481
      %v11483 = vrot.slane %v10746, 5
      %v11484 = vrot.slane %v11483, 4
      %v11485 = vrot.slane %v10747, 5
      %v11486 = vsel %vm1347, %v11484, %v11485
      %v11487 = vrot.slane %v11485, 4
      %v11488 = vrot.slane %v10877, 5
      %v11489 = vsel %vm1347, %v11487, %v11488
      %v11490 = vrot.slane %v10748, 5
      %v11491 = vrot.slane %v11490, 4
      %v11492 = vrot.slane %v10749, 5
      %v11493 = vsel %vm1347, %v11491, %v11492
      %v11494 = vrot.slane %v11492, 4
      %v11495 = vrot.slane %v10878, 5
      %v11496 = vsel %vm1347, %v11494, %v11495
      %v11497 = vrot.slane %v10750, 5
      %v11498 = vrot.slane %v11497, 4
      %v11499 = vrot.slane %v10751, 5
      %v11500 = vsel %vm1347, %v11498, %v11499
      %v11501 = vrot.slane %v11499, 4
      %v11502 = vrot.slane %v10879, 5
      %v11503 = vsel %vm1347, %v11501, %v11502
      %11504 = vrot.lane.b32.xlu0 %v11395, 8
      %v11505 = vpop.permute.xlu0 %11504
      %11506 = vrot.lane.b32.xlu0 %v11398, 8
      %v11507 = vpop.permute.xlu0 %11506
      %11508 = vrot.lane.b32.xlu0 %v11402, 8
      %v11509 = vpop.permute.xlu0 %11508
      %11510 = vrot.lane.b32.xlu0 %v11405, 8
      %v11511 = vpop.permute.xlu0 %11510
      %11512 = vrot.lane.b32.xlu0 %v11409, 8
      %v11513 = vpop.permute.xlu0 %11512
      %11514 = vrot.lane.b32.xlu0 %v11412, 8
      %v11515 = vpop.permute.xlu0 %11514
      %11516 = vrot.lane.b32.xlu0 %v11416, 8
      %v11517 = vpop.permute.xlu0 %11516
      %11518 = vrot.lane.b32.xlu0 %v11419, 8
      %v11519 = vpop.permute.xlu0 %11518
      %11520 = vrot.lane.b32.xlu0 %v11423, 8
      %v11521 = vpop.permute.xlu0 %11520
      %11522 = vrot.lane.b32.xlu0 %v11426, 8
      %v11523 = vpop.permute.xlu0 %11522
      %11524 = vrot.lane.b32.xlu0 %v11430, 8
      %v11525 = vpop.permute.xlu0 %11524
      %11526 = vrot.lane.b32.xlu0 %v11433, 8
      %v11527 = vpop.permute.xlu0 %11526
      %11528 = vrot.lane.b32.xlu0 %v11437, 8
      %v11529 = vpop.permute.xlu0 %11528
      %11530 = vrot.lane.b32.xlu0 %v11440, 8
      %v11531 = vpop.permute.xlu0 %11530
      %11532 = vrot.lane.b32.xlu0 %v11444, 8
      %v11533 = vpop.permute.xlu0 %11532
      %11534 = vrot.lane.b32.xlu0 %v11447, 8
      %v11535 = vpop.permute.xlu0 %11534
      %11536 = vrot.lane.b32.xlu0 %v11451, 8
      %v11537 = vpop.permute.xlu0 %11536
      %11538 = vrot.lane.b32.xlu0 %v11454, 8
      %v11539 = vpop.permute.xlu0 %11538
      %11540 = vrot.lane.b32.xlu0 %v11458, 8
      %v11541 = vpop.permute.xlu0 %11540
      %11542 = vrot.lane.b32.xlu0 %v11461, 8
      %v11543 = vpop.permute.xlu0 %11542
      %11544 = vrot.lane.b32.xlu0 %v11465, 8
      %v11545 = vpop.permute.xlu0 %11544
      %11546 = vrot.lane.b32.xlu0 %v11468, 8
      %v11547 = vpop.permute.xlu0 %11546
      %11548 = vrot.lane.b32.xlu0 %v11472, 8
      %v11549 = vpop.permute.xlu0 %11548
      %11550 = vrot.lane.b32.xlu0 %v11475, 8
      %v11551 = vpop.permute.xlu0 %11550
      %11552 = vrot.lane.b32.xlu0 %v11479, 8
      %v11553 = vpop.permute.xlu0 %11552
      %11554 = vrot.lane.b32.xlu0 %v11482, 8
      %v11555 = vpop.permute.xlu0 %11554
      %11556 = vrot.lane.b32.xlu0 %v11486, 8
      %v11557 = vpop.permute.xlu0 %11556
      %11558 = vrot.lane.b32.xlu0 %v11489, 8
      %v11559 = vpop.permute.xlu0 %11558
      %11560 = vrot.lane.b32.xlu0 %v11493, 8
      %v11561 = vpop.permute.xlu0 %11560
      %11562 = vrot.lane.b32.xlu0 %v11496, 8
      %v11563 = vpop.permute.xlu0 %11562
      %11564 = vrot.lane.b32.xlu0 %v11500, 8
      %v11565 = vpop.permute.xlu0 %11564
      %11566 = vrot.lane.b32.xlu0 %v11503, 8
      %v11567 = vpop.permute.xlu0 %11566
      %11600 = vst.msk [vmem:[%s8504] sm:$0xf] %vm1556, %v11505
      %11601 = vst.msk [vmem:[%s8504 + $0x4] sm:$0xf] %vm1556, %v11507
      %11602 = vst.msk [vmem:[%s8504 + $0x8] sm:$0xf] %vm1556, %v11509
      %11603 = vst.msk [vmem:[%s8504 + $0xc] sm:$0xf] %vm1556, %v11511
      %11604 = vst.msk [vmem:[%s8504 + $0x10] sm:$0xf] %vm1556, %v11513
      %11605 = vst.msk [vmem:[%s8504 + $0x14] sm:$0xf] %vm1556, %v11515
      %11606 = vst.msk [vmem:[%s8504 + $0x18] sm:$0xf] %vm1556, %v11517
      %11607 = vst.msk [vmem:[%s8504 + $0x1c] sm:$0xf] %vm1556, %v11519
      %11608 = vst.msk [vmem:[%s8504 + $0x20] sm:$0xf] %vm1556, %v11521
      %11609 = vst.msk [vmem:[%s8504 + $0x24] sm:$0xf] %vm1556, %v11523
      %11610 = vst.msk [vmem:[%s8504 + $0x28] sm:$0xf] %vm1556, %v11525
      %11611 = vst.msk [vmem:[%s8504 + $0x2c] sm:$0xf] %vm1556, %v11527
      %11612 = vst.msk [vmem:[%s8504 + $0x30] sm:$0xf] %vm1556, %v11529
      %11613 = vst.msk [vmem:[%s8504 + $0x34] sm:$0xf] %vm1556, %v11531
      %11614 = vst.msk [vmem:[%s8504 + $0x38] sm:$0xf] %vm1556, %v11533
      %11615 = vst.msk [vmem:[%s8504 + $0x3c] sm:$0xf] %vm1556, %v11535
      %11616 = vst.msk [vmem:[%s8504 + $0x40] sm:$0xf] %vm1556, %v11537
      %11617 = vst.msk [vmem:[%s8504 + $0x44] sm:$0xf] %vm1556, %v11539
      %11618 = vst.msk [vmem:[%s8504 + $0x48] sm:$0xf] %vm1556, %v11541
      %11619 = vst.msk [vmem:[%s8504 + $0x4c] sm:$0xf] %vm1556, %v11543
      %11620 = vst.msk [vmem:[%s8504 + $0x50] sm:$0xf] %vm1556, %v11545
      %11621 = vst.msk [vmem:[%s8504 + $0x54] sm:$0xf] %vm1556, %v11547
      %11622 = vst.msk [vmem:[%s8504 + $0x58] sm:$0xf] %vm1556, %v11549
      %11623 = vst.msk [vmem:[%s8504 + $0x5c] sm:$0xf] %vm1556, %v11551
      %11624 = vst.msk [vmem:[%s8504 + $0x60] sm:$0xf] %vm1556, %v11553
      %11625 = vst.msk [vmem:[%s8504 + $0x64] sm:$0xf] %vm1556, %v11555
      %11626 = vst.msk [vmem:[%s8504 + $0x68] sm:$0xf] %vm1556, %v11557
      %11627 = vst.msk [vmem:[%s8504 + $0x6c] sm:$0xf] %vm1556, %v11559
      %11628 = vst.msk [vmem:[%s8504 + $0x70] sm:$0xf] %vm1556, %v11561
      %11629 = vst.msk [vmem:[%s8504 + $0x74] sm:$0xf] %vm1556, %v11563
      %11630 = vst.msk [vmem:[%s8504 + $0x78] sm:$0xf] %vm1556, %v11565
      %11631 = vst.msk [vmem:[%s8504 + $0x7c] sm:$0xf] %vm1556, %v11567
      %v11632 = vld [vmem:[#allocation3] sm:$0xf]
      %v11633 = vld [vmem:[#allocation3 + $0x4] sm:$0xf]
      %v11634 = vld [vmem:[#allocation3 + $0x8] sm:$0xf]
      %v11635 = vld [vmem:[#allocation3 + $0xc] sm:$0xf]
      %v11636 = vld [vmem:[#allocation3 + $0x10] sm:$0xf]
      %v11637 = vld [vmem:[#allocation3 + $0x14] sm:$0xf]
      %v11638 = vld [vmem:[#allocation3 + $0x18] sm:$0xf]
      %v11639 = vld [vmem:[#allocation3 + $0x1c] sm:$0xf]
      %v11640 = vld [vmem:[#allocation3 + $0x20] sm:$0xf]
      %v11641 = vld [vmem:[#allocation3 + $0x24] sm:$0xf]
      %v11642 = vld [vmem:[#allocation3 + $0x28] sm:$0xf]
      %v11643 = vld [vmem:[#allocation3 + $0x2c] sm:$0xf]
      %v11644 = vld [vmem:[#allocation3 + $0x30] sm:$0xf]
      %v11645 = vld [vmem:[#allocation3 + $0x34] sm:$0xf]
      %v11646 = vld [vmem:[#allocation3 + $0x38] sm:$0xf]
      %v11647 = vld [vmem:[#allocation3 + $0x3c] sm:$0xf]
      %v11648 = vld [vmem:[#allocation3 + $0x40] sm:$0xf]
      %v11649 = vld [vmem:[#allocation3 + $0x44] sm:$0xf]
      %v11650 = vld [vmem:[#allocation3 + $0x48] sm:$0xf]
      %v11651 = vld [vmem:[#allocation3 + $0x4c] sm:$0xf]
      %v11652 = vld [vmem:[#allocation3 + $0x50] sm:$0xf]
      %v11653 = vld [vmem:[#allocation3 + $0x54] sm:$0xf]
      %v11654 = vld [vmem:[#allocation3 + $0x58] sm:$0xf]
      %v11655 = vld [vmem:[#allocation3 + $0x5c] sm:$0xf]
      %v11656 = vld [vmem:[#allocation3 + $0x60] sm:$0xf]
      %v11657 = vld [vmem:[#allocation3 + $0x64] sm:$0xf]
      %v11658 = vld [vmem:[#allocation3 + $0x68] sm:$0xf]
      %v11659 = vld [vmem:[#allocation3 + $0x6c] sm:$0xf]
      %v11660 = vld [vmem:[#allocation3 + $0x70] sm:$0xf]
      %v11661 = vld [vmem:[#allocation3 + $0x74] sm:$0xf]
      %v11662 = vld [vmem:[#allocation3 + $0x78] sm:$0xf]
      %v11663 = vld [vmem:[#allocation3 + $0x7c] sm:$0xf]
      %v11664 = vld [vmem:[%s7] sm:$0xf]
      %v11665 = vld [vmem:[%s7 + $0x4] sm:$0x3]
      %v11666 = vld [vmem:[%s8504] sm:$0xf]
      %v11667 = vld [vmem:[%s8504 + $0x4] sm:$0xf]
      %v11668 = vld [vmem:[%s8504 + $0x8] sm:$0xf]
      %v11669 = vld [vmem:[%s8504 + $0xc] sm:$0xf]
      %v11670 = vld [vmem:[%s8504 + $0x10] sm:$0xf]
      %v11671 = vld [vmem:[%s8504 + $0x14] sm:$0xf]
      %v11672 = vld [vmem:[%s8504 + $0x18] sm:$0xf]
      %v11673 = vld [vmem:[%s8504 + $0x1c] sm:$0xf]
      %v11674 = vld [vmem:[%s8504 + $0x20] sm:$0xf]
      %v11675 = vld [vmem:[%s8504 + $0x24] sm:$0xf]
      %v11676 = vld [vmem:[%s8504 + $0x28] sm:$0xf]
      %v11677 = vld [vmem:[%s8504 + $0x2c] sm:$0xf]
      %v11678 = vld [vmem:[%s8504 + $0x30] sm:$0xf]
      %v11679 = vld [vmem:[%s8504 + $0x34] sm:$0xf]
      %v11680 = vld [vmem:[%s8504 + $0x38] sm:$0xf]
      %v11681 = vld [vmem:[%s8504 + $0x3c] sm:$0xf]
      %v11682 = vld [vmem:[%s8504 + $0x40] sm:$0xf]
      %v11683 = vld [vmem:[%s8504 + $0x44] sm:$0xf]
      %v11684 = vld [vmem:[%s8504 + $0x48] sm:$0xf]
      %v11685 = vld [vmem:[%s8504 + $0x4c] sm:$0xf]
      %v11686 = vld [vmem:[%s8504 + $0x50] sm:$0xf]
      %v11687 = vld [vmem:[%s8504 + $0x54] sm:$0xf]
      %v11688 = vld [vmem:[%s8504 + $0x58] sm:$0xf]
      %v11689 = vld [vmem:[%s8504 + $0x5c] sm:$0xf]
      %v11690 = vld [vmem:[%s8504 + $0x60] sm:$0xf]
      %v11691 = vld [vmem:[%s8504 + $0x64] sm:$0xf]
      %v11692 = vld [vmem:[%s8504 + $0x68] sm:$0xf]
      %v11693 = vld [vmem:[%s8504 + $0x6c] sm:$0xf]
      %v11694 = vld [vmem:[%s8504 + $0x70] sm:$0xf]
      %v11695 = vld [vmem:[%s8504 + $0x74] sm:$0xf]
      %v11696 = vld [vmem:[%s8504 + $0x78] sm:$0xf]
      %v11697 = vld [vmem:[%s8504 + $0x7c] sm:$0xf]
      %s11698 = scalar_lea.vmem %s7, 8
      %v11699 = vld [vmem:[%s11698] sm:$0xf]
      %v11700 = vld [vmem:[%s11698 + $0x4] sm:$0x3]
      %v11733 = vunpack.c.l.b16 %v11666
      %v11734 = vunpack.c.l.b16 %v11667
      %v11735 = vunpack.c.l.b16 %v11668
      %v11736 = vunpack.c.l.b16 %v11669
      %v11737 = vunpack.c.l.b16 %v11670
      %v11738 = vunpack.c.l.b16 %v11671
      %v11739 = vunpack.c.l.b16 %v11672
      %v11740 = vunpack.c.l.b16 %v11673
      %v11741 = vunpack.c.l.b16 %v11674
      %v11742 = vunpack.c.l.b16 %v11675
      %v11743 = vunpack.c.l.b16 %v11676
      %v11744 = vunpack.c.l.b16 %v11677
      %v11745 = vunpack.c.l.b16 %v11678
      %v11746 = vunpack.c.l.b16 %v11679
      %v11747 = vunpack.c.l.b16 %v11680
      %v11748 = vunpack.c.l.b16 %v11681
      %v11749 = vunpack.c.l.b16 %v11682
      %v11750 = vunpack.c.l.b16 %v11683
      %v11751 = vunpack.c.l.b16 %v11684
      %v11752 = vunpack.c.l.b16 %v11685
      %v11753 = vunpack.c.l.b16 %v11686
      %v11754 = vunpack.c.l.b16 %v11687
      %v11755 = vunpack.c.l.b16 %v11688
      %v11756 = vunpack.c.l.b16 %v11689
      %v11757 = vunpack.c.l.b16 %v11690
      %v11758 = vunpack.c.l.b16 %v11691
      %v11759 = vunpack.c.l.b16 %v11692
      %v11760 = vunpack.c.l.b16 %v11693
      %v11761 = vunpack.c.l.b16 %v11694
      %v11762 = vunpack.c.l.b16 %v11695
      %v11763 = vunpack.c.l.b16 %v11696
      %v11764 = vunpack.c.l.b16 %v11697
      %v11765 = vpack.c.b16 %v11734, %v11733
      %v11766 = vpack.c.b16 %v11736, %v11735
      %v11767 = vpack.c.b16 %v11738, %v11737
      %v11768 = vpack.c.b16 %v11740, %v11739
      %v11769 = vpack.c.b16 %v11742, %v11741
      %v11770 = vpack.c.b16 %v11744, %v11743
      %v11771 = vpack.c.b16 %v11746, %v11745
      %v11772 = vpack.c.b16 %v11748, %v11747
      %v11773 = vpack.c.b16 %v11750, %v11749
      %v11774 = vpack.c.b16 %v11752, %v11751
      %v11775 = vpack.c.b16 %v11754, %v11753
      %v11776 = vpack.c.b16 %v11756, %v11755
      %v11777 = vpack.c.b16 %v11758, %v11757
      %v11778 = vpack.c.b16 %v11760, %v11759
      %v11779 = vpack.c.b16 %v11762, %v11761
      %v11780 = vpack.c.b16 %v11764, %v11763
      %v11783 = vunpack.c.l.b16 %v11699
      %v11784 = vunpack.c.l.b16 %v11700
      %v11785 = vpack.c.b16 %v11784, %v11783
      %v11787 = vsel %vm9507, %v11765, 0
      %v11790 = vsel %vm9507, %v11766, 0
      %v11793 = vsel %vm9507, %v11767, 0
      %v11796 = vsel %vm9507, %v11768, 0
      %v11799 = vsel %vm9507, %v11769, 0
      %v11802 = vsel %vm9507, %v11770, 0
      %v11805 = vsel %vm9507, %v11771, 0
      %v11808 = vsel %vm9507, %v11772, 0
      %v11811 = vsel %vm9507, %v11773, 0
      %v11814 = vsel %vm9507, %v11774, 0
      %v11817 = vsel %vm9507, %v11775, 0
      %v11820 = vsel %vm9507, %v11776, 0
      %v11823 = vsel %vm9507, %v11777, 0
      %v11826 = vsel %vm9507, %v11778, 0
      %v11829 = vsel %vm9507, %v11779, 0
      %v11832 = vsel %vm9507, %v11780, 0
      %v11835 = vsel %vm4197, %v11785, 0
      %11837 = vmatprep.subr.bf16.mxu0 0
      %11838 = vmatpush1.bf16.msra.mxu0 0
      %11839 = vmatprep.subr.bf16.mxu0 0
      %11840 = vmatpush1.bf16.msra.mxu0 0
      %11841 = vmatprep.subr.bf16.mxu0 0
      %11842 = vmatpush1.bf16.msra.mxu0 0
      %11843 = vmatprep.subr.bf16.mxu0 0
      %11844 = vmatpush1.bf16.msra.mxu0 0
      %11845 = vmatprep.subr.bf16.mxu0 0
      %11846 = vmatpush1.bf16.msra.mxu0 0
      %11847 = vmatprep.subr.bf16.mxu0 0
      %11848 = vmatpush1.bf16.msra.mxu0 0
      %11849 = vmatprep.subr.bf16.mxu0 0
      %11850 = vmatpush1.bf16.msra.mxu0 0
      %11851 = vmatprep.subr.bf16.mxu0 0
      %11852 = vmatpush1.bf16.msra.mxu0 %v11835
      %11853 = vmatprep.subr.bf16.mxu0 0
      %11854 = vmatpush2.bf16.msra.mxu0 0
      %11855 = vmatprep.subr.bf16.mxu0 0
      %11856 = vmatpush2.bf16.msra.mxu0 0
      %11857 = vmatprep.subr.bf16.mxu0 0
      %11858 = vmatpush2.bf16.msra.mxu0 0
      %11859 = vmatprep.subr.bf16.mxu0 0
      %11860 = vmatpush2.bf16.msra.mxu0 0
      %11861 = vmatprep.subr.bf16.mxu0 0
      %11862 = vmatpush2.bf16.msra.mxu0 0
      %11863 = vmatprep.subr.bf16.mxu0 0
      %11864 = vmatpush2.bf16.msra.mxu0 0
      %11865 = vmatprep.subr.bf16.mxu0 0
      %11866 = vmatpush2.bf16.msra.mxu0 0
      %11867 = vmatprep.subr.bf16.mxu0 0
      %11868 = vmatpush2.bf16.msra.mxu0 0
      %11869 = vmatprep.mubr.bf16.mxu0 0
      %11870 = vmatmul.mubr.bf16.gmra.mxu0 %v11787
      %v11871 = vpop.f32.mrf.mxu0
      %v11872 = vadd.f32 0.0, %v11871
      %v11873 = vpop.f32.mrf.mxu0
      %v11874 = vpop.f32.mrf.mxu0
      %v11875 = vadd.f32 0.0, %v11874
      %v11876 = vpop.f32.mrf.mxu0
      %11877 = vmatprep.mubr.bf16.mxu0 0
      %11878 = vmatmul.mubr.bf16.gmra.mxu0 %v11790
      %v11879 = vpop.f32.mrf.mxu0
      %v11880 = vadd.f32 0.0, %v11879
      %v11881 = vpop.f32.mrf.mxu0
      %v11882 = vpop.f32.mrf.mxu0
      %v11883 = vadd.f32 0.0, %v11882
      %v11884 = vpop.f32.mrf.mxu0
      %11885 = vmatprep.mubr.bf16.mxu0 0
      %11886 = vmatmul.mubr.bf16.gmra.mxu0 %v11793
      %v11887 = vpop.f32.mrf.mxu0
      %v11888 = vadd.f32 0.0, %v11887
      %v11889 = vpop.f32.mrf.mxu0
      %v11890 = vpop.f32.mrf.mxu0
      %v11891 = vadd.f32 0.0, %v11890
      %v11892 = vpop.f32.mrf.mxu0
      %11893 = vmatprep.mubr.bf16.mxu0 0
      %11894 = vmatmul.mubr.bf16.gmra.mxu0 %v11796
      %v11895 = vpop.f32.mrf.mxu0
      %v11896 = vadd.f32 0.0, %v11895
      %v11897 = vpop.f32.mrf.mxu0
      %v11898 = vpop.f32.mrf.mxu0
      %v11899 = vadd.f32 0.0, %v11898
      %v11900 = vpop.f32.mrf.mxu0
      %11901 = vmatprep.mubr.bf16.mxu0 0
      %11902 = vmatmul.mubr.bf16.gmra.mxu0 %v11799
      %v11903 = vpop.f32.mrf.mxu0
      %v11904 = vadd.f32 0.0, %v11903
      %v11905 = vpop.f32.mrf.mxu0
      %v11906 = vpop.f32.mrf.mxu0
      %v11907 = vadd.f32 0.0, %v11906
      %v11908 = vpop.f32.mrf.mxu0
      %11909 = vmatprep.mubr.bf16.mxu0 0
      %11910 = vmatmul.mubr.bf16.gmra.mxu0 %v11802
      %v11911 = vpop.f32.mrf.mxu0
      %v11912 = vadd.f32 0.0, %v11911
      %v11913 = vpop.f32.mrf.mxu0
      %v11914 = vpop.f32.mrf.mxu0
      %v11915 = vadd.f32 0.0, %v11914
      %v11916 = vpop.f32.mrf.mxu0
      %11917 = vmatprep.mubr.bf16.mxu0 0
      %11918 = vmatmul.mubr.bf16.gmra.mxu0 %v11805
      %v11919 = vpop.f32.mrf.mxu0
      %v11920 = vadd.f32 0.0, %v11919
      %v11921 = vpop.f32.mrf.mxu0
      %v11922 = vpop.f32.mrf.mxu0
      %v11923 = vadd.f32 0.0, %v11922
      %v11924 = vpop.f32.mrf.mxu0
      %11925 = vmatprep.mubr.bf16.mxu0 0
      %11926 = vmatmul.mubr.bf16.gmra.mxu0 %v11808
      %v11927 = vpop.f32.mrf.mxu0
      %v11928 = vadd.f32 0.0, %v11927
      %v11929 = vpop.f32.mrf.mxu0
      %v11930 = vpop.f32.mrf.mxu0
      %v11931 = vadd.f32 0.0, %v11930
      %v11932 = vpop.f32.mrf.mxu0
      %11933 = vmatprep.mubr.bf16.mxu0 0
      %11934 = vmatmul.mubr.bf16.gmra.mxu0 %v11811
      %v11935 = vpop.f32.mrf.mxu0
      %v11936 = vadd.f32 0.0, %v11935
      %v11937 = vpop.f32.mrf.mxu0
      %v11938 = vpop.f32.mrf.mxu0
      %v11939 = vadd.f32 0.0, %v11938
      %v11940 = vpop.f32.mrf.mxu0
      %11941 = vmatprep.mubr.bf16.mxu0 0
      %11942 = vmatmul.mubr.bf16.gmra.mxu0 %v11814
      %v11943 = vpop.f32.mrf.mxu0
      %v11944 = vadd.f32 0.0, %v11943
      %v11945 = vpop.f32.mrf.mxu0
      %v11946 = vpop.f32.mrf.mxu0
      %v11947 = vadd.f32 0.0, %v11946
      %v11948 = vpop.f32.mrf.mxu0
      %11949 = vmatprep.mubr.bf16.mxu0 0
      %11950 = vmatmul.mubr.bf16.gmra.mxu0 %v11817
      %v11951 = vpop.f32.mrf.mxu0
      %v11952 = vadd.f32 0.0, %v11951
      %v11953 = vpop.f32.mrf.mxu0
      %v11954 = vpop.f32.mrf.mxu0
      %v11955 = vadd.f32 0.0, %v11954
      %v11956 = vpop.f32.mrf.mxu0
      %11957 = vmatprep.mubr.bf16.mxu0 0
      %11958 = vmatmul.mubr.bf16.gmra.mxu0 %v11820
      %v11959 = vpop.f32.mrf.mxu0
      %v11960 = vadd.f32 0.0, %v11959
      %v11961 = vpop.f32.mrf.mxu0
      %v11962 = vpop.f32.mrf.mxu0
      %v11963 = vadd.f32 0.0, %v11962
      %v11964 = vpop.f32.mrf.mxu0
      %11965 = vmatprep.mubr.bf16.mxu0 0
      %11966 = vmatmul.mubr.bf16.gmra.mxu0 %v11823
      %v11967 = vpop.f32.mrf.mxu0
      %v11968 = vadd.f32 0.0, %v11967
      %v11969 = vpop.f32.mrf.mxu0
      %v11970 = vpop.f32.mrf.mxu0
      %v11971 = vadd.f32 0.0, %v11970
      %v11972 = vpop.f32.mrf.mxu0
      %11973 = vmatprep.mubr.bf16.mxu0 0
      %11974 = vmatmul.mubr.bf16.gmra.mxu0 %v11826
      %v11975 = vpop.f32.mrf.mxu0
      %v11976 = vadd.f32 0.0, %v11975
      %v11977 = vpop.f32.mrf.mxu0
      %v11978 = vpop.f32.mrf.mxu0
      %v11979 = vadd.f32 0.0, %v11978
      %v11980 = vpop.f32.mrf.mxu0
      %11981 = vmatprep.mubr.bf16.mxu0 0
      %11982 = vmatmul.mubr.bf16.gmra.mxu0 %v11829
      %v11983 = vpop.f32.mrf.mxu0
      %v11984 = vadd.f32 0.0, %v11983
      %v11985 = vpop.f32.mrf.mxu0
      %v11986 = vpop.f32.mrf.mxu0
      %v11987 = vadd.f32 0.0, %v11986
      %v11988 = vpop.f32.mrf.mxu0
      %11989 = vmatprep.mubr.bf16.mxu0 0
      %11990 = vmatmul.mubr.bf16.gmra.mxu0 %v11832
      %v11991 = vpop.f32.mrf.mxu0
      %v11992 = vadd.f32 0.0, %v11991
      %v11993 = vpop.f32.mrf.mxu0
      %v11994 = vpop.f32.mrf.mxu0
      %v11995 = vadd.f32 0.0, %v11994
      %v11996 = vpop.f32.mrf.mxu0
      %11997 = vdwg.mxu0
      %v12030 = vunpack.c.l.b16 %v11632
      %v12031 = vunpack.c.l.b16 %v11633
      %v12032 = vunpack.c.l.b16 %v11634
      %v12033 = vunpack.c.l.b16 %v11635
      %v12034 = vunpack.c.l.b16 %v11636
      %v12035 = vunpack.c.l.b16 %v11637
      %v12036 = vunpack.c.l.b16 %v11638
      %v12037 = vunpack.c.l.b16 %v11639
      %v12038 = vunpack.c.l.b16 %v11640
      %v12039 = vunpack.c.l.b16 %v11641
      %v12040 = vunpack.c.l.b16 %v11642
      %v12041 = vunpack.c.l.b16 %v11643
      %v12042 = vunpack.c.l.b16 %v11644
      %v12043 = vunpack.c.l.b16 %v11645
      %v12044 = vunpack.c.l.b16 %v11646
      %v12045 = vunpack.c.l.b16 %v11647
      %v12046 = vunpack.c.l.b16 %v11648
      %v12047 = vunpack.c.l.b16 %v11649
      %v12048 = vunpack.c.l.b16 %v11650
      %v12049 = vunpack.c.l.b16 %v11651
      %v12050 = vunpack.c.l.b16 %v11652
      %v12051 = vunpack.c.l.b16 %v11653
      %v12052 = vunpack.c.l.b16 %v11654
      %v12053 = vunpack.c.l.b16 %v11655
      %v12054 = vunpack.c.l.b16 %v11656
      %v12055 = vunpack.c.l.b16 %v11657
      %v12056 = vunpack.c.l.b16 %v11658
      %v12057 = vunpack.c.l.b16 %v11659
      %v12058 = vunpack.c.l.b16 %v11660
      %v12059 = vunpack.c.l.b16 %v11661
      %v12060 = vunpack.c.l.b16 %v11662
      %v12061 = vunpack.c.l.b16 %v11663
      %v12062 = vpack.c.b16 %v12031, %v12030
      %v12063 = vpack.c.b16 %v12033, %v12032
      %v12064 = vpack.c.b16 %v12035, %v12034
      %v12065 = vpack.c.b16 %v12037, %v12036
      %v12066 = vpack.c.b16 %v12039, %v12038
      %v12067 = vpack.c.b16 %v12041, %v12040
      %v12068 = vpack.c.b16 %v12043, %v12042
      %v12069 = vpack.c.b16 %v12045, %v12044
      %v12070 = vpack.c.b16 %v12047, %v12046
      %v12071 = vpack.c.b16 %v12049, %v12048
      %v12072 = vpack.c.b16 %v12051, %v12050
      %v12073 = vpack.c.b16 %v12053, %v12052
      %v12074 = vpack.c.b16 %v12055, %v12054
      %v12075 = vpack.c.b16 %v12057, %v12056
      %v12076 = vpack.c.b16 %v12059, %v12058
      %v12077 = vpack.c.b16 %v12061, %v12060
      %v12080 = vunpack.c.l.b16 %v11664
      %v12081 = vunpack.c.l.b16 %v11665
      %v12082 = vpack.c.b16 %v12081, %v12080
      %v12084 = vsel %vm9507, %v12062, 0
      %v12087 = vsel %vm9507, %v12063, 0
      %v12090 = vsel %vm9507, %v12064, 0
      %v12093 = vsel %vm9507, %v12065, 0
      %v12096 = vsel %vm9507, %v12066, 0
      %v12099 = vsel %vm9507, %v12067, 0
      %v12102 = vsel %vm9507, %v12068, 0
      %v12105 = vsel %vm9507, %v12069, 0
      %v12108 = vsel %vm9507, %v12070, 0
      %v12111 = vsel %vm9507, %v12071, 0
      %v12114 = vsel %vm9507, %v12072, 0
      %v12117 = vsel %vm9507, %v12073, 0
      %v12120 = vsel %vm9507, %v12074, 0
      %v12123 = vsel %vm9507, %v12075, 0
      %v12126 = vsel %vm9507, %v12076, 0
      %v12129 = vsel %vm9507, %v12077, 0
      %v12132 = vsel %vm4197, %v12082, 0
      %12134 = vmatprep.subr.bf16.mxu0 0
      %12135 = vmatpush1.bf16.msra.mxu0 0
      %12136 = vmatprep.subr.bf16.mxu0 0
      %12137 = vmatpush1.bf16.msra.mxu0 0
      %12138 = vmatprep.subr.bf16.mxu0 0
      %12139 = vmatpush1.bf16.msra.mxu0 0
      %12140 = vmatprep.subr.bf16.mxu0 0
      %12141 = vmatpush1.bf16.msra.mxu0 0
      %12142 = vmatprep.subr.bf16.mxu0 0
      %12143 = vmatpush1.bf16.msra.mxu0 0
      %12144 = vmatprep.subr.bf16.mxu0 0
      %12145 = vmatpush1.bf16.msra.mxu0 0
      %12146 = vmatprep.subr.bf16.mxu0 0
      %12147 = vmatpush1.bf16.msra.mxu0 0
      %12148 = vmatprep.subr.bf16.mxu0 0
      %12149 = vmatpush1.bf16.msra.mxu0 %v12132
      %12150 = vmatprep.subr.bf16.mxu0 0
      %12151 = vmatpush2.bf16.msra.mxu0 0
      %12152 = vmatprep.subr.bf16.mxu0 0
      %12153 = vmatpush2.bf16.msra.mxu0 0
      %12154 = vmatprep.subr.bf16.mxu0 0
      %12155 = vmatpush2.bf16.msra.mxu0 0
      %12156 = vmatprep.subr.bf16.mxu0 0
      %12157 = vmatpush2.bf16.msra.mxu0 0
      %12158 = vmatprep.subr.bf16.mxu0 0
      %12159 = vmatpush2.bf16.msra.mxu0 0
      %12160 = vmatprep.subr.bf16.mxu0 0
      %12161 = vmatpush2.bf16.msra.mxu0 0
      %12162 = vmatprep.subr.bf16.mxu0 0
      %12163 = vmatpush2.bf16.msra.mxu0 0
      %12164 = vmatprep.subr.bf16.mxu0 0
      %12165 = vmatpush2.bf16.msra.mxu0 0
      %12166 = vmatprep.mubr.bf16.mxu0 0
      %12167 = vmatmul.mubr.bf16.gmra.mxu0 %v12084
      %v12168 = vpop.f32.mrf.mxu0
      %v12169 = vadd.f32 %v11872, %v12168
      %v12170 = vpop.f32.mrf.mxu0
      %v12171 = vpop.f32.mrf.mxu0
      %v12172 = vadd.f32 %v11875, %v12171
      %v12173 = vpop.f32.mrf.mxu0
      %12174 = vmatprep.mubr.bf16.mxu0 0
      %12175 = vmatmul.mubr.bf16.gmra.mxu0 %v12087
      %v12176 = vpop.f32.mrf.mxu0
      %v12177 = vadd.f32 %v11880, %v12176
      %v12178 = vpop.f32.mrf.mxu0
      %v12179 = vpop.f32.mrf.mxu0
      %v12180 = vadd.f32 %v11883, %v12179
      %v12181 = vpop.f32.mrf.mxu0
      %12182 = vmatprep.mubr.bf16.mxu0 0
      %12183 = vmatmul.mubr.bf16.gmra.mxu0 %v12090
      %v12184 = vpop.f32.mrf.mxu0
      %v12185 = vadd.f32 %v11888, %v12184
      %v12186 = vpop.f32.mrf.mxu0
      %v12187 = vpop.f32.mrf.mxu0
      %v12188 = vadd.f32 %v11891, %v12187
      %v12189 = vpop.f32.mrf.mxu0
      %12190 = vmatprep.mubr.bf16.mxu0 0
      %12191 = vmatmul.mubr.bf16.gmra.mxu0 %v12093
      %v12192 = vpop.f32.mrf.mxu0
      %v12193 = vadd.f32 %v11896, %v12192
      %v12194 = vpop.f32.mrf.mxu0
      %v12195 = vpop.f32.mrf.mxu0
      %v12196 = vadd.f32 %v11899, %v12195
      %v12197 = vpop.f32.mrf.mxu0
      %12198 = vmatprep.mubr.bf16.mxu0 0
      %12199 = vmatmul.mubr.bf16.gmra.mxu0 %v12096
      %v12200 = vpop.f32.mrf.mxu0
      %v12201 = vadd.f32 %v11904, %v12200
      %v12202 = vpop.f32.mrf.mxu0
      %v12203 = vpop.f32.mrf.mxu0
      %v12204 = vadd.f32 %v11907, %v12203
      %v12205 = vpop.f32.mrf.mxu0
      %12206 = vmatprep.mubr.bf16.mxu0 0
      %12207 = vmatmul.mubr.bf16.gmra.mxu0 %v12099
      %v12208 = vpop.f32.mrf.mxu0
      %v12209 = vadd.f32 %v11912, %v12208
      %v12210 = vpop.f32.mrf.mxu0
      %v12211 = vpop.f32.mrf.mxu0
      %v12212 = vadd.f32 %v11915, %v12211
      %v12213 = vpop.f32.mrf.mxu0
      %12214 = vmatprep.mubr.bf16.mxu0 0
      %12215 = vmatmul.mubr.bf16.gmra.mxu0 %v12102
      %v12216 = vpop.f32.mrf.mxu0
      %v12217 = vadd.f32 %v11920, %v12216
      %v12218 = vpop.f32.mrf.mxu0
      %v12219 = vpop.f32.mrf.mxu0
      %v12220 = vadd.f32 %v11923, %v12219
      %v12221 = vpop.f32.mrf.mxu0
      %12222 = vmatprep.mubr.bf16.mxu0 0
      %12223 = vmatmul.mubr.bf16.gmra.mxu0 %v12105
      %v12224 = vpop.f32.mrf.mxu0
      %v12225 = vadd.f32 %v11928, %v12224
      %v12226 = vpop.f32.mrf.mxu0
      %v12227 = vpop.f32.mrf.mxu0
      %v12228 = vadd.f32 %v11931, %v12227
      %v12229 = vpop.f32.mrf.mxu0
      %12230 = vmatprep.mubr.bf16.mxu0 0
      %12231 = vmatmul.mubr.bf16.gmra.mxu0 %v12108
      %v12232 = vpop.f32.mrf.mxu0
      %v12233 = vadd.f32 %v11936, %v12232
      %v12234 = vpop.f32.mrf.mxu0
      %v12235 = vpop.f32.mrf.mxu0
      %v12236 = vadd.f32 %v11939, %v12235
      %v12237 = vpop.f32.mrf.mxu0
      %12238 = vmatprep.mubr.bf16.mxu0 0
      %12239 = vmatmul.mubr.bf16.gmra.mxu0 %v12111
      %v12240 = vpop.f32.mrf.mxu0
      %v12241 = vadd.f32 %v11944, %v12240
      %v12242 = vpop.f32.mrf.mxu0
      %v12243 = vpop.f32.mrf.mxu0
      %v12244 = vadd.f32 %v11947, %v12243
      %v12245 = vpop.f32.mrf.mxu0
      %12246 = vmatprep.mubr.bf16.mxu0 0
      %12247 = vmatmul.mubr.bf16.gmra.mxu0 %v12114
      %v12248 = vpop.f32.mrf.mxu0
      %v12249 = vadd.f32 %v11952, %v12248
      %v12250 = vpop.f32.mrf.mxu0
      %v12251 = vpop.f32.mrf.mxu0
      %v12252 = vadd.f32 %v11955, %v12251
      %v12253 = vpop.f32.mrf.mxu0
      %12254 = vmatprep.mubr.bf16.mxu0 0
      %12255 = vmatmul.mubr.bf16.gmra.mxu0 %v12117
      %v12256 = vpop.f32.mrf.mxu0
      %v12257 = vadd.f32 %v11960, %v12256
      %v12258 = vpop.f32.mrf.mxu0
      %v12259 = vpop.f32.mrf.mxu0
      %v12260 = vadd.f32 %v11963, %v12259
      %v12261 = vpop.f32.mrf.mxu0
      %12262 = vmatprep.mubr.bf16.mxu0 0
      %12263 = vmatmul.mubr.bf16.gmra.mxu0 %v12120
      %v12264 = vpop.f32.mrf.mxu0
      %v12265 = vadd.f32 %v11968, %v12264
      %v12266 = vpop.f32.mrf.mxu0
      %v12267 = vpop.f32.mrf.mxu0
      %v12268 = vadd.f32 %v11971, %v12267
      %v12269 = vpop.f32.mrf.mxu0
      %12270 = vmatprep.mubr.bf16.mxu0 0
      %12271 = vmatmul.mubr.bf16.gmra.mxu0 %v12123
      %v12272 = vpop.f32.mrf.mxu0
      %v12273 = vadd.f32 %v11976, %v12272
      %v12274 = vpop.f32.mrf.mxu0
      %v12275 = vpop.f32.mrf.mxu0
      %v12276 = vadd.f32 %v11979, %v12275
      %v12277 = vpop.f32.mrf.mxu0
      %12278 = vmatprep.mubr.bf16.mxu0 0
      %12279 = vmatmul.mubr.bf16.gmra.mxu0 %v12126
      %v12280 = vpop.f32.mrf.mxu0
      %v12281 = vadd.f32 %v11984, %v12280
      %v12282 = vpop.f32.mrf.mxu0
      %v12283 = vpop.f32.mrf.mxu0
      %v12284 = vadd.f32 %v11987, %v12283
      %v12285 = vpop.f32.mrf.mxu0
      %12286 = vmatprep.mubr.bf16.mxu0 0
      %12287 = vmatmul.mubr.bf16.gmra.mxu0 %v12129
      %v12288 = vpop.f32.mrf.mxu0
      %v12289 = vadd.f32 %v11992, %v12288
      %v12290 = vpop.f32.mrf.mxu0
      %v12291 = vpop.f32.mrf.mxu0
      %v12292 = vadd.f32 %v11995, %v12291
      %v12293 = vpop.f32.mrf.mxu0
      %12294 = vdwg.mxu0
      %v12295 = vld [vmem:[%s10017] sm:$0xf]
      %v12296 = vld [vmem:[%s10017 + $0x4] sm:$0xf]
      %v12297 = vld [vmem:[%s10017 + $0x8] sm:$0xf]
      %v12298 = vld [vmem:[%s10017 + $0xc] sm:$0xf]
      %v12299 = vld [vmem:[%s10017 + $0x10] sm:$0xf]
      %v12300 = vld [vmem:[%s10017 + $0x14] sm:$0xf]
      %v12301 = vld [vmem:[%s10017 + $0x18] sm:$0xf]
      %v12302 = vld [vmem:[%s10017 + $0x1c] sm:$0xf]
      %v12303 = vld [vmem:[%s10017 + $0x20] sm:$0xf]
      %v12304 = vld [vmem:[%s10017 + $0x24] sm:$0xf]
      %v12305 = vld [vmem:[%s10017 + $0x28] sm:$0xf]
      %v12306 = vld [vmem:[%s10017 + $0x2c] sm:$0xf]
      %v12307 = vld [vmem:[%s10017 + $0x30] sm:$0xf]
      %v12308 = vld [vmem:[%s10017 + $0x34] sm:$0xf]
      %v12309 = vld [vmem:[%s10017 + $0x38] sm:$0xf]
      %v12310 = vld [vmem:[%s10017 + $0x3c] sm:$0xf]
      %v12311 = vld [vmem:[%s10017 + $0x40] sm:$0xf]
      %v12312 = vld [vmem:[%s10017 + $0x44] sm:$0xf]
      %v12313 = vld [vmem:[%s10017 + $0x48] sm:$0xf]
      %v12314 = vld [vmem:[%s10017 + $0x4c] sm:$0xf]
      %v12315 = vld [vmem:[%s10017 + $0x50] sm:$0xf]
      %v12316 = vld [vmem:[%s10017 + $0x54] sm:$0xf]
      %v12317 = vld [vmem:[%s10017 + $0x58] sm:$0xf]
      %v12318 = vld [vmem:[%s10017 + $0x5c] sm:$0xf]
      %v12319 = vld [vmem:[%s10017 + $0x60] sm:$0xf]
      %v12320 = vld [vmem:[%s10017 + $0x64] sm:$0xf]
      %v12321 = vld [vmem:[%s10017 + $0x68] sm:$0xf]
      %v12322 = vld [vmem:[%s10017 + $0x6c] sm:$0xf]
      %v12323 = vld [vmem:[%s10017 + $0x70] sm:$0xf]
      %v12324 = vld [vmem:[%s10017 + $0x74] sm:$0xf]
      %v12325 = vld [vmem:[%s10017 + $0x78] sm:$0xf]
      %v12326 = vld [vmem:[%s10017 + $0x7c] sm:$0xf]
      %s12327 = scalar_lea.vmem %s7, 16
      %v12328 = vld [vmem:[%s12327] sm:$0xf]
      %v12329 = vld [vmem:[%s12327 + $0x4] sm:$0x3]
      %v12362 = vunpack.c.l.b16 %v12295
      %v12363 = vunpack.c.l.b16 %v12296
      %v12364 = vunpack.c.l.b16 %v12297
      %v12365 = vunpack.c.l.b16 %v12298
      %v12366 = vunpack.c.l.b16 %v12299
      %v12367 = vunpack.c.l.b16 %v12300
      %v12368 = vunpack.c.l.b16 %v12301
      %v12369 = vunpack.c.l.b16 %v12302
      %v12370 = vunpack.c.l.b16 %v12303
      %v12371 = vunpack.c.l.b16 %v12304
      %v12372 = vunpack.c.l.b16 %v12305
      %v12373 = vunpack.c.l.b16 %v12306
      %v12374 = vunpack.c.l.b16 %v12307
      %v12375 = vunpack.c.l.b16 %v12308
      %v12376 = vunpack.c.l.b16 %v12309
      %v12377 = vunpack.c.l.b16 %v12310
      %v12378 = vunpack.c.l.b16 %v12311
      %v12379 = vunpack.c.l.b16 %v12312
      %v12380 = vunpack.c.l.b16 %v12313
      %v12381 = vunpack.c.l.b16 %v12314
      %v12382 = vunpack.c.l.b16 %v12315
      %v12383 = vunpack.c.l.b16 %v12316
      %v12384 = vunpack.c.l.b16 %v12317
      %v12385 = vunpack.c.l.b16 %v12318
      %v12386 = vunpack.c.l.b16 %v12319
      %v12387 = vunpack.c.l.b16 %v12320
      %v12388 = vunpack.c.l.b16 %v12321
      %v12389 = vunpack.c.l.b16 %v12322
      %v12390 = vunpack.c.l.b16 %v12323
      %v12391 = vunpack.c.l.b16 %v12324
      %v12392 = vunpack.c.l.b16 %v12325
      %v12393 = vunpack.c.l.b16 %v12326
      %v12394 = vpack.c.b16 %v12363, %v12362
      %v12395 = vpack.c.b16 %v12365, %v12364
      %v12396 = vpack.c.b16 %v12367, %v12366
      %v12397 = vpack.c.b16 %v12369, %v12368
      %v12398 = vpack.c.b16 %v12371, %v12370
      %v12399 = vpack.c.b16 %v12373, %v12372
      %v12400 = vpack.c.b16 %v12375, %v12374
      %v12401 = vpack.c.b16 %v12377, %v12376
      %v12402 = vpack.c.b16 %v12379, %v12378
      %v12403 = vpack.c.b16 %v12381, %v12380
      %v12404 = vpack.c.b16 %v12383, %v12382
      %v12405 = vpack.c.b16 %v12385, %v12384
      %v12406 = vpack.c.b16 %v12387, %v12386
      %v12407 = vpack.c.b16 %v12389, %v12388
      %v12408 = vpack.c.b16 %v12391, %v12390
      %v12409 = vpack.c.b16 %v12393, %v12392
      %v12412 = vunpack.c.l.b16 %v12328
      %v12413 = vunpack.c.l.b16 %v12329
      %v12414 = vpack.c.b16 %v12413, %v12412
      %v12416 = vsel %vm9507, %v12394, 0
      %v12419 = vsel %vm9507, %v12395, 0
      %v12422 = vsel %vm9507, %v12396, 0
      %v12425 = vsel %vm9507, %v12397, 0
      %v12428 = vsel %vm9507, %v12398, 0
      %v12431 = vsel %vm9507, %v12399, 0
      %v12434 = vsel %vm9507, %v12400, 0
      %v12437 = vsel %vm9507, %v12401, 0
      %v12440 = vsel %vm9507, %v12402, 0
      %v12443 = vsel %vm9507, %v12403, 0
      %v12446 = vsel %vm9507, %v12404, 0
      %v12449 = vsel %vm9507, %v12405, 0
      %v12452 = vsel %vm9507, %v12406, 0
      %v12455 = vsel %vm9507, %v12407, 0
      %v12458 = vsel %vm9507, %v12408, 0
      %v12461 = vsel %vm9507, %v12409, 0
      %v12464 = vsel %vm4197, %v12414, 0
      %12466 = vmatprep.subr.bf16.mxu0 0
      %12467 = vmatpush1.bf16.msra.mxu0 0
      %12468 = vmatprep.subr.bf16.mxu0 0
      %12469 = vmatpush1.bf16.msra.mxu0 0
      %12470 = vmatprep.subr.bf16.mxu0 0
      %12471 = vmatpush1.bf16.msra.mxu0 0
      %12472 = vmatprep.subr.bf16.mxu0 0
      %12473 = vmatpush1.bf16.msra.mxu0 0
      %12474 = vmatprep.subr.bf16.mxu0 0
      %12475 = vmatpush1.bf16.msra.mxu0 0
      %12476 = vmatprep.subr.bf16.mxu0 0
      %12477 = vmatpush1.bf16.msra.mxu0 0
      %12478 = vmatprep.subr.bf16.mxu0 0
      %12479 = vmatpush1.bf16.msra.mxu0 0
      %12480 = vmatprep.subr.bf16.mxu0 0
      %12481 = vmatpush1.bf16.msra.mxu0 %v12464
      %12482 = vmatprep.subr.bf16.mxu0 0
      %12483 = vmatpush2.bf16.msra.mxu0 0
      %12484 = vmatprep.subr.bf16.mxu0 0
      %12485 = vmatpush2.bf16.msra.mxu0 0
      %12486 = vmatprep.subr.bf16.mxu0 0
      %12487 = vmatpush2.bf16.msra.mxu0 0
      %12488 = vmatprep.subr.bf16.mxu0 0
      %12489 = vmatpush2.bf16.msra.mxu0 0
      %12490 = vmatprep.subr.bf16.mxu0 0
      %12491 = vmatpush2.bf16.msra.mxu0 0
      %12492 = vmatprep.subr.bf16.mxu0 0
      %12493 = vmatpush2.bf16.msra.mxu0 0
      %12494 = vmatprep.subr.bf16.mxu0 0
      %12495 = vmatpush2.bf16.msra.mxu0 0
      %12496 = vmatprep.subr.bf16.mxu0 0
      %12497 = vmatpush2.bf16.msra.mxu0 0
      %12498 = vmatprep.mubr.bf16.mxu0 0
      %12499 = vmatmul.mubr.bf16.gmra.mxu0 %v12416
      %v12500 = vpop.f32.mrf.mxu0
      %v12501 = vadd.f32 0.0, %v12500
      %v12502 = vpop.f32.mrf.mxu0
      %v12503 = vpop.f32.mrf.mxu0
      %v12504 = vadd.f32 0.0, %v12503
      %v12505 = vpop.f32.mrf.mxu0
      %12506 = vmatprep.mubr.bf16.mxu0 0
      %12507 = vmatmul.mubr.bf16.gmra.mxu0 %v12419
      %v12508 = vpop.f32.mrf.mxu0
      %v12509 = vadd.f32 0.0, %v12508
      %v12510 = vpop.f32.mrf.mxu0
      %v12511 = vpop.f32.mrf.mxu0
      %v12512 = vadd.f32 0.0, %v12511
      %v12513 = vpop.f32.mrf.mxu0
      %12514 = vmatprep.mubr.bf16.mxu0 0
      %12515 = vmatmul.mubr.bf16.gmra.mxu0 %v12422
      %v12516 = vpop.f32.mrf.mxu0
      %v12517 = vadd.f32 0.0, %v12516
      %v12518 = vpop.f32.mrf.mxu0
      %v12519 = vpop.f32.mrf.mxu0
      %v12520 = vadd.f32 0.0, %v12519
      %v12521 = vpop.f32.mrf.mxu0
      %12522 = vmatprep.mubr.bf16.mxu0 0
      %12523 = vmatmul.mubr.bf16.gmra.mxu0 %v12425
      %v12524 = vpop.f32.mrf.mxu0
      %v12525 = vadd.f32 0.0, %v12524
      %v12526 = vpop.f32.mrf.mxu0
      %v12527 = vpop.f32.mrf.mxu0
      %v12528 = vadd.f32 0.0, %v12527
      %v12529 = vpop.f32.mrf.mxu0
      %12530 = vmatprep.mubr.bf16.mxu0 0
      %12531 = vmatmul.mubr.bf16.gmra.mxu0 %v12428
      %v12532 = vpop.f32.mrf.mxu0
      %v12533 = vadd.f32 0.0, %v12532
      %v12534 = vpop.f32.mrf.mxu0
      %v12535 = vpop.f32.mrf.mxu0
      %v12536 = vadd.f32 0.0, %v12535
      %v12537 = vpop.f32.mrf.mxu0
      %12538 = vmatprep.mubr.bf16.mxu0 0
      %12539 = vmatmul.mubr.bf16.gmra.mxu0 %v12431
      %v12540 = vpop.f32.mrf.mxu0
      %v12541 = vadd.f32 0.0, %v12540
      %v12542 = vpop.f32.mrf.mxu0
      %v12543 = vpop.f32.mrf.mxu0
      %v12544 = vadd.f32 0.0, %v12543
      %v12545 = vpop.f32.mrf.mxu0
      %12546 = vmatprep.mubr.bf16.mxu0 0
      %12547 = vmatmul.mubr.bf16.gmra.mxu0 %v12434
      %v12548 = vpop.f32.mrf.mxu0
      %v12549 = vadd.f32 0.0, %v12548
      %v12550 = vpop.f32.mrf.mxu0
      %v12551 = vpop.f32.mrf.mxu0
      %v12552 = vadd.f32 0.0, %v12551
      %v12553 = vpop.f32.mrf.mxu0
      %12554 = vmatprep.mubr.bf16.mxu0 0
      %12555 = vmatmul.mubr.bf16.gmra.mxu0 %v12437
      %v12556 = vpop.f32.mrf.mxu0
      %v12557 = vadd.f32 0.0, %v12556
      %v12558 = vpop.f32.mrf.mxu0
      %v12559 = vpop.f32.mrf.mxu0
      %v12560 = vadd.f32 0.0, %v12559
      %v12561 = vpop.f32.mrf.mxu0
      %12562 = vmatprep.mubr.bf16.mxu0 0
      %12563 = vmatmul.mubr.bf16.gmra.mxu0 %v12440
      %v12564 = vpop.f32.mrf.mxu0
      %v12565 = vadd.f32 0.0, %v12564
      %v12566 = vpop.f32.mrf.mxu0
      %v12567 = vpop.f32.mrf.mxu0
      %v12568 = vadd.f32 0.0, %v12567
      %v12569 = vpop.f32.mrf.mxu0
      %12570 = vmatprep.mubr.bf16.mxu0 0
      %12571 = vmatmul.mubr.bf16.gmra.mxu0 %v12443
      %v12572 = vpop.f32.mrf.mxu0
      %v12573 = vadd.f32 0.0, %v12572
      %v12574 = vpop.f32.mrf.mxu0
      %v12575 = vpop.f32.mrf.mxu0
      %v12576 = vadd.f32 0.0, %v12575
      %v12577 = vpop.f32.mrf.mxu0
      %12578 = vmatprep.mubr.bf16.mxu0 0
      %12579 = vmatmul.mubr.bf16.gmra.mxu0 %v12446
      %v12580 = vpop.f32.mrf.mxu0
      %v12581 = vadd.f32 0.0, %v12580
      %v12582 = vpop.f32.mrf.mxu0
      %v12583 = vpop.f32.mrf.mxu0
      %v12584 = vadd.f32 0.0, %v12583
      %v12585 = vpop.f32.mrf.mxu0
      %12586 = vmatprep.mubr.bf16.mxu0 0
      %12587 = vmatmul.mubr.bf16.gmra.mxu0 %v12449
      %v12588 = vpop.f32.mrf.mxu0
      %v12589 = vadd.f32 0.0, %v12588
      %v12590 = vpop.f32.mrf.mxu0
      %v12591 = vpop.f32.mrf.mxu0
      %v12592 = vadd.f32 0.0, %v12591
      %v12593 = vpop.f32.mrf.mxu0
      %12594 = vmatprep.mubr.bf16.mxu0 0
      %12595 = vmatmul.mubr.bf16.gmra.mxu0 %v12452
      %v12596 = vpop.f32.mrf.mxu0
      %v12597 = vadd.f32 0.0, %v12596
      %v12598 = vpop.f32.mrf.mxu0
      %v12599 = vpop.f32.mrf.mxu0
      %v12600 = vadd.f32 0.0, %v12599
      %v12601 = vpop.f32.mrf.mxu0
      %12602 = vmatprep.mubr.bf16.mxu0 0
      %12603 = vmatmul.mubr.bf16.gmra.mxu0 %v12455
      %v12604 = vpop.f32.mrf.mxu0
      %v12605 = vadd.f32 0.0, %v12604
      %v12606 = vpop.f32.mrf.mxu0
      %v12607 = vpop.f32.mrf.mxu0
      %v12608 = vadd.f32 0.0, %v12607
      %v12609 = vpop.f32.mrf.mxu0
      %12610 = vmatprep.mubr.bf16.mxu0 0
      %12611 = vmatmul.mubr.bf16.gmra.mxu0 %v12458
      %v12612 = vpop.f32.mrf.mxu0
      %v12613 = vadd.f32 0.0, %v12612
      %v12614 = vpop.f32.mrf.mxu0
      %v12615 = vpop.f32.mrf.mxu0
      %v12616 = vadd.f32 0.0, %v12615
      %v12617 = vpop.f32.mrf.mxu0
      %12618 = vmatprep.mubr.bf16.mxu0 0
      %12619 = vmatmul.mubr.bf16.gmra.mxu0 %v12461
      %v12620 = vpop.f32.mrf.mxu0
      %v12621 = vadd.f32 0.0, %v12620
      %v12622 = vpop.f32.mrf.mxu0
      %v12623 = vpop.f32.mrf.mxu0
      %v12624 = vadd.f32 0.0, %v12623
      %v12625 = vpop.f32.mrf.mxu0
      %12626 = vdwg.mxu0
      %v12627 = vadd.f32 %v12169, %v12501
      %v12628 = vadd.f32 %v12172, %v12504
      %v12629 = vadd.f32 %v12177, %v12509
      %v12630 = vadd.f32 %v12180, %v12512
      %v12631 = vadd.f32 %v12185, %v12517
      %v12632 = vadd.f32 %v12188, %v12520
      %v12633 = vadd.f32 %v12193, %v12525
      %v12634 = vadd.f32 %v12196, %v12528
      %v12635 = vadd.f32 %v12201, %v12533
      %v12636 = vadd.f32 %v12204, %v12536
      %v12637 = vadd.f32 %v12209, %v12541
      %v12638 = vadd.f32 %v12212, %v12544
      %v12639 = vadd.f32 %v12217, %v12549
      %v12640 = vadd.f32 %v12220, %v12552
      %v12641 = vadd.f32 %v12225, %v12557
      %v12642 = vadd.f32 %v12228, %v12560
      %v12643 = vadd.f32 %v12233, %v12565
      %v12644 = vadd.f32 %v12236, %v12568
      %v12645 = vadd.f32 %v12241, %v12573
      %v12646 = vadd.f32 %v12244, %v12576
      %v12647 = vadd.f32 %v12249, %v12581
      %v12648 = vadd.f32 %v12252, %v12584
      %v12649 = vadd.f32 %v12257, %v12589
      %v12650 = vadd.f32 %v12260, %v12592
      %v12651 = vadd.f32 %v12265, %v12597
      %v12652 = vadd.f32 %v12268, %v12600
      %v12653 = vadd.f32 %v12273, %v12605
      %v12654 = vadd.f32 %v12276, %v12608
      %v12655 = vadd.f32 %v12281, %v12613
      %v12656 = vadd.f32 %v12284, %v12616
      %v12657 = vadd.f32 %v12289, %v12621
      %v12658 = vadd.f32 %v12292, %v12624
      %v12659 = vld [vmem:[%s8] sm:$0x1]
      %v12661 = vlaneseq
      %v12662 = vshrl.u32 %v12661, 7
      %v12663 = vsub.s32 0, %v12662
      %v12664 = vrot.slane %v12659, %v12663
      %v12666 = vmul.f32 %v12627, %v12664
      %v12667 = vmul.f32 %v12628, %v12664
      %v12668 = vmul.f32 %v12629, %v12664
      %v12669 = vmul.f32 %v12630, %v12664
      %v12670 = vmul.f32 %v12631, %v12664
      %v12671 = vmul.f32 %v12632, %v12664
      %v12672 = vmul.f32 %v12633, %v12664
      %v12673 = vmul.f32 %v12634, %v12664
      %v12674 = vmul.f32 %v12635, %v12664
      %v12675 = vmul.f32 %v12636, %v12664
      %v12676 = vmul.f32 %v12637, %v12664
      %v12677 = vmul.f32 %v12638, %v12664
      %v12678 = vmul.f32 %v12639, %v12664
      %v12679 = vmul.f32 %v12640, %v12664
      %v12680 = vmul.f32 %v12641, %v12664
      %v12681 = vmul.f32 %v12642, %v12664
      %v12682 = vmul.f32 %v12643, %v12664
      %v12683 = vmul.f32 %v12644, %v12664
      %v12684 = vmul.f32 %v12645, %v12664
      %v12685 = vmul.f32 %v12646, %v12664
      %v12686 = vmul.f32 %v12647, %v12664
      %v12687 = vmul.f32 %v12648, %v12664
      %v12688 = vmul.f32 %v12649, %v12664
      %v12689 = vmul.f32 %v12650, %v12664
      %v12690 = vmul.f32 %v12651, %v12664
      %v12691 = vmul.f32 %v12652, %v12664
      %v12692 = vmul.f32 %v12653, %v12664
      %v12693 = vmul.f32 %v12654, %v12664
      %v12694 = vmul.f32 %v12655, %v12664
      %v12695 = vmul.f32 %v12656, %v12664
      %v12696 = vmul.f32 %v12657, %v12664
      %v12697 = vmul.f32 %v12658, %v12664
      %v12698 = vld [vmem:[%s9] sm:$0x1]
      %v12700 = vlaneseq
      %v12701 = vshrl.u32 %v12700, 7
      %v12702 = vsub.s32 0, %v12701
      %v12703 = vrot.slane %v12698, %v12702
      %v12705 = vadd.f32 %v12666, %v12703
      %v12706 = vadd.f32 %v12667, %v12703
      %v12707 = vadd.f32 %v12668, %v12703
      %v12708 = vadd.f32 %v12669, %v12703
      %v12709 = vadd.f32 %v12670, %v12703
      %v12710 = vadd.f32 %v12671, %v12703
      %v12711 = vadd.f32 %v12672, %v12703
      %v12712 = vadd.f32 %v12673, %v12703
      %v12713 = vadd.f32 %v12674, %v12703
      %v12714 = vadd.f32 %v12675, %v12703
      %v12715 = vadd.f32 %v12676, %v12703
      %v12716 = vadd.f32 %v12677, %v12703
      %v12717 = vadd.f32 %v12678, %v12703
      %v12718 = vadd.f32 %v12679, %v12703
      %v12719 = vadd.f32 %v12680, %v12703
      %v12720 = vadd.f32 %v12681, %v12703
      %v12721 = vadd.f32 %v12682, %v12703
      %v12722 = vadd.f32 %v12683, %v12703
      %v12723 = vadd.f32 %v12684, %v12703
      %v12724 = vadd.f32 %v12685, %v12703
      %v12725 = vadd.f32 %v12686, %v12703
      %v12726 = vadd.f32 %v12687, %v12703
      %v12727 = vadd.f32 %v12688, %v12703
      %v12728 = vadd.f32 %v12689, %v12703
      %v12729 = vadd.f32 %v12690, %v12703
      %v12730 = vadd.f32 %v12691, %v12703
      %v12731 = vadd.f32 %v12692, %v12703
      %v12732 = vadd.f32 %v12693, %v12703
      %v12733 = vadd.f32 %v12694, %v12703
      %v12734 = vadd.f32 %v12695, %v12703
      %v12735 = vadd.f32 %v12696, %v12703
      %v12736 = vadd.f32 %v12697, %v12703
      %v12737 = vmax.f32 %v12705, 0.0
      %v12738 = vmax.f32 %v12706, 0.0
      %v12739 = vmax.f32 %v12707, 0.0
      %v12740 = vmax.f32 %v12708, 0.0
      %v12741 = vmax.f32 %v12709, 0.0
      %v12742 = vmax.f32 %v12710, 0.0
      %v12743 = vmax.f32 %v12711, 0.0
      %v12744 = vmax.f32 %v12712, 0.0
      %v12745 = vmax.f32 %v12713, 0.0
      %v12746 = vmax.f32 %v12714, 0.0
      %v12747 = vmax.f32 %v12715, 0.0
      %v12748 = vmax.f32 %v12716, 0.0
      %v12749 = vmax.f32 %v12717, 0.0
      %v12750 = vmax.f32 %v12718, 0.0
      %v12751 = vmax.f32 %v12719, 0.0
      %v12752 = vmax.f32 %v12720, 0.0
      %v12753 = vmax.f32 %v12721, 0.0
      %v12754 = vmax.f32 %v12722, 0.0
      %v12755 = vmax.f32 %v12723, 0.0
      %v12756 = vmax.f32 %v12724, 0.0
      %v12757 = vmax.f32 %v12725, 0.0
      %v12758 = vmax.f32 %v12726, 0.0
      %v12759 = vmax.f32 %v12727, 0.0
      %v12760 = vmax.f32 %v12728, 0.0
      %v12761 = vmax.f32 %v12729, 0.0
      %v12762 = vmax.f32 %v12730, 0.0
      %v12763 = vmax.f32 %v12731, 0.0
      %v12764 = vmax.f32 %v12732, 0.0
      %v12765 = vmax.f32 %v12733, 0.0
      %v12766 = vmax.f32 %v12734, 0.0
      %v12767 = vmax.f32 %v12735, 0.0
      %v12768 = vmax.f32 %v12736, 0.0
      %v12769 = vpack.c.bf16 %v12738, %v12737
      %v12770 = vpack.c.bf16 %v12740, %v12739
      %v12771 = vpack.c.bf16 %v12742, %v12741
      %v12772 = vpack.c.bf16 %v12744, %v12743
      %v12773 = vpack.c.bf16 %v12746, %v12745
      %v12774 = vpack.c.bf16 %v12748, %v12747
      %v12775 = vpack.c.bf16 %v12750, %v12749
      %v12776 = vpack.c.bf16 %v12752, %v12751
      %v12777 = vpack.c.bf16 %v12754, %v12753
      %v12778 = vpack.c.bf16 %v12756, %v12755
      %v12779 = vpack.c.bf16 %v12758, %v12757
      %v12780 = vpack.c.bf16 %v12760, %v12759
      %v12781 = vpack.c.bf16 %v12762, %v12761
      %v12782 = vpack.c.bf16 %v12764, %v12763
      %v12783 = vpack.c.bf16 %v12766, %v12765
      %v12784 = vpack.c.bf16 %v12768, %v12767
      %v12785 = vld [vmem:[%s10] sm:$0x3]
      %vm12786 = vcmask 31744
      %v12788 = vsel %vm12786, %v12769, 0
      %v12791 = vsel %vm12786, %v12770, 0
      %v12794 = vsel %vm12786, %v12771, 0
      %v12797 = vsel %vm12786, %v12772, 0
      %v12800 = vsel %vm12786, %v12773, 0
      %v12803 = vsel %vm12786, %v12774, 0
      %v12806 = vsel %vm12786, %v12775, 0
      %v12809 = vsel %vm12786, %v12776, 0
      %v12812 = vsel %vm12786, %v12777, 0
      %v12815 = vsel %vm12786, %v12778, 0
      %v12818 = vsel %vm12786, %v12779, 0
      %v12821 = vsel %vm12786, %v12780, 0
      %v12824 = vsel %vm12786, %v12781, 0
      %v12827 = vsel %vm12786, %v12782, 0
      %v12830 = vsel %vm12786, %v12783, 0
      %v12833 = vsel %vm12786, %v12784, 0
      %vm12835 = vcmask 1041408
      %v12837 = vsel %vm12835, %v12785, 0
      %12839 = vmatprep.subr.bf16.mxu0 0
      %12840 = vmatpush1.bf16.msra.mxu0 0
      %12841 = vmatprep.subr.bf16.mxu0 0
      %12842 = vmatpush1.bf16.msra.mxu0 0
      %12843 = vmatprep.subr.bf16.mxu0 0
      %12844 = vmatpush1.bf16.msra.mxu0 0
      %12845 = vmatprep.subr.bf16.mxu0 0
      %12846 = vmatpush1.bf16.msra.mxu0 0
      %12847 = vmatprep.subr.bf16.mxu0 0
      %12848 = vmatpush1.bf16.msra.mxu0 0
      %12849 = vmatprep.subr.bf16.mxu0 0
      %12850 = vmatpush1.bf16.msra.mxu0 0
      %12851 = vmatprep.subr.bf16.mxu0 0
      %12852 = vmatpush1.bf16.msra.mxu0 0
      %12853 = vmatprep.subr.bf16.mxu0 0
      %12854 = vmatpush1.bf16.msra.mxu0 %v12837
      %12855 = vmatprep.subr.bf16.mxu0 0
      %12856 = vmatpush2.bf16.msra.mxu0 0
      %12857 = vmatprep.subr.bf16.mxu0 0
      %12858 = vmatpush2.bf16.msra.mxu0 0
      %12859 = vmatprep.subr.bf16.mxu0 0
      %12860 = vmatpush2.bf16.msra.mxu0 0
      %12861 = vmatprep.subr.bf16.mxu0 0
      %12862 = vmatpush2.bf16.msra.mxu0 0
      %12863 = vmatprep.subr.bf16.mxu0 0
      %12864 = vmatpush2.bf16.msra.mxu0 0
      %12865 = vmatprep.subr.bf16.mxu0 0
      %12866 = vmatpush2.bf16.msra.mxu0 0
      %12867 = vmatprep.subr.bf16.mxu0 0
      %12868 = vmatpush2.bf16.msra.mxu0 0
      %12869 = vmatprep.subr.bf16.mxu0 0
      %12870 = vmatpush2.bf16.msra.mxu0 0
      %12871 = vmatprep.mubr.bf16.mxu0 0
      %12872 = vmatmul.mubr.bf16.gmra.mxu0 %v12788
      %v12873 = vpop.f32.mrf.mxu0
      %v12874 = vadd.f32 0.0, %v12873
      %v12875 = vpop.f32.mrf.mxu0
      %v12876 = vpop.f32.mrf.mxu0
      %v12877 = vadd.f32 0.0, %v12876
      %v12878 = vpop.f32.mrf.mxu0
      %12879 = vmatprep.mubr.bf16.mxu0 0
      %12880 = vmatmul.mubr.bf16.gmra.mxu0 %v12791
      %v12881 = vpop.f32.mrf.mxu0
      %v12882 = vadd.f32 0.0, %v12881
      %v12883 = vpop.f32.mrf.mxu0
      %v12884 = vpop.f32.mrf.mxu0
      %v12885 = vadd.f32 0.0, %v12884
      %v12886 = vpop.f32.mrf.mxu0
      %12887 = vmatprep.mubr.bf16.mxu0 0
      %12888 = vmatmul.mubr.bf16.gmra.mxu0 %v12794
      %v12889 = vpop.f32.mrf.mxu0
      %v12890 = vadd.f32 0.0, %v12889
      %v12891 = vpop.f32.mrf.mxu0
      %v12892 = vpop.f32.mrf.mxu0
      %v12893 = vadd.f32 0.0, %v12892
      %v12894 = vpop.f32.mrf.mxu0
      %12895 = vmatprep.mubr.bf16.mxu0 0
      %12896 = vmatmul.mubr.bf16.gmra.mxu0 %v12797
      %v12897 = vpop.f32.mrf.mxu0
      %v12898 = vadd.f32 0.0, %v12897
      %v12899 = vpop.f32.mrf.mxu0
      %v12900 = vpop.f32.mrf.mxu0
      %v12901 = vadd.f32 0.0, %v12900
      %v12902 = vpop.f32.mrf.mxu0
      %12903 = vmatprep.mubr.bf16.mxu0 0
      %12904 = vmatmul.mubr.bf16.gmra.mxu0 %v12800
      %v12905 = vpop.f32.mrf.mxu0
      %v12906 = vadd.f32 0.0, %v12905
      %v12907 = vpop.f32.mrf.mxu0
      %v12908 = vpop.f32.mrf.mxu0
      %v12909 = vadd.f32 0.0, %v12908
      %v12910 = vpop.f32.mrf.mxu0
      %12911 = vmatprep.mubr.bf16.mxu0 0
      %12912 = vmatmul.mubr.bf16.gmra.mxu0 %v12803
      %v12913 = vpop.f32.mrf.mxu0
      %v12914 = vadd.f32 0.0, %v12913
      %v12915 = vpop.f32.mrf.mxu0
      %v12916 = vpop.f32.mrf.mxu0
      %v12917 = vadd.f32 0.0, %v12916
      %v12918 = vpop.f32.mrf.mxu0
      %12919 = vmatprep.mubr.bf16.mxu0 0
      %12920 = vmatmul.mubr.bf16.gmra.mxu0 %v12806
      %v12921 = vpop.f32.mrf.mxu0
      %v12922 = vadd.f32 0.0, %v12921
      %v12923 = vpop.f32.mrf.mxu0
      %v12924 = vpop.f32.mrf.mxu0
      %v12925 = vadd.f32 0.0, %v12924
      %v12926 = vpop.f32.mrf.mxu0
      %12927 = vmatprep.mubr.bf16.mxu0 0
      %12928 = vmatmul.mubr.bf16.gmra.mxu0 %v12809
      %v12929 = vpop.f32.mrf.mxu0
      %v12930 = vadd.f32 0.0, %v12929
      %v12931 = vpop.f32.mrf.mxu0
      %v12932 = vpop.f32.mrf.mxu0
      %v12933 = vadd.f32 0.0, %v12932
      %v12934 = vpop.f32.mrf.mxu0
      %12935 = vmatprep.mubr.bf16.mxu0 0
      %12936 = vmatmul.mubr.bf16.gmra.mxu0 %v12812
      %v12937 = vpop.f32.mrf.mxu0
      %v12938 = vadd.f32 0.0, %v12937
      %v12939 = vpop.f32.mrf.mxu0
      %v12940 = vpop.f32.mrf.mxu0
      %v12941 = vadd.f32 0.0, %v12940
      %v12942 = vpop.f32.mrf.mxu0
      %12943 = vmatprep.mubr.bf16.mxu0 0
      %12944 = vmatmul.mubr.bf16.gmra.mxu0 %v12815
      %v12945 = vpop.f32.mrf.mxu0
      %v12946 = vadd.f32 0.0, %v12945
      %v12947 = vpop.f32.mrf.mxu0
      %v12948 = vpop.f32.mrf.mxu0
      %v12949 = vadd.f32 0.0, %v12948
      %v12950 = vpop.f32.mrf.mxu0
      %12951 = vmatprep.mubr.bf16.mxu0 0
      %12952 = vmatmul.mubr.bf16.gmra.mxu0 %v12818
      %v12953 = vpop.f32.mrf.mxu0
      %v12954 = vadd.f32 0.0, %v12953
      %v12955 = vpop.f32.mrf.mxu0
      %v12956 = vpop.f32.mrf.mxu0
      %v12957 = vadd.f32 0.0, %v12956
      %v12958 = vpop.f32.mrf.mxu0
      %12959 = vmatprep.mubr.bf16.mxu0 0
      %12960 = vmatmul.mubr.bf16.gmra.mxu0 %v12821
      %v12961 = vpop.f32.mrf.mxu0
      %v12962 = vadd.f32 0.0, %v12961
      %v12963 = vpop.f32.mrf.mxu0
      %v12964 = vpop.f32.mrf.mxu0
      %v12965 = vadd.f32 0.0, %v12964
      %v12966 = vpop.f32.mrf.mxu0
      %12967 = vmatprep.mubr.bf16.mxu0 0
      %12968 = vmatmul.mubr.bf16.gmra.mxu0 %v12824
      %v12969 = vpop.f32.mrf.mxu0
      %v12970 = vadd.f32 0.0, %v12969
      %v12971 = vpop.f32.mrf.mxu0
      %v12972 = vpop.f32.mrf.mxu0
      %v12973 = vadd.f32 0.0, %v12972
      %v12974 = vpop.f32.mrf.mxu0
      %12975 = vmatprep.mubr.bf16.mxu0 0
      %12976 = vmatmul.mubr.bf16.gmra.mxu0 %v12827
      %v12977 = vpop.f32.mrf.mxu0
      %v12978 = vadd.f32 0.0, %v12977
      %v12979 = vpop.f32.mrf.mxu0
      %v12980 = vpop.f32.mrf.mxu0
      %v12981 = vadd.f32 0.0, %v12980
      %v12982 = vpop.f32.mrf.mxu0
      %12983 = vmatprep.mubr.bf16.mxu0 0
      %12984 = vmatmul.mubr.bf16.gmra.mxu0 %v12830
      %v12985 = vpop.f32.mrf.mxu0
      %v12986 = vadd.f32 0.0, %v12985
      %v12987 = vpop.f32.mrf.mxu0
      %v12988 = vpop.f32.mrf.mxu0
      %v12989 = vadd.f32 0.0, %v12988
      %v12990 = vpop.f32.mrf.mxu0
      %12991 = vmatprep.mubr.bf16.mxu0 0
      %12992 = vmatmul.mubr.bf16.gmra.mxu0 %v12833
      %v12993 = vpop.f32.mrf.mxu0
      %v12994 = vadd.f32 0.0, %v12993
      %v12995 = vpop.f32.mrf.mxu0
      %v12996 = vpop.f32.mrf.mxu0
      %v12997 = vadd.f32 0.0, %v12996
      %v12998 = vpop.f32.mrf.mxu0
      %12999 = vdwg.mxu0
      %vm13000 = vcmask 15360
      %13001 = vst.msk [vmem:[%s386] sm:$0xff] %vm13000, %v12874
      %13002 = vst.msk [vmem:[%s386 + $0x8] sm:$0xff] %vm13000, %v12877
      %13003 = vst.msk [vmem:[%s386 + $0x10] sm:$0xff] %vm13000, %v12882
      %13004 = vst.msk [vmem:[%s386 + $0x18] sm:$0xff] %vm13000, %v12885
      %13005 = vst.msk [vmem:[%s386 + $0x20] sm:$0xff] %vm13000, %v12890
      %13006 = vst.msk [vmem:[%s386 + $0x28] sm:$0xff] %vm13000, %v12893
      %13007 = vst.msk [vmem:[%s386 + $0x30] sm:$0xff] %vm13000, %v12898
      %13008 = vst.msk [vmem:[%s386 + $0x38] sm:$0xff] %vm13000, %v12901
      %13009 = vst.msk [vmem:[%s386 + $0x40] sm:$0xff] %vm13000, %v12906
      %13010 = vst.msk [vmem:[%s386 + $0x48] sm:$0xff] %vm13000, %v12909
      %13011 = vst.msk [vmem:[%s386 + $0x50] sm:$0xff] %vm13000, %v12914
      %13012 = vst.msk [vmem:[%s386 + $0x58] sm:$0xff] %vm13000, %v12917
      %13013 = vst.msk [vmem:[%s386 + $0x60] sm:$0xff] %vm13000, %v12922
      %13014 = vst.msk [vmem:[%s386 + $0x68] sm:$0xff] %vm13000, %v12925
      %13015 = vst.msk [vmem:[%s386 + $0x70] sm:$0xff] %vm13000, %v12930
      %13016 = vst.msk [vmem:[%s386 + $0x78] sm:$0xff] %vm13000, %v12933
      %13017 = vst.msk [vmem:[%s386 + $0x80] sm:$0xff] %vm13000, %v12938
      %13018 = vst.msk [vmem:[%s386 + $0x88] sm:$0xff] %vm13000, %v12941
      %13019 = vst.msk [vmem:[%s386 + $0x90] sm:$0xff] %vm13000, %v12946
      %13020 = vst.msk [vmem:[%s386 + $0x98] sm:$0xff] %vm13000, %v12949
      %13021 = vst.msk [vmem:[%s386 + $0xa0] sm:$0xff] %vm13000, %v12954
      %13022 = vst.msk [vmem:[%s386 + $0xa8] sm:$0xff] %vm13000, %v12957
      %13023 = vst.msk [vmem:[%s386 + $0xb0] sm:$0xff] %vm13000, %v12962
      %13024 = vst.msk [vmem:[%s386 + $0xb8] sm:$0xff] %vm13000, %v12965
      %13025 = vst.msk [vmem:[%s386 + $0xc0] sm:$0xff] %vm13000, %v12970
      %13026 = vst.msk [vmem:[%s386 + $0xc8] sm:$0xff] %vm13000, %v12973
      %13027 = vst.msk [vmem:[%s386 + $0xd0] sm:$0xff] %vm13000, %v12978
      %13028 = vst.msk [vmem:[%s386 + $0xd8] sm:$0xff] %vm13000, %v12981
      %13029 = vst.msk [vmem:[%s386 + $0xe0] sm:$0xff] %vm13000, %v12986
      %13030 = vst.msk [vmem:[%s386 + $0xe8] sm:$0xff] %vm13000, %v12989
      %13031 = vst.msk [vmem:[%s386 + $0xf0] sm:$0xff] %vm13000, %v12994
      %13032 = vst.msk [vmem:[%s386 + $0xf8] sm:$0xff] %vm13000, %v12997
      %p13033 = scmp.lt.s32.totalorder %s22, 1
      %s13034 = scalar_select %p13033, %s22, 1
      %s13035 = smul.addr %s13034, 32
      %s13036 = smul.addr %s13035, 8
      %s13037 = scalar_lea.vmem %s11, %s13036
      // Predicated region
      $region65: #{multiframe_net_large_forward.1} parent=63 // pred_check
        %p13038 = pneg %p276
      $region66: #{multiframe_net_large_forward.1} parent=63 // pred_check_branch
        %13040 = sbr.rel (%p13038) target = $region68
      $region67: #{multiframe_net_large_forward.1} parent=63 // pred_region
        _
      $region68: #{multiframe_net_large_forward.1} parent=63 // pred_fallthru
        _
    $region64: #{multiframe_net_large_forward.1} parent=5 // pred_fallthru
      _
    %p13041 = scmp.le.s32.totalorder 2, %s17
    // Predicated region
    $region69: #{multiframe_net_large_forward.1} parent=5 // pred_check
      %p13042 = pneg %p13041
    $region70: #{multiframe_net_large_forward.1} parent=5 // pred_check_branch
      %13044 = sbr.rel (%p13042) target = $region72
    $region71: #{multiframe_net_large_forward.1} parent=5 // pred_region
      %s13045 = ssub.s32 %s17, 2
      // Predicated region
      $region73: #{multiframe_net_large_forward.1} parent=71 // pred_check
        %p13046 = pneg %p282
      $region74: #{multiframe_net_large_forward.1} parent=71 // pred_check_branch
        %13048 = sbr.rel (%p13046) target = $region76
      $region75: #{multiframe_net_large_forward.1} parent=71 // pred_region
        %p13049 = scmp.lt.s32.totalorder %s23, 1
        %s13050 = scalar_select %p13049, %s23, 1
        %s13051 = smul.addr %s13050, 32
        %s13052 = smul.addr %s13051, 8
        %s13053 = scalar_lea.vmem %s11, %s13052
      $region76: #{multiframe_net_large_forward.1} parent=71 // pred_fallthru
        _
    $region72: #{multiframe_net_large_forward.1} parent=5 // pred_fallthru
      _
  $region6: #{multiframe_net_large_forward.1} parent=0 // loop_footer
    %s21 = sadd.s32 1, %s17
  $region7: #{multiframe_net_large_forward.1} parent=0 // loop_footer_branch
    %16 = sbr.rel target = $region3
  $region8: #{multiframe_net_large_forward.1} parent=0 // loop_exit
    _

</llo_original>
